<compile_context>
chip_gen: v6e
topology: v6e:2x2x1
jax: 0.10.0
libtpu: 0.0.40
codegen_flags: <defaults>
</compile_context>

<pallas_src>
import math
import jax
import jax.numpy as jnp
from jax.experimental import pallas as pl
from jax.experimental.pallas import tpu as pltpu

C, H, W = 512, 7, 7
K = C * H * W          # 25088
HIDDEN = 256
TK = K // 2            # 12544 -> 2 grid steps, divisible by 128 (lane constraint)


def head_kernel(x_ref, w1_ref, b1_ref, w2t_ref, b2_ref, o_ref, acc_ref):
    k = pl.program_id(0)

    @pl.when(k == 0)
    def _():
        acc_ref[...] = jnp.zeros_like(acc_ref)

    # fc1 partial matmul over this K tile: (BM, TK)bf16 @ (TK, 256)bf16 -> f32 acc.
    # x is fully resident in VMEM; slice the current K window in-kernel.
    off = pl.multiple_of(k * TK, 128)
    x_tile = x_ref[:, pl.ds(off, TK)]
    acc_ref[...] += jnp.dot(x_tile, w1_ref[...],
                            preferred_element_type=jnp.float32)

    @pl.when(k == pl.num_programs(0) - 1)
    def _():
        h = acc_ref[...] + b1_ref[...]                      # fc1 bias  (BM, 256) f32
        # fc2 on the VPU: (BM,256)*(1,256) -> lane-reduce -> (BM,1), then bias.
        y = jnp.sum(h * w2t_ref[...], axis=-1, keepdims=True) + b2_ref[...]
        o_ref[...] = jnp.maximum(y, 0.0).astype(o_ref.dtype)   # relu


def resnet_counter_head(feat, w1, b1, w2t, b2):
    """feat: (B, 512, 7, 7) float32.  Returns (B, 1) float32.

    w1: (K, 256) f32 (cast to bf16 internally), b1: (1, 256) f32,
    w2t: (1, 256) f32 (fc2 weight, transposed), b2: (1, 1) f32.
    """
    B = feat.shape[0]
    x = feat.reshape(B, K)  # Flatten (glue, outside kernel)

    # Pad batch to a sublane multiple so the (BM, *) tiles fill vregs.
    BM = max(8, -(-B // 8) * 8)
    if BM != B:
        x = jnp.pad(x, ((0, BM - B), (0, 0)))

    # Stream activations / big weight in bf16; accumulate in f32 on the MXU.
    x_bf16 = x.astype(jnp.bfloat16)
    w1_bf16 = w1.astype(jnp.bfloat16)

    grid = (K // TK,)
    out = pl.pallas_call(
        head_kernel,
        out_shape=jax.ShapeDtypeStruct((BM, 1), jnp.float32),
        grid_spec=pltpu.PrefetchScalarGridSpec(
            num_scalar_prefetch=0,
            grid=grid,
            in_specs=[
                pl.BlockSpec((BM, K), lambda k: (0, 0)),        # x, fully resident
                pl.BlockSpec((TK, HIDDEN), lambda k: (k, 0)),   # W1 tile (streamed)
                pl.BlockSpec((1, HIDDEN), lambda k: (0, 0)),    # b1
                pl.BlockSpec((1, HIDDEN), lambda k: (0, 0)),    # W2^T
                pl.BlockSpec((1, 1), lambda k: (0, 0)),         # b2
            ],
            out_specs=pl.BlockSpec((BM, 1), lambda k: (0, 0)),
            scratch_shapes=[pltpu.VMEM((BM, HIDDEN), jnp.float32)],
        ),
        compiler_params=pltpu.CompilerParams(
            dimension_semantics=("arbitrary",),
            vmem_limit_bytes=32 * 1024 * 1024),
    )(x_bf16, w1_bf16, b1, w2t, b2)
    return out[:B]


def init_params(key):
    """Deterministic init matching the module: xavier_uniform weights, zero biases."""
    k1, k2 = jax.random.split(key)
    bound1 = math.sqrt(6.0 / (K + HIDDEN))
    w1 = jax.random.uniform(k1, (K, HIDDEN), jnp.float32, -bound1, bound1)
    b1 = jnp.zeros((1, HIDDEN), jnp.float32)
    bound2 = math.sqrt(6.0 / (HIDDEN + 1))
    w2t = jax.random.uniform(k2, (1, HIDDEN), jnp.float32, -bound2, bound2)
    b2 = jnp.zeros((1, 1), jnp.float32)
    return w1, b1, w2t, b2


if __name__ == "__main__":
    key = jax.random.PRNGKey(0)
    kfeat, kparam = jax.random.split(key)

    B = 2
    # Stand-in for the (untranslatable) pretrained ResNet backbone output.
    feat = jax.random.normal(kfeat, (B, C, H, W), jnp.float32)
    w1, b1, w2t, b2 = init_params(kparam)

    out = resnet_counter_head(feat, w1, b1, w2t, b2)
    out = jax.block_until_ready(out)

    # Reference check in plain JAX, with x/W1 cast through bf16 to match the
    # kernel's streamed precision (f32 accumulation, same math as the MXU path).
    x = feat.reshape(B, K)
    x16 = x.astype(jnp.bfloat16).astype(jnp.float32)
    w116 = w1.astype(jnp.bfloat16).astype(jnp.float32)
    h = x16 @ w116 + b1
    ref = jnp.maximum(h @ w2t.T + b2, 0.0)
    assert out.shape == (B, 1)
    assert jnp.allclose(out, ref, rtol=2e-3, atol=2e-3)

    print("KERNEL_OK")
</pallas_src>

<mosaic_0001>
module attributes {stable_mosaic.version = 11 : i64} {
  func.func @head_kernel(%arg0: i32, %arg1: memref<8x25088xbf16, #tpu.memory_space<vmem>>, %arg2: memref<12544x256xbf16, #tpu.memory_space<vmem>>, %arg3: memref<1x256xf32, #tpu.memory_space<vmem>>, %arg4: memref<1x256xf32, #tpu.memory_space<vmem>>, %arg5: memref<1x1xf32, #tpu.memory_space<vmem>>, %arg6: memref<8x1xf32, #tpu.memory_space<vmem>>, %arg7: memref<8x256xf32, #tpu.memory_space<vmem>>) attributes {dimension_semantics = [#tpu.dimension_semantics<arbitrary>], iteration_bounds = array<i64: 2>, scalar_prefetch = 0 : i64, scratch_operands = 1 : i64, tpu.core_type = #tpu.core_type<tc>, window_params = [{pipeline_mode = #tpu.pipeline_mode<synchronous>, transform_indices = @transform_0, window_bounds = array<i64: 8, 25088>}, {transform_indices = @transform_1, window_bounds = array<i64: 12544, 256>}, {pipeline_mode = #tpu.pipeline_mode<synchronous>, transform_indices = @transform_2, window_bounds = array<i64: 1, 256>}, {pipeline_mode = #tpu.pipeline_mode<synchronous>, transform_indices = @transform_3, window_bounds = array<i64: 1, 256>}, {pipeline_mode = #tpu.pipeline_mode<synchronous>, transform_indices = @transform_4, window_bounds = array<i64: 1, 1>}, {pipeline_mode = #tpu.pipeline_mode<synchronous>, transform_indices = @transform_5, window_bounds = array<i64: 8, 1>}]} {
    %c0_i32 = arith.constant 0 : i32
    %0 = arith.cmpi eq, %arg0, %c0_i32 : i32
    %1 = arith.extui %0 : i1 to i32
    %c0_i32_0 = arith.constant 0 : i32
    %2 = arith.cmpi ne, %1, %c0_i32_0 : i32
    scf.if %2 {
      %cst_8 = arith.constant 0.000000e+00 : f32
      %15 = vector.broadcast %cst_8 : f32 to vector<8x256xf32>
      %c0_9 = arith.constant 0 : index
      %c0_10 = arith.constant 0 : index
      %16 = vector.load %arg7[%c0_9, %c0_10] : memref<8x256xf32, #tpu.memory_space<vmem>>, vector<8x256xf32>
      tpu.vector_store %arg7[%c0_9, %c0_10], %15 {strides = array<i32>} : memref<8x256xf32, #tpu.memory_space<vmem>>, vector<8x256xf32>,
    } else {
    }
    %c12544_i32 = arith.constant 12544 : i32
    %3 = arith.muli %arg0, %c12544_i32 : i32
    %4 = tpu.assume_multiple %3, 128 : i32
    %c0 = arith.constant 0 : index
    %5 = arith.index_cast %4 : i32 to index
    %6 = vector.load %arg1[%c0, %5] : memref<8x25088xbf16, #tpu.memory_space<vmem>>, vector<8x12544xbf16>
    %c0_1 = arith.constant 0 : index
    %c0_2 = arith.constant 0 : index
    %7 = vector.load %arg7[%c0_1, %c0_2] : memref<8x256xf32, #tpu.memory_space<vmem>>, vector<8x256xf32>
    %c0_3 = arith.constant 0 : index
    %c0_4 = arith.constant 0 : index
    %8 = vector.load %arg2[%c0_3, %c0_4] : memref<12544x256xbf16, #tpu.memory_space<vmem>>, vector<12544x256xbf16>
    %cst = arith.constant dense<0.000000e+00> : vector<8x256xf32>
    %9 = tpu.matmul %6, %8, %cst {dimension_numbers = #tpu.dot_dimension_numbers<[1], [0], [0], [1], [0, 0, 1, 1], [], []>} : vector<8x12544xbf16>, vector<12544x256xbf16>, vector<8x256xf32> -> vector<8x256xf32>
    %10 = arith.addf %7, %9 : vector<8x256xf32>
    %c0_5 = arith.constant 0 : index
    %c0_6 = arith.constant 0 : index
    %11 = vector.load %arg7[%c0_5, %c0_6] : memref<8x256xf32, #tpu.memory_space<vmem>>, vector<8x256xf32>
    tpu.vector_store %arg7[%c0_5, %c0_6], %10 {strides = array<i32>} : memref<8x256xf32, #tpu.memory_space<vmem>>, vector<8x256xf32>,
    %c1_i32 = arith.constant 1 : i32
    %12 = arith.cmpi eq, %arg0, %c1_i32 : i32
    %13 = arith.extui %12 : i1 to i32
    %c0_i32_7 = arith.constant 0 : i32
    %14 = arith.cmpi ne, %13, %c0_i32_7 : i32
    scf.if %14 {
      %c0_8 = arith.constant 0 : index
      %c0_9 = arith.constant 0 : index
      %15 = vector.load %arg7[%c0_8, %c0_9] : memref<8x256xf32, #tpu.memory_space<vmem>>, vector<8x256xf32>
      %c0_10 = arith.constant 0 : index
      %c0_11 = arith.constant 0 : index
      %16 = vector.load %arg3[%c0_10, %c0_11] : memref<1x256xf32, #tpu.memory_space<vmem>>, vector<1x256xf32>
      %17 = vector.broadcast %16 : vector<1x256xf32> to vector<8x256xf32>
      %18 = arith.addf %15, %17 : vector<8x256xf32>
      %c0_12 = arith.constant 0 : index
      %c0_13 = arith.constant 0 : index
      %19 = vector.load %arg4[%c0_12, %c0_13] : memref<1x256xf32, #tpu.memory_space<vmem>>, vector<1x256xf32>
      %20 = vector.broadcast %19 : vector<1x256xf32> to vector<8x256xf32>
      %21 = arith.mulf %18, %20 : vector<8x256xf32>
      %cst_14 = arith.constant dense<0.000000e+00> : vector<8xf32>
      %22 = vector.multi_reduction <add>, %21, %cst_14 [1] : vector<8x256xf32> to vector<8xf32>
      %23 = vector.shape_cast %22 : vector<8xf32> to vector<8x1xf32>
      %c0_15 = arith.constant 0 : index
      %c0_16 = arith.constant 0 : index
      %24 = vector.load %arg5[%c0_15, %c0_16] : memref<1x1xf32, #tpu.memory_space<vmem>>, vector<1x1xf32>
      %25 = vector.broadcast %24 : vector<1x1xf32> to vector<8x1xf32>
      %26 = arith.addf %23, %25 : vector<8x1xf32>
      %cst_17 = arith.constant 0.000000e+00 : f32
      %27 = vector.broadcast %cst_17 : f32 to vector<8x1xf32>
      %28 = arith.maximumf %26, %27 : vector<8x1xf32>
      %c0_18 = arith.constant 0 : index
      %c0_19 = arith.constant 0 : index
      %29 = vector.load %arg6[%c0_18, %c0_19] : memref<8x1xf32, #tpu.memory_space<vmem>>, vector<8x1xf32>
      tpu.vector_store %arg6[%c0_18, %c0_19], %28 {strides = array<i32>} : memref<8x1xf32, #tpu.memory_space<vmem>>, vector<8x1xf32>,
    } else {
    }
    return
  }
  func.func @transform_0(%arg0: i32) -> (i32, i32) {
    %c0_i32 = arith.constant 0 : i32
    %c0_i32_0 = arith.constant 0 : i32
    %c0_i32_1 = arith.constant 0 : i32
    return %c0_i32, %c0_i32_0 : i32, i32
  }
  func.func @transform_1(%arg0: i32) -> (i32, i32) {
    %c0_i32 = arith.constant 0 : i32
    %c0_i32_0 = arith.constant 0 : i32
    return %arg0, %c0_i32 : i32, i32
  }
  func.func @transform_2(%arg0: i32) -> (i32, i32) {
    %c0_i32 = arith.constant 0 : i32
    %c0_i32_0 = arith.constant 0 : i32
    %c0_i32_1 = arith.constant 0 : i32
    return %c0_i32, %c0_i32_0 : i32, i32
  }
  func.func @transform_3(%arg0: i32) -> (i32, i32) {
    %c0_i32 = arith.constant 0 : i32
    %c0_i32_0 = arith.constant 0 : i32
    %c0_i32_1 = arith.constant 0 : i32
    return %c0_i32, %c0_i32_0 : i32, i32
  }
  func.func @transform_4(%arg0: i32) -> (i32, i32) {
    %c0_i32 = arith.constant 0 : i32
    %c0_i32_0 = arith.constant 0 : i32
    %c0_i32_1 = arith.constant 0 : i32
    return %c0_i32, %c0_i32_0 : i32, i32
  }
  func.func @transform_5(%arg0: i32) -> (i32, i32) {
    %c0_i32 = arith.constant 0 : i32
    %c0_i32_0 = arith.constant 0 : i32
    %c0_i32_1 = arith.constant 0 : i32
    return %c0_i32, %c0_i32_0 : i32, i32
  }
}

</mosaic_0001>

<llo_original>
// kernel: tpu_custom_call.1
$region0: #{tpu_custom_call.1}
  #allocation0 [shape = 'u32[]', space=smem, size = 0x4, offset = 0x4, fixed_abs, tag = 'smem constant byte address 0x4 - core index']
  #allocation1 [shape = 'u32[144,128]{1,0:T(1,128)}', space=vmem, size = 0x12000, scoped, tag = 'internal scratch']
  #allocation2 [shape = 'f32[8,256]{1,0:T(8,128)}', space=vmem, size = 0x2000, scoped, tag = 'scratch operand']
  #allocation3 [shape = 'f32[1,1]{1,0:T(1,128)S(1)}', space=vmem, size = 0x200, scoped, tag = 'scoped memory for tpu_custom_call.1']
  %s0 = inlined_call_operand.hbm [shape: bf16[8,25088], index: 0, kind: input, shape index: {}]
  %s1 = inlined_call_operand.hbm [shape: bf16[25088,256], index: 1, kind: input, shape index: {}]
  %s2 = inlined_call_operand.hbm [shape: f32[1,256], index: 2, kind: input, shape index: {}]
  %s3 = inlined_call_operand.hbm [shape: f32[1,256], index: 3, kind: input, shape index: {}]
  %s4 = inlined_call_operand.<no memory space> [shape: f32[1,1], index: 4, kind: input, shape index: {}]
  %s5 = inlined_call_operand.vmem [shape: f32[8,1], index: 5, kind: output, shape index: {}]
  %s6 = sld [smem:[#allocation0]]
  $region77: #{tpu_custom_call.1} parent=0
    _
  %s8 = ssub.s32 1, %s6
  %s9 = scalar_select 0, %s8, %s6
  %v10 = vstv %s4
  %11 = vst [vmem:[#allocation3] sm:$0x1] %v10
  $region1: #{tpu_custom_call.1} parent=0
    #allocation4 [shape = 'u8[401408]{0}', space=vmem, size = 0x62000, scoped, tag = 'input window, operand 0, single buffered']
    #allocation5 [shape = 's32[2]{0}', space=sflag, size = 0x8, scoped, tag = 'scoped memory for tpu_custom_call.1']
    #allocation6 [shape = 'u8[12845056]{0}', space=vmem, size = 0xc40000, scoped, tag = 'input window, operand 1']
    #allocation7 [shape = 's32[2]{0}', space=sflag, size = 0x8, scoped, tag = 'scoped memory for tpu_custom_call.1']
    #allocation8 [shape = 'u8[1024]{0}', space=vmem, size = 0x400, scoped, tag = 'input window, operand 2, single buffered']
    #allocation9 [shape = 'u8[1024]{0}', space=vmem, size = 0x400, scoped, tag = 'input window, operand 3, single buffered']
    #allocation10 [shape = 's32[1]{0}', space=sflag, size = 0x4, scoped, tag = 'scoped memory for tpu_custom_call.1']
    %12 = vsyncpa [#allocation5], 0
    %13 = vsyncpa [#allocation7], 0
    %s14 = scalar_lea.sflag [#allocation7], 1
    %15 = vsyncpa %s14, 0
    %16 = vsyncpa [#allocation10], 0
    loop: start=0, step=1, limit=4
    $region2: #{tpu_custom_call.1} parent=1 // loop_pre_header
      _
    $region3: #{tpu_custom_call.1} parent=1 // loop_header
      %s18 = sphi 0, %s22
      %p19 = scmp.ge.s32.totalorder %s18, 4
      %s26 = sphi 0, %s26
      %s28 = sphi 0, %s26
      %s29 = sphi 0, %s28
      %s43 = sphi 0, %s29
      %s49 = sphi 0, %s51
      %s52 = sphi 0, %s49
      %s53 = sphi 0, %s52
      %s69 = sphi 0, %s53
      %s73 = sphi 0, %s73
      %s75 = sphi 0, %s73
      %s76 = sphi 0, %s75
      %s90 = sphi 0, %s76
      %s94 = sphi 0, %s94
      %s96 = sphi 0, %s94
      %s97 = sphi 0, %s96
      %s111 = sphi 0, %s97
      %s115 = sphi 0, %s115
      %s117 = sphi 0, %s115
      %s118 = sphi 0, %s117
      %s132 = sphi 0, %s118
      %s136 = sphi 0, %s136
      %s138 = sphi 0, %s136
      %s139 = sphi 0, %s138
      %s153 = sphi 0, %s139
    $region4: #{tpu_custom_call.1} parent=1 // loop_header_branch
      %21 = sbr.rel (%p19) target = $region8
    $region5: #{tpu_custom_call.1} parent=1 // loop_body
      %s23 = ssub.s32 %s18, 1
      %s24 = ssub.s32 %s18, 2
      %s25 = sadd.s32 %s18, 1
      %s27 = sadd.s32 %s26, 1
      %p30 = scmp.eq.s32.totalorder %s18, 1
      %p31 = scmp.ne.s32.totalorder %s26, %s28
      %p32 = scmp.eq.s32.totalorder %s18, 0
      %p33 = por %p31, %p32
      %p34 = scmp.ne.s32.totalorder %s26, %s28
      %p35 = scmp.eq.s32.totalorder %s23, 1
      %p36 = por %p34, %p35
      %p37 = scmp.ne.s32.totalorder %s28, %s29
      %p38 = scmp.eq.s32.totalorder %s23, 0
      %p39 = por %p37, %p38
      %p40 = scmp.ne.s32.totalorder %s28, %s29
      %p41 = scmp.eq.s32.totalorder %s24, 1
      %p42 = por %p40, %p41
      %p44 = scmp.ne.s32.totalorder %s29, %s43
      %p45 = scmp.eq.s32.totalorder %s24, 0
      %p46 = por %p44, %p45
      %s47 = ssub.s32 %s18, %s25
      %p48 = scmp.eq.s32.totalorder %s47, 0
      %s50 = sadd.s32 %s49, 1
      %s51 = scalar_select %p48, %s49, %s50
      %p54 = pneg %p48
      %p55 = scmp.eq.s32.totalorder %s18, 1
      %p56 = por %p54, %p55
      %p57 = scmp.ne.s32.totalorder %s49, %s52
      %p58 = scmp.eq.s32.totalorder %s18, 0
      %p59 = por %p57, %p58
      %p60 = scmp.ne.s32.totalorder %s49, %s52
      %p61 = scmp.eq.s32.totalorder %s23, 1
      %p62 = por %p60, %p61
      %p63 = scmp.ne.s32.totalorder %s52, %s53
      %p64 = scmp.eq.s32.totalorder %s23, 0
      %p65 = por %p63, %p64
      %p66 = scmp.ne.s32.totalorder %s52, %s53
      %p67 = scmp.eq.s32.totalorder %s24, 1
      %p68 = por %p66, %p67
      %p70 = scmp.ne.s32.totalorder %s53, %s69
      %p71 = scmp.eq.s32.totalorder %s24, 0
      %p72 = por %p70, %p71
      %s74 = sadd.s32 %s73, 1
      %p77 = scmp.eq.s32.totalorder %s18, 1
      %p78 = scmp.ne.s32.totalorder %s73, %s75
      %p79 = scmp.eq.s32.totalorder %s18, 0
      %p80 = por %p78, %p79
      %p81 = scmp.ne.s32.totalorder %s73, %s75
      %p82 = scmp.eq.s32.totalorder %s23, 1
      %p83 = por %p81, %p82
      %p84 = scmp.ne.s32.totalorder %s75, %s76
      %p85 = scmp.eq.s32.totalorder %s23, 0
      %p86 = por %p84, %p85
      %p87 = scmp.ne.s32.totalorder %s75, %s76
      %p88 = scmp.eq.s32.totalorder %s24, 1
      %p89 = por %p87, %p88
      %p91 = scmp.ne.s32.totalorder %s76, %s90
      %p92 = scmp.eq.s32.totalorder %s24, 0
      %p93 = por %p91, %p92
      %s95 = sadd.s32 %s94, 1
      %p98 = scmp.eq.s32.totalorder %s18, 1
      %p99 = scmp.ne.s32.totalorder %s94, %s96
      %p100 = scmp.eq.s32.totalorder %s18, 0
      %p101 = por %p99, %p100
      %p102 = scmp.ne.s32.totalorder %s94, %s96
      %p103 = scmp.eq.s32.totalorder %s23, 1
      %p104 = por %p102, %p103
      %p105 = scmp.ne.s32.totalorder %s96, %s97
      %p106 = scmp.eq.s32.totalorder %s23, 0
      %p107 = por %p105, %p106
      %p108 = scmp.ne.s32.totalorder %s96, %s97
      %p109 = scmp.eq.s32.totalorder %s24, 1
      %p110 = por %p108, %p109
      %p112 = scmp.ne.s32.totalorder %s97, %s111
      %p113 = scmp.eq.s32.totalorder %s24, 0
      %p114 = por %p112, %p113
      %s116 = sadd.s32 %s115, 1
      %p119 = scmp.eq.s32.totalorder %s18, 1
      %p120 = scmp.ne.s32.totalorder %s115, %s117
      %p121 = scmp.eq.s32.totalorder %s18, 0
      %p122 = por %p120, %p121
      %p123 = scmp.ne.s32.totalorder %s115, %s117
      %p124 = scmp.eq.s32.totalorder %s23, 1
      %p125 = por %p123, %p124
      %p126 = scmp.ne.s32.totalorder %s117, %s118
      %p127 = scmp.eq.s32.totalorder %s23, 0
      %p128 = por %p126, %p127
      %p129 = scmp.ne.s32.totalorder %s117, %s118
      %p130 = scmp.eq.s32.totalorder %s24, 1
      %p131 = por %p129, %p130
      %p133 = scmp.ne.s32.totalorder %s118, %s132
      %p134 = scmp.eq.s32.totalorder %s24, 0
      %p135 = por %p133, %p134
      %s137 = sadd.s32 %s136, 1
      %p140 = scmp.eq.s32.totalorder %s18, 1
      %p141 = scmp.ne.s32.totalorder %s136, %s138
      %p142 = scmp.eq.s32.totalorder %s18, 0
      %p143 = por %p141, %p142
      %p144 = scmp.ne.s32.totalorder %s136, %s138
      %p145 = scmp.eq.s32.totalorder %s23, 1
      %p146 = por %p144, %p145
      %p147 = scmp.ne.s32.totalorder %s138, %s139
      %p148 = scmp.eq.s32.totalorder %s23, 0
      %p149 = por %p147, %p148
      %p150 = scmp.ne.s32.totalorder %s138, %s139
      %p151 = scmp.eq.s32.totalorder %s24, 1
      %p152 = por %p150, %p151
      %p154 = scmp.ne.s32.totalorder %s139, %s153
      %p155 = scmp.eq.s32.totalorder %s24, 0
      %p156 = por %p154, %p155
      %p157 = scmp.le.s32.totalorder 1, %s18
      %p158 = scmp.lt.s32.totalorder %s18, 3
      %p159 = pnand %p157, %p158
      %p160 = pneg %p159
      // Predicated region
      $region9: #{tpu_custom_call.1} parent=5 // pred_check
        _
      $region10: #{tpu_custom_call.1} parent=5 // pred_check_branch
        %162 = sbr.rel (%p159) target = $region12
      $region11: #{tpu_custom_call.1} parent=5 // pred_region
        %s163 = ssub.s32 %s18, 1
        // Predicated region
        $region13: #{tpu_custom_call.1} parent=11 // pred_check
          %p164 = pneg %p39
        $region14: #{tpu_custom_call.1} parent=11 // pred_check_branch
          %166 = sbr.rel (%p164) target = $region16
        $region15: #{tpu_custom_call.1} parent=11 // pred_region
          %s168 = ssub.s32 12544, 12544
          %169 = vsyncadd [#allocation5], %s168
          %s171 = sshll.u32 [#allocation4], 4
          %s172 = int_to_ptr.vmem [resolvable:$true] %s171
          %174 = dma.hbm_to_vmem [thread:$0]  %s0, 12544, %s172, [#allocation5]
        $region16: #{tpu_custom_call.1} parent=11 // pred_fallthru
          _
        // Predicated region
        $region17: #{tpu_custom_call.1} parent=11 // pred_check
          %p175 = pneg %p86
        $region18: #{tpu_custom_call.1} parent=11 // pred_check_branch
          %177 = sbr.rel (%p175) target = $region20
        $region19: #{tpu_custom_call.1} parent=11 // pred_region
          %s179 = ssub.s32 32, 32
          %180 = vsyncadd [#allocation7], %s179
          %s182 = sshll.u32 [#allocation8], 4
          %s183 = int_to_ptr.vmem [resolvable:$true] %s182
          %185 = dma.hbm_to_vmem [thread:$0]  %s2, 32, %s183, [#allocation7]
        $region20: #{tpu_custom_call.1} parent=11 // pred_fallthru
          _
        // Predicated region
        $region21: #{tpu_custom_call.1} parent=11 // pred_check
          %p186 = pneg %p107
        $region22: #{tpu_custom_call.1} parent=11 // pred_check_branch
          %188 = sbr.rel (%p186) target = $region24
        $region23: #{tpu_custom_call.1} parent=11 // pred_region
          %s190 = ssub.s32 32, 32
          %191 = vsyncadd [#allocation10], %s190
          %s193 = sshll.u32 [#allocation9], 4
          %s194 = int_to_ptr.vmem [resolvable:$true] %s193
          %196 = dma.hbm_to_vmem [thread:$0]  %s3, 32, %s194, [#allocation10]
        $region24: #{tpu_custom_call.1} parent=11 // pred_fallthru
          _
        // Predicated region
        $region25: #{tpu_custom_call.1} parent=11 // pred_check
          %p197 = pneg %p128
        $region26: #{tpu_custom_call.1} parent=11 // pred_check_branch
          %199 = sbr.rel (%p197) target = $region28
        $region27: #{tpu_custom_call.1} parent=11 // pred_region
          _
        $region28: #{tpu_custom_call.1} parent=11 // pred_fallthru
          _
      $region12: #{tpu_custom_call.1} parent=5 // pred_fallthru
        _
      %p200 = scmp.lt.s32.totalorder %s18, 2
      // Predicated region
      $region29: #{tpu_custom_call.1} parent=5 // pred_check
        %p201 = pneg %p200
      $region30: #{tpu_custom_call.1} parent=5 // pred_check_branch
        %203 = sbr.rel (%p201) target = $region32
      $region31: #{tpu_custom_call.1} parent=5 // pred_region
        // Predicated region
        $region33: #{tpu_custom_call.1} parent=31 // pred_check
          %p204 = pneg %p59
        $region34: #{tpu_custom_call.1} parent=31 // pred_check_branch
          %206 = sbr.rel (%p204) target = $region36
        $region35: #{tpu_custom_call.1} parent=31 // pred_region
          %s207 = sand.u32 %s18, 1
          %s208 = scalar_lea.sflag [#allocation7], %s207
          %s209 = sand.u32 %s49, 1
          %s210 = smul.addr %s209, 12544
          %s211 = scalar_lea.vmem [#allocation6], %s210
          %s212 = smul.u32 1568, %s18
          %s214 = ssub.s32 200704, 200704
          %215 = vsyncadd %s208, %s214
          %s216 = smul.addr %s212, 2
          %s217 = smul.addr %s216, 64
          %s218 = scalar_lea.hbm %s1, %s217
          %s219 = sshll.u32 %s211, 4
          %s220 = int_to_ptr.vmem [resolvable:$true] %s219
          %225 = dma.hbm_to_vmem [thread:$0]  %s218, 200704, %s220, %s208, 128, 128, 8
        $region36: #{tpu_custom_call.1} parent=31 // pred_fallthru
          _
      $region32: #{tpu_custom_call.1} parent=5 // pred_fallthru
        _
      %p226 = scmp.le.s32.totalorder 1, %s18
      %p227 = scmp.lt.s32.totalorder %s18, 3
      %p228 = pnand %p226, %p227
      %p229 = pneg %p228
      // Predicated region
      $region37: #{tpu_custom_call.1} parent=5 // pred_check
        _
      $region38: #{tpu_custom_call.1} parent=5 // pred_check_branch
        %231 = sbr.rel (%p228) target = $region40
      $region39: #{tpu_custom_call.1} parent=5 // pred_region
        %s232 = ssub.s32 %s18, 1
        // Predicated region
        $region41: #{tpu_custom_call.1} parent=39 // pred_check
          %p233 = pneg %p39
        $region42: #{tpu_custom_call.1} parent=39 // pred_check_branch
          %235 = sbr.rel (%p233) target = $region44
        $region43: #{tpu_custom_call.1} parent=39 // pred_region
          %236 = dma.done [#allocation5], 12544
        $region44: #{tpu_custom_call.1} parent=39 // pred_fallthru
          _
        %s237 = sand.u32 %s23, 1
        %s238 = scalar_lea.sflag [#allocation7], %s237
        %s239 = sand.u32 %s52, 1
        %s240 = smul.addr %s239, 12544
        %s241 = scalar_lea.vmem [#allocation6], %s240
        // Predicated region
        $region45: #{tpu_custom_call.1} parent=39 // pred_check
          %p242 = pneg %p65
        $region46: #{tpu_custom_call.1} parent=39 // pred_check_branch
          %244 = sbr.rel (%p242) target = $region48
        $region47: #{tpu_custom_call.1} parent=39 // pred_region
          %245 = dma.done %s238, 200704
        $region48: #{tpu_custom_call.1} parent=39 // pred_fallthru
          _
        // Predicated region
        $region49: #{tpu_custom_call.1} parent=39 // pred_check
          %p246 = pneg %p86
        $region50: #{tpu_custom_call.1} parent=39 // pred_check_branch
          %248 = sbr.rel (%p246) target = $region52
        $region51: #{tpu_custom_call.1} parent=39 // pred_region
          %249 = dma.done [#allocation7], 32
        $region52: #{tpu_custom_call.1} parent=39 // pred_fallthru
          _
        // Predicated region
        $region53: #{tpu_custom_call.1} parent=39 // pred_check
          %p250 = pneg %p107
        $region54: #{tpu_custom_call.1} parent=39 // pred_check_branch
          %252 = sbr.rel (%p250) target = $region56
        $region55: #{tpu_custom_call.1} parent=39 // pred_region
          %253 = dma.done [#allocation10], 32
        $region56: #{tpu_custom_call.1} parent=39 // pred_fallthru
          _
        %p254 = pneg %p39
        %p255 = pneg %p36
        %s256 = sand.u32 %s23, 1
        %s257 = scalar_lea.sflag [#allocation7], %s256
        %s258 = sand.u32 %s52, 1
        %s259 = smul.addr %s258, 12544
        %s260 = scalar_lea.vmem [#allocation6], %s259
        %p261 = pneg %p65
        %p262 = pneg %p62
        %p263 = pneg %p86
        %p264 = pneg %p83
        %p265 = pneg %p107
        %p266 = pneg %p104
        %p267 = pneg %p128
        %p268 = pneg %p125
        %p269 = pneg %p149
        %p270 = pneg %p146
        %s271 = smul.u32 1568, %s23
        %p272 = scmp.eq.s32.totalorder %s23, 0
        // Predicated region
        $region57: #{tpu_custom_call.1} parent=39 // pred_check
          %p273 = pneg %p272
        $region58: #{tpu_custom_call.1} parent=39 // pred_check_branch
          %275 = sbr.rel (%p273) target = $region60
        $region59: #{tpu_custom_call.1} parent=39 // pred_region
          %276 = vst [vmem:[#allocation2] sm:$0xff] 0.0
          %277 = vst [vmem:[#allocation2 + $0x8] sm:$0xff] 0.0
        $region60: #{tpu_custom_call.1} parent=39 // pred_fallthru
          _
        %s278 = smul.u32 %s23, 12544
        %s279 = sshra.s32 %s278, 7
        %s280 = sand.u32 %s278, 127
        %s281 = smul.addr %s279, 4
        %s282 = scalar_lea.vmem [#allocation4], %s281
        %v283 = vld [vmem:[%s282] sm:$0xff]
        %v284 = vld [vmem:[%s282 + $0x8] sm:$0xff]
        %v285 = vld [vmem:[%s282 + $0x10] sm:$0xff]
        %v286 = vld [vmem:[%s282 + $0x18] sm:$0xff]
        %v287 = vld [vmem:[%s282 + $0x20] sm:$0xff]
        %v288 = vld [vmem:[%s282 + $0x28] sm:$0xff]
        %v289 = vld [vmem:[%s282 + $0x30] sm:$0xff]
        %v290 = vld [vmem:[%s282 + $0x38] sm:$0xff]
        %v291 = vld [vmem:[%s282 + $0x40] sm:$0xff]
        %v292 = vld [vmem:[%s282 + $0x48] sm:$0xff]
        %v293 = vld [vmem:[%s282 + $0x50] sm:$0xff]
        %v294 = vld [vmem:[%s282 + $0x58] sm:$0xff]
        %v295 = vld [vmem:[%s282 + $0x60] sm:$0xff]
        %v296 = vld [vmem:[%s282 + $0x68] sm:$0xff]
        %v297 = vld [vmem:[%s282 + $0x70] sm:$0xff]
        %v298 = vld [vmem:[%s282 + $0x78] sm:$0xff]
        %v299 = vld [vmem:[%s282 + $0x80] sm:$0xff]
        %v300 = vld [vmem:[%s282 + $0x88] sm:$0xff]
        %v301 = vld [vmem:[%s282 + $0x90] sm:$0xff]
        %v302 = vld [vmem:[%s282 + $0x98] sm:$0xff]
        %v303 = vld [vmem:[%s282 + $0xa0] sm:$0xff]
        %v304 = vld [vmem:[%s282 + $0xa8] sm:$0xff]
        %v305 = vld [vmem:[%s282 + $0xb0] sm:$0xff]
        %v306 = vld [vmem:[%s282 + $0xb8] sm:$0xff]
        %v307 = vld [vmem:[%s282 + $0xc0] sm:$0xff]
        %v308 = vld [vmem:[%s282 + $0xc8] sm:$0xff]
        %v309 = vld [vmem:[%s282 + $0xd0] sm:$0xff]
        %v310 = vld [vmem:[%s282 + $0xd8] sm:$0xff]
        %v311 = vld [vmem:[%s282 + $0xe0] sm:$0xff]
        %v312 = vld [vmem:[%s282 + $0xe8] sm:$0xff]
        %v313 = vld [vmem:[%s282 + $0xf0] sm:$0xff]
        %v314 = vld [vmem:[%s282 + $0xf8] sm:$0xff]
        %v315 = vld [vmem:[%s282 + $0x100] sm:$0xff]
        %v316 = vld [vmem:[%s282 + $0x108] sm:$0xff]
        %v317 = vld [vmem:[%s282 + $0x110] sm:$0xff]
        %v318 = vld [vmem:[%s282 + $0x118] sm:$0xff]
        %v319 = vld [vmem:[%s282 + $0x120] sm:$0xff]
        %v320 = vld [vmem:[%s282 + $0x128] sm:$0xff]
        %v321 = vld [vmem:[%s282 + $0x130] sm:$0xff]
        %v322 = vld [vmem:[%s282 + $0x138] sm:$0xff]
        %v323 = vld [vmem:[%s282 + $0x140] sm:$0xff]
        %v324 = vld [vmem:[%s282 + $0x148] sm:$0xff]
        %v325 = vld [vmem:[%s282 + $0x150] sm:$0xff]
        %v326 = vld [vmem:[%s282 + $0x158] sm:$0xff]
        %v327 = vld [vmem:[%s282 + $0x160] sm:$0xff]
        %v328 = vld [vmem:[%s282 + $0x168] sm:$0xff]
        %v329 = vld [vmem:[%s282 + $0x170] sm:$0xff]
        %v330 = vld [vmem:[%s282 + $0x178] sm:$0xff]
        %v331 = vld [vmem:[%s282 + $0x180] sm:$0xff]
        %v332 = vld [vmem:[#allocation2] sm:$0xff]
        %v333 = vld [vmem:[#allocation2 + $0x8] sm:$0xff]
        %v334 = vld [vmem:[%s241] sm:$0xff]
        %v335 = vld [vmem:[%s241 + $0x8] sm:$0xff]
        %v336 = vld [vmem:[%s241 + $0x10] sm:$0xff]
        %v337 = vld [vmem:[%s241 + $0x18] sm:$0xff]
        %v338 = vld [vmem:[%s241 + $0x20] sm:$0xff]
        %v339 = vld [vmem:[%s241 + $0x28] sm:$0xff]
        %v340 = vld [vmem:[%s241 + $0x30] sm:$0xff]
        %v341 = vld [vmem:[%s241 + $0x38] sm:$0xff]
        %v342 = vld [vmem:[%s241 + $0x40] sm:$0xff]
        %v343 = vld [vmem:[%s241 + $0x48] sm:$0xff]
        %v344 = vld [vmem:[%s241 + $0x50] sm:$0xff]
        %v345 = vld [vmem:[%s241 + $0x58] sm:$0xff]
        %v346 = vld [vmem:[%s241 + $0x60] sm:$0xff]
        %v347 = vld [vmem:[%s241 + $0x68] sm:$0xff]
        %v348 = vld [vmem:[%s241 + $0x70] sm:$0xff]
        %v349 = vld [vmem:[%s241 + $0x78] sm:$0xff]
        %v350 = vld [vmem:[%s241 + $0x80] sm:$0xff]
        %v351 = vld [vmem:[%s241 + $0x88] sm:$0xff]
        %v352 = vld [vmem:[%s241 + $0x90] sm:$0xff]
        %v353 = vld [vmem:[%s241 + $0x98] sm:$0xff]
        %v354 = vld [vmem:[%s241 + $0xa0] sm:$0xff]
        %v355 = vld [vmem:[%s241 + $0xa8] sm:$0xff]
        %v356 = vld [vmem:[%s241 + $0xb0] sm:$0xff]
        %v357 = vld [vmem:[%s241 + $0xb8] sm:$0xff]
        %v358 = vld [vmem:[%s241 + $0xc0] sm:$0xff]
        %v359 = vld [vmem:[%s241 + $0xc8] sm:$0xff]
        %v360 = vld [vmem:[%s241 + $0xd0] sm:$0xff]
        %v361 = vld [vmem:[%s241 + $0xd8] sm:$0xff]
        %v362 = vld [vmem:[%s241 + $0xe0] sm:$0xff]
        %v363 = vld [vmem:[%s241 + $0xe8] sm:$0xff]
        %v364 = vld [vmem:[%s241 + $0xf0] sm:$0xff]
        %v365 = vld [vmem:[%s241 + $0xf8] sm:$0xff]
        %v366 = vld [vmem:[%s241 + $0x100] sm:$0xff]
        %v367 = vld [vmem:[%s241 + $0x108] sm:$0xff]
        %v368 = vld [vmem:[%s241 + $0x110] sm:$0xff]
        %v369 = vld [vmem:[%s241 + $0x118] sm:$0xff]
        %v370 = vld [vmem:[%s241 + $0x120] sm:$0xff]
        %v371 = vld [vmem:[%s241 + $0x128] sm:$0xff]
        %v372 = vld [vmem:[%s241 + $0x130] sm:$0xff]
        %v373 = vld [vmem:[%s241 + $0x138] sm:$0xff]
        %v374 = vld [vmem:[%s241 + $0x140] sm:$0xff]
        %v375 = vld [vmem:[%s241 + $0x148] sm:$0xff]
        %v376 = vld [vmem:[%s241 + $0x150] sm:$0xff]
        %v377 = vld [vmem:[%s241 + $0x158] sm:$0xff]
        %v378 = vld [vmem:[%s241 + $0x160] sm:$0xff]
        %v379 = vld [vmem:[%s241 + $0x168] sm:$0xff]
        %v380 = vld [vmem:[%s241 + $0x170] sm:$0xff]
        %v381 = vld [vmem:[%s241 + $0x178] sm:$0xff]
        %v382 = vld [vmem:[%s241 + $0x180] sm:$0xff]
        %v383 = vld [vmem:[%s241 + $0x188] sm:$0xff]
        %v384 = vld [vmem:[%s241 + $0x190] sm:$0xff]
        %v385 = vld [vmem:[%s241 + $0x198] sm:$0xff]
        %v386 = vld [vmem:[%s241 + $0x1a0] sm:$0xff]
        %v387 = vld [vmem:[%s241 + $0x1a8] sm:$0xff]
        %v388 = vld [vmem:[%s241 + $0x1b0] sm:$0xff]
        %v389 = vld [vmem:[%s241 + $0x1b8] sm:$0xff]
        %v390 = vld [vmem:[%s241 + $0x1c0] sm:$0xff]
        %v391 = vld [vmem:[%s241 + $0x1c8] sm:$0xff]
        %v392 = vld [vmem:[%s241 + $0x1d0] sm:$0xff]
        %v393 = vld [vmem:[%s241 + $0x1d8] sm:$0xff]
        %v394 = vld [vmem:[%s241 + $0x1e0] sm:$0xff]
        %v395 = vld [vmem:[%s241 + $0x1e8] sm:$0xff]
        %v396 = vld [vmem:[%s241 + $0x1f0] sm:$0xff]
        %v397 = vld [vmem:[%s241 + $0x1f8] sm:$0xff]
        %v398 = vld [vmem:[%s241 + $0x200] sm:$0xff]
        %v399 = vld [vmem:[%s241 + $0x208] sm:$0xff]
        %v400 = vld [vmem:[%s241 + $0x210] sm:$0xff]
        %v401 = vld [vmem:[%s241 + $0x218] sm:$0xff]
        %v402 = vld [vmem:[%s241 + $0x220] sm:$0xff]
        %v403 = vld [vmem:[%s241 + $0x228] sm:$0xff]
        %v404 = vld [vmem:[%s241 + $0x230] sm:$0xff]
        %v405 = vld [vmem:[%s241 + $0x238] sm:$0xff]
        %v406 = vld [vmem:[%s241 + $0x240] sm:$0xff]
        %v407 = vld [vmem:[%s241 + $0x248] sm:$0xff]
        %v408 = vld [vmem:[%s241 + $0x250] sm:$0xff]
        %v409 = vld [vmem:[%s241 + $0x258] sm:$0xff]
        %v410 = vld [vmem:[%s241 + $0x260] sm:$0xff]
        %v411 = vld [vmem:[%s241 + $0x268] sm:$0xff]
        %v412 = vld [vmem:[%s241 + $0x270] sm:$0xff]
        %v413 = vld [vmem:[%s241 + $0x278] sm:$0xff]
        %v414 = vld [vmem:[%s241 + $0x280] sm:$0xff]
        %v415 = vld [vmem:[%s241 + $0x288] sm:$0xff]
        %v416 = vld [vmem:[%s241 + $0x290] sm:$0xff]
        %v417 = vld [vmem:[%s241 + $0x298] sm:$0xff]
        %v418 = vld [vmem:[%s241 + $0x2a0] sm:$0xff]
        %v419 = vld [vmem:[%s241 + $0x2a8] sm:$0xff]
        %v420 = vld [vmem:[%s241 + $0x2b0] sm:$0xff]
        %v421 = vld [vmem:[%s241 + $0x2b8] sm:$0xff]
        %v422 = vld [vmem:[%s241 + $0x2c0] sm:$0xff]
        %v423 = vld [vmem:[%s241 + $0x2c8] sm:$0xff]
        %v424 = vld [vmem:[%s241 + $0x2d0] sm:$0xff]
        %v425 = vld [vmem:[%s241 + $0x2d8] sm:$0xff]
        %v426 = vld [vmem:[%s241 + $0x2e0] sm:$0xff]
        %v427 = vld [vmem:[%s241 + $0x2e8] sm:$0xff]
        %v428 = vld [vmem:[%s241 + $0x2f0] sm:$0xff]
        %v429 = vld [vmem:[%s241 + $0x2f8] sm:$0xff]
        %v430 = vld [vmem:[%s241 + $0x300] sm:$0xff]
        %v431 = vld [vmem:[%s241 + $0x308] sm:$0xff]
        %v432 = vld [vmem:[%s241 + $0x310] sm:$0xff]
        %v433 = vld [vmem:[%s241 + $0x318] sm:$0xff]
        %v434 = vld [vmem:[%s241 + $0x320] sm:$0xff]
        %v435 = vld [vmem:[%s241 + $0x328] sm:$0xff]
        %v436 = vld [vmem:[%s241 + $0x330] sm:$0xff]
        %v437 = vld [vmem:[%s241 + $0x338] sm:$0xff]
        %v438 = vld [vmem:[%s241 + $0x340] sm:$0xff]
        %v439 = vld [vmem:[%s241 + $0x348] sm:$0xff]
        %v440 = vld [vmem:[%s241 + $0x350] sm:$0xff]
        %v441 = vld [vmem:[%s241 + $0x358] sm:$0xff]
        %v442 = vld [vmem:[%s241 + $0x360] sm:$0xff]
        %v443 = vld [vmem:[%s241 + $0x368] sm:$0xff]
        %v444 = vld [vmem:[%s241 + $0x370] sm:$0xff]
        %v445 = vld [vmem:[%s241 + $0x378] sm:$0xff]
        %v446 = vld [vmem:[%s241 + $0x380] sm:$0xff]
        %v447 = vld [vmem:[%s241 + $0x388] sm:$0xff]
        %v448 = vld [vmem:[%s241 + $0x390] sm:$0xff]
        %v449 = vld [vmem:[%s241 + $0x398] sm:$0xff]
        %v450 = vld [vmem:[%s241 + $0x3a0] sm:$0xff]
        %v451 = vld [vmem:[%s241 + $0x3a8] sm:$0xff]
        %v452 = vld [vmem:[%s241 + $0x3b0] sm:$0xff]
        %v453 = vld [vmem:[%s241 + $0x3b8] sm:$0xff]
        %v454 = vld [vmem:[%s241 + $0x3c0] sm:$0xff]
        %v455 = vld [vmem:[%s241 + $0x3c8] sm:$0xff]
        %v456 = vld [vmem:[%s241 + $0x3d0] sm:$0xff]
        %v457 = vld [vmem:[%s241 + $0x3d8] sm:$0xff]
        %v458 = vld [vmem:[%s241 + $0x3e0] sm:$0xff]
        %v459 = vld [vmem:[%s241 + $0x3e8] sm:$0xff]
        %v460 = vld [vmem:[%s241 + $0x3f0] sm:$0xff]
        %v461 = vld [vmem:[%s241 + $0x3f8] sm:$0xff]
        %v462 = vld [vmem:[%s241 + $0x400] sm:$0xff]
        %v463 = vld [vmem:[%s241 + $0x408] sm:$0xff]
        %v464 = vld [vmem:[%s241 + $0x410] sm:$0xff]
        %v465 = vld [vmem:[%s241 + $0x418] sm:$0xff]
        %v466 = vld [vmem:[%s241 + $0x420] sm:$0xff]
        %v467 = vld [vmem:[%s241 + $0x428] sm:$0xff]
        %v468 = vld [vmem:[%s241 + $0x430] sm:$0xff]
        %v469 = vld [vmem:[%s241 + $0x438] sm:$0xff]
        %v470 = vld [vmem:[%s241 + $0x440] sm:$0xff]
        %v471 = vld [vmem:[%s241 + $0x448] sm:$0xff]
        %v472 = vld [vmem:[%s241 + $0x450] sm:$0xff]
        %v473 = vld [vmem:[%s241 + $0x458] sm:$0xff]
        %v474 = vld [vmem:[%s241 + $0x460] sm:$0xff]
        %v475 = vld [vmem:[%s241 + $0x468] sm:$0xff]
        %v476 = vld [vmem:[%s241 + $0x470] sm:$0xff]
        %v477 = vld [vmem:[%s241 + $0x478] sm:$0xff]
        %v478 = vld [vmem:[%s241 + $0x480] sm:$0xff]
        %v479 = vld [vmem:[%s241 + $0x488] sm:$0xff]
        %v480 = vld [vmem:[%s241 + $0x490] sm:$0xff]
        %v481 = vld [vmem:[%s241 + $0x498] sm:$0xff]
        %v482 = vld [vmem:[%s241 + $0x4a0] sm:$0xff]
        %v483 = vld [vmem:[%s241 + $0x4a8] sm:$0xff]
        %v484 = vld [vmem:[%s241 + $0x4b0] sm:$0xff]
        %v485 = vld [vmem:[%s241 + $0x4b8] sm:$0xff]
        %v486 = vld [vmem:[%s241 + $0x4c0] sm:$0xff]
        %v487 = vld [vmem:[%s241 + $0x4c8] sm:$0xff]
        %v488 = vld [vmem:[%s241 + $0x4d0] sm:$0xff]
        %v489 = vld [vmem:[%s241 + $0x4d8] sm:$0xff]
        %v490 = vld [vmem:[%s241 + $0x4e0] sm:$0xff]
        %v491 = vld [vmem:[%s241 + $0x4e8] sm:$0xff]
        %v492 = vld [vmem:[%s241 + $0x4f0] sm:$0xff]
        %v493 = vld [vmem:[%s241 + $0x4f8] sm:$0xff]
        %v494 = vld [vmem:[%s241 + $0x500] sm:$0xff]
        %v495 = vld [vmem:[%s241 + $0x508] sm:$0xff]
        %v496 = vld [vmem:[%s241 + $0x510] sm:$0xff]
        %v497 = vld [vmem:[%s241 + $0x518] sm:$0xff]
        %v498 = vld [vmem:[%s241 + $0x520] sm:$0xff]
        %v499 = vld [vmem:[%s241 + $0x528] sm:$0xff]
        %v500 = vld [vmem:[%s241 + $0x530] sm:$0xff]
        %v501 = vld [vmem:[%s241 + $0x538] sm:$0xff]
        %v502 = vld [vmem:[%s241 + $0x540] sm:$0xff]
        %v503 = vld [vmem:[%s241 + $0x548] sm:$0xff]
        %v504 = vld [vmem:[%s241 + $0x550] sm:$0xff]
        %v505 = vld [vmem:[%s241 + $0x558] sm:$0xff]
        %v506 = vld [vmem:[%s241 + $0x560] sm:$0xff]
        %v507 = vld [vmem:[%s241 + $0x568] sm:$0xff]
        %v508 = vld [vmem:[%s241 + $0x570] sm:$0xff]
        %v509 = vld [vmem:[%s241 + $0x578] sm:$0xff]
        %v510 = vld [vmem:[%s241 + $0x580] sm:$0xff]
        %v511 = vld [vmem:[%s241 + $0x588] sm:$0xff]
        %v512 = vld [vmem:[%s241 + $0x590] sm:$0xff]
        %v513 = vld [vmem:[%s241 + $0x598] sm:$0xff]
        %v514 = vld [vmem:[%s241 + $0x5a0] sm:$0xff]
        %v515 = vld [vmem:[%s241 + $0x5a8] sm:$0xff]
        %v516 = vld [vmem:[%s241 + $0x5b0] sm:$0xff]
        %v517 = vld [vmem:[%s241 + $0x5b8] sm:$0xff]
        %v518 = vld [vmem:[%s241 + $0x5c0] sm:$0xff]
        %v519 = vld [vmem:[%s241 + $0x5c8] sm:$0xff]
        %v520 = vld [vmem:[%s241 + $0x5d0] sm:$0xff]
        %v521 = vld [vmem:[%s241 + $0x5d8] sm:$0xff]
        %v522 = vld [vmem:[%s241 + $0x5e0] sm:$0xff]
        %v523 = vld [vmem:[%s241 + $0x5e8] sm:$0xff]
        %v524 = vld [vmem:[%s241 + $0x5f0] sm:$0xff]
        %v525 = vld [vmem:[%s241 + $0x5f8] sm:$0xff]
        %v526 = vld [vmem:[%s241 + $0x600] sm:$0xff]
        %v527 = vld [vmem:[%s241 + $0x608] sm:$0xff]
        %v528 = vld [vmem:[%s241 + $0x610] sm:$0xff]
        %v529 = vld [vmem:[%s241 + $0x618] sm:$0xff]
        %v530 = vld [vmem:[%s241 + $0x620] sm:$0xff]
        %v531 = vld [vmem:[%s241 + $0x628] sm:$0xff]
        %v532 = vld [vmem:[%s241 + $0x630] sm:$0xff]
        %v533 = vld [vmem:[%s241 + $0x638] sm:$0xff]
        %v534 = vld [vmem:[%s241 + $0x640] sm:$0xff]
        %v535 = vld [vmem:[%s241 + $0x648] sm:$0xff]
        %v536 = vld [vmem:[%s241 + $0x650] sm:$0xff]
        %v537 = vld [vmem:[%s241 + $0x658] sm:$0xff]
        %v538 = vld [vmem:[%s241 + $0x660] sm:$0xff]
        %v539 = vld [vmem:[%s241 + $0x668] sm:$0xff]
        %v540 = vld [vmem:[%s241 + $0x670] sm:$0xff]
        %v541 = vld [vmem:[%s241 + $0x678] sm:$0xff]
        %v542 = vld [vmem:[%s241 + $0x680] sm:$0xff]
        %v543 = vld [vmem:[%s241 + $0x688] sm:$0xff]
        %v544 = vld [vmem:[%s241 + $0x690] sm:$0xff]
        %v545 = vld [vmem:[%s241 + $0x698] sm:$0xff]
        %v546 = vld [vmem:[%s241 + $0x6a0] sm:$0xff]
        %v547 = vld [vmem:[%s241 + $0x6a8] sm:$0xff]
        %v548 = vld [vmem:[%s241 + $0x6b0] sm:$0xff]
        %v549 = vld [vmem:[%s241 + $0x6b8] sm:$0xff]
        %v550 = vld [vmem:[%s241 + $0x6c0] sm:$0xff]
        %v551 = vld [vmem:[%s241 + $0x6c8] sm:$0xff]
        %v552 = vld [vmem:[%s241 + $0x6d0] sm:$0xff]
        %v553 = vld [vmem:[%s241 + $0x6d8] sm:$0xff]
        %v554 = vld [vmem:[%s241 + $0x6e0] sm:$0xff]
        %v555 = vld [vmem:[%s241 + $0x6e8] sm:$0xff]
        %v556 = vld [vmem:[%s241 + $0x6f0] sm:$0xff]
        %v557 = vld [vmem:[%s241 + $0x6f8] sm:$0xff]
        %v558 = vld [vmem:[%s241 + $0x700] sm:$0xff]
        %v559 = vld [vmem:[%s241 + $0x708] sm:$0xff]
        %v560 = vld [vmem:[%s241 + $0x710] sm:$0xff]
        %v561 = vld [vmem:[%s241 + $0x718] sm:$0xff]
        %v562 = vld [vmem:[%s241 + $0x720] sm:$0xff]
        %v563 = vld [vmem:[%s241 + $0x728] sm:$0xff]
        %v564 = vld [vmem:[%s241 + $0x730] sm:$0xff]
        %v565 = vld [vmem:[%s241 + $0x738] sm:$0xff]
        %v566 = vld [vmem:[%s241 + $0x740] sm:$0xff]
        %v567 = vld [vmem:[%s241 + $0x748] sm:$0xff]
        %v568 = vld [vmem:[%s241 + $0x750] sm:$0xff]
        %v569 = vld [vmem:[%s241 + $0x758] sm:$0xff]
        %v570 = vld [vmem:[%s241 + $0x760] sm:$0xff]
        %v571 = vld [vmem:[%s241 + $0x768] sm:$0xff]
        %v572 = vld [vmem:[%s241 + $0x770] sm:$0xff]
        %v573 = vld [vmem:[%s241 + $0x778] sm:$0xff]
        %v574 = vld [vmem:[%s241 + $0x780] sm:$0xff]
        %v575 = vld [vmem:[%s241 + $0x788] sm:$0xff]
        %v576 = vld [vmem:[%s241 + $0x790] sm:$0xff]
        %v577 = vld [vmem:[%s241 + $0x798] sm:$0xff]
        %v578 = vld [vmem:[%s241 + $0x7a0] sm:$0xff]
        %v579 = vld [vmem:[%s241 + $0x7a8] sm:$0xff]
        %v580 = vld [vmem:[%s241 + $0x7b0] sm:$0xff]
        %v581 = vld [vmem:[%s241 + $0x7b8] sm:$0xff]
        %v582 = vld [vmem:[%s241 + $0x7c0] sm:$0xff]
        %v583 = vld [vmem:[%s241 + $0x7c8] sm:$0xff]
        %v584 = vld [vmem:[%s241 + $0x7d0] sm:$0xff]
        %v585 = vld [vmem:[%s241 + $0x7d8] sm:$0xff]
        %v586 = vld [vmem:[%s241 + $0x7e0] sm:$0xff]
        %v587 = vld [vmem:[%s241 + $0x7e8] sm:$0xff]
        %v588 = vld [vmem:[%s241 + $0x7f0] sm:$0xff]
        %v589 = vld [vmem:[%s241 + $0x7f8] sm:$0xff]
        %v590 = vld [vmem:[%s241 + $0x800] sm:$0xff]
        %v591 = vld [vmem:[%s241 + $0x808] sm:$0xff]
        %v592 = vld [vmem:[%s241 + $0x810] sm:$0xff]
        %v593 = vld [vmem:[%s241 + $0x818] sm:$0xff]
        %v594 = vld [vmem:[%s241 + $0x820] sm:$0xff]
        %v595 = vld [vmem:[%s241 + $0x828] sm:$0xff]
        %v596 = vld [vmem:[%s241 + $0x830] sm:$0xff]
        %v597 = vld [vmem:[%s241 + $0x838] sm:$0xff]
        %v598 = vld [vmem:[%s241 + $0x840] sm:$0xff]
        %v599 = vld [vmem:[%s241 + $0x848] sm:$0xff]
        %v600 = vld [vmem:[%s241 + $0x850] sm:$0xff]
        %v601 = vld [vmem:[%s241 + $0x858] sm:$0xff]
        %v602 = vld [vmem:[%s241 + $0x860] sm:$0xff]
        %v603 = vld [vmem:[%s241 + $0x868] sm:$0xff]
        %v604 = vld [vmem:[%s241 + $0x870] sm:$0xff]
        %v605 = vld [vmem:[%s241 + $0x878] sm:$0xff]
        %v606 = vld [vmem:[%s241 + $0x880] sm:$0xff]
        %v607 = vld [vmem:[%s241 + $0x888] sm:$0xff]
        %v608 = vld [vmem:[%s241 + $0x890] sm:$0xff]
        %v609 = vld [vmem:[%s241 + $0x898] sm:$0xff]
        %v610 = vld [vmem:[%s241 + $0x8a0] sm:$0xff]
        %v611 = vld [vmem:[%s241 + $0x8a8] sm:$0xff]
        %v612 = vld [vmem:[%s241 + $0x8b0] sm:$0xff]
        %v613 = vld [vmem:[%s241 + $0x8b8] sm:$0xff]
        %v614 = vld [vmem:[%s241 + $0x8c0] sm:$0xff]
        %v615 = vld [vmem:[%s241 + $0x8c8] sm:$0xff]
        %v616 = vld [vmem:[%s241 + $0x8d0] sm:$0xff]
        %v617 = vld [vmem:[%s241 + $0x8d8] sm:$0xff]
        %v618 = vld [vmem:[%s241 + $0x8e0] sm:$0xff]
        %v619 = vld [vmem:[%s241 + $0x8e8] sm:$0xff]
        %v620 = vld [vmem:[%s241 + $0x8f0] sm:$0xff]
        %v621 = vld [vmem:[%s241 + $0x8f8] sm:$0xff]
        %v622 = vld [vmem:[%s241 + $0x900] sm:$0xff]
        %v623 = vld [vmem:[%s241 + $0x908] sm:$0xff]
        %v624 = vld [vmem:[%s241 + $0x910] sm:$0xff]
        %v625 = vld [vmem:[%s241 + $0x918] sm:$0xff]
        %v626 = vld [vmem:[%s241 + $0x920] sm:$0xff]
        %v627 = vld [vmem:[%s241 + $0x928] sm:$0xff]
        %v628 = vld [vmem:[%s241 + $0x930] sm:$0xff]
        %v629 = vld [vmem:[%s241 + $0x938] sm:$0xff]
        %v630 = vld [vmem:[%s241 + $0x940] sm:$0xff]
        %v631 = vld [vmem:[%s241 + $0x948] sm:$0xff]
        %v632 = vld [vmem:[%s241 + $0x950] sm:$0xff]
        %v633 = vld [vmem:[%s241 + $0x958] sm:$0xff]
        %v634 = vld [vmem:[%s241 + $0x960] sm:$0xff]
        %v635 = vld [vmem:[%s241 + $0x968] sm:$0xff]
        %v636 = vld [vmem:[%s241 + $0x970] sm:$0xff]
        %v637 = vld [vmem:[%s241 + $0x978] sm:$0xff]
        %v638 = vld [vmem:[%s241 + $0x980] sm:$0xff]
        %v639 = vld [vmem:[%s241 + $0x988] sm:$0xff]
        %v640 = vld [vmem:[%s241 + $0x990] sm:$0xff]
        %v641 = vld [vmem:[%s241 + $0x998] sm:$0xff]
        %v642 = vld [vmem:[%s241 + $0x9a0] sm:$0xff]
        %v643 = vld [vmem:[%s241 + $0x9a8] sm:$0xff]
        %v644 = vld [vmem:[%s241 + $0x9b0] sm:$0xff]
        %v645 = vld [vmem:[%s241 + $0x9b8] sm:$0xff]
        %v646 = vld [vmem:[%s241 + $0x9c0] sm:$0xff]
        %v647 = vld [vmem:[%s241 + $0x9c8] sm:$0xff]
        %v648 = vld [vmem:[%s241 + $0x9d0] sm:$0xff]
        %v649 = vld [vmem:[%s241 + $0x9d8] sm:$0xff]
        %v650 = vld [vmem:[%s241 + $0x9e0] sm:$0xff]
        %v651 = vld [vmem:[%s241 + $0x9e8] sm:$0xff]
        %v652 = vld [vmem:[%s241 + $0x9f0] sm:$0xff]
        %v653 = vld [vmem:[%s241 + $0x9f8] sm:$0xff]
        %v654 = vld [vmem:[%s241 + $0xa00] sm:$0xff]
        %v655 = vld [vmem:[%s241 + $0xa08] sm:$0xff]
        %v656 = vld [vmem:[%s241 + $0xa10] sm:$0xff]
        %v657 = vld [vmem:[%s241 + $0xa18] sm:$0xff]
        %v658 = vld [vmem:[%s241 + $0xa20] sm:$0xff]
        %v659 = vld [vmem:[%s241 + $0xa28] sm:$0xff]
        %v660 = vld [vmem:[%s241 + $0xa30] sm:$0xff]
        %v661 = vld [vmem:[%s241 + $0xa38] sm:$0xff]
        %v662 = vld [vmem:[%s241 + $0xa40] sm:$0xff]
        %v663 = vld [vmem:[%s241 + $0xa48] sm:$0xff]
        %v664 = vld [vmem:[%s241 + $0xa50] sm:$0xff]
        %v665 = vld [vmem:[%s241 + $0xa58] sm:$0xff]
        %v666 = vld [vmem:[%s241 + $0xa60] sm:$0xff]
        %v667 = vld [vmem:[%s241 + $0xa68] sm:$0xff]
        %v668 = vld [vmem:[%s241 + $0xa70] sm:$0xff]
        %v669 = vld [vmem:[%s241 + $0xa78] sm:$0xff]
        %v670 = vld [vmem:[%s241 + $0xa80] sm:$0xff]
        %v671 = vld [vmem:[%s241 + $0xa88] sm:$0xff]
        %v672 = vld [vmem:[%s241 + $0xa90] sm:$0xff]
        %v673 = vld [vmem:[%s241 + $0xa98] sm:$0xff]
        %v674 = vld [vmem:[%s241 + $0xaa0] sm:$0xff]
        %v675 = vld [vmem:[%s241 + $0xaa8] sm:$0xff]
        %v676 = vld [vmem:[%s241 + $0xab0] sm:$0xff]
        %v677 = vld [vmem:[%s241 + $0xab8] sm:$0xff]
        %v678 = vld [vmem:[%s241 + $0xac0] sm:$0xff]
        %v679 = vld [vmem:[%s241 + $0xac8] sm:$0xff]
        %v680 = vld [vmem:[%s241 + $0xad0] sm:$0xff]
        %v681 = vld [vmem:[%s241 + $0xad8] sm:$0xff]
        %v682 = vld [vmem:[%s241 + $0xae0] sm:$0xff]
        %v683 = vld [vmem:[%s241 + $0xae8] sm:$0xff]
        %v684 = vld [vmem:[%s241 + $0xaf0] sm:$0xff]
        %v685 = vld [vmem:[%s241 + $0xaf8] sm:$0xff]
        %v686 = vld [vmem:[%s241 + $0xb00] sm:$0xff]
        %v687 = vld [vmem:[%s241 + $0xb08] sm:$0xff]
        %v688 = vld [vmem:[%s241 + $0xb10] sm:$0xff]
        %v689 = vld [vmem:[%s241 + $0xb18] sm:$0xff]
        %v690 = vld [vmem:[%s241 + $0xb20] sm:$0xff]
        %v691 = vld [vmem:[%s241 + $0xb28] sm:$0xff]
        %v692 = vld [vmem:[%s241 + $0xb30] sm:$0xff]
        %v693 = vld [vmem:[%s241 + $0xb38] sm:$0xff]
        %v694 = vld [vmem:[%s241 + $0xb40] sm:$0xff]
        %v695 = vld [vmem:[%s241 + $0xb48] sm:$0xff]
        %v696 = vld [vmem:[%s241 + $0xb50] sm:$0xff]
        %v697 = vld [vmem:[%s241 + $0xb58] sm:$0xff]
        %v698 = vld [vmem:[%s241 + $0xb60] sm:$0xff]
        %v699 = vld [vmem:[%s241 + $0xb68] sm:$0xff]
        %v700 = vld [vmem:[%s241 + $0xb70] sm:$0xff]
        %v701 = vld [vmem:[%s241 + $0xb78] sm:$0xff]
        %v702 = vld [vmem:[%s241 + $0xb80] sm:$0xff]
        %v703 = vld [vmem:[%s241 + $0xb88] sm:$0xff]
        %v704 = vld [vmem:[%s241 + $0xb90] sm:$0xff]
        %v705 = vld [vmem:[%s241 + $0xb98] sm:$0xff]
        %v706 = vld [vmem:[%s241 + $0xba0] sm:$0xff]
        %v707 = vld [vmem:[%s241 + $0xba8] sm:$0xff]
        %v708 = vld [vmem:[%s241 + $0xbb0] sm:$0xff]
        %v709 = vld [vmem:[%s241 + $0xbb8] sm:$0xff]
        %v710 = vld [vmem:[%s241 + $0xbc0] sm:$0xff]
        %v711 = vld [vmem:[%s241 + $0xbc8] sm:$0xff]
        %v712 = vld [vmem:[%s241 + $0xbd0] sm:$0xff]
        %v713 = vld [vmem:[%s241 + $0xbd8] sm:$0xff]
        %v714 = vld [vmem:[%s241 + $0xbe0] sm:$0xff]
        %v715 = vld [vmem:[%s241 + $0xbe8] sm:$0xff]
        %v716 = vld [vmem:[%s241 + $0xbf0] sm:$0xff]
        %v717 = vld [vmem:[%s241 + $0xbf8] sm:$0xff]
        %v718 = vld [vmem:[%s241 + $0xc00] sm:$0xff]
        %v719 = vld [vmem:[%s241 + $0xc08] sm:$0xff]
        %v720 = vld [vmem:[%s241 + $0xc10] sm:$0xff]
        %v721 = vld [vmem:[%s241 + $0xc18] sm:$0xff]
        %v722 = vld [vmem:[%s241 + $0xc20] sm:$0xff]
        %v723 = vld [vmem:[%s241 + $0xc28] sm:$0xff]
        %v724 = vld [vmem:[%s241 + $0xc30] sm:$0xff]
        %v725 = vld [vmem:[%s241 + $0xc38] sm:$0xff]
        %v726 = vld [vmem:[%s241 + $0xc40] sm:$0xff]
        %v727 = vld [vmem:[%s241 + $0xc48] sm:$0xff]
        %v728 = vld [vmem:[%s241 + $0xc50] sm:$0xff]
        %v729 = vld [vmem:[%s241 + $0xc58] sm:$0xff]
        %v730 = vld [vmem:[%s241 + $0xc60] sm:$0xff]
        %v731 = vld [vmem:[%s241 + $0xc68] sm:$0xff]
        %v732 = vld [vmem:[%s241 + $0xc70] sm:$0xff]
        %v733 = vld [vmem:[%s241 + $0xc78] sm:$0xff]
        %v734 = vld [vmem:[%s241 + $0xc80] sm:$0xff]
        %v735 = vld [vmem:[%s241 + $0xc88] sm:$0xff]
        %v736 = vld [vmem:[%s241 + $0xc90] sm:$0xff]
        %v737 = vld [vmem:[%s241 + $0xc98] sm:$0xff]
        %v738 = vld [vmem:[%s241 + $0xca0] sm:$0xff]
        %v739 = vld [vmem:[%s241 + $0xca8] sm:$0xff]
        %v740 = vld [vmem:[%s241 + $0xcb0] sm:$0xff]
        %v741 = vld [vmem:[%s241 + $0xcb8] sm:$0xff]
        %v742 = vld [vmem:[%s241 + $0xcc0] sm:$0xff]
        %v743 = vld [vmem:[%s241 + $0xcc8] sm:$0xff]
        %v744 = vld [vmem:[%s241 + $0xcd0] sm:$0xff]
        %v745 = vld [vmem:[%s241 + $0xcd8] sm:$0xff]
        %v746 = vld [vmem:[%s241 + $0xce0] sm:$0xff]
        %v747 = vld [vmem:[%s241 + $0xce8] sm:$0xff]
        %v748 = vld [vmem:[%s241 + $0xcf0] sm:$0xff]
        %v749 = vld [vmem:[%s241 + $0xcf8] sm:$0xff]
        %v750 = vld [vmem:[%s241 + $0xd00] sm:$0xff]
        %v751 = vld [vmem:[%s241 + $0xd08] sm:$0xff]
        %v752 = vld [vmem:[%s241 + $0xd10] sm:$0xff]
        %v753 = vld [vmem:[%s241 + $0xd18] sm:$0xff]
        %v754 = vld [vmem:[%s241 + $0xd20] sm:$0xff]
        %v755 = vld [vmem:[%s241 + $0xd28] sm:$0xff]
        %v756 = vld [vmem:[%s241 + $0xd30] sm:$0xff]
        %v757 = vld [vmem:[%s241 + $0xd38] sm:$0xff]
        %v758 = vld [vmem:[%s241 + $0xd40] sm:$0xff]
        %v759 = vld [vmem:[%s241 + $0xd48] sm:$0xff]
        %v760 = vld [vmem:[%s241 + $0xd50] sm:$0xff]
        %v761 = vld [vmem:[%s241 + $0xd58] sm:$0xff]
        %v762 = vld [vmem:[%s241 + $0xd60] sm:$0xff]
        %v763 = vld [vmem:[%s241 + $0xd68] sm:$0xff]
        %v764 = vld [vmem:[%s241 + $0xd70] sm:$0xff]
        %v765 = vld [vmem:[%s241 + $0xd78] sm:$0xff]
        %v766 = vld [vmem:[%s241 + $0xd80] sm:$0xff]
        %v767 = vld [vmem:[%s241 + $0xd88] sm:$0xff]
        %v768 = vld [vmem:[%s241 + $0xd90] sm:$0xff]
        %v769 = vld [vmem:[%s241 + $0xd98] sm:$0xff]
        %v770 = vld [vmem:[%s241 + $0xda0] sm:$0xff]
        %v771 = vld [vmem:[%s241 + $0xda8] sm:$0xff]
        %v772 = vld [vmem:[%s241 + $0xdb0] sm:$0xff]
        %v773 = vld [vmem:[%s241 + $0xdb8] sm:$0xff]
        %v774 = vld [vmem:[%s241 + $0xdc0] sm:$0xff]
        %v775 = vld [vmem:[%s241 + $0xdc8] sm:$0xff]
        %v776 = vld [vmem:[%s241 + $0xdd0] sm:$0xff]
        %v777 = vld [vmem:[%s241 + $0xdd8] sm:$0xff]
        %v778 = vld [vmem:[%s241 + $0xde0] sm:$0xff]
        %v779 = vld [vmem:[%s241 + $0xde8] sm:$0xff]
        %v780 = vld [vmem:[%s241 + $0xdf0] sm:$0xff]
        %v781 = vld [vmem:[%s241 + $0xdf8] sm:$0xff]
        %v782 = vld [vmem:[%s241 + $0xe00] sm:$0xff]
        %v783 = vld [vmem:[%s241 + $0xe08] sm:$0xff]
        %v784 = vld [vmem:[%s241 + $0xe10] sm:$0xff]
        %v785 = vld [vmem:[%s241 + $0xe18] sm:$0xff]
        %v786 = vld [vmem:[%s241 + $0xe20] sm:$0xff]
        %v787 = vld [vmem:[%s241 + $0xe28] sm:$0xff]
        %v788 = vld [vmem:[%s241 + $0xe30] sm:$0xff]
        %v789 = vld [vmem:[%s241 + $0xe38] sm:$0xff]
        %v790 = vld [vmem:[%s241 + $0xe40] sm:$0xff]
        %v791 = vld [vmem:[%s241 + $0xe48] sm:$0xff]
        %v792 = vld [vmem:[%s241 + $0xe50] sm:$0xff]
        %v793 = vld [vmem:[%s241 + $0xe58] sm:$0xff]
        %v794 = vld [vmem:[%s241 + $0xe60] sm:$0xff]
        %v795 = vld [vmem:[%s241 + $0xe68] sm:$0xff]
        %v796 = vld [vmem:[%s241 + $0xe70] sm:$0xff]
        %v797 = vld [vmem:[%s241 + $0xe78] sm:$0xff]
        %v798 = vld [vmem:[%s241 + $0xe80] sm:$0xff]
        %v799 = vld [vmem:[%s241 + $0xe88] sm:$0xff]
        %v800 = vld [vmem:[%s241 + $0xe90] sm:$0xff]
        %v801 = vld [vmem:[%s241 + $0xe98] sm:$0xff]
        %v802 = vld [vmem:[%s241 + $0xea0] sm:$0xff]
        %v803 = vld [vmem:[%s241 + $0xea8] sm:$0xff]
        %v804 = vld [vmem:[%s241 + $0xeb0] sm:$0xff]
        %v805 = vld [vmem:[%s241 + $0xeb8] sm:$0xff]
        %v806 = vld [vmem:[%s241 + $0xec0] sm:$0xff]
        %v807 = vld [vmem:[%s241 + $0xec8] sm:$0xff]
        %v808 = vld [vmem:[%s241 + $0xed0] sm:$0xff]
        %v809 = vld [vmem:[%s241 + $0xed8] sm:$0xff]
        %v810 = vld [vmem:[%s241 + $0xee0] sm:$0xff]
        %v811 = vld [vmem:[%s241 + $0xee8] sm:$0xff]
        %v812 = vld [vmem:[%s241 + $0xef0] sm:$0xff]
        %v813 = vld [vmem:[%s241 + $0xef8] sm:$0xff]
        %v814 = vld [vmem:[%s241 + $0xf00] sm:$0xff]
        %v815 = vld [vmem:[%s241 + $0xf08] sm:$0xff]
        %v816 = vld [vmem:[%s241 + $0xf10] sm:$0xff]
        %v817 = vld [vmem:[%s241 + $0xf18] sm:$0xff]
        %v818 = vld [vmem:[%s241 + $0xf20] sm:$0xff]
        %v819 = vld [vmem:[%s241 + $0xf28] sm:$0xff]
        %v820 = vld [vmem:[%s241 + $0xf30] sm:$0xff]
        %v821 = vld [vmem:[%s241 + $0xf38] sm:$0xff]
        %v822 = vld [vmem:[%s241 + $0xf40] sm:$0xff]
        %v823 = vld [vmem:[%s241 + $0xf48] sm:$0xff]
        %v824 = vld [vmem:[%s241 + $0xf50] sm:$0xff]
        %v825 = vld [vmem:[%s241 + $0xf58] sm:$0xff]
        %v826 = vld [vmem:[%s241 + $0xf60] sm:$0xff]
        %v827 = vld [vmem:[%s241 + $0xf68] sm:$0xff]
        %v828 = vld [vmem:[%s241 + $0xf70] sm:$0xff]
        %v829 = vld [vmem:[%s241 + $0xf78] sm:$0xff]
        %v830 = vld [vmem:[%s241 + $0xf80] sm:$0xff]
        %v831 = vld [vmem:[%s241 + $0xf88] sm:$0xff]
        %v832 = vld [vmem:[%s241 + $0xf90] sm:$0xff]
        %v833 = vld [vmem:[%s241 + $0xf98] sm:$0xff]
        %v834 = vld [vmem:[%s241 + $0xfa0] sm:$0xff]
        %v835 = vld [vmem:[%s241 + $0xfa8] sm:$0xff]
        %v836 = vld [vmem:[%s241 + $0xfb0] sm:$0xff]
        %v837 = vld [vmem:[%s241 + $0xfb8] sm:$0xff]
        %v838 = vld [vmem:[%s241 + $0xfc0] sm:$0xff]
        %v839 = vld [vmem:[%s241 + $0xfc8] sm:$0xff]
        %v840 = vld [vmem:[%s241 + $0xfd0] sm:$0xff]
        %v841 = vld [vmem:[%s241 + $0xfd8] sm:$0xff]
        %v842 = vld [vmem:[%s241 + $0xfe0] sm:$0xff]
        %v843 = vld [vmem:[%s241 + $0xfe8] sm:$0xff]
        %v844 = vld [vmem:[%s241 + $0xff0] sm:$0xff]
        %v845 = vld [vmem:[%s241 + $0xff8] sm:$0xff]
        %v846 = vld [vmem:[%s241 + $0x1000] sm:$0xff]
        %v847 = vld [vmem:[%s241 + $0x1008] sm:$0xff]
        %v848 = vld [vmem:[%s241 + $0x1010] sm:$0xff]
        %v849 = vld [vmem:[%s241 + $0x1018] sm:$0xff]
        %v850 = vld [vmem:[%s241 + $0x1020] sm:$0xff]
        %v851 = vld [vmem:[%s241 + $0x1028] sm:$0xff]
        %v852 = vld [vmem:[%s241 + $0x1030] sm:$0xff]
        %v853 = vld [vmem:[%s241 + $0x1038] sm:$0xff]
        %v854 = vld [vmem:[%s241 + $0x1040] sm:$0xff]
        %v855 = vld [vmem:[%s241 + $0x1048] sm:$0xff]
        %v856 = vld [vmem:[%s241 + $0x1050] sm:$0xff]
        %v857 = vld [vmem:[%s241 + $0x1058] sm:$0xff]
        %v858 = vld [vmem:[%s241 + $0x1060] sm:$0xff]
        %v859 = vld [vmem:[%s241 + $0x1068] sm:$0xff]
        %v860 = vld [vmem:[%s241 + $0x1070] sm:$0xff]
        %v861 = vld [vmem:[%s241 + $0x1078] sm:$0xff]
        %v862 = vld [vmem:[%s241 + $0x1080] sm:$0xff]
        %v863 = vld [vmem:[%s241 + $0x1088] sm:$0xff]
        %v864 = vld [vmem:[%s241 + $0x1090] sm:$0xff]
        %v865 = vld [vmem:[%s241 + $0x1098] sm:$0xff]
        %v866 = vld [vmem:[%s241 + $0x10a0] sm:$0xff]
        %v867 = vld [vmem:[%s241 + $0x10a8] sm:$0xff]
        %v868 = vld [vmem:[%s241 + $0x10b0] sm:$0xff]
        %v869 = vld [vmem:[%s241 + $0x10b8] sm:$0xff]
        %v870 = vld [vmem:[%s241 + $0x10c0] sm:$0xff]
        %v871 = vld [vmem:[%s241 + $0x10c8] sm:$0xff]
        %v872 = vld [vmem:[%s241 + $0x10d0] sm:$0xff]
        %v873 = vld [vmem:[%s241 + $0x10d8] sm:$0xff]
        %v874 = vld [vmem:[%s241 + $0x10e0] sm:$0xff]
        %v875 = vld [vmem:[%s241 + $0x10e8] sm:$0xff]
        %v876 = vld [vmem:[%s241 + $0x10f0] sm:$0xff]
        %v877 = vld [vmem:[%s241 + $0x10f8] sm:$0xff]
        %v878 = vld [vmem:[%s241 + $0x1100] sm:$0xff]
        %v879 = vld [vmem:[%s241 + $0x1108] sm:$0xff]
        %v880 = vld [vmem:[%s241 + $0x1110] sm:$0xff]
        %v881 = vld [vmem:[%s241 + $0x1118] sm:$0xff]
        %v882 = vld [vmem:[%s241 + $0x1120] sm:$0xff]
        %v883 = vld [vmem:[%s241 + $0x1128] sm:$0xff]
        %v884 = vld [vmem:[%s241 + $0x1130] sm:$0xff]
        %v885 = vld [vmem:[%s241 + $0x1138] sm:$0xff]
        %v886 = vld [vmem:[%s241 + $0x1140] sm:$0xff]
        %v887 = vld [vmem:[%s241 + $0x1148] sm:$0xff]
        %v888 = vld [vmem:[%s241 + $0x1150] sm:$0xff]
        %v889 = vld [vmem:[%s241 + $0x1158] sm:$0xff]
        %v890 = vld [vmem:[%s241 + $0x1160] sm:$0xff]
        %v891 = vld [vmem:[%s241 + $0x1168] sm:$0xff]
        %v892 = vld [vmem:[%s241 + $0x1170] sm:$0xff]
        %v893 = vld [vmem:[%s241 + $0x1178] sm:$0xff]
        %v894 = vld [vmem:[%s241 + $0x1180] sm:$0xff]
        %v895 = vld [vmem:[%s241 + $0x1188] sm:$0xff]
        %v896 = vld [vmem:[%s241 + $0x1190] sm:$0xff]
        %v897 = vld [vmem:[%s241 + $0x1198] sm:$0xff]
        %v898 = vld [vmem:[%s241 + $0x11a0] sm:$0xff]
        %v899 = vld [vmem:[%s241 + $0x11a8] sm:$0xff]
        %v900 = vld [vmem:[%s241 + $0x11b0] sm:$0xff]
        %v901 = vld [vmem:[%s241 + $0x11b8] sm:$0xff]
        %v902 = vld [vmem:[%s241 + $0x11c0] sm:$0xff]
        %v903 = vld [vmem:[%s241 + $0x11c8] sm:$0xff]
        %v904 = vld [vmem:[%s241 + $0x11d0] sm:$0xff]
        %v905 = vld [vmem:[%s241 + $0x11d8] sm:$0xff]
        %v906 = vld [vmem:[%s241 + $0x11e0] sm:$0xff]
        %v907 = vld [vmem:[%s241 + $0x11e8] sm:$0xff]
        %v908 = vld [vmem:[%s241 + $0x11f0] sm:$0xff]
        %v909 = vld [vmem:[%s241 + $0x11f8] sm:$0xff]
        %v910 = vld [vmem:[%s241 + $0x1200] sm:$0xff]
        %v911 = vld [vmem:[%s241 + $0x1208] sm:$0xff]
        %v912 = vld [vmem:[%s241 + $0x1210] sm:$0xff]
        %v913 = vld [vmem:[%s241 + $0x1218] sm:$0xff]
        %v914 = vld [vmem:[%s241 + $0x1220] sm:$0xff]
        %v915 = vld [vmem:[%s241 + $0x1228] sm:$0xff]
        %v916 = vld [vmem:[%s241 + $0x1230] sm:$0xff]
        %v917 = vld [vmem:[%s241 + $0x1238] sm:$0xff]
        %v918 = vld [vmem:[%s241 + $0x1240] sm:$0xff]
        %v919 = vld [vmem:[%s241 + $0x1248] sm:$0xff]
        %v920 = vld [vmem:[%s241 + $0x1250] sm:$0xff]
        %v921 = vld [vmem:[%s241 + $0x1258] sm:$0xff]
        %v922 = vld [vmem:[%s241 + $0x1260] sm:$0xff]
        %v923 = vld [vmem:[%s241 + $0x1268] sm:$0xff]
        %v924 = vld [vmem:[%s241 + $0x1270] sm:$0xff]
        %v925 = vld [vmem:[%s241 + $0x1278] sm:$0xff]
        %v926 = vld [vmem:[%s241 + $0x1280] sm:$0xff]
        %v927 = vld [vmem:[%s241 + $0x1288] sm:$0xff]
        %v928 = vld [vmem:[%s241 + $0x1290] sm:$0xff]
        %v929 = vld [vmem:[%s241 + $0x1298] sm:$0xff]
        %v930 = vld [vmem:[%s241 + $0x12a0] sm:$0xff]
        %v931 = vld [vmem:[%s241 + $0x12a8] sm:$0xff]
        %v932 = vld [vmem:[%s241 + $0x12b0] sm:$0xff]
        %v933 = vld [vmem:[%s241 + $0x12b8] sm:$0xff]
        %v934 = vld [vmem:[%s241 + $0x12c0] sm:$0xff]
        %v935 = vld [vmem:[%s241 + $0x12c8] sm:$0xff]
        %v936 = vld [vmem:[%s241 + $0x12d0] sm:$0xff]
        %v937 = vld [vmem:[%s241 + $0x12d8] sm:$0xff]
        %v938 = vld [vmem:[%s241 + $0x12e0] sm:$0xff]
        %v939 = vld [vmem:[%s241 + $0x12e8] sm:$0xff]
        %v940 = vld [vmem:[%s241 + $0x12f0] sm:$0xff]
        %v941 = vld [vmem:[%s241 + $0x12f8] sm:$0xff]
        %v942 = vld [vmem:[%s241 + $0x1300] sm:$0xff]
        %v943 = vld [vmem:[%s241 + $0x1308] sm:$0xff]
        %v944 = vld [vmem:[%s241 + $0x1310] sm:$0xff]
        %v945 = vld [vmem:[%s241 + $0x1318] sm:$0xff]
        %v946 = vld [vmem:[%s241 + $0x1320] sm:$0xff]
        %v947 = vld [vmem:[%s241 + $0x1328] sm:$0xff]
        %v948 = vld [vmem:[%s241 + $0x1330] sm:$0xff]
        %v949 = vld [vmem:[%s241 + $0x1338] sm:$0xff]
        %v950 = vld [vmem:[%s241 + $0x1340] sm:$0xff]
        %v951 = vld [vmem:[%s241 + $0x1348] sm:$0xff]
        %v952 = vld [vmem:[%s241 + $0x1350] sm:$0xff]
        %v953 = vld [vmem:[%s241 + $0x1358] sm:$0xff]
        %v954 = vld [vmem:[%s241 + $0x1360] sm:$0xff]
        %v955 = vld [vmem:[%s241 + $0x1368] sm:$0xff]
        %v956 = vld [vmem:[%s241 + $0x1370] sm:$0xff]
        %v957 = vld [vmem:[%s241 + $0x1378] sm:$0xff]
        %v958 = vld [vmem:[%s241 + $0x1380] sm:$0xff]
        %v959 = vld [vmem:[%s241 + $0x1388] sm:$0xff]
        %v960 = vld [vmem:[%s241 + $0x1390] sm:$0xff]
        %v961 = vld [vmem:[%s241 + $0x1398] sm:$0xff]
        %v962 = vld [vmem:[%s241 + $0x13a0] sm:$0xff]
        %v963 = vld [vmem:[%s241 + $0x13a8] sm:$0xff]
        %v964 = vld [vmem:[%s241 + $0x13b0] sm:$0xff]
        %v965 = vld [vmem:[%s241 + $0x13b8] sm:$0xff]
        %v966 = vld [vmem:[%s241 + $0x13c0] sm:$0xff]
        %v967 = vld [vmem:[%s241 + $0x13c8] sm:$0xff]
        %v968 = vld [vmem:[%s241 + $0x13d0] sm:$0xff]
        %v969 = vld [vmem:[%s241 + $0x13d8] sm:$0xff]
        %v970 = vld [vmem:[%s241 + $0x13e0] sm:$0xff]
        %v971 = vld [vmem:[%s241 + $0x13e8] sm:$0xff]
        %v972 = vld [vmem:[%s241 + $0x13f0] sm:$0xff]
        %v973 = vld [vmem:[%s241 + $0x13f8] sm:$0xff]
        %v974 = vld [vmem:[%s241 + $0x1400] sm:$0xff]
        %v975 = vld [vmem:[%s241 + $0x1408] sm:$0xff]
        %v976 = vld [vmem:[%s241 + $0x1410] sm:$0xff]
        %v977 = vld [vmem:[%s241 + $0x1418] sm:$0xff]
        %v978 = vld [vmem:[%s241 + $0x1420] sm:$0xff]
        %v979 = vld [vmem:[%s241 + $0x1428] sm:$0xff]
        %v980 = vld [vmem:[%s241 + $0x1430] sm:$0xff]
        %v981 = vld [vmem:[%s241 + $0x1438] sm:$0xff]
        %v982 = vld [vmem:[%s241 + $0x1440] sm:$0xff]
        %v983 = vld [vmem:[%s241 + $0x1448] sm:$0xff]
        %v984 = vld [vmem:[%s241 + $0x1450] sm:$0xff]
        %v985 = vld [vmem:[%s241 + $0x1458] sm:$0xff]
        %v986 = vld [vmem:[%s241 + $0x1460] sm:$0xff]
        %v987 = vld [vmem:[%s241 + $0x1468] sm:$0xff]
        %v988 = vld [vmem:[%s241 + $0x1470] sm:$0xff]
        %v989 = vld [vmem:[%s241 + $0x1478] sm:$0xff]
        %v990 = vld [vmem:[%s241 + $0x1480] sm:$0xff]
        %v991 = vld [vmem:[%s241 + $0x1488] sm:$0xff]
        %v992 = vld [vmem:[%s241 + $0x1490] sm:$0xff]
        %v993 = vld [vmem:[%s241 + $0x1498] sm:$0xff]
        %v994 = vld [vmem:[%s241 + $0x14a0] sm:$0xff]
        %v995 = vld [vmem:[%s241 + $0x14a8] sm:$0xff]
        %v996 = vld [vmem:[%s241 + $0x14b0] sm:$0xff]
        %v997 = vld [vmem:[%s241 + $0x14b8] sm:$0xff]
        %v998 = vld [vmem:[%s241 + $0x14c0] sm:$0xff]
        %v999 = vld [vmem:[%s241 + $0x14c8] sm:$0xff]
        %v1000 = vld [vmem:[%s241 + $0x14d0] sm:$0xff]
        %v1001 = vld [vmem:[%s241 + $0x14d8] sm:$0xff]
        %v1002 = vld [vmem:[%s241 + $0x14e0] sm:$0xff]
        %v1003 = vld [vmem:[%s241 + $0x14e8] sm:$0xff]
        %v1004 = vld [vmem:[%s241 + $0x14f0] sm:$0xff]
        %v1005 = vld [vmem:[%s241 + $0x14f8] sm:$0xff]
        %v1006 = vld [vmem:[%s241 + $0x1500] sm:$0xff]
        %v1007 = vld [vmem:[%s241 + $0x1508] sm:$0xff]
        %v1008 = vld [vmem:[%s241 + $0x1510] sm:$0xff]
        %v1009 = vld [vmem:[%s241 + $0x1518] sm:$0xff]
        %v1010 = vld [vmem:[%s241 + $0x1520] sm:$0xff]
        %v1011 = vld [vmem:[%s241 + $0x1528] sm:$0xff]
        %v1012 = vld [vmem:[%s241 + $0x1530] sm:$0xff]
        %v1013 = vld [vmem:[%s241 + $0x1538] sm:$0xff]
        %v1014 = vld [vmem:[%s241 + $0x1540] sm:$0xff]
        %v1015 = vld [vmem:[%s241 + $0x1548] sm:$0xff]
        %v1016 = vld [vmem:[%s241 + $0x1550] sm:$0xff]
        %v1017 = vld [vmem:[%s241 + $0x1558] sm:$0xff]
        %v1018 = vld [vmem:[%s241 + $0x1560] sm:$0xff]
        %v1019 = vld [vmem:[%s241 + $0x1568] sm:$0xff]
        %v1020 = vld [vmem:[%s241 + $0x1570] sm:$0xff]
        %v1021 = vld [vmem:[%s241 + $0x1578] sm:$0xff]
        %v1022 = vld [vmem:[%s241 + $0x1580] sm:$0xff]
        %v1023 = vld [vmem:[%s241 + $0x1588] sm:$0xff]
        %v1024 = vld [vmem:[%s241 + $0x1590] sm:$0xff]
        %v1025 = vld [vmem:[%s241 + $0x1598] sm:$0xff]
        %v1026 = vld [vmem:[%s241 + $0x15a0] sm:$0xff]
        %v1027 = vld [vmem:[%s241 + $0x15a8] sm:$0xff]
        %v1028 = vld [vmem:[%s241 + $0x15b0] sm:$0xff]
        %v1029 = vld [vmem:[%s241 + $0x15b8] sm:$0xff]
        %v1030 = vld [vmem:[%s241 + $0x15c0] sm:$0xff]
        %v1031 = vld [vmem:[%s241 + $0x15c8] sm:$0xff]
        %v1032 = vld [vmem:[%s241 + $0x15d0] sm:$0xff]
        %v1033 = vld [vmem:[%s241 + $0x15d8] sm:$0xff]
        %v1034 = vld [vmem:[%s241 + $0x15e0] sm:$0xff]
        %v1035 = vld [vmem:[%s241 + $0x15e8] sm:$0xff]
        %v1036 = vld [vmem:[%s241 + $0x15f0] sm:$0xff]
        %v1037 = vld [vmem:[%s241 + $0x15f8] sm:$0xff]
        %v1038 = vld [vmem:[%s241 + $0x1600] sm:$0xff]
        %v1039 = vld [vmem:[%s241 + $0x1608] sm:$0xff]
        %v1040 = vld [vmem:[%s241 + $0x1610] sm:$0xff]
        %v1041 = vld [vmem:[%s241 + $0x1618] sm:$0xff]
        %v1042 = vld [vmem:[%s241 + $0x1620] sm:$0xff]
        %v1043 = vld [vmem:[%s241 + $0x1628] sm:$0xff]
        %v1044 = vld [vmem:[%s241 + $0x1630] sm:$0xff]
        %v1045 = vld [vmem:[%s241 + $0x1638] sm:$0xff]
        %v1046 = vld [vmem:[%s241 + $0x1640] sm:$0xff]
        %v1047 = vld [vmem:[%s241 + $0x1648] sm:$0xff]
        %v1048 = vld [vmem:[%s241 + $0x1650] sm:$0xff]
        %v1049 = vld [vmem:[%s241 + $0x1658] sm:$0xff]
        %v1050 = vld [vmem:[%s241 + $0x1660] sm:$0xff]
        %v1051 = vld [vmem:[%s241 + $0x1668] sm:$0xff]
        %v1052 = vld [vmem:[%s241 + $0x1670] sm:$0xff]
        %v1053 = vld [vmem:[%s241 + $0x1678] sm:$0xff]
        %v1054 = vld [vmem:[%s241 + $0x1680] sm:$0xff]
        %v1055 = vld [vmem:[%s241 + $0x1688] sm:$0xff]
        %v1056 = vld [vmem:[%s241 + $0x1690] sm:$0xff]
        %v1057 = vld [vmem:[%s241 + $0x1698] sm:$0xff]
        %v1058 = vld [vmem:[%s241 + $0x16a0] sm:$0xff]
        %v1059 = vld [vmem:[%s241 + $0x16a8] sm:$0xff]
        %v1060 = vld [vmem:[%s241 + $0x16b0] sm:$0xff]
        %v1061 = vld [vmem:[%s241 + $0x16b8] sm:$0xff]
        %v1062 = vld [vmem:[%s241 + $0x16c0] sm:$0xff]
        %v1063 = vld [vmem:[%s241 + $0x16c8] sm:$0xff]
        %v1064 = vld [vmem:[%s241 + $0x16d0] sm:$0xff]
        %v1065 = vld [vmem:[%s241 + $0x16d8] sm:$0xff]
        %v1066 = vld [vmem:[%s241 + $0x16e0] sm:$0xff]
        %v1067 = vld [vmem:[%s241 + $0x16e8] sm:$0xff]
        %v1068 = vld [vmem:[%s241 + $0x16f0] sm:$0xff]
        %v1069 = vld [vmem:[%s241 + $0x16f8] sm:$0xff]
        %v1070 = vld [vmem:[%s241 + $0x1700] sm:$0xff]
        %v1071 = vld [vmem:[%s241 + $0x1708] sm:$0xff]
        %v1072 = vld [vmem:[%s241 + $0x1710] sm:$0xff]
        %v1073 = vld [vmem:[%s241 + $0x1718] sm:$0xff]
        %v1074 = vld [vmem:[%s241 + $0x1720] sm:$0xff]
        %v1075 = vld [vmem:[%s241 + $0x1728] sm:$0xff]
        %v1076 = vld [vmem:[%s241 + $0x1730] sm:$0xff]
        %v1077 = vld [vmem:[%s241 + $0x1738] sm:$0xff]
        %v1078 = vld [vmem:[%s241 + $0x1740] sm:$0xff]
        %v1079 = vld [vmem:[%s241 + $0x1748] sm:$0xff]
        %v1080 = vld [vmem:[%s241 + $0x1750] sm:$0xff]
        %v1081 = vld [vmem:[%s241 + $0x1758] sm:$0xff]
        %v1082 = vld [vmem:[%s241 + $0x1760] sm:$0xff]
        %v1083 = vld [vmem:[%s241 + $0x1768] sm:$0xff]
        %v1084 = vld [vmem:[%s241 + $0x1770] sm:$0xff]
        %v1085 = vld [vmem:[%s241 + $0x1778] sm:$0xff]
        %v1086 = vld [vmem:[%s241 + $0x1780] sm:$0xff]
        %v1087 = vld [vmem:[%s241 + $0x1788] sm:$0xff]
        %v1088 = vld [vmem:[%s241 + $0x1790] sm:$0xff]
        %v1089 = vld [vmem:[%s241 + $0x1798] sm:$0xff]
        %v1090 = vld [vmem:[%s241 + $0x17a0] sm:$0xff]
        %v1091 = vld [vmem:[%s241 + $0x17a8] sm:$0xff]
        %v1092 = vld [vmem:[%s241 + $0x17b0] sm:$0xff]
        %v1093 = vld [vmem:[%s241 + $0x17b8] sm:$0xff]
        %v1094 = vld [vmem:[%s241 + $0x17c0] sm:$0xff]
        %v1095 = vld [vmem:[%s241 + $0x17c8] sm:$0xff]
        %v1096 = vld [vmem:[%s241 + $0x17d0] sm:$0xff]
        %v1097 = vld [vmem:[%s241 + $0x17d8] sm:$0xff]
        %v1098 = vld [vmem:[%s241 + $0x17e0] sm:$0xff]
        %v1099 = vld [vmem:[%s241 + $0x17e8] sm:$0xff]
        %v1100 = vld [vmem:[%s241 + $0x17f0] sm:$0xff]
        %v1101 = vld [vmem:[%s241 + $0x17f8] sm:$0xff]
        %v1102 = vld [vmem:[%s241 + $0x1800] sm:$0xff]
        %v1103 = vld [vmem:[%s241 + $0x1808] sm:$0xff]
        %v1104 = vld [vmem:[%s241 + $0x1810] sm:$0xff]
        %v1105 = vld [vmem:[%s241 + $0x1818] sm:$0xff]
        %v1106 = vld [vmem:[%s241 + $0x1820] sm:$0xff]
        %v1107 = vld [vmem:[%s241 + $0x1828] sm:$0xff]
        %v1108 = vld [vmem:[%s241 + $0x1830] sm:$0xff]
        %v1109 = vld [vmem:[%s241 + $0x1838] sm:$0xff]
        %v1110 = vld [vmem:[%s241 + $0x1840] sm:$0xff]
        %v1111 = vld [vmem:[%s241 + $0x1848] sm:$0xff]
        %v1112 = vld [vmem:[%s241 + $0x1850] sm:$0xff]
        %v1113 = vld [vmem:[%s241 + $0x1858] sm:$0xff]
        %v1114 = vld [vmem:[%s241 + $0x1860] sm:$0xff]
        %v1115 = vld [vmem:[%s241 + $0x1868] sm:$0xff]
        %v1116 = vld [vmem:[%s241 + $0x1870] sm:$0xff]
        %v1117 = vld [vmem:[%s241 + $0x1878] sm:$0xff]
        %v1118 = vld [vmem:[%s241 + $0x1880] sm:$0xff]
        %v1119 = vld [vmem:[%s241 + $0x1888] sm:$0xff]
        %v1120 = vld [vmem:[%s241 + $0x1890] sm:$0xff]
        %v1121 = vld [vmem:[%s241 + $0x1898] sm:$0xff]
        %v1122 = vld [vmem:[%s241 + $0x18a0] sm:$0xff]
        %v1123 = vld [vmem:[%s241 + $0x18a8] sm:$0xff]
        %v1124 = vld [vmem:[%s241 + $0x18b0] sm:$0xff]
        %v1125 = vld [vmem:[%s241 + $0x18b8] sm:$0xff]
        %v1126 = vld [vmem:[%s241 + $0x18c0] sm:$0xff]
        %v1127 = vld [vmem:[%s241 + $0x18c8] sm:$0xff]
        %v1128 = vld [vmem:[%s241 + $0x18d0] sm:$0xff]
        %v1129 = vld [vmem:[%s241 + $0x18d8] sm:$0xff]
        %v1130 = vld [vmem:[%s241 + $0x18e0] sm:$0xff]
        %v1131 = vld [vmem:[%s241 + $0x18e8] sm:$0xff]
        %v1132 = vld [vmem:[%s241 + $0x18f0] sm:$0xff]
        %v1133 = vld [vmem:[%s241 + $0x18f8] sm:$0xff]
        %v1134 = vld [vmem:[%s241 + $0x1900] sm:$0xff]
        %v1135 = vld [vmem:[%s241 + $0x1908] sm:$0xff]
        %v1136 = vld [vmem:[%s241 + $0x1910] sm:$0xff]
        %v1137 = vld [vmem:[%s241 + $0x1918] sm:$0xff]
        %v1138 = vld [vmem:[%s241 + $0x1920] sm:$0xff]
        %v1139 = vld [vmem:[%s241 + $0x1928] sm:$0xff]
        %v1140 = vld [vmem:[%s241 + $0x1930] sm:$0xff]
        %v1141 = vld [vmem:[%s241 + $0x1938] sm:$0xff]
        %v1142 = vld [vmem:[%s241 + $0x1940] sm:$0xff]
        %v1143 = vld [vmem:[%s241 + $0x1948] sm:$0xff]
        %v1144 = vld [vmem:[%s241 + $0x1950] sm:$0xff]
        %v1145 = vld [vmem:[%s241 + $0x1958] sm:$0xff]
        %v1146 = vld [vmem:[%s241 + $0x1960] sm:$0xff]
        %v1147 = vld [vmem:[%s241 + $0x1968] sm:$0xff]
        %v1148 = vld [vmem:[%s241 + $0x1970] sm:$0xff]
        %v1149 = vld [vmem:[%s241 + $0x1978] sm:$0xff]
        %v1150 = vld [vmem:[%s241 + $0x1980] sm:$0xff]
        %v1151 = vld [vmem:[%s241 + $0x1988] sm:$0xff]
        %v1152 = vld [vmem:[%s241 + $0x1990] sm:$0xff]
        %v1153 = vld [vmem:[%s241 + $0x1998] sm:$0xff]
        %v1154 = vld [vmem:[%s241 + $0x19a0] sm:$0xff]
        %v1155 = vld [vmem:[%s241 + $0x19a8] sm:$0xff]
        %v1156 = vld [vmem:[%s241 + $0x19b0] sm:$0xff]
        %v1157 = vld [vmem:[%s241 + $0x19b8] sm:$0xff]
        %v1158 = vld [vmem:[%s241 + $0x19c0] sm:$0xff]
        %v1159 = vld [vmem:[%s241 + $0x19c8] sm:$0xff]
        %v1160 = vld [vmem:[%s241 + $0x19d0] sm:$0xff]
        %v1161 = vld [vmem:[%s241 + $0x19d8] sm:$0xff]
        %v1162 = vld [vmem:[%s241 + $0x19e0] sm:$0xff]
        %v1163 = vld [vmem:[%s241 + $0x19e8] sm:$0xff]
        %v1164 = vld [vmem:[%s241 + $0x19f0] sm:$0xff]
        %v1165 = vld [vmem:[%s241 + $0x19f8] sm:$0xff]
        %v1166 = vld [vmem:[%s241 + $0x1a00] sm:$0xff]
        %v1167 = vld [vmem:[%s241 + $0x1a08] sm:$0xff]
        %v1168 = vld [vmem:[%s241 + $0x1a10] sm:$0xff]
        %v1169 = vld [vmem:[%s241 + $0x1a18] sm:$0xff]
        %v1170 = vld [vmem:[%s241 + $0x1a20] sm:$0xff]
        %v1171 = vld [vmem:[%s241 + $0x1a28] sm:$0xff]
        %v1172 = vld [vmem:[%s241 + $0x1a30] sm:$0xff]
        %v1173 = vld [vmem:[%s241 + $0x1a38] sm:$0xff]
        %v1174 = vld [vmem:[%s241 + $0x1a40] sm:$0xff]
        %v1175 = vld [vmem:[%s241 + $0x1a48] sm:$0xff]
        %v1176 = vld [vmem:[%s241 + $0x1a50] sm:$0xff]
        %v1177 = vld [vmem:[%s241 + $0x1a58] sm:$0xff]
        %v1178 = vld [vmem:[%s241 + $0x1a60] sm:$0xff]
        %v1179 = vld [vmem:[%s241 + $0x1a68] sm:$0xff]
        %v1180 = vld [vmem:[%s241 + $0x1a70] sm:$0xff]
        %v1181 = vld [vmem:[%s241 + $0x1a78] sm:$0xff]
        %v1182 = vld [vmem:[%s241 + $0x1a80] sm:$0xff]
        %v1183 = vld [vmem:[%s241 + $0x1a88] sm:$0xff]
        %v1184 = vld [vmem:[%s241 + $0x1a90] sm:$0xff]
        %v1185 = vld [vmem:[%s241 + $0x1a98] sm:$0xff]
        %v1186 = vld [vmem:[%s241 + $0x1aa0] sm:$0xff]
        %v1187 = vld [vmem:[%s241 + $0x1aa8] sm:$0xff]
        %v1188 = vld [vmem:[%s241 + $0x1ab0] sm:$0xff]
        %v1189 = vld [vmem:[%s241 + $0x1ab8] sm:$0xff]
        %v1190 = vld [vmem:[%s241 + $0x1ac0] sm:$0xff]
        %v1191 = vld [vmem:[%s241 + $0x1ac8] sm:$0xff]
        %v1192 = vld [vmem:[%s241 + $0x1ad0] sm:$0xff]
        %v1193 = vld [vmem:[%s241 + $0x1ad8] sm:$0xff]
        %v1194 = vld [vmem:[%s241 + $0x1ae0] sm:$0xff]
        %v1195 = vld [vmem:[%s241 + $0x1ae8] sm:$0xff]
        %v1196 = vld [vmem:[%s241 + $0x1af0] sm:$0xff]
        %v1197 = vld [vmem:[%s241 + $0x1af8] sm:$0xff]
        %v1198 = vld [vmem:[%s241 + $0x1b00] sm:$0xff]
        %v1199 = vld [vmem:[%s241 + $0x1b08] sm:$0xff]
        %v1200 = vld [vmem:[%s241 + $0x1b10] sm:$0xff]
        %v1201 = vld [vmem:[%s241 + $0x1b18] sm:$0xff]
        %v1202 = vld [vmem:[%s241 + $0x1b20] sm:$0xff]
        %v1203 = vld [vmem:[%s241 + $0x1b28] sm:$0xff]
        %v1204 = vld [vmem:[%s241 + $0x1b30] sm:$0xff]
        %v1205 = vld [vmem:[%s241 + $0x1b38] sm:$0xff]
        %v1206 = vld [vmem:[%s241 + $0x1b40] sm:$0xff]
        %v1207 = vld [vmem:[%s241 + $0x1b48] sm:$0xff]
        %v1208 = vld [vmem:[%s241 + $0x1b50] sm:$0xff]
        %v1209 = vld [vmem:[%s241 + $0x1b58] sm:$0xff]
        %v1210 = vld [vmem:[%s241 + $0x1b60] sm:$0xff]
        %v1211 = vld [vmem:[%s241 + $0x1b68] sm:$0xff]
        %v1212 = vld [vmem:[%s241 + $0x1b70] sm:$0xff]
        %v1213 = vld [vmem:[%s241 + $0x1b78] sm:$0xff]
        %v1214 = vld [vmem:[%s241 + $0x1b80] sm:$0xff]
        %v1215 = vld [vmem:[%s241 + $0x1b88] sm:$0xff]
        %v1216 = vld [vmem:[%s241 + $0x1b90] sm:$0xff]
        %v1217 = vld [vmem:[%s241 + $0x1b98] sm:$0xff]
        %v1218 = vld [vmem:[%s241 + $0x1ba0] sm:$0xff]
        %v1219 = vld [vmem:[%s241 + $0x1ba8] sm:$0xff]
        %v1220 = vld [vmem:[%s241 + $0x1bb0] sm:$0xff]
        %v1221 = vld [vmem:[%s241 + $0x1bb8] sm:$0xff]
        %v1222 = vld [vmem:[%s241 + $0x1bc0] sm:$0xff]
        %v1223 = vld [vmem:[%s241 + $0x1bc8] sm:$0xff]
        %v1224 = vld [vmem:[%s241 + $0x1bd0] sm:$0xff]
        %v1225 = vld [vmem:[%s241 + $0x1bd8] sm:$0xff]
        %v1226 = vld [vmem:[%s241 + $0x1be0] sm:$0xff]
        %v1227 = vld [vmem:[%s241 + $0x1be8] sm:$0xff]
        %v1228 = vld [vmem:[%s241 + $0x1bf0] sm:$0xff]
        %v1229 = vld [vmem:[%s241 + $0x1bf8] sm:$0xff]
        %v1230 = vld [vmem:[%s241 + $0x1c00] sm:$0xff]
        %v1231 = vld [vmem:[%s241 + $0x1c08] sm:$0xff]
        %v1232 = vld [vmem:[%s241 + $0x1c10] sm:$0xff]
        %v1233 = vld [vmem:[%s241 + $0x1c18] sm:$0xff]
        %v1234 = vld [vmem:[%s241 + $0x1c20] sm:$0xff]
        %v1235 = vld [vmem:[%s241 + $0x1c28] sm:$0xff]
        %v1236 = vld [vmem:[%s241 + $0x1c30] sm:$0xff]
        %v1237 = vld [vmem:[%s241 + $0x1c38] sm:$0xff]
        %v1238 = vld [vmem:[%s241 + $0x1c40] sm:$0xff]
        %v1239 = vld [vmem:[%s241 + $0x1c48] sm:$0xff]
        %v1240 = vld [vmem:[%s241 + $0x1c50] sm:$0xff]
        %v1241 = vld [vmem:[%s241 + $0x1c58] sm:$0xff]
        %v1242 = vld [vmem:[%s241 + $0x1c60] sm:$0xff]
        %v1243 = vld [vmem:[%s241 + $0x1c68] sm:$0xff]
        %v1244 = vld [vmem:[%s241 + $0x1c70] sm:$0xff]
        %v1245 = vld [vmem:[%s241 + $0x1c78] sm:$0xff]
        %v1246 = vld [vmem:[%s241 + $0x1c80] sm:$0xff]
        %v1247 = vld [vmem:[%s241 + $0x1c88] sm:$0xff]
        %v1248 = vld [vmem:[%s241 + $0x1c90] sm:$0xff]
        %v1249 = vld [vmem:[%s241 + $0x1c98] sm:$0xff]
        %v1250 = vld [vmem:[%s241 + $0x1ca0] sm:$0xff]
        %v1251 = vld [vmem:[%s241 + $0x1ca8] sm:$0xff]
        %v1252 = vld [vmem:[%s241 + $0x1cb0] sm:$0xff]
        %v1253 = vld [vmem:[%s241 + $0x1cb8] sm:$0xff]
        %v1254 = vld [vmem:[%s241 + $0x1cc0] sm:$0xff]
        %v1255 = vld [vmem:[%s241 + $0x1cc8] sm:$0xff]
        %v1256 = vld [vmem:[%s241 + $0x1cd0] sm:$0xff]
        %v1257 = vld [vmem:[%s241 + $0x1cd8] sm:$0xff]
        %v1258 = vld [vmem:[%s241 + $0x1ce0] sm:$0xff]
        %v1259 = vld [vmem:[%s241 + $0x1ce8] sm:$0xff]
        %v1260 = vld [vmem:[%s241 + $0x1cf0] sm:$0xff]
        %v1261 = vld [vmem:[%s241 + $0x1cf8] sm:$0xff]
        %v1262 = vld [vmem:[%s241 + $0x1d00] sm:$0xff]
        %v1263 = vld [vmem:[%s241 + $0x1d08] sm:$0xff]
        %v1264 = vld [vmem:[%s241 + $0x1d10] sm:$0xff]
        %v1265 = vld [vmem:[%s241 + $0x1d18] sm:$0xff]
        %v1266 = vld [vmem:[%s241 + $0x1d20] sm:$0xff]
        %v1267 = vld [vmem:[%s241 + $0x1d28] sm:$0xff]
        %v1268 = vld [vmem:[%s241 + $0x1d30] sm:$0xff]
        %v1269 = vld [vmem:[%s241 + $0x1d38] sm:$0xff]
        %v1270 = vld [vmem:[%s241 + $0x1d40] sm:$0xff]
        %v1271 = vld [vmem:[%s241 + $0x1d48] sm:$0xff]
        %v1272 = vld [vmem:[%s241 + $0x1d50] sm:$0xff]
        %v1273 = vld [vmem:[%s241 + $0x1d58] sm:$0xff]
        %v1274 = vld [vmem:[%s241 + $0x1d60] sm:$0xff]
        %v1275 = vld [vmem:[%s241 + $0x1d68] sm:$0xff]
        %v1276 = vld [vmem:[%s241 + $0x1d70] sm:$0xff]
        %v1277 = vld [vmem:[%s241 + $0x1d78] sm:$0xff]
        %v1278 = vld [vmem:[%s241 + $0x1d80] sm:$0xff]
        %v1279 = vld [vmem:[%s241 + $0x1d88] sm:$0xff]
        %v1280 = vld [vmem:[%s241 + $0x1d90] sm:$0xff]
        %v1281 = vld [vmem:[%s241 + $0x1d98] sm:$0xff]
        %v1282 = vld [vmem:[%s241 + $0x1da0] sm:$0xff]
        %v1283 = vld [vmem:[%s241 + $0x1da8] sm:$0xff]
        %v1284 = vld [vmem:[%s241 + $0x1db0] sm:$0xff]
        %v1285 = vld [vmem:[%s241 + $0x1db8] sm:$0xff]
        %v1286 = vld [vmem:[%s241 + $0x1dc0] sm:$0xff]
        %v1287 = vld [vmem:[%s241 + $0x1dc8] sm:$0xff]
        %v1288 = vld [vmem:[%s241 + $0x1dd0] sm:$0xff]
        %v1289 = vld [vmem:[%s241 + $0x1dd8] sm:$0xff]
        %v1290 = vld [vmem:[%s241 + $0x1de0] sm:$0xff]
        %v1291 = vld [vmem:[%s241 + $0x1de8] sm:$0xff]
        %v1292 = vld [vmem:[%s241 + $0x1df0] sm:$0xff]
        %v1293 = vld [vmem:[%s241 + $0x1df8] sm:$0xff]
        %v1294 = vld [vmem:[%s241 + $0x1e00] sm:$0xff]
        %v1295 = vld [vmem:[%s241 + $0x1e08] sm:$0xff]
        %v1296 = vld [vmem:[%s241 + $0x1e10] sm:$0xff]
        %v1297 = vld [vmem:[%s241 + $0x1e18] sm:$0xff]
        %v1298 = vld [vmem:[%s241 + $0x1e20] sm:$0xff]
        %v1299 = vld [vmem:[%s241 + $0x1e28] sm:$0xff]
        %v1300 = vld [vmem:[%s241 + $0x1e30] sm:$0xff]
        %v1301 = vld [vmem:[%s241 + $0x1e38] sm:$0xff]
        %v1302 = vld [vmem:[%s241 + $0x1e40] sm:$0xff]
        %v1303 = vld [vmem:[%s241 + $0x1e48] sm:$0xff]
        %v1304 = vld [vmem:[%s241 + $0x1e50] sm:$0xff]
        %v1305 = vld [vmem:[%s241 + $0x1e58] sm:$0xff]
        %v1306 = vld [vmem:[%s241 + $0x1e60] sm:$0xff]
        %v1307 = vld [vmem:[%s241 + $0x1e68] sm:$0xff]
        %v1308 = vld [vmem:[%s241 + $0x1e70] sm:$0xff]
        %v1309 = vld [vmem:[%s241 + $0x1e78] sm:$0xff]
        %v1310 = vld [vmem:[%s241 + $0x1e80] sm:$0xff]
        %v1311 = vld [vmem:[%s241 + $0x1e88] sm:$0xff]
        %v1312 = vld [vmem:[%s241 + $0x1e90] sm:$0xff]
        %v1313 = vld [vmem:[%s241 + $0x1e98] sm:$0xff]
        %v1314 = vld [vmem:[%s241 + $0x1ea0] sm:$0xff]
        %v1315 = vld [vmem:[%s241 + $0x1ea8] sm:$0xff]
        %v1316 = vld [vmem:[%s241 + $0x1eb0] sm:$0xff]
        %v1317 = vld [vmem:[%s241 + $0x1eb8] sm:$0xff]
        %v1318 = vld [vmem:[%s241 + $0x1ec0] sm:$0xff]
        %v1319 = vld [vmem:[%s241 + $0x1ec8] sm:$0xff]
        %v1320 = vld [vmem:[%s241 + $0x1ed0] sm:$0xff]
        %v1321 = vld [vmem:[%s241 + $0x1ed8] sm:$0xff]
        %v1322 = vld [vmem:[%s241 + $0x1ee0] sm:$0xff]
        %v1323 = vld [vmem:[%s241 + $0x1ee8] sm:$0xff]
        %v1324 = vld [vmem:[%s241 + $0x1ef0] sm:$0xff]
        %v1325 = vld [vmem:[%s241 + $0x1ef8] sm:$0xff]
        %v1326 = vld [vmem:[%s241 + $0x1f00] sm:$0xff]
        %v1327 = vld [vmem:[%s241 + $0x1f08] sm:$0xff]
        %v1328 = vld [vmem:[%s241 + $0x1f10] sm:$0xff]
        %v1329 = vld [vmem:[%s241 + $0x1f18] sm:$0xff]
        %v1330 = vld [vmem:[%s241 + $0x1f20] sm:$0xff]
        %v1331 = vld [vmem:[%s241 + $0x1f28] sm:$0xff]
        %v1332 = vld [vmem:[%s241 + $0x1f30] sm:$0xff]
        %v1333 = vld [vmem:[%s241 + $0x1f38] sm:$0xff]
        %v1334 = vld [vmem:[%s241 + $0x1f40] sm:$0xff]
        %v1335 = vld [vmem:[%s241 + $0x1f48] sm:$0xff]
        %v1336 = vld [vmem:[%s241 + $0x1f50] sm:$0xff]
        %v1337 = vld [vmem:[%s241 + $0x1f58] sm:$0xff]
        %v1338 = vld [vmem:[%s241 + $0x1f60] sm:$0xff]
        %v1339 = vld [vmem:[%s241 + $0x1f68] sm:$0xff]
        %v1340 = vld [vmem:[%s241 + $0x1f70] sm:$0xff]
        %v1341 = vld [vmem:[%s241 + $0x1f78] sm:$0xff]
        %v1342 = vld [vmem:[%s241 + $0x1f80] sm:$0xff]
        %v1343 = vld [vmem:[%s241 + $0x1f88] sm:$0xff]
        %v1344 = vld [vmem:[%s241 + $0x1f90] sm:$0xff]
        %v1345 = vld [vmem:[%s241 + $0x1f98] sm:$0xff]
        %v1346 = vld [vmem:[%s241 + $0x1fa0] sm:$0xff]
        %v1347 = vld [vmem:[%s241 + $0x1fa8] sm:$0xff]
        %v1348 = vld [vmem:[%s241 + $0x1fb0] sm:$0xff]
        %v1349 = vld [vmem:[%s241 + $0x1fb8] sm:$0xff]
        %v1350 = vld [vmem:[%s241 + $0x1fc0] sm:$0xff]
        %v1351 = vld [vmem:[%s241 + $0x1fc8] sm:$0xff]
        %v1352 = vld [vmem:[%s241 + $0x1fd0] sm:$0xff]
        %v1353 = vld [vmem:[%s241 + $0x1fd8] sm:$0xff]
        %v1354 = vld [vmem:[%s241 + $0x1fe0] sm:$0xff]
        %v1355 = vld [vmem:[%s241 + $0x1fe8] sm:$0xff]
        %v1356 = vld [vmem:[%s241 + $0x1ff0] sm:$0xff]
        %v1357 = vld [vmem:[%s241 + $0x1ff8] sm:$0xff]
        %v1358 = vld [vmem:[%s241 + $0x2000] sm:$0xff]
        %v1359 = vld [vmem:[%s241 + $0x2008] sm:$0xff]
        %v1360 = vld [vmem:[%s241 + $0x2010] sm:$0xff]
        %v1361 = vld [vmem:[%s241 + $0x2018] sm:$0xff]
        %v1362 = vld [vmem:[%s241 + $0x2020] sm:$0xff]
        %v1363 = vld [vmem:[%s241 + $0x2028] sm:$0xff]
        %v1364 = vld [vmem:[%s241 + $0x2030] sm:$0xff]
        %v1365 = vld [vmem:[%s241 + $0x2038] sm:$0xff]
        %v1366 = vld [vmem:[%s241 + $0x2040] sm:$0xff]
        %v1367 = vld [vmem:[%s241 + $0x2048] sm:$0xff]
        %v1368 = vld [vmem:[%s241 + $0x2050] sm:$0xff]
        %v1369 = vld [vmem:[%s241 + $0x2058] sm:$0xff]
        %v1370 = vld [vmem:[%s241 + $0x2060] sm:$0xff]
        %v1371 = vld [vmem:[%s241 + $0x2068] sm:$0xff]
        %v1372 = vld [vmem:[%s241 + $0x2070] sm:$0xff]
        %v1373 = vld [vmem:[%s241 + $0x2078] sm:$0xff]
        %v1374 = vld [vmem:[%s241 + $0x2080] sm:$0xff]
        %v1375 = vld [vmem:[%s241 + $0x2088] sm:$0xff]
        %v1376 = vld [vmem:[%s241 + $0x2090] sm:$0xff]
        %v1377 = vld [vmem:[%s241 + $0x2098] sm:$0xff]
        %v1378 = vld [vmem:[%s241 + $0x20a0] sm:$0xff]
        %v1379 = vld [vmem:[%s241 + $0x20a8] sm:$0xff]
        %v1380 = vld [vmem:[%s241 + $0x20b0] sm:$0xff]
        %v1381 = vld [vmem:[%s241 + $0x20b8] sm:$0xff]
        %v1382 = vld [vmem:[%s241 + $0x20c0] sm:$0xff]
        %v1383 = vld [vmem:[%s241 + $0x20c8] sm:$0xff]
        %v1384 = vld [vmem:[%s241 + $0x20d0] sm:$0xff]
        %v1385 = vld [vmem:[%s241 + $0x20d8] sm:$0xff]
        %v1386 = vld [vmem:[%s241 + $0x20e0] sm:$0xff]
        %v1387 = vld [vmem:[%s241 + $0x20e8] sm:$0xff]
        %v1388 = vld [vmem:[%s241 + $0x20f0] sm:$0xff]
        %v1389 = vld [vmem:[%s241 + $0x20f8] sm:$0xff]
        %v1390 = vld [vmem:[%s241 + $0x2100] sm:$0xff]
        %v1391 = vld [vmem:[%s241 + $0x2108] sm:$0xff]
        %v1392 = vld [vmem:[%s241 + $0x2110] sm:$0xff]
        %v1393 = vld [vmem:[%s241 + $0x2118] sm:$0xff]
        %v1394 = vld [vmem:[%s241 + $0x2120] sm:$0xff]
        %v1395 = vld [vmem:[%s241 + $0x2128] sm:$0xff]
        %v1396 = vld [vmem:[%s241 + $0x2130] sm:$0xff]
        %v1397 = vld [vmem:[%s241 + $0x2138] sm:$0xff]
        %v1398 = vld [vmem:[%s241 + $0x2140] sm:$0xff]
        %v1399 = vld [vmem:[%s241 + $0x2148] sm:$0xff]
        %v1400 = vld [vmem:[%s241 + $0x2150] sm:$0xff]
        %v1401 = vld [vmem:[%s241 + $0x2158] sm:$0xff]
        %v1402 = vld [vmem:[%s241 + $0x2160] sm:$0xff]
        %v1403 = vld [vmem:[%s241 + $0x2168] sm:$0xff]
        %v1404 = vld [vmem:[%s241 + $0x2170] sm:$0xff]
        %v1405 = vld [vmem:[%s241 + $0x2178] sm:$0xff]
        %v1406 = vld [vmem:[%s241 + $0x2180] sm:$0xff]
        %v1407 = vld [vmem:[%s241 + $0x2188] sm:$0xff]
        %v1408 = vld [vmem:[%s241 + $0x2190] sm:$0xff]
        %v1409 = vld [vmem:[%s241 + $0x2198] sm:$0xff]
        %v1410 = vld [vmem:[%s241 + $0x21a0] sm:$0xff]
        %v1411 = vld [vmem:[%s241 + $0x21a8] sm:$0xff]
        %v1412 = vld [vmem:[%s241 + $0x21b0] sm:$0xff]
        %v1413 = vld [vmem:[%s241 + $0x21b8] sm:$0xff]
        %v1414 = vld [vmem:[%s241 + $0x21c0] sm:$0xff]
        %v1415 = vld [vmem:[%s241 + $0x21c8] sm:$0xff]
        %v1416 = vld [vmem:[%s241 + $0x21d0] sm:$0xff]
        %v1417 = vld [vmem:[%s241 + $0x21d8] sm:$0xff]
        %v1418 = vld [vmem:[%s241 + $0x21e0] sm:$0xff]
        %v1419 = vld [vmem:[%s241 + $0x21e8] sm:$0xff]
        %v1420 = vld [vmem:[%s241 + $0x21f0] sm:$0xff]
        %v1421 = vld [vmem:[%s241 + $0x21f8] sm:$0xff]
        %v1422 = vld [vmem:[%s241 + $0x2200] sm:$0xff]
        %v1423 = vld [vmem:[%s241 + $0x2208] sm:$0xff]
        %v1424 = vld [vmem:[%s241 + $0x2210] sm:$0xff]
        %v1425 = vld [vmem:[%s241 + $0x2218] sm:$0xff]
        %v1426 = vld [vmem:[%s241 + $0x2220] sm:$0xff]
        %v1427 = vld [vmem:[%s241 + $0x2228] sm:$0xff]
        %v1428 = vld [vmem:[%s241 + $0x2230] sm:$0xff]
        %v1429 = vld [vmem:[%s241 + $0x2238] sm:$0xff]
        %v1430 = vld [vmem:[%s241 + $0x2240] sm:$0xff]
        %v1431 = vld [vmem:[%s241 + $0x2248] sm:$0xff]
        %v1432 = vld [vmem:[%s241 + $0x2250] sm:$0xff]
        %v1433 = vld [vmem:[%s241 + $0x2258] sm:$0xff]
        %v1434 = vld [vmem:[%s241 + $0x2260] sm:$0xff]
        %v1435 = vld [vmem:[%s241 + $0x2268] sm:$0xff]
        %v1436 = vld [vmem:[%s241 + $0x2270] sm:$0xff]
        %v1437 = vld [vmem:[%s241 + $0x2278] sm:$0xff]
        %v1438 = vld [vmem:[%s241 + $0x2280] sm:$0xff]
        %v1439 = vld [vmem:[%s241 + $0x2288] sm:$0xff]
        %v1440 = vld [vmem:[%s241 + $0x2290] sm:$0xff]
        %v1441 = vld [vmem:[%s241 + $0x2298] sm:$0xff]
        %v1442 = vld [vmem:[%s241 + $0x22a0] sm:$0xff]
        %v1443 = vld [vmem:[%s241 + $0x22a8] sm:$0xff]
        %v1444 = vld [vmem:[%s241 + $0x22b0] sm:$0xff]
        %v1445 = vld [vmem:[%s241 + $0x22b8] sm:$0xff]
        %v1446 = vld [vmem:[%s241 + $0x22c0] sm:$0xff]
        %v1447 = vld [vmem:[%s241 + $0x22c8] sm:$0xff]
        %v1448 = vld [vmem:[%s241 + $0x22d0] sm:$0xff]
        %v1449 = vld [vmem:[%s241 + $0x22d8] sm:$0xff]
        %v1450 = vld [vmem:[%s241 + $0x22e0] sm:$0xff]
        %v1451 = vld [vmem:[%s241 + $0x22e8] sm:$0xff]
        %v1452 = vld [vmem:[%s241 + $0x22f0] sm:$0xff]
        %v1453 = vld [vmem:[%s241 + $0x22f8] sm:$0xff]
        %v1454 = vld [vmem:[%s241 + $0x2300] sm:$0xff]
        %v1455 = vld [vmem:[%s241 + $0x2308] sm:$0xff]
        %v1456 = vld [vmem:[%s241 + $0x2310] sm:$0xff]
        %v1457 = vld [vmem:[%s241 + $0x2318] sm:$0xff]
        %v1458 = vld [vmem:[%s241 + $0x2320] sm:$0xff]
        %v1459 = vld [vmem:[%s241 + $0x2328] sm:$0xff]
        %v1460 = vld [vmem:[%s241 + $0x2330] sm:$0xff]
        %v1461 = vld [vmem:[%s241 + $0x2338] sm:$0xff]
        %v1462 = vld [vmem:[%s241 + $0x2340] sm:$0xff]
        %v1463 = vld [vmem:[%s241 + $0x2348] sm:$0xff]
        %v1464 = vld [vmem:[%s241 + $0x2350] sm:$0xff]
        %v1465 = vld [vmem:[%s241 + $0x2358] sm:$0xff]
        %v1466 = vld [vmem:[%s241 + $0x2360] sm:$0xff]
        %v1467 = vld [vmem:[%s241 + $0x2368] sm:$0xff]
        %v1468 = vld [vmem:[%s241 + $0x2370] sm:$0xff]
        %v1469 = vld [vmem:[%s241 + $0x2378] sm:$0xff]
        %v1470 = vld [vmem:[%s241 + $0x2380] sm:$0xff]
        %v1471 = vld [vmem:[%s241 + $0x2388] sm:$0xff]
        %v1472 = vld [vmem:[%s241 + $0x2390] sm:$0xff]
        %v1473 = vld [vmem:[%s241 + $0x2398] sm:$0xff]
        %v1474 = vld [vmem:[%s241 + $0x23a0] sm:$0xff]
        %v1475 = vld [vmem:[%s241 + $0x23a8] sm:$0xff]
        %v1476 = vld [vmem:[%s241 + $0x23b0] sm:$0xff]
        %v1477 = vld [vmem:[%s241 + $0x23b8] sm:$0xff]
        %v1478 = vld [vmem:[%s241 + $0x23c0] sm:$0xff]
        %v1479 = vld [vmem:[%s241 + $0x23c8] sm:$0xff]
        %v1480 = vld [vmem:[%s241 + $0x23d0] sm:$0xff]
        %v1481 = vld [vmem:[%s241 + $0x23d8] sm:$0xff]
        %v1482 = vld [vmem:[%s241 + $0x23e0] sm:$0xff]
        %v1483 = vld [vmem:[%s241 + $0x23e8] sm:$0xff]
        %v1484 = vld [vmem:[%s241 + $0x23f0] sm:$0xff]
        %v1485 = vld [vmem:[%s241 + $0x23f8] sm:$0xff]
        %v1486 = vld [vmem:[%s241 + $0x2400] sm:$0xff]
        %v1487 = vld [vmem:[%s241 + $0x2408] sm:$0xff]
        %v1488 = vld [vmem:[%s241 + $0x2410] sm:$0xff]
        %v1489 = vld [vmem:[%s241 + $0x2418] sm:$0xff]
        %v1490 = vld [vmem:[%s241 + $0x2420] sm:$0xff]
        %v1491 = vld [vmem:[%s241 + $0x2428] sm:$0xff]
        %v1492 = vld [vmem:[%s241 + $0x2430] sm:$0xff]
        %v1493 = vld [vmem:[%s241 + $0x2438] sm:$0xff]
        %v1494 = vld [vmem:[%s241 + $0x2440] sm:$0xff]
        %v1495 = vld [vmem:[%s241 + $0x2448] sm:$0xff]
        %v1496 = vld [vmem:[%s241 + $0x2450] sm:$0xff]
        %v1497 = vld [vmem:[%s241 + $0x2458] sm:$0xff]
        %v1498 = vld [vmem:[%s241 + $0x2460] sm:$0xff]
        %v1499 = vld [vmem:[%s241 + $0x2468] sm:$0xff]
        %v1500 = vld [vmem:[%s241 + $0x2470] sm:$0xff]
        %v1501 = vld [vmem:[%s241 + $0x2478] sm:$0xff]
        %v1502 = vld [vmem:[%s241 + $0x2480] sm:$0xff]
        %v1503 = vld [vmem:[%s241 + $0x2488] sm:$0xff]
        %v1504 = vld [vmem:[%s241 + $0x2490] sm:$0xff]
        %v1505 = vld [vmem:[%s241 + $0x2498] sm:$0xff]
        %v1506 = vld [vmem:[%s241 + $0x24a0] sm:$0xff]
        %v1507 = vld [vmem:[%s241 + $0x24a8] sm:$0xff]
        %v1508 = vld [vmem:[%s241 + $0x24b0] sm:$0xff]
        %v1509 = vld [vmem:[%s241 + $0x24b8] sm:$0xff]
        %v1510 = vld [vmem:[%s241 + $0x24c0] sm:$0xff]
        %v1511 = vld [vmem:[%s241 + $0x24c8] sm:$0xff]
        %v1512 = vld [vmem:[%s241 + $0x24d0] sm:$0xff]
        %v1513 = vld [vmem:[%s241 + $0x24d8] sm:$0xff]
        %v1514 = vld [vmem:[%s241 + $0x24e0] sm:$0xff]
        %v1515 = vld [vmem:[%s241 + $0x24e8] sm:$0xff]
        %v1516 = vld [vmem:[%s241 + $0x24f0] sm:$0xff]
        %v1517 = vld [vmem:[%s241 + $0x24f8] sm:$0xff]
        %v1518 = vld [vmem:[%s241 + $0x2500] sm:$0xff]
        %v1519 = vld [vmem:[%s241 + $0x2508] sm:$0xff]
        %v1520 = vld [vmem:[%s241 + $0x2510] sm:$0xff]
        %v1521 = vld [vmem:[%s241 + $0x2518] sm:$0xff]
        %v1522 = vld [vmem:[%s241 + $0x2520] sm:$0xff]
        %v1523 = vld [vmem:[%s241 + $0x2528] sm:$0xff]
        %v1524 = vld [vmem:[%s241 + $0x2530] sm:$0xff]
        %v1525 = vld [vmem:[%s241 + $0x2538] sm:$0xff]
        %v1526 = vld [vmem:[%s241 + $0x2540] sm:$0xff]
        %v1527 = vld [vmem:[%s241 + $0x2548] sm:$0xff]
        %v1528 = vld [vmem:[%s241 + $0x2550] sm:$0xff]
        %v1529 = vld [vmem:[%s241 + $0x2558] sm:$0xff]
        %v1530 = vld [vmem:[%s241 + $0x2560] sm:$0xff]
        %v1531 = vld [vmem:[%s241 + $0x2568] sm:$0xff]
        %v1532 = vld [vmem:[%s241 + $0x2570] sm:$0xff]
        %v1533 = vld [vmem:[%s241 + $0x2578] sm:$0xff]
        %v1534 = vld [vmem:[%s241 + $0x2580] sm:$0xff]
        %v1535 = vld [vmem:[%s241 + $0x2588] sm:$0xff]
        %v1536 = vld [vmem:[%s241 + $0x2590] sm:$0xff]
        %v1537 = vld [vmem:[%s241 + $0x2598] sm:$0xff]
        %v1538 = vld [vmem:[%s241 + $0x25a0] sm:$0xff]
        %v1539 = vld [vmem:[%s241 + $0x25a8] sm:$0xff]
        %v1540 = vld [vmem:[%s241 + $0x25b0] sm:$0xff]
        %v1541 = vld [vmem:[%s241 + $0x25b8] sm:$0xff]
        %v1542 = vld [vmem:[%s241 + $0x25c0] sm:$0xff]
        %v1543 = vld [vmem:[%s241 + $0x25c8] sm:$0xff]
        %v1544 = vld [vmem:[%s241 + $0x25d0] sm:$0xff]
        %v1545 = vld [vmem:[%s241 + $0x25d8] sm:$0xff]
        %v1546 = vld [vmem:[%s241 + $0x25e0] sm:$0xff]
        %v1547 = vld [vmem:[%s241 + $0x25e8] sm:$0xff]
        %v1548 = vld [vmem:[%s241 + $0x25f0] sm:$0xff]
        %v1549 = vld [vmem:[%s241 + $0x25f8] sm:$0xff]
        %v1550 = vld [vmem:[%s241 + $0x2600] sm:$0xff]
        %v1551 = vld [vmem:[%s241 + $0x2608] sm:$0xff]
        %v1552 = vld [vmem:[%s241 + $0x2610] sm:$0xff]
        %v1553 = vld [vmem:[%s241 + $0x2618] sm:$0xff]
        %v1554 = vld [vmem:[%s241 + $0x2620] sm:$0xff]
        %v1555 = vld [vmem:[%s241 + $0x2628] sm:$0xff]
        %v1556 = vld [vmem:[%s241 + $0x2630] sm:$0xff]
        %v1557 = vld [vmem:[%s241 + $0x2638] sm:$0xff]
        %v1558 = vld [vmem:[%s241 + $0x2640] sm:$0xff]
        %v1559 = vld [vmem:[%s241 + $0x2648] sm:$0xff]
        %v1560 = vld [vmem:[%s241 + $0x2650] sm:$0xff]
        %v1561 = vld [vmem:[%s241 + $0x2658] sm:$0xff]
        %v1562 = vld [vmem:[%s241 + $0x2660] sm:$0xff]
        %v1563 = vld [vmem:[%s241 + $0x2668] sm:$0xff]
        %v1564 = vld [vmem:[%s241 + $0x2670] sm:$0xff]
        %v1565 = vld [vmem:[%s241 + $0x2678] sm:$0xff]
        %v1566 = vld [vmem:[%s241 + $0x2680] sm:$0xff]
        %v1567 = vld [vmem:[%s241 + $0x2688] sm:$0xff]
        %v1568 = vld [vmem:[%s241 + $0x2690] sm:$0xff]
        %v1569 = vld [vmem:[%s241 + $0x2698] sm:$0xff]
        %v1570 = vld [vmem:[%s241 + $0x26a0] sm:$0xff]
        %v1571 = vld [vmem:[%s241 + $0x26a8] sm:$0xff]
        %v1572 = vld [vmem:[%s241 + $0x26b0] sm:$0xff]
        %v1573 = vld [vmem:[%s241 + $0x26b8] sm:$0xff]
        %v1574 = vld [vmem:[%s241 + $0x26c0] sm:$0xff]
        %v1575 = vld [vmem:[%s241 + $0x26c8] sm:$0xff]
        %v1576 = vld [vmem:[%s241 + $0x26d0] sm:$0xff]
        %v1577 = vld [vmem:[%s241 + $0x26d8] sm:$0xff]
        %v1578 = vld [vmem:[%s241 + $0x26e0] sm:$0xff]
        %v1579 = vld [vmem:[%s241 + $0x26e8] sm:$0xff]
        %v1580 = vld [vmem:[%s241 + $0x26f0] sm:$0xff]
        %v1581 = vld [vmem:[%s241 + $0x26f8] sm:$0xff]
        %v1582 = vld [vmem:[%s241 + $0x2700] sm:$0xff]
        %v1583 = vld [vmem:[%s241 + $0x2708] sm:$0xff]
        %v1584 = vld [vmem:[%s241 + $0x2710] sm:$0xff]
        %v1585 = vld [vmem:[%s241 + $0x2718] sm:$0xff]
        %v1586 = vld [vmem:[%s241 + $0x2720] sm:$0xff]
        %v1587 = vld [vmem:[%s241 + $0x2728] sm:$0xff]
        %v1588 = vld [vmem:[%s241 + $0x2730] sm:$0xff]
        %v1589 = vld [vmem:[%s241 + $0x2738] sm:$0xff]
        %v1590 = vld [vmem:[%s241 + $0x2740] sm:$0xff]
        %v1591 = vld [vmem:[%s241 + $0x2748] sm:$0xff]
        %v1592 = vld [vmem:[%s241 + $0x2750] sm:$0xff]
        %v1593 = vld [vmem:[%s241 + $0x2758] sm:$0xff]
        %v1594 = vld [vmem:[%s241 + $0x2760] sm:$0xff]
        %v1595 = vld [vmem:[%s241 + $0x2768] sm:$0xff]
        %v1596 = vld [vmem:[%s241 + $0x2770] sm:$0xff]
        %v1597 = vld [vmem:[%s241 + $0x2778] sm:$0xff]
        %v1598 = vld [vmem:[%s241 + $0x2780] sm:$0xff]
        %v1599 = vld [vmem:[%s241 + $0x2788] sm:$0xff]
        %v1600 = vld [vmem:[%s241 + $0x2790] sm:$0xff]
        %v1601 = vld [vmem:[%s241 + $0x2798] sm:$0xff]
        %v1602 = vld [vmem:[%s241 + $0x27a0] sm:$0xff]
        %v1603 = vld [vmem:[%s241 + $0x27a8] sm:$0xff]
        %v1604 = vld [vmem:[%s241 + $0x27b0] sm:$0xff]
        %v1605 = vld [vmem:[%s241 + $0x27b8] sm:$0xff]
        %v1606 = vld [vmem:[%s241 + $0x27c0] sm:$0xff]
        %v1607 = vld [vmem:[%s241 + $0x27c8] sm:$0xff]
        %v1608 = vld [vmem:[%s241 + $0x27d0] sm:$0xff]
        %v1609 = vld [vmem:[%s241 + $0x27d8] sm:$0xff]
        %v1610 = vld [vmem:[%s241 + $0x27e0] sm:$0xff]
        %v1611 = vld [vmem:[%s241 + $0x27e8] sm:$0xff]
        %v1612 = vld [vmem:[%s241 + $0x27f0] sm:$0xff]
        %v1613 = vld [vmem:[%s241 + $0x27f8] sm:$0xff]
        %v1614 = vld [vmem:[%s241 + $0x2800] sm:$0xff]
        %v1615 = vld [vmem:[%s241 + $0x2808] sm:$0xff]
        %v1616 = vld [vmem:[%s241 + $0x2810] sm:$0xff]
        %v1617 = vld [vmem:[%s241 + $0x2818] sm:$0xff]
        %v1618 = vld [vmem:[%s241 + $0x2820] sm:$0xff]
        %v1619 = vld [vmem:[%s241 + $0x2828] sm:$0xff]
        %v1620 = vld [vmem:[%s241 + $0x2830] sm:$0xff]
        %v1621 = vld [vmem:[%s241 + $0x2838] sm:$0xff]
        %v1622 = vld [vmem:[%s241 + $0x2840] sm:$0xff]
        %v1623 = vld [vmem:[%s241 + $0x2848] sm:$0xff]
        %v1624 = vld [vmem:[%s241 + $0x2850] sm:$0xff]
        %v1625 = vld [vmem:[%s241 + $0x2858] sm:$0xff]
        %v1626 = vld [vmem:[%s241 + $0x2860] sm:$0xff]
        %v1627 = vld [vmem:[%s241 + $0x2868] sm:$0xff]
        %v1628 = vld [vmem:[%s241 + $0x2870] sm:$0xff]
        %v1629 = vld [vmem:[%s241 + $0x2878] sm:$0xff]
        %v1630 = vld [vmem:[%s241 + $0x2880] sm:$0xff]
        %v1631 = vld [vmem:[%s241 + $0x2888] sm:$0xff]
        %v1632 = vld [vmem:[%s241 + $0x2890] sm:$0xff]
        %v1633 = vld [vmem:[%s241 + $0x2898] sm:$0xff]
        %v1634 = vld [vmem:[%s241 + $0x28a0] sm:$0xff]
        %v1635 = vld [vmem:[%s241 + $0x28a8] sm:$0xff]
        %v1636 = vld [vmem:[%s241 + $0x28b0] sm:$0xff]
        %v1637 = vld [vmem:[%s241 + $0x28b8] sm:$0xff]
        %v1638 = vld [vmem:[%s241 + $0x28c0] sm:$0xff]
        %v1639 = vld [vmem:[%s241 + $0x28c8] sm:$0xff]
        %v1640 = vld [vmem:[%s241 + $0x28d0] sm:$0xff]
        %v1641 = vld [vmem:[%s241 + $0x28d8] sm:$0xff]
        %v1642 = vld [vmem:[%s241 + $0x28e0] sm:$0xff]
        %v1643 = vld [vmem:[%s241 + $0x28e8] sm:$0xff]
        %v1644 = vld [vmem:[%s241 + $0x28f0] sm:$0xff]
        %v1645 = vld [vmem:[%s241 + $0x28f8] sm:$0xff]
        %v1646 = vld [vmem:[%s241 + $0x2900] sm:$0xff]
        %v1647 = vld [vmem:[%s241 + $0x2908] sm:$0xff]
        %v1648 = vld [vmem:[%s241 + $0x2910] sm:$0xff]
        %v1649 = vld [vmem:[%s241 + $0x2918] sm:$0xff]
        %v1650 = vld [vmem:[%s241 + $0x2920] sm:$0xff]
        %v1651 = vld [vmem:[%s241 + $0x2928] sm:$0xff]
        %v1652 = vld [vmem:[%s241 + $0x2930] sm:$0xff]
        %v1653 = vld [vmem:[%s241 + $0x2938] sm:$0xff]
        %v1654 = vld [vmem:[%s241 + $0x2940] sm:$0xff]
        %v1655 = vld [vmem:[%s241 + $0x2948] sm:$0xff]
        %v1656 = vld [vmem:[%s241 + $0x2950] sm:$0xff]
        %v1657 = vld [vmem:[%s241 + $0x2958] sm:$0xff]
        %v1658 = vld [vmem:[%s241 + $0x2960] sm:$0xff]
        %v1659 = vld [vmem:[%s241 + $0x2968] sm:$0xff]
        %v1660 = vld [vmem:[%s241 + $0x2970] sm:$0xff]
        %v1661 = vld [vmem:[%s241 + $0x2978] sm:$0xff]
        %v1662 = vld [vmem:[%s241 + $0x2980] sm:$0xff]
        %v1663 = vld [vmem:[%s241 + $0x2988] sm:$0xff]
        %v1664 = vld [vmem:[%s241 + $0x2990] sm:$0xff]
        %v1665 = vld [vmem:[%s241 + $0x2998] sm:$0xff]
        %v1666 = vld [vmem:[%s241 + $0x29a0] sm:$0xff]
        %v1667 = vld [vmem:[%s241 + $0x29a8] sm:$0xff]
        %v1668 = vld [vmem:[%s241 + $0x29b0] sm:$0xff]
        %v1669 = vld [vmem:[%s241 + $0x29b8] sm:$0xff]
        %v1670 = vld [vmem:[%s241 + $0x29c0] sm:$0xff]
        %v1671 = vld [vmem:[%s241 + $0x29c8] sm:$0xff]
        %v1672 = vld [vmem:[%s241 + $0x29d0] sm:$0xff]
        %v1673 = vld [vmem:[%s241 + $0x29d8] sm:$0xff]
        %v1674 = vld [vmem:[%s241 + $0x29e0] sm:$0xff]
        %v1675 = vld [vmem:[%s241 + $0x29e8] sm:$0xff]
        %v1676 = vld [vmem:[%s241 + $0x29f0] sm:$0xff]
        %v1677 = vld [vmem:[%s241 + $0x29f8] sm:$0xff]
        %v1678 = vld [vmem:[%s241 + $0x2a00] sm:$0xff]
        %v1679 = vld [vmem:[%s241 + $0x2a08] sm:$0xff]
        %v1680 = vld [vmem:[%s241 + $0x2a10] sm:$0xff]
        %v1681 = vld [vmem:[%s241 + $0x2a18] sm:$0xff]
        %v1682 = vld [vmem:[%s241 + $0x2a20] sm:$0xff]
        %v1683 = vld [vmem:[%s241 + $0x2a28] sm:$0xff]
        %v1684 = vld [vmem:[%s241 + $0x2a30] sm:$0xff]
        %v1685 = vld [vmem:[%s241 + $0x2a38] sm:$0xff]
        %v1686 = vld [vmem:[%s241 + $0x2a40] sm:$0xff]
        %v1687 = vld [vmem:[%s241 + $0x2a48] sm:$0xff]
        %v1688 = vld [vmem:[%s241 + $0x2a50] sm:$0xff]
        %v1689 = vld [vmem:[%s241 + $0x2a58] sm:$0xff]
        %v1690 = vld [vmem:[%s241 + $0x2a60] sm:$0xff]
        %v1691 = vld [vmem:[%s241 + $0x2a68] sm:$0xff]
        %v1692 = vld [vmem:[%s241 + $0x2a70] sm:$0xff]
        %v1693 = vld [vmem:[%s241 + $0x2a78] sm:$0xff]
        %v1694 = vld [vmem:[%s241 + $0x2a80] sm:$0xff]
        %v1695 = vld [vmem:[%s241 + $0x2a88] sm:$0xff]
        %v1696 = vld [vmem:[%s241 + $0x2a90] sm:$0xff]
        %v1697 = vld [vmem:[%s241 + $0x2a98] sm:$0xff]
        %v1698 = vld [vmem:[%s241 + $0x2aa0] sm:$0xff]
        %v1699 = vld [vmem:[%s241 + $0x2aa8] sm:$0xff]
        %v1700 = vld [vmem:[%s241 + $0x2ab0] sm:$0xff]
        %v1701 = vld [vmem:[%s241 + $0x2ab8] sm:$0xff]
        %v1702 = vld [vmem:[%s241 + $0x2ac0] sm:$0xff]
        %v1703 = vld [vmem:[%s241 + $0x2ac8] sm:$0xff]
        %v1704 = vld [vmem:[%s241 + $0x2ad0] sm:$0xff]
        %v1705 = vld [vmem:[%s241 + $0x2ad8] sm:$0xff]
        %v1706 = vld [vmem:[%s241 + $0x2ae0] sm:$0xff]
        %v1707 = vld [vmem:[%s241 + $0x2ae8] sm:$0xff]
        %v1708 = vld [vmem:[%s241 + $0x2af0] sm:$0xff]
        %v1709 = vld [vmem:[%s241 + $0x2af8] sm:$0xff]
        %v1710 = vld [vmem:[%s241 + $0x2b00] sm:$0xff]
        %v1711 = vld [vmem:[%s241 + $0x2b08] sm:$0xff]
        %v1712 = vld [vmem:[%s241 + $0x2b10] sm:$0xff]
        %v1713 = vld [vmem:[%s241 + $0x2b18] sm:$0xff]
        %v1714 = vld [vmem:[%s241 + $0x2b20] sm:$0xff]
        %v1715 = vld [vmem:[%s241 + $0x2b28] sm:$0xff]
        %v1716 = vld [vmem:[%s241 + $0x2b30] sm:$0xff]
        %v1717 = vld [vmem:[%s241 + $0x2b38] sm:$0xff]
        %v1718 = vld [vmem:[%s241 + $0x2b40] sm:$0xff]
        %v1719 = vld [vmem:[%s241 + $0x2b48] sm:$0xff]
        %v1720 = vld [vmem:[%s241 + $0x2b50] sm:$0xff]
        %v1721 = vld [vmem:[%s241 + $0x2b58] sm:$0xff]
        %v1722 = vld [vmem:[%s241 + $0x2b60] sm:$0xff]
        %v1723 = vld [vmem:[%s241 + $0x2b68] sm:$0xff]
        %v1724 = vld [vmem:[%s241 + $0x2b70] sm:$0xff]
        %v1725 = vld [vmem:[%s241 + $0x2b78] sm:$0xff]
        %v1726 = vld [vmem:[%s241 + $0x2b80] sm:$0xff]
        %v1727 = vld [vmem:[%s241 + $0x2b88] sm:$0xff]
        %v1728 = vld [vmem:[%s241 + $0x2b90] sm:$0xff]
        %v1729 = vld [vmem:[%s241 + $0x2b98] sm:$0xff]
        %v1730 = vld [vmem:[%s241 + $0x2ba0] sm:$0xff]
        %v1731 = vld [vmem:[%s241 + $0x2ba8] sm:$0xff]
        %v1732 = vld [vmem:[%s241 + $0x2bb0] sm:$0xff]
        %v1733 = vld [vmem:[%s241 + $0x2bb8] sm:$0xff]
        %v1734 = vld [vmem:[%s241 + $0x2bc0] sm:$0xff]
        %v1735 = vld [vmem:[%s241 + $0x2bc8] sm:$0xff]
        %v1736 = vld [vmem:[%s241 + $0x2bd0] sm:$0xff]
        %v1737 = vld [vmem:[%s241 + $0x2bd8] sm:$0xff]
        %v1738 = vld [vmem:[%s241 + $0x2be0] sm:$0xff]
        %v1739 = vld [vmem:[%s241 + $0x2be8] sm:$0xff]
        %v1740 = vld [vmem:[%s241 + $0x2bf0] sm:$0xff]
        %v1741 = vld [vmem:[%s241 + $0x2bf8] sm:$0xff]
        %v1742 = vld [vmem:[%s241 + $0x2c00] sm:$0xff]
        %v1743 = vld [vmem:[%s241 + $0x2c08] sm:$0xff]
        %v1744 = vld [vmem:[%s241 + $0x2c10] sm:$0xff]
        %v1745 = vld [vmem:[%s241 + $0x2c18] sm:$0xff]
        %v1746 = vld [vmem:[%s241 + $0x2c20] sm:$0xff]
        %v1747 = vld [vmem:[%s241 + $0x2c28] sm:$0xff]
        %v1748 = vld [vmem:[%s241 + $0x2c30] sm:$0xff]
        %v1749 = vld [vmem:[%s241 + $0x2c38] sm:$0xff]
        %v1750 = vld [vmem:[%s241 + $0x2c40] sm:$0xff]
        %v1751 = vld [vmem:[%s241 + $0x2c48] sm:$0xff]
        %v1752 = vld [vmem:[%s241 + $0x2c50] sm:$0xff]
        %v1753 = vld [vmem:[%s241 + $0x2c58] sm:$0xff]
        %v1754 = vld [vmem:[%s241 + $0x2c60] sm:$0xff]
        %v1755 = vld [vmem:[%s241 + $0x2c68] sm:$0xff]
        %v1756 = vld [vmem:[%s241 + $0x2c70] sm:$0xff]
        %v1757 = vld [vmem:[%s241 + $0x2c78] sm:$0xff]
        %v1758 = vld [vmem:[%s241 + $0x2c80] sm:$0xff]
        %v1759 = vld [vmem:[%s241 + $0x2c88] sm:$0xff]
        %v1760 = vld [vmem:[%s241 + $0x2c90] sm:$0xff]
        %v1761 = vld [vmem:[%s241 + $0x2c98] sm:$0xff]
        %v1762 = vld [vmem:[%s241 + $0x2ca0] sm:$0xff]
        %v1763 = vld [vmem:[%s241 + $0x2ca8] sm:$0xff]
        %v1764 = vld [vmem:[%s241 + $0x2cb0] sm:$0xff]
        %v1765 = vld [vmem:[%s241 + $0x2cb8] sm:$0xff]
        %v1766 = vld [vmem:[%s241 + $0x2cc0] sm:$0xff]
        %v1767 = vld [vmem:[%s241 + $0x2cc8] sm:$0xff]
        %v1768 = vld [vmem:[%s241 + $0x2cd0] sm:$0xff]
        %v1769 = vld [vmem:[%s241 + $0x2cd8] sm:$0xff]
        %v1770 = vld [vmem:[%s241 + $0x2ce0] sm:$0xff]
        %v1771 = vld [vmem:[%s241 + $0x2ce8] sm:$0xff]
        %v1772 = vld [vmem:[%s241 + $0x2cf0] sm:$0xff]
        %v1773 = vld [vmem:[%s241 + $0x2cf8] sm:$0xff]
        %v1774 = vld [vmem:[%s241 + $0x2d00] sm:$0xff]
        %v1775 = vld [vmem:[%s241 + $0x2d08] sm:$0xff]
        %v1776 = vld [vmem:[%s241 + $0x2d10] sm:$0xff]
        %v1777 = vld [vmem:[%s241 + $0x2d18] sm:$0xff]
        %v1778 = vld [vmem:[%s241 + $0x2d20] sm:$0xff]
        %v1779 = vld [vmem:[%s241 + $0x2d28] sm:$0xff]
        %v1780 = vld [vmem:[%s241 + $0x2d30] sm:$0xff]
        %v1781 = vld [vmem:[%s241 + $0x2d38] sm:$0xff]
        %v1782 = vld [vmem:[%s241 + $0x2d40] sm:$0xff]
        %v1783 = vld [vmem:[%s241 + $0x2d48] sm:$0xff]
        %v1784 = vld [vmem:[%s241 + $0x2d50] sm:$0xff]
        %v1785 = vld [vmem:[%s241 + $0x2d58] sm:$0xff]
        %v1786 = vld [vmem:[%s241 + $0x2d60] sm:$0xff]
        %v1787 = vld [vmem:[%s241 + $0x2d68] sm:$0xff]
        %v1788 = vld [vmem:[%s241 + $0x2d70] sm:$0xff]
        %v1789 = vld [vmem:[%s241 + $0x2d78] sm:$0xff]
        %v1790 = vld [vmem:[%s241 + $0x2d80] sm:$0xff]
        %v1791 = vld [vmem:[%s241 + $0x2d88] sm:$0xff]
        %v1792 = vld [vmem:[%s241 + $0x2d90] sm:$0xff]
        %v1793 = vld [vmem:[%s241 + $0x2d98] sm:$0xff]
        %v1794 = vld [vmem:[%s241 + $0x2da0] sm:$0xff]
        %v1795 = vld [vmem:[%s241 + $0x2da8] sm:$0xff]
        %v1796 = vld [vmem:[%s241 + $0x2db0] sm:$0xff]
        %v1797 = vld [vmem:[%s241 + $0x2db8] sm:$0xff]
        %v1798 = vld [vmem:[%s241 + $0x2dc0] sm:$0xff]
        %v1799 = vld [vmem:[%s241 + $0x2dc8] sm:$0xff]
        %v1800 = vld [vmem:[%s241 + $0x2dd0] sm:$0xff]
        %v1801 = vld [vmem:[%s241 + $0x2dd8] sm:$0xff]
        %v1802 = vld [vmem:[%s241 + $0x2de0] sm:$0xff]
        %v1803 = vld [vmem:[%s241 + $0x2de8] sm:$0xff]
        %v1804 = vld [vmem:[%s241 + $0x2df0] sm:$0xff]
        %v1805 = vld [vmem:[%s241 + $0x2df8] sm:$0xff]
        %v1806 = vld [vmem:[%s241 + $0x2e00] sm:$0xff]
        %v1807 = vld [vmem:[%s241 + $0x2e08] sm:$0xff]
        %v1808 = vld [vmem:[%s241 + $0x2e10] sm:$0xff]
        %v1809 = vld [vmem:[%s241 + $0x2e18] sm:$0xff]
        %v1810 = vld [vmem:[%s241 + $0x2e20] sm:$0xff]
        %v1811 = vld [vmem:[%s241 + $0x2e28] sm:$0xff]
        %v1812 = vld [vmem:[%s241 + $0x2e30] sm:$0xff]
        %v1813 = vld [vmem:[%s241 + $0x2e38] sm:$0xff]
        %v1814 = vld [vmem:[%s241 + $0x2e40] sm:$0xff]
        %v1815 = vld [vmem:[%s241 + $0x2e48] sm:$0xff]
        %v1816 = vld [vmem:[%s241 + $0x2e50] sm:$0xff]
        %v1817 = vld [vmem:[%s241 + $0x2e58] sm:$0xff]
        %v1818 = vld [vmem:[%s241 + $0x2e60] sm:$0xff]
        %v1819 = vld [vmem:[%s241 + $0x2e68] sm:$0xff]
        %v1820 = vld [vmem:[%s241 + $0x2e70] sm:$0xff]
        %v1821 = vld [vmem:[%s241 + $0x2e78] sm:$0xff]
        %v1822 = vld [vmem:[%s241 + $0x2e80] sm:$0xff]
        %v1823 = vld [vmem:[%s241 + $0x2e88] sm:$0xff]
        %v1824 = vld [vmem:[%s241 + $0x2e90] sm:$0xff]
        %v1825 = vld [vmem:[%s241 + $0x2e98] sm:$0xff]
        %v1826 = vld [vmem:[%s241 + $0x2ea0] sm:$0xff]
        %v1827 = vld [vmem:[%s241 + $0x2ea8] sm:$0xff]
        %v1828 = vld [vmem:[%s241 + $0x2eb0] sm:$0xff]
        %v1829 = vld [vmem:[%s241 + $0x2eb8] sm:$0xff]
        %v1830 = vld [vmem:[%s241 + $0x2ec0] sm:$0xff]
        %v1831 = vld [vmem:[%s241 + $0x2ec8] sm:$0xff]
        %v1832 = vld [vmem:[%s241 + $0x2ed0] sm:$0xff]
        %v1833 = vld [vmem:[%s241 + $0x2ed8] sm:$0xff]
        %v1834 = vld [vmem:[%s241 + $0x2ee0] sm:$0xff]
        %v1835 = vld [vmem:[%s241 + $0x2ee8] sm:$0xff]
        %v1836 = vld [vmem:[%s241 + $0x2ef0] sm:$0xff]
        %v1837 = vld [vmem:[%s241 + $0x2ef8] sm:$0xff]
        %v1838 = vld [vmem:[%s241 + $0x2f00] sm:$0xff]
        %v1839 = vld [vmem:[%s241 + $0x2f08] sm:$0xff]
        %v1840 = vld [vmem:[%s241 + $0x2f10] sm:$0xff]
        %v1841 = vld [vmem:[%s241 + $0x2f18] sm:$0xff]
        %v1842 = vld [vmem:[%s241 + $0x2f20] sm:$0xff]
        %v1843 = vld [vmem:[%s241 + $0x2f28] sm:$0xff]
        %v1844 = vld [vmem:[%s241 + $0x2f30] sm:$0xff]
        %v1845 = vld [vmem:[%s241 + $0x2f38] sm:$0xff]
        %v1846 = vld [vmem:[%s241 + $0x2f40] sm:$0xff]
        %v1847 = vld [vmem:[%s241 + $0x2f48] sm:$0xff]
        %v1848 = vld [vmem:[%s241 + $0x2f50] sm:$0xff]
        %v1849 = vld [vmem:[%s241 + $0x2f58] sm:$0xff]
        %v1850 = vld [vmem:[%s241 + $0x2f60] sm:$0xff]
        %v1851 = vld [vmem:[%s241 + $0x2f68] sm:$0xff]
        %v1852 = vld [vmem:[%s241 + $0x2f70] sm:$0xff]
        %v1853 = vld [vmem:[%s241 + $0x2f78] sm:$0xff]
        %v1854 = vld [vmem:[%s241 + $0x2f80] sm:$0xff]
        %v1855 = vld [vmem:[%s241 + $0x2f88] sm:$0xff]
        %v1856 = vld [vmem:[%s241 + $0x2f90] sm:$0xff]
        %v1857 = vld [vmem:[%s241 + $0x2f98] sm:$0xff]
        %v1858 = vld [vmem:[%s241 + $0x2fa0] sm:$0xff]
        %v1859 = vld [vmem:[%s241 + $0x2fa8] sm:$0xff]
        %v1860 = vld [vmem:[%s241 + $0x2fb0] sm:$0xff]
        %v1861 = vld [vmem:[%s241 + $0x2fb8] sm:$0xff]
        %v1862 = vld [vmem:[%s241 + $0x2fc0] sm:$0xff]
        %v1863 = vld [vmem:[%s241 + $0x2fc8] sm:$0xff]
        %v1864 = vld [vmem:[%s241 + $0x2fd0] sm:$0xff]
        %v1865 = vld [vmem:[%s241 + $0x2fd8] sm:$0xff]
        %v1866 = vld [vmem:[%s241 + $0x2fe0] sm:$0xff]
        %v1867 = vld [vmem:[%s241 + $0x2fe8] sm:$0xff]
        %v1868 = vld [vmem:[%s241 + $0x2ff0] sm:$0xff]
        %v1869 = vld [vmem:[%s241 + $0x2ff8] sm:$0xff]
        %v1870 = vld [vmem:[%s241 + $0x3000] sm:$0xff]
        %v1871 = vld [vmem:[%s241 + $0x3008] sm:$0xff]
        %v1872 = vld [vmem:[%s241 + $0x3010] sm:$0xff]
        %v1873 = vld [vmem:[%s241 + $0x3018] sm:$0xff]
        %v1874 = vld [vmem:[%s241 + $0x3020] sm:$0xff]
        %v1875 = vld [vmem:[%s241 + $0x3028] sm:$0xff]
        %v1876 = vld [vmem:[%s241 + $0x3030] sm:$0xff]
        %v1877 = vld [vmem:[%s241 + $0x3038] sm:$0xff]
        %v1878 = vld [vmem:[%s241 + $0x3040] sm:$0xff]
        %v1879 = vld [vmem:[%s241 + $0x3048] sm:$0xff]
        %v1880 = vld [vmem:[%s241 + $0x3050] sm:$0xff]
        %v1881 = vld [vmem:[%s241 + $0x3058] sm:$0xff]
        %v1882 = vld [vmem:[%s241 + $0x3060] sm:$0xff]
        %v1883 = vld [vmem:[%s241 + $0x3068] sm:$0xff]
        %v1884 = vld [vmem:[%s241 + $0x3070] sm:$0xff]
        %v1885 = vld [vmem:[%s241 + $0x3078] sm:$0xff]
        %v1886 = vld [vmem:[%s241 + $0x3080] sm:$0xff]
        %v1887 = vld [vmem:[%s241 + $0x3088] sm:$0xff]
        %v1888 = vld [vmem:[%s241 + $0x3090] sm:$0xff]
        %v1889 = vld [vmem:[%s241 + $0x3098] sm:$0xff]
        %v1890 = vld [vmem:[%s241 + $0x30a0] sm:$0xff]
        %v1891 = vld [vmem:[%s241 + $0x30a8] sm:$0xff]
        %v1892 = vld [vmem:[%s241 + $0x30b0] sm:$0xff]
        %v1893 = vld [vmem:[%s241 + $0x30b8] sm:$0xff]
        %v1894 = vld [vmem:[%s241 + $0x30c0] sm:$0xff]
        %v1895 = vld [vmem:[%s241 + $0x30c8] sm:$0xff]
        %v1896 = vld [vmem:[%s241 + $0x30d0] sm:$0xff]
        %v1897 = vld [vmem:[%s241 + $0x30d8] sm:$0xff]
        %v1898 = vld [vmem:[%s241 + $0x30e0] sm:$0xff]
        %v1899 = vld [vmem:[%s241 + $0x30e8] sm:$0xff]
        %v1900 = vld [vmem:[%s241 + $0x30f0] sm:$0xff]
        %v1901 = vld [vmem:[%s241 + $0x30f8] sm:$0xff]
        %v1951 = vunpack.c.l.b16 %v283
        %v1952 = vunpack.c.h.b16 %v283
        %v1953 = vunpack.c.l.b16 %v284
        %v1954 = vunpack.c.h.b16 %v284
        %v1955 = vunpack.c.l.b16 %v285
        %v1956 = vunpack.c.h.b16 %v285
        %v1957 = vunpack.c.l.b16 %v286
        %v1958 = vunpack.c.h.b16 %v286
        %v1959 = vunpack.c.l.b16 %v287
        %v1960 = vunpack.c.h.b16 %v287
        %v1961 = vunpack.c.l.b16 %v288
        %v1962 = vunpack.c.h.b16 %v288
        %v1963 = vunpack.c.l.b16 %v289
        %v1964 = vunpack.c.h.b16 %v289
        %v1965 = vunpack.c.l.b16 %v290
        %v1966 = vunpack.c.h.b16 %v290
        %v1967 = vunpack.c.l.b16 %v291
        %v1968 = vunpack.c.h.b16 %v291
        %v1969 = vunpack.c.l.b16 %v292
        %v1970 = vunpack.c.h.b16 %v292
        %v1971 = vunpack.c.l.b16 %v293
        %v1972 = vunpack.c.h.b16 %v293
        %v1973 = vunpack.c.l.b16 %v294
        %v1974 = vunpack.c.h.b16 %v294
        %v1975 = vunpack.c.l.b16 %v295
        %v1976 = vunpack.c.h.b16 %v295
        %v1977 = vunpack.c.l.b16 %v296
        %v1978 = vunpack.c.h.b16 %v296
        %v1979 = vunpack.c.l.b16 %v297
        %v1980 = vunpack.c.h.b16 %v297
        %v1981 = vunpack.c.l.b16 %v298
        %v1982 = vunpack.c.h.b16 %v298
        %v1983 = vunpack.c.l.b16 %v299
        %v1984 = vunpack.c.h.b16 %v299
        %v1985 = vunpack.c.l.b16 %v300
        %v1986 = vunpack.c.h.b16 %v300
        %v1987 = vunpack.c.l.b16 %v301
        %v1988 = vunpack.c.h.b16 %v301
        %v1989 = vunpack.c.l.b16 %v302
        %v1990 = vunpack.c.h.b16 %v302
        %v1991 = vunpack.c.l.b16 %v303
        %v1992 = vunpack.c.h.b16 %v303
        %v1993 = vunpack.c.l.b16 %v304
        %v1994 = vunpack.c.h.b16 %v304
        %v1995 = vunpack.c.l.b16 %v305
        %v1996 = vunpack.c.h.b16 %v305
        %v1997 = vunpack.c.l.b16 %v306
        %v1998 = vunpack.c.h.b16 %v306
        %v1999 = vunpack.c.l.b16 %v307
        %v2000 = vunpack.c.h.b16 %v307
        %v2001 = vunpack.c.l.b16 %v308
        %v2002 = vunpack.c.h.b16 %v308
        %v2003 = vunpack.c.l.b16 %v309
        %v2004 = vunpack.c.h.b16 %v309
        %v2005 = vunpack.c.l.b16 %v310
        %v2006 = vunpack.c.h.b16 %v310
        %v2007 = vunpack.c.l.b16 %v311
        %v2008 = vunpack.c.h.b16 %v311
        %v2009 = vunpack.c.l.b16 %v312
        %v2010 = vunpack.c.h.b16 %v312
        %v2011 = vunpack.c.l.b16 %v313
        %v2012 = vunpack.c.h.b16 %v313
        %v2013 = vunpack.c.l.b16 %v314
        %v2014 = vunpack.c.h.b16 %v314
        %v2015 = vunpack.c.l.b16 %v315
        %v2016 = vunpack.c.h.b16 %v315
        %v2017 = vunpack.c.l.b16 %v316
        %v2018 = vunpack.c.h.b16 %v316
        %v2019 = vunpack.c.l.b16 %v317
        %v2020 = vunpack.c.h.b16 %v317
        %v2021 = vunpack.c.l.b16 %v318
        %v2022 = vunpack.c.h.b16 %v318
        %v2023 = vunpack.c.l.b16 %v319
        %v2024 = vunpack.c.h.b16 %v319
        %v2025 = vunpack.c.l.b16 %v320
        %v2026 = vunpack.c.h.b16 %v320
        %v2027 = vunpack.c.l.b16 %v321
        %v2028 = vunpack.c.h.b16 %v321
        %v2029 = vunpack.c.l.b16 %v322
        %v2030 = vunpack.c.h.b16 %v322
        %v2031 = vunpack.c.l.b16 %v323
        %v2032 = vunpack.c.h.b16 %v323
        %v2033 = vunpack.c.l.b16 %v324
        %v2034 = vunpack.c.h.b16 %v324
        %v2035 = vunpack.c.l.b16 %v325
        %v2036 = vunpack.c.h.b16 %v325
        %v2037 = vunpack.c.l.b16 %v326
        %v2038 = vunpack.c.h.b16 %v326
        %v2039 = vunpack.c.l.b16 %v327
        %v2040 = vunpack.c.h.b16 %v327
        %v2041 = vunpack.c.l.b16 %v328
        %v2042 = vunpack.c.h.b16 %v328
        %v2043 = vunpack.c.l.b16 %v329
        %v2044 = vunpack.c.h.b16 %v329
        %v2045 = vunpack.c.l.b16 %v330
        %v2046 = vunpack.c.h.b16 %v330
        %v2047 = vunpack.c.l.b16 %v331
        %v2048 = vunpack.c.h.b16 %v331
        %v2049 = vpack.c.b16 %v1951, %v1951
        %v2050 = vpack.c.b16 %v1952, %v1952
        %v2051 = vpack.c.b16 %v1953, %v1953
        %v2052 = vpack.c.b16 %v1954, %v1954
        %v2053 = vpack.c.b16 %v1955, %v1955
        %v2054 = vpack.c.b16 %v1956, %v1956
        %v2055 = vpack.c.b16 %v1957, %v1957
        %v2056 = vpack.c.b16 %v1958, %v1958
        %v2057 = vpack.c.b16 %v1959, %v1959
        %v2058 = vpack.c.b16 %v1960, %v1960
        %v2059 = vpack.c.b16 %v1961, %v1961
        %v2060 = vpack.c.b16 %v1962, %v1962
        %v2061 = vpack.c.b16 %v1963, %v1963
        %v2062 = vpack.c.b16 %v1964, %v1964
        %v2063 = vpack.c.b16 %v1965, %v1965
        %v2064 = vpack.c.b16 %v1966, %v1966
        %v2065 = vpack.c.b16 %v1967, %v1967
        %v2066 = vpack.c.b16 %v1968, %v1968
        %v2067 = vpack.c.b16 %v1969, %v1969
        %v2068 = vpack.c.b16 %v1970, %v1970
        %v2069 = vpack.c.b16 %v1971, %v1971
        %v2070 = vpack.c.b16 %v1972, %v1972
        %v2071 = vpack.c.b16 %v1973, %v1973
        %v2072 = vpack.c.b16 %v1974, %v1974
        %v2073 = vpack.c.b16 %v1975, %v1975
        %v2074 = vpack.c.b16 %v1976, %v1976
        %v2075 = vpack.c.b16 %v1977, %v1977
        %v2076 = vpack.c.b16 %v1978, %v1978
        %v2077 = vpack.c.b16 %v1979, %v1979
        %v2078 = vpack.c.b16 %v1980, %v1980
        %v2079 = vpack.c.b16 %v1981, %v1981
        %v2080 = vpack.c.b16 %v1982, %v1982
        %v2081 = vpack.c.b16 %v1983, %v1983
        %v2082 = vpack.c.b16 %v1984, %v1984
        %v2083 = vpack.c.b16 %v1985, %v1985
        %v2084 = vpack.c.b16 %v1986, %v1986
        %v2085 = vpack.c.b16 %v1987, %v1987
        %v2086 = vpack.c.b16 %v1988, %v1988
        %v2087 = vpack.c.b16 %v1989, %v1989
        %v2088 = vpack.c.b16 %v1990, %v1990
        %v2089 = vpack.c.b16 %v1991, %v1991
        %v2090 = vpack.c.b16 %v1992, %v1992
        %v2091 = vpack.c.b16 %v1993, %v1993
        %v2092 = vpack.c.b16 %v1994, %v1994
        %v2093 = vpack.c.b16 %v1995, %v1995
        %v2094 = vpack.c.b16 %v1996, %v1996
        %v2095 = vpack.c.b16 %v1997, %v1997
        %v2096 = vpack.c.b16 %v1998, %v1998
        %v2097 = vpack.c.b16 %v1999, %v1999
        %v2098 = vpack.c.b16 %v2000, %v2000
        %v2099 = vpack.c.b16 %v2001, %v2001
        %v2100 = vpack.c.b16 %v2002, %v2002
        %v2101 = vpack.c.b16 %v2003, %v2003
        %v2102 = vpack.c.b16 %v2004, %v2004
        %v2103 = vpack.c.b16 %v2005, %v2005
        %v2104 = vpack.c.b16 %v2006, %v2006
        %v2105 = vpack.c.b16 %v2007, %v2007
        %v2106 = vpack.c.b16 %v2008, %v2008
        %v2107 = vpack.c.b16 %v2009, %v2009
        %v2108 = vpack.c.b16 %v2010, %v2010
        %v2109 = vpack.c.b16 %v2011, %v2011
        %v2110 = vpack.c.b16 %v2012, %v2012
        %v2111 = vpack.c.b16 %v2013, %v2013
        %v2112 = vpack.c.b16 %v2014, %v2014
        %v2113 = vpack.c.b16 %v2015, %v2015
        %v2114 = vpack.c.b16 %v2016, %v2016
        %v2115 = vpack.c.b16 %v2017, %v2017
        %v2116 = vpack.c.b16 %v2018, %v2018
        %v2117 = vpack.c.b16 %v2019, %v2019
        %v2118 = vpack.c.b16 %v2020, %v2020
        %v2119 = vpack.c.b16 %v2021, %v2021
        %v2120 = vpack.c.b16 %v2022, %v2022
        %v2121 = vpack.c.b16 %v2023, %v2023
        %v2122 = vpack.c.b16 %v2024, %v2024
        %v2123 = vpack.c.b16 %v2025, %v2025
        %v2124 = vpack.c.b16 %v2026, %v2026
        %v2125 = vpack.c.b16 %v2027, %v2027
        %v2126 = vpack.c.b16 %v2028, %v2028
        %v2127 = vpack.c.b16 %v2029, %v2029
        %v2128 = vpack.c.b16 %v2030, %v2030
        %v2129 = vpack.c.b16 %v2031, %v2031
        %v2130 = vpack.c.b16 %v2032, %v2032
        %v2131 = vpack.c.b16 %v2033, %v2033
        %v2132 = vpack.c.b16 %v2034, %v2034
        %v2133 = vpack.c.b16 %v2035, %v2035
        %v2134 = vpack.c.b16 %v2036, %v2036
        %v2135 = vpack.c.b16 %v2037, %v2037
        %v2136 = vpack.c.b16 %v2038, %v2038
        %v2137 = vpack.c.b16 %v2039, %v2039
        %v2138 = vpack.c.b16 %v2040, %v2040
        %v2139 = vpack.c.b16 %v2041, %v2041
        %v2140 = vpack.c.b16 %v2042, %v2042
        %v2141 = vpack.c.b16 %v2043, %v2043
        %v2142 = vpack.c.b16 %v2044, %v2044
        %v2143 = vpack.c.b16 %v2045, %v2045
        %v2144 = vpack.c.b16 %v2046, %v2046
        %v2145 = vpack.c.b16 %v2047, %v2047
        %v2146 = vpack.c.b16 %v2048, %v2048
        %v3813 = vunpack.c.l.b16 %v334
        %v3814 = vunpack.c.h.b16 %v334
        %v3815 = vunpack.c.l.b16 %v335
        %v3816 = vunpack.c.h.b16 %v335
        %v3817 = vunpack.c.l.b16 %v336
        %v3818 = vunpack.c.h.b16 %v336
        %v3819 = vunpack.c.l.b16 %v337
        %v3820 = vunpack.c.h.b16 %v337
        %v3821 = vunpack.c.l.b16 %v338
        %v3822 = vunpack.c.h.b16 %v338
        %v3823 = vunpack.c.l.b16 %v339
        %v3824 = vunpack.c.h.b16 %v339
        %v3825 = vunpack.c.l.b16 %v340
        %v3826 = vunpack.c.h.b16 %v340
        %v3827 = vunpack.c.l.b16 %v341
        %v3828 = vunpack.c.h.b16 %v341
        %v3829 = vunpack.c.l.b16 %v342
        %v3830 = vunpack.c.h.b16 %v342
        %v3831 = vunpack.c.l.b16 %v343
        %v3832 = vunpack.c.h.b16 %v343
        %v3833 = vunpack.c.l.b16 %v344
        %v3834 = vunpack.c.h.b16 %v344
        %v3835 = vunpack.c.l.b16 %v345
        %v3836 = vunpack.c.h.b16 %v345
        %v3837 = vunpack.c.l.b16 %v346
        %v3838 = vunpack.c.h.b16 %v346
        %v3839 = vunpack.c.l.b16 %v347
        %v3840 = vunpack.c.h.b16 %v347
        %v3841 = vunpack.c.l.b16 %v348
        %v3842 = vunpack.c.h.b16 %v348
        %v3843 = vunpack.c.l.b16 %v349
        %v3844 = vunpack.c.h.b16 %v349
        %v3845 = vunpack.c.l.b16 %v350
        %v3846 = vunpack.c.h.b16 %v350
        %v3847 = vunpack.c.l.b16 %v351
        %v3848 = vunpack.c.h.b16 %v351
        %v3849 = vunpack.c.l.b16 %v352
        %v3850 = vunpack.c.h.b16 %v352
        %v3851 = vunpack.c.l.b16 %v353
        %v3852 = vunpack.c.h.b16 %v353
        %v3853 = vunpack.c.l.b16 %v354
        %v3854 = vunpack.c.h.b16 %v354
        %v3855 = vunpack.c.l.b16 %v355
        %v3856 = vunpack.c.h.b16 %v355
        %v3857 = vunpack.c.l.b16 %v356
        %v3858 = vunpack.c.h.b16 %v356
        %v3859 = vunpack.c.l.b16 %v357
        %v3860 = vunpack.c.h.b16 %v357
        %v3861 = vunpack.c.l.b16 %v358
        %v3862 = vunpack.c.h.b16 %v358
        %v3863 = vunpack.c.l.b16 %v359
        %v3864 = vunpack.c.h.b16 %v359
        %v3865 = vunpack.c.l.b16 %v360
        %v3866 = vunpack.c.h.b16 %v360
        %v3867 = vunpack.c.l.b16 %v361
        %v3868 = vunpack.c.h.b16 %v361
        %v3869 = vunpack.c.l.b16 %v362
        %v3870 = vunpack.c.h.b16 %v362
        %v3871 = vunpack.c.l.b16 %v363
        %v3872 = vunpack.c.h.b16 %v363
        %v3873 = vunpack.c.l.b16 %v364
        %v3874 = vunpack.c.h.b16 %v364
        %v3875 = vunpack.c.l.b16 %v365
        %v3876 = vunpack.c.h.b16 %v365
        %v3877 = vunpack.c.l.b16 %v366
        %v3878 = vunpack.c.h.b16 %v366
        %v3879 = vunpack.c.l.b16 %v367
        %v3880 = vunpack.c.h.b16 %v367
        %v3881 = vunpack.c.l.b16 %v368
        %v3882 = vunpack.c.h.b16 %v368
        %v3883 = vunpack.c.l.b16 %v369
        %v3884 = vunpack.c.h.b16 %v369
        %v3885 = vunpack.c.l.b16 %v370
        %v3886 = vunpack.c.h.b16 %v370
        %v3887 = vunpack.c.l.b16 %v371
        %v3888 = vunpack.c.h.b16 %v371
        %v3889 = vunpack.c.l.b16 %v372
        %v3890 = vunpack.c.h.b16 %v372
        %v3891 = vunpack.c.l.b16 %v373
        %v3892 = vunpack.c.h.b16 %v373
        %v3893 = vunpack.c.l.b16 %v374
        %v3894 = vunpack.c.h.b16 %v374
        %v3895 = vunpack.c.l.b16 %v375
        %v3896 = vunpack.c.h.b16 %v375
        %v3897 = vunpack.c.l.b16 %v376
        %v3898 = vunpack.c.h.b16 %v376
        %v3899 = vunpack.c.l.b16 %v377
        %v3900 = vunpack.c.h.b16 %v377
        %v3901 = vunpack.c.l.b16 %v378
        %v3902 = vunpack.c.h.b16 %v378
        %v3903 = vunpack.c.l.b16 %v379
        %v3904 = vunpack.c.h.b16 %v379
        %v3905 = vunpack.c.l.b16 %v380
        %v3906 = vunpack.c.h.b16 %v380
        %v3907 = vunpack.c.l.b16 %v381
        %v3908 = vunpack.c.h.b16 %v381
        %v3909 = vunpack.c.l.b16 %v382
        %v3910 = vunpack.c.h.b16 %v382
        %v3911 = vunpack.c.l.b16 %v383
        %v3912 = vunpack.c.h.b16 %v383
        %v3913 = vunpack.c.l.b16 %v384
        %v3914 = vunpack.c.h.b16 %v384
        %v3915 = vunpack.c.l.b16 %v385
        %v3916 = vunpack.c.h.b16 %v385
        %v3917 = vunpack.c.l.b16 %v386
        %v3918 = vunpack.c.h.b16 %v386
        %v3919 = vunpack.c.l.b16 %v387
        %v3920 = vunpack.c.h.b16 %v387
        %v3921 = vunpack.c.l.b16 %v388
        %v3922 = vunpack.c.h.b16 %v388
        %v3923 = vunpack.c.l.b16 %v389
        %v3924 = vunpack.c.h.b16 %v389
        %v3925 = vunpack.c.l.b16 %v390
        %v3926 = vunpack.c.h.b16 %v390
        %v3927 = vunpack.c.l.b16 %v391
        %v3928 = vunpack.c.h.b16 %v391
        %v3929 = vunpack.c.l.b16 %v392
        %v3930 = vunpack.c.h.b16 %v392
        %v3931 = vunpack.c.l.b16 %v393
        %v3932 = vunpack.c.h.b16 %v393
        %v3933 = vunpack.c.l.b16 %v394
        %v3934 = vunpack.c.h.b16 %v394
        %v3935 = vunpack.c.l.b16 %v395
        %v3936 = vunpack.c.h.b16 %v395
        %v3937 = vunpack.c.l.b16 %v396
        %v3938 = vunpack.c.h.b16 %v396
        %v3939 = vunpack.c.l.b16 %v397
        %v3940 = vunpack.c.h.b16 %v397
        %v3941 = vunpack.c.l.b16 %v398
        %v3942 = vunpack.c.h.b16 %v398
        %v3943 = vunpack.c.l.b16 %v399
        %v3944 = vunpack.c.h.b16 %v399
        %v3945 = vunpack.c.l.b16 %v400
        %v3946 = vunpack.c.h.b16 %v400
        %v3947 = vunpack.c.l.b16 %v401
        %v3948 = vunpack.c.h.b16 %v401
        %v3949 = vunpack.c.l.b16 %v402
        %v3950 = vunpack.c.h.b16 %v402
        %v3951 = vunpack.c.l.b16 %v403
        %v3952 = vunpack.c.h.b16 %v403
        %v3953 = vunpack.c.l.b16 %v404
        %v3954 = vunpack.c.h.b16 %v404
        %v3955 = vunpack.c.l.b16 %v405
        %v3956 = vunpack.c.h.b16 %v405
        %v3957 = vunpack.c.l.b16 %v406
        %v3958 = vunpack.c.h.b16 %v406
        %v3959 = vunpack.c.l.b16 %v407
        %v3960 = vunpack.c.h.b16 %v407
        %v3961 = vunpack.c.l.b16 %v408
        %v3962 = vunpack.c.h.b16 %v408
        %v3963 = vunpack.c.l.b16 %v409
        %v3964 = vunpack.c.h.b16 %v409
        %v3965 = vunpack.c.l.b16 %v410
        %v3966 = vunpack.c.h.b16 %v410
        %v3967 = vunpack.c.l.b16 %v411
        %v3968 = vunpack.c.h.b16 %v411
        %v3969 = vunpack.c.l.b16 %v412
        %v3970 = vunpack.c.h.b16 %v412
        %v3971 = vunpack.c.l.b16 %v413
        %v3972 = vunpack.c.h.b16 %v413
        %v3973 = vunpack.c.l.b16 %v414
        %v3974 = vunpack.c.h.b16 %v414
        %v3975 = vunpack.c.l.b16 %v415
        %v3976 = vunpack.c.h.b16 %v415
        %v3977 = vunpack.c.l.b16 %v416
        %v3978 = vunpack.c.h.b16 %v416
        %v3979 = vunpack.c.l.b16 %v417
        %v3980 = vunpack.c.h.b16 %v417
        %v3981 = vunpack.c.l.b16 %v418
        %v3982 = vunpack.c.h.b16 %v418
        %v3983 = vunpack.c.l.b16 %v419
        %v3984 = vunpack.c.h.b16 %v419
        %v3985 = vunpack.c.l.b16 %v420
        %v3986 = vunpack.c.h.b16 %v420
        %v3987 = vunpack.c.l.b16 %v421
        %v3988 = vunpack.c.h.b16 %v421
        %v3989 = vunpack.c.l.b16 %v422
        %v3990 = vunpack.c.h.b16 %v422
        %v3991 = vunpack.c.l.b16 %v423
        %v3992 = vunpack.c.h.b16 %v423
        %v3993 = vunpack.c.l.b16 %v424
        %v3994 = vunpack.c.h.b16 %v424
        %v3995 = vunpack.c.l.b16 %v425
        %v3996 = vunpack.c.h.b16 %v425
        %v3997 = vunpack.c.l.b16 %v426
        %v3998 = vunpack.c.h.b16 %v426
        %v3999 = vunpack.c.l.b16 %v427
        %v4000 = vunpack.c.h.b16 %v427
        %v4001 = vunpack.c.l.b16 %v428
        %v4002 = vunpack.c.h.b16 %v428
        %v4003 = vunpack.c.l.b16 %v429
        %v4004 = vunpack.c.h.b16 %v429
        %v4005 = vunpack.c.l.b16 %v430
        %v4006 = vunpack.c.h.b16 %v430
        %v4007 = vunpack.c.l.b16 %v431
        %v4008 = vunpack.c.h.b16 %v431
        %v4009 = vunpack.c.l.b16 %v432
        %v4010 = vunpack.c.h.b16 %v432
        %v4011 = vunpack.c.l.b16 %v433
        %v4012 = vunpack.c.h.b16 %v433
        %v4013 = vunpack.c.l.b16 %v434
        %v4014 = vunpack.c.h.b16 %v434
        %v4015 = vunpack.c.l.b16 %v435
        %v4016 = vunpack.c.h.b16 %v435
        %v4017 = vunpack.c.l.b16 %v436
        %v4018 = vunpack.c.h.b16 %v436
        %v4019 = vunpack.c.l.b16 %v437
        %v4020 = vunpack.c.h.b16 %v437
        %v4021 = vunpack.c.l.b16 %v438
        %v4022 = vunpack.c.h.b16 %v438
        %v4023 = vunpack.c.l.b16 %v439
        %v4024 = vunpack.c.h.b16 %v439
        %v4025 = vunpack.c.l.b16 %v440
        %v4026 = vunpack.c.h.b16 %v440
        %v4027 = vunpack.c.l.b16 %v441
        %v4028 = vunpack.c.h.b16 %v441
        %v4029 = vunpack.c.l.b16 %v442
        %v4030 = vunpack.c.h.b16 %v442
        %v4031 = vunpack.c.l.b16 %v443
        %v4032 = vunpack.c.h.b16 %v443
        %v4033 = vunpack.c.l.b16 %v444
        %v4034 = vunpack.c.h.b16 %v444
        %v4035 = vunpack.c.l.b16 %v445
        %v4036 = vunpack.c.h.b16 %v445
        %v4037 = vunpack.c.l.b16 %v446
        %v4038 = vunpack.c.h.b16 %v446
        %v4039 = vunpack.c.l.b16 %v447
        %v4040 = vunpack.c.h.b16 %v447
        %v4041 = vunpack.c.l.b16 %v448
        %v4042 = vunpack.c.h.b16 %v448
        %v4043 = vunpack.c.l.b16 %v449
        %v4044 = vunpack.c.h.b16 %v449
        %v4045 = vunpack.c.l.b16 %v450
        %v4046 = vunpack.c.h.b16 %v450
        %v4047 = vunpack.c.l.b16 %v451
        %v4048 = vunpack.c.h.b16 %v451
        %v4049 = vunpack.c.l.b16 %v452
        %v4050 = vunpack.c.h.b16 %v452
        %v4051 = vunpack.c.l.b16 %v453
        %v4052 = vunpack.c.h.b16 %v453
        %v4053 = vunpack.c.l.b16 %v454
        %v4054 = vunpack.c.h.b16 %v454
        %v4055 = vunpack.c.l.b16 %v455
        %v4056 = vunpack.c.h.b16 %v455
        %v4057 = vunpack.c.l.b16 %v456
        %v4058 = vunpack.c.h.b16 %v456
        %v4059 = vunpack.c.l.b16 %v457
        %v4060 = vunpack.c.h.b16 %v457
        %v4061 = vunpack.c.l.b16 %v458
        %v4062 = vunpack.c.h.b16 %v458
        %v4063 = vunpack.c.l.b16 %v459
        %v4064 = vunpack.c.h.b16 %v459
        %v4065 = vunpack.c.l.b16 %v460
        %v4066 = vunpack.c.h.b16 %v460
        %v4067 = vunpack.c.l.b16 %v461
        %v4068 = vunpack.c.h.b16 %v461
        %v4069 = vunpack.c.l.b16 %v462
        %v4070 = vunpack.c.h.b16 %v462
        %v4071 = vunpack.c.l.b16 %v463
        %v4072 = vunpack.c.h.b16 %v463
        %v4073 = vunpack.c.l.b16 %v464
        %v4074 = vunpack.c.h.b16 %v464
        %v4075 = vunpack.c.l.b16 %v465
        %v4076 = vunpack.c.h.b16 %v465
        %v4077 = vunpack.c.l.b16 %v466
        %v4078 = vunpack.c.h.b16 %v466
        %v4079 = vunpack.c.l.b16 %v467
        %v4080 = vunpack.c.h.b16 %v467
        %v4081 = vunpack.c.l.b16 %v468
        %v4082 = vunpack.c.h.b16 %v468
        %v4083 = vunpack.c.l.b16 %v469
        %v4084 = vunpack.c.h.b16 %v469
        %v4085 = vunpack.c.l.b16 %v470
        %v4086 = vunpack.c.h.b16 %v470
        %v4087 = vunpack.c.l.b16 %v471
        %v4088 = vunpack.c.h.b16 %v471
        %v4089 = vunpack.c.l.b16 %v472
        %v4090 = vunpack.c.h.b16 %v472
        %v4091 = vunpack.c.l.b16 %v473
        %v4092 = vunpack.c.h.b16 %v473
        %v4093 = vunpack.c.l.b16 %v474
        %v4094 = vunpack.c.h.b16 %v474
        %v4095 = vunpack.c.l.b16 %v475
        %v4096 = vunpack.c.h.b16 %v475
        %v4097 = vunpack.c.l.b16 %v476
        %v4098 = vunpack.c.h.b16 %v476
        %v4099 = vunpack.c.l.b16 %v477
        %v4100 = vunpack.c.h.b16 %v477
        %v4101 = vunpack.c.l.b16 %v478
        %v4102 = vunpack.c.h.b16 %v478
        %v4103 = vunpack.c.l.b16 %v479
        %v4104 = vunpack.c.h.b16 %v479
        %v4105 = vunpack.c.l.b16 %v480
        %v4106 = vunpack.c.h.b16 %v480
        %v4107 = vunpack.c.l.b16 %v481
        %v4108 = vunpack.c.h.b16 %v481
        %v4109 = vunpack.c.l.b16 %v482
        %v4110 = vunpack.c.h.b16 %v482
        %v4111 = vunpack.c.l.b16 %v483
        %v4112 = vunpack.c.h.b16 %v483
        %v4113 = vunpack.c.l.b16 %v484
        %v4114 = vunpack.c.h.b16 %v484
        %v4115 = vunpack.c.l.b16 %v485
        %v4116 = vunpack.c.h.b16 %v485
        %v4117 = vunpack.c.l.b16 %v486
        %v4118 = vunpack.c.h.b16 %v486
        %v4119 = vunpack.c.l.b16 %v487
        %v4120 = vunpack.c.h.b16 %v487
        %v4121 = vunpack.c.l.b16 %v488
        %v4122 = vunpack.c.h.b16 %v488
        %v4123 = vunpack.c.l.b16 %v489
        %v4124 = vunpack.c.h.b16 %v489
        %v4125 = vunpack.c.l.b16 %v490
        %v4126 = vunpack.c.h.b16 %v490
        %v4127 = vunpack.c.l.b16 %v491
        %v4128 = vunpack.c.h.b16 %v491
        %v4129 = vunpack.c.l.b16 %v492
        %v4130 = vunpack.c.h.b16 %v492
        %v4131 = vunpack.c.l.b16 %v493
        %v4132 = vunpack.c.h.b16 %v493
        %v4133 = vunpack.c.l.b16 %v494
        %v4134 = vunpack.c.h.b16 %v494
        %v4135 = vunpack.c.l.b16 %v495
        %v4136 = vunpack.c.h.b16 %v495
        %v4137 = vunpack.c.l.b16 %v496
        %v4138 = vunpack.c.h.b16 %v496
        %v4139 = vunpack.c.l.b16 %v497
        %v4140 = vunpack.c.h.b16 %v497
        %v4141 = vunpack.c.l.b16 %v498
        %v4142 = vunpack.c.h.b16 %v498
        %v4143 = vunpack.c.l.b16 %v499
        %v4144 = vunpack.c.h.b16 %v499
        %v4145 = vunpack.c.l.b16 %v500
        %v4146 = vunpack.c.h.b16 %v500
        %v4147 = vunpack.c.l.b16 %v501
        %v4148 = vunpack.c.h.b16 %v501
        %v4149 = vunpack.c.l.b16 %v502
        %v4150 = vunpack.c.h.b16 %v502
        %v4151 = vunpack.c.l.b16 %v503
        %v4152 = vunpack.c.h.b16 %v503
        %v4153 = vunpack.c.l.b16 %v504
        %v4154 = vunpack.c.h.b16 %v504
        %v4155 = vunpack.c.l.b16 %v505
        %v4156 = vunpack.c.h.b16 %v505
        %v4157 = vunpack.c.l.b16 %v506
        %v4158 = vunpack.c.h.b16 %v506
        %v4159 = vunpack.c.l.b16 %v507
        %v4160 = vunpack.c.h.b16 %v507
        %v4161 = vunpack.c.l.b16 %v508
        %v4162 = vunpack.c.h.b16 %v508
        %v4163 = vunpack.c.l.b16 %v509
        %v4164 = vunpack.c.h.b16 %v509
        %v4165 = vunpack.c.l.b16 %v510
        %v4166 = vunpack.c.h.b16 %v510
        %v4167 = vunpack.c.l.b16 %v511
        %v4168 = vunpack.c.h.b16 %v511
        %v4169 = vunpack.c.l.b16 %v512
        %v4170 = vunpack.c.h.b16 %v512
        %v4171 = vunpack.c.l.b16 %v513
        %v4172 = vunpack.c.h.b16 %v513
        %v4173 = vunpack.c.l.b16 %v514
        %v4174 = vunpack.c.h.b16 %v514
        %v4175 = vunpack.c.l.b16 %v515
        %v4176 = vunpack.c.h.b16 %v515
        %v4177 = vunpack.c.l.b16 %v516
        %v4178 = vunpack.c.h.b16 %v516
        %v4179 = vunpack.c.l.b16 %v517
        %v4180 = vunpack.c.h.b16 %v517
        %v4181 = vunpack.c.l.b16 %v518
        %v4182 = vunpack.c.h.b16 %v518
        %v4183 = vunpack.c.l.b16 %v519
        %v4184 = vunpack.c.h.b16 %v519
        %v4185 = vunpack.c.l.b16 %v520
        %v4186 = vunpack.c.h.b16 %v520
        %v4187 = vunpack.c.l.b16 %v521
        %v4188 = vunpack.c.h.b16 %v521
        %v4189 = vunpack.c.l.b16 %v522
        %v4190 = vunpack.c.h.b16 %v522
        %v4191 = vunpack.c.l.b16 %v523
        %v4192 = vunpack.c.h.b16 %v523
        %v4193 = vunpack.c.l.b16 %v524
        %v4194 = vunpack.c.h.b16 %v524
        %v4195 = vunpack.c.l.b16 %v525
        %v4196 = vunpack.c.h.b16 %v525
        %v4197 = vunpack.c.l.b16 %v526
        %v4198 = vunpack.c.h.b16 %v526
        %v4199 = vunpack.c.l.b16 %v527
        %v4200 = vunpack.c.h.b16 %v527
        %v4201 = vunpack.c.l.b16 %v528
        %v4202 = vunpack.c.h.b16 %v528
        %v4203 = vunpack.c.l.b16 %v529
        %v4204 = vunpack.c.h.b16 %v529
        %v4205 = vunpack.c.l.b16 %v530
        %v4206 = vunpack.c.h.b16 %v530
        %v4207 = vunpack.c.l.b16 %v531
        %v4208 = vunpack.c.h.b16 %v531
        %v4209 = vunpack.c.l.b16 %v532
        %v4210 = vunpack.c.h.b16 %v532
        %v4211 = vunpack.c.l.b16 %v533
        %v4212 = vunpack.c.h.b16 %v533
        %v4213 = vunpack.c.l.b16 %v534
        %v4214 = vunpack.c.h.b16 %v534
        %v4215 = vunpack.c.l.b16 %v535
        %v4216 = vunpack.c.h.b16 %v535
        %v4217 = vunpack.c.l.b16 %v536
        %v4218 = vunpack.c.h.b16 %v536
        %v4219 = vunpack.c.l.b16 %v537
        %v4220 = vunpack.c.h.b16 %v537
        %v4221 = vunpack.c.l.b16 %v538
        %v4222 = vunpack.c.h.b16 %v538
        %v4223 = vunpack.c.l.b16 %v539
        %v4224 = vunpack.c.h.b16 %v539
        %v4225 = vunpack.c.l.b16 %v540
        %v4226 = vunpack.c.h.b16 %v540
        %v4227 = vunpack.c.l.b16 %v541
        %v4228 = vunpack.c.h.b16 %v541
        %v4229 = vunpack.c.l.b16 %v542
        %v4230 = vunpack.c.h.b16 %v542
        %v4231 = vunpack.c.l.b16 %v543
        %v4232 = vunpack.c.h.b16 %v543
        %v4233 = vunpack.c.l.b16 %v544
        %v4234 = vunpack.c.h.b16 %v544
        %v4235 = vunpack.c.l.b16 %v545
        %v4236 = vunpack.c.h.b16 %v545
        %v4237 = vunpack.c.l.b16 %v546
        %v4238 = vunpack.c.h.b16 %v546
        %v4239 = vunpack.c.l.b16 %v547
        %v4240 = vunpack.c.h.b16 %v547
        %v4241 = vunpack.c.l.b16 %v548
        %v4242 = vunpack.c.h.b16 %v548
        %v4243 = vunpack.c.l.b16 %v549
        %v4244 = vunpack.c.h.b16 %v549
        %v4245 = vunpack.c.l.b16 %v550
        %v4246 = vunpack.c.h.b16 %v550
        %v4247 = vunpack.c.l.b16 %v551
        %v4248 = vunpack.c.h.b16 %v551
        %v4249 = vunpack.c.l.b16 %v552
        %v4250 = vunpack.c.h.b16 %v552
        %v4251 = vunpack.c.l.b16 %v553
        %v4252 = vunpack.c.h.b16 %v553
        %v4253 = vunpack.c.l.b16 %v554
        %v4254 = vunpack.c.h.b16 %v554
        %v4255 = vunpack.c.l.b16 %v555
        %v4256 = vunpack.c.h.b16 %v555
        %v4257 = vunpack.c.l.b16 %v556
        %v4258 = vunpack.c.h.b16 %v556
        %v4259 = vunpack.c.l.b16 %v557
        %v4260 = vunpack.c.h.b16 %v557
        %v4261 = vunpack.c.l.b16 %v558
        %v4262 = vunpack.c.h.b16 %v558
        %v4263 = vunpack.c.l.b16 %v559
        %v4264 = vunpack.c.h.b16 %v559
        %v4265 = vunpack.c.l.b16 %v560
        %v4266 = vunpack.c.h.b16 %v560
        %v4267 = vunpack.c.l.b16 %v561
        %v4268 = vunpack.c.h.b16 %v561
        %v4269 = vunpack.c.l.b16 %v562
        %v4270 = vunpack.c.h.b16 %v562
        %v4271 = vunpack.c.l.b16 %v563
        %v4272 = vunpack.c.h.b16 %v563
        %v4273 = vunpack.c.l.b16 %v564
        %v4274 = vunpack.c.h.b16 %v564
        %v4275 = vunpack.c.l.b16 %v565
        %v4276 = vunpack.c.h.b16 %v565
        %v4277 = vunpack.c.l.b16 %v566
        %v4278 = vunpack.c.h.b16 %v566
        %v4279 = vunpack.c.l.b16 %v567
        %v4280 = vunpack.c.h.b16 %v567
        %v4281 = vunpack.c.l.b16 %v568
        %v4282 = vunpack.c.h.b16 %v568
        %v4283 = vunpack.c.l.b16 %v569
        %v4284 = vunpack.c.h.b16 %v569
        %v4285 = vunpack.c.l.b16 %v570
        %v4286 = vunpack.c.h.b16 %v570
        %v4287 = vunpack.c.l.b16 %v571
        %v4288 = vunpack.c.h.b16 %v571
        %v4289 = vunpack.c.l.b16 %v572
        %v4290 = vunpack.c.h.b16 %v572
        %v4291 = vunpack.c.l.b16 %v573
        %v4292 = vunpack.c.h.b16 %v573
        %v4293 = vunpack.c.l.b16 %v574
        %v4294 = vunpack.c.h.b16 %v574
        %v4295 = vunpack.c.l.b16 %v575
        %v4296 = vunpack.c.h.b16 %v575
        %v4297 = vunpack.c.l.b16 %v576
        %v4298 = vunpack.c.h.b16 %v576
        %v4299 = vunpack.c.l.b16 %v577
        %v4300 = vunpack.c.h.b16 %v577
        %v4301 = vunpack.c.l.b16 %v578
        %v4302 = vunpack.c.h.b16 %v578
        %v4303 = vunpack.c.l.b16 %v579
        %v4304 = vunpack.c.h.b16 %v579
        %v4305 = vunpack.c.l.b16 %v580
        %v4306 = vunpack.c.h.b16 %v580
        %v4307 = vunpack.c.l.b16 %v581
        %v4308 = vunpack.c.h.b16 %v581
        %v4309 = vunpack.c.l.b16 %v582
        %v4310 = vunpack.c.h.b16 %v582
        %v4311 = vunpack.c.l.b16 %v583
        %v4312 = vunpack.c.h.b16 %v583
        %v4313 = vunpack.c.l.b16 %v584
        %v4314 = vunpack.c.h.b16 %v584
        %v4315 = vunpack.c.l.b16 %v585
        %v4316 = vunpack.c.h.b16 %v585
        %v4317 = vunpack.c.l.b16 %v586
        %v4318 = vunpack.c.h.b16 %v586
        %v4319 = vunpack.c.l.b16 %v587
        %v4320 = vunpack.c.h.b16 %v587
        %v4321 = vunpack.c.l.b16 %v588
        %v4322 = vunpack.c.h.b16 %v588
        %v4323 = vunpack.c.l.b16 %v589
        %v4324 = vunpack.c.h.b16 %v589
        %v4325 = vunpack.c.l.b16 %v590
        %v4326 = vunpack.c.h.b16 %v590
        %v4327 = vunpack.c.l.b16 %v591
        %v4328 = vunpack.c.h.b16 %v591
        %v4329 = vunpack.c.l.b16 %v592
        %v4330 = vunpack.c.h.b16 %v592
        %v4331 = vunpack.c.l.b16 %v593
        %v4332 = vunpack.c.h.b16 %v593
        %v4333 = vunpack.c.l.b16 %v594
        %v4334 = vunpack.c.h.b16 %v594
        %v4335 = vunpack.c.l.b16 %v595
        %v4336 = vunpack.c.h.b16 %v595
        %v4337 = vunpack.c.l.b16 %v596
        %v4338 = vunpack.c.h.b16 %v596
        %v4339 = vunpack.c.l.b16 %v597
        %v4340 = vunpack.c.h.b16 %v597
        %v4341 = vunpack.c.l.b16 %v598
        %v4342 = vunpack.c.h.b16 %v598
        %v4343 = vunpack.c.l.b16 %v599
        %v4344 = vunpack.c.h.b16 %v599
        %v4345 = vunpack.c.l.b16 %v600
        %v4346 = vunpack.c.h.b16 %v600
        %v4347 = vunpack.c.l.b16 %v601
        %v4348 = vunpack.c.h.b16 %v601
        %v4349 = vunpack.c.l.b16 %v602
        %v4350 = vunpack.c.h.b16 %v602
        %v4351 = vunpack.c.l.b16 %v603
        %v4352 = vunpack.c.h.b16 %v603
        %v4353 = vunpack.c.l.b16 %v604
        %v4354 = vunpack.c.h.b16 %v604
        %v4355 = vunpack.c.l.b16 %v605
        %v4356 = vunpack.c.h.b16 %v605
        %v4357 = vunpack.c.l.b16 %v606
        %v4358 = vunpack.c.h.b16 %v606
        %v4359 = vunpack.c.l.b16 %v607
        %v4360 = vunpack.c.h.b16 %v607
        %v4361 = vunpack.c.l.b16 %v608
        %v4362 = vunpack.c.h.b16 %v608
        %v4363 = vunpack.c.l.b16 %v609
        %v4364 = vunpack.c.h.b16 %v609
        %v4365 = vunpack.c.l.b16 %v610
        %v4366 = vunpack.c.h.b16 %v610
        %v4367 = vunpack.c.l.b16 %v611
        %v4368 = vunpack.c.h.b16 %v611
        %v4369 = vunpack.c.l.b16 %v612
        %v4370 = vunpack.c.h.b16 %v612
        %v4371 = vunpack.c.l.b16 %v613
        %v4372 = vunpack.c.h.b16 %v613
        %v4373 = vunpack.c.l.b16 %v614
        %v4374 = vunpack.c.h.b16 %v614
        %v4375 = vunpack.c.l.b16 %v615
        %v4376 = vunpack.c.h.b16 %v615
        %v4377 = vunpack.c.l.b16 %v616
        %v4378 = vunpack.c.h.b16 %v616
        %v4379 = vunpack.c.l.b16 %v617
        %v4380 = vunpack.c.h.b16 %v617
        %v4381 = vunpack.c.l.b16 %v618
        %v4382 = vunpack.c.h.b16 %v618
        %v4383 = vunpack.c.l.b16 %v619
        %v4384 = vunpack.c.h.b16 %v619
        %v4385 = vunpack.c.l.b16 %v620
        %v4386 = vunpack.c.h.b16 %v620
        %v4387 = vunpack.c.l.b16 %v621
        %v4388 = vunpack.c.h.b16 %v621
        %v4389 = vunpack.c.l.b16 %v622
        %v4390 = vunpack.c.h.b16 %v622
        %v4391 = vunpack.c.l.b16 %v623
        %v4392 = vunpack.c.h.b16 %v623
        %v4393 = vunpack.c.l.b16 %v624
        %v4394 = vunpack.c.h.b16 %v624
        %v4395 = vunpack.c.l.b16 %v625
        %v4396 = vunpack.c.h.b16 %v625
        %v4397 = vunpack.c.l.b16 %v626
        %v4398 = vunpack.c.h.b16 %v626
        %v4399 = vunpack.c.l.b16 %v627
        %v4400 = vunpack.c.h.b16 %v627
        %v4401 = vunpack.c.l.b16 %v628
        %v4402 = vunpack.c.h.b16 %v628
        %v4403 = vunpack.c.l.b16 %v629
        %v4404 = vunpack.c.h.b16 %v629
        %v4405 = vunpack.c.l.b16 %v630
        %v4406 = vunpack.c.h.b16 %v630
        %v4407 = vunpack.c.l.b16 %v631
        %v4408 = vunpack.c.h.b16 %v631
        %v4409 = vunpack.c.l.b16 %v632
        %v4410 = vunpack.c.h.b16 %v632
        %v4411 = vunpack.c.l.b16 %v633
        %v4412 = vunpack.c.h.b16 %v633
        %v4413 = vunpack.c.l.b16 %v634
        %v4414 = vunpack.c.h.b16 %v634
        %v4415 = vunpack.c.l.b16 %v635
        %v4416 = vunpack.c.h.b16 %v635
        %v4417 = vunpack.c.l.b16 %v636
        %v4418 = vunpack.c.h.b16 %v636
        %v4419 = vunpack.c.l.b16 %v637
        %v4420 = vunpack.c.h.b16 %v637
        %v4421 = vunpack.c.l.b16 %v638
        %v4422 = vunpack.c.h.b16 %v638
        %v4423 = vunpack.c.l.b16 %v639
        %v4424 = vunpack.c.h.b16 %v639
        %v4425 = vunpack.c.l.b16 %v640
        %v4426 = vunpack.c.h.b16 %v640
        %v4427 = vunpack.c.l.b16 %v641
        %v4428 = vunpack.c.h.b16 %v641
        %v4429 = vunpack.c.l.b16 %v642
        %v4430 = vunpack.c.h.b16 %v642
        %v4431 = vunpack.c.l.b16 %v643
        %v4432 = vunpack.c.h.b16 %v643
        %v4433 = vunpack.c.l.b16 %v644
        %v4434 = vunpack.c.h.b16 %v644
        %v4435 = vunpack.c.l.b16 %v645
        %v4436 = vunpack.c.h.b16 %v645
        %v4437 = vunpack.c.l.b16 %v646
        %v4438 = vunpack.c.h.b16 %v646
        %v4439 = vunpack.c.l.b16 %v647
        %v4440 = vunpack.c.h.b16 %v647
        %v4441 = vunpack.c.l.b16 %v648
        %v4442 = vunpack.c.h.b16 %v648
        %v4443 = vunpack.c.l.b16 %v649
        %v4444 = vunpack.c.h.b16 %v649
        %v4445 = vunpack.c.l.b16 %v650
        %v4446 = vunpack.c.h.b16 %v650
        %v4447 = vunpack.c.l.b16 %v651
        %v4448 = vunpack.c.h.b16 %v651
        %v4449 = vunpack.c.l.b16 %v652
        %v4450 = vunpack.c.h.b16 %v652
        %v4451 = vunpack.c.l.b16 %v653
        %v4452 = vunpack.c.h.b16 %v653
        %v4453 = vunpack.c.l.b16 %v654
        %v4454 = vunpack.c.h.b16 %v654
        %v4455 = vunpack.c.l.b16 %v655
        %v4456 = vunpack.c.h.b16 %v655
        %v4457 = vunpack.c.l.b16 %v656
        %v4458 = vunpack.c.h.b16 %v656
        %v4459 = vunpack.c.l.b16 %v657
        %v4460 = vunpack.c.h.b16 %v657
        %v4461 = vunpack.c.l.b16 %v658
        %v4462 = vunpack.c.h.b16 %v658
        %v4463 = vunpack.c.l.b16 %v659
        %v4464 = vunpack.c.h.b16 %v659
        %v4465 = vunpack.c.l.b16 %v660
        %v4466 = vunpack.c.h.b16 %v660
        %v4467 = vunpack.c.l.b16 %v661
        %v4468 = vunpack.c.h.b16 %v661
        %v4469 = vunpack.c.l.b16 %v662
        %v4470 = vunpack.c.h.b16 %v662
        %v4471 = vunpack.c.l.b16 %v663
        %v4472 = vunpack.c.h.b16 %v663
        %v4473 = vunpack.c.l.b16 %v664
        %v4474 = vunpack.c.h.b16 %v664
        %v4475 = vunpack.c.l.b16 %v665
        %v4476 = vunpack.c.h.b16 %v665
        %v4477 = vunpack.c.l.b16 %v666
        %v4478 = vunpack.c.h.b16 %v666
        %v4479 = vunpack.c.l.b16 %v667
        %v4480 = vunpack.c.h.b16 %v667
        %v4481 = vunpack.c.l.b16 %v668
        %v4482 = vunpack.c.h.b16 %v668
        %v4483 = vunpack.c.l.b16 %v669
        %v4484 = vunpack.c.h.b16 %v669
        %v4485 = vunpack.c.l.b16 %v670
        %v4486 = vunpack.c.h.b16 %v670
        %v4487 = vunpack.c.l.b16 %v671
        %v4488 = vunpack.c.h.b16 %v671
        %v4489 = vunpack.c.l.b16 %v672
        %v4490 = vunpack.c.h.b16 %v672
        %v4491 = vunpack.c.l.b16 %v673
        %v4492 = vunpack.c.h.b16 %v673
        %v4493 = vunpack.c.l.b16 %v674
        %v4494 = vunpack.c.h.b16 %v674
        %v4495 = vunpack.c.l.b16 %v675
        %v4496 = vunpack.c.h.b16 %v675
        %v4497 = vunpack.c.l.b16 %v676
        %v4498 = vunpack.c.h.b16 %v676
        %v4499 = vunpack.c.l.b16 %v677
        %v4500 = vunpack.c.h.b16 %v677
        %v4501 = vunpack.c.l.b16 %v678
        %v4502 = vunpack.c.h.b16 %v678
        %v4503 = vunpack.c.l.b16 %v679
        %v4504 = vunpack.c.h.b16 %v679
        %v4505 = vunpack.c.l.b16 %v680
        %v4506 = vunpack.c.h.b16 %v680
        %v4507 = vunpack.c.l.b16 %v681
        %v4508 = vunpack.c.h.b16 %v681
        %v4509 = vunpack.c.l.b16 %v682
        %v4510 = vunpack.c.h.b16 %v682
        %v4511 = vunpack.c.l.b16 %v683
        %v4512 = vunpack.c.h.b16 %v683
        %v4513 = vunpack.c.l.b16 %v684
        %v4514 = vunpack.c.h.b16 %v684
        %v4515 = vunpack.c.l.b16 %v685
        %v4516 = vunpack.c.h.b16 %v685
        %v4517 = vunpack.c.l.b16 %v686
        %v4518 = vunpack.c.h.b16 %v686
        %v4519 = vunpack.c.l.b16 %v687
        %v4520 = vunpack.c.h.b16 %v687
        %v4521 = vunpack.c.l.b16 %v688
        %v4522 = vunpack.c.h.b16 %v688
        %v4523 = vunpack.c.l.b16 %v689
        %v4524 = vunpack.c.h.b16 %v689
        %v4525 = vunpack.c.l.b16 %v690
        %v4526 = vunpack.c.h.b16 %v690
        %v4527 = vunpack.c.l.b16 %v691
        %v4528 = vunpack.c.h.b16 %v691
        %v4529 = vunpack.c.l.b16 %v692
        %v4530 = vunpack.c.h.b16 %v692
        %v4531 = vunpack.c.l.b16 %v693
        %v4532 = vunpack.c.h.b16 %v693
        %v4533 = vunpack.c.l.b16 %v694
        %v4534 = vunpack.c.h.b16 %v694
        %v4535 = vunpack.c.l.b16 %v695
        %v4536 = vunpack.c.h.b16 %v695
        %v4537 = vunpack.c.l.b16 %v696
        %v4538 = vunpack.c.h.b16 %v696
        %v4539 = vunpack.c.l.b16 %v697
        %v4540 = vunpack.c.h.b16 %v697
        %v4541 = vunpack.c.l.b16 %v698
        %v4542 = vunpack.c.h.b16 %v698
        %v4543 = vunpack.c.l.b16 %v699
        %v4544 = vunpack.c.h.b16 %v699
        %v4545 = vunpack.c.l.b16 %v700
        %v4546 = vunpack.c.h.b16 %v700
        %v4547 = vunpack.c.l.b16 %v701
        %v4548 = vunpack.c.h.b16 %v701
        %v4549 = vunpack.c.l.b16 %v702
        %v4550 = vunpack.c.h.b16 %v702
        %v4551 = vunpack.c.l.b16 %v703
        %v4552 = vunpack.c.h.b16 %v703
        %v4553 = vunpack.c.l.b16 %v704
        %v4554 = vunpack.c.h.b16 %v704
        %v4555 = vunpack.c.l.b16 %v705
        %v4556 = vunpack.c.h.b16 %v705
        %v4557 = vunpack.c.l.b16 %v706
        %v4558 = vunpack.c.h.b16 %v706
        %v4559 = vunpack.c.l.b16 %v707
        %v4560 = vunpack.c.h.b16 %v707
        %v4561 = vunpack.c.l.b16 %v708
        %v4562 = vunpack.c.h.b16 %v708
        %v4563 = vunpack.c.l.b16 %v709
        %v4564 = vunpack.c.h.b16 %v709
        %v4565 = vunpack.c.l.b16 %v710
        %v4566 = vunpack.c.h.b16 %v710
        %v4567 = vunpack.c.l.b16 %v711
        %v4568 = vunpack.c.h.b16 %v711
        %v4569 = vunpack.c.l.b16 %v712
        %v4570 = vunpack.c.h.b16 %v712
        %v4571 = vunpack.c.l.b16 %v713
        %v4572 = vunpack.c.h.b16 %v713
        %v4573 = vunpack.c.l.b16 %v714
        %v4574 = vunpack.c.h.b16 %v714
        %v4575 = vunpack.c.l.b16 %v715
        %v4576 = vunpack.c.h.b16 %v715
        %v4577 = vunpack.c.l.b16 %v716
        %v4578 = vunpack.c.h.b16 %v716
        %v4579 = vunpack.c.l.b16 %v717
        %v4580 = vunpack.c.h.b16 %v717
        %v4581 = vunpack.c.l.b16 %v718
        %v4582 = vunpack.c.h.b16 %v718
        %v4583 = vunpack.c.l.b16 %v719
        %v4584 = vunpack.c.h.b16 %v719
        %v4585 = vunpack.c.l.b16 %v720
        %v4586 = vunpack.c.h.b16 %v720
        %v4587 = vunpack.c.l.b16 %v721
        %v4588 = vunpack.c.h.b16 %v721
        %v4589 = vunpack.c.l.b16 %v722
        %v4590 = vunpack.c.h.b16 %v722
        %v4591 = vunpack.c.l.b16 %v723
        %v4592 = vunpack.c.h.b16 %v723
        %v4593 = vunpack.c.l.b16 %v724
        %v4594 = vunpack.c.h.b16 %v724
        %v4595 = vunpack.c.l.b16 %v725
        %v4596 = vunpack.c.h.b16 %v725
        %v4597 = vunpack.c.l.b16 %v726
        %v4598 = vunpack.c.h.b16 %v726
        %v4599 = vunpack.c.l.b16 %v727
        %v4600 = vunpack.c.h.b16 %v727
        %v4601 = vunpack.c.l.b16 %v728
        %v4602 = vunpack.c.h.b16 %v728
        %v4603 = vunpack.c.l.b16 %v729
        %v4604 = vunpack.c.h.b16 %v729
        %v4605 = vunpack.c.l.b16 %v730
        %v4606 = vunpack.c.h.b16 %v730
        %v4607 = vunpack.c.l.b16 %v731
        %v4608 = vunpack.c.h.b16 %v731
        %v4609 = vunpack.c.l.b16 %v732
        %v4610 = vunpack.c.h.b16 %v732
        %v4611 = vunpack.c.l.b16 %v733
        %v4612 = vunpack.c.h.b16 %v733
        %v4613 = vunpack.c.l.b16 %v734
        %v4614 = vunpack.c.h.b16 %v734
        %v4615 = vunpack.c.l.b16 %v735
        %v4616 = vunpack.c.h.b16 %v735
        %v4617 = vunpack.c.l.b16 %v736
        %v4618 = vunpack.c.h.b16 %v736
        %v4619 = vunpack.c.l.b16 %v737
        %v4620 = vunpack.c.h.b16 %v737
        %v4621 = vunpack.c.l.b16 %v738
        %v4622 = vunpack.c.h.b16 %v738
        %v4623 = vunpack.c.l.b16 %v739
        %v4624 = vunpack.c.h.b16 %v739
        %v4625 = vunpack.c.l.b16 %v740
        %v4626 = vunpack.c.h.b16 %v740
        %v4627 = vunpack.c.l.b16 %v741
        %v4628 = vunpack.c.h.b16 %v741
        %v4629 = vunpack.c.l.b16 %v742
        %v4630 = vunpack.c.h.b16 %v742
        %v4631 = vunpack.c.l.b16 %v743
        %v4632 = vunpack.c.h.b16 %v743
        %v4633 = vunpack.c.l.b16 %v744
        %v4634 = vunpack.c.h.b16 %v744
        %v4635 = vunpack.c.l.b16 %v745
        %v4636 = vunpack.c.h.b16 %v745
        %v4637 = vunpack.c.l.b16 %v746
        %v4638 = vunpack.c.h.b16 %v746
        %v4639 = vunpack.c.l.b16 %v747
        %v4640 = vunpack.c.h.b16 %v747
        %v4641 = vunpack.c.l.b16 %v748
        %v4642 = vunpack.c.h.b16 %v748
        %v4643 = vunpack.c.l.b16 %v749
        %v4644 = vunpack.c.h.b16 %v749
        %v4645 = vunpack.c.l.b16 %v750
        %v4646 = vunpack.c.h.b16 %v750
        %v4647 = vunpack.c.l.b16 %v751
        %v4648 = vunpack.c.h.b16 %v751
        %v4649 = vunpack.c.l.b16 %v752
        %v4650 = vunpack.c.h.b16 %v752
        %v4651 = vunpack.c.l.b16 %v753
        %v4652 = vunpack.c.h.b16 %v753
        %v4653 = vunpack.c.l.b16 %v754
        %v4654 = vunpack.c.h.b16 %v754
        %v4655 = vunpack.c.l.b16 %v755
        %v4656 = vunpack.c.h.b16 %v755
        %v4657 = vunpack.c.l.b16 %v756
        %v4658 = vunpack.c.h.b16 %v756
        %v4659 = vunpack.c.l.b16 %v757
        %v4660 = vunpack.c.h.b16 %v757
        %v4661 = vunpack.c.l.b16 %v758
        %v4662 = vunpack.c.h.b16 %v758
        %v4663 = vunpack.c.l.b16 %v759
        %v4664 = vunpack.c.h.b16 %v759
        %v4665 = vunpack.c.l.b16 %v760
        %v4666 = vunpack.c.h.b16 %v760
        %v4667 = vunpack.c.l.b16 %v761
        %v4668 = vunpack.c.h.b16 %v761
        %v4669 = vunpack.c.l.b16 %v762
        %v4670 = vunpack.c.h.b16 %v762
        %v4671 = vunpack.c.l.b16 %v763
        %v4672 = vunpack.c.h.b16 %v763
        %v4673 = vunpack.c.l.b16 %v764
        %v4674 = vunpack.c.h.b16 %v764
        %v4675 = vunpack.c.l.b16 %v765
        %v4676 = vunpack.c.h.b16 %v765
        %v4677 = vunpack.c.l.b16 %v766
        %v4678 = vunpack.c.h.b16 %v766
        %v4679 = vunpack.c.l.b16 %v767
        %v4680 = vunpack.c.h.b16 %v767
        %v4681 = vunpack.c.l.b16 %v768
        %v4682 = vunpack.c.h.b16 %v768
        %v4683 = vunpack.c.l.b16 %v769
        %v4684 = vunpack.c.h.b16 %v769
        %v4685 = vunpack.c.l.b16 %v770
        %v4686 = vunpack.c.h.b16 %v770
        %v4687 = vunpack.c.l.b16 %v771
        %v4688 = vunpack.c.h.b16 %v771
        %v4689 = vunpack.c.l.b16 %v772
        %v4690 = vunpack.c.h.b16 %v772
        %v4691 = vunpack.c.l.b16 %v773
        %v4692 = vunpack.c.h.b16 %v773
        %v4693 = vunpack.c.l.b16 %v774
        %v4694 = vunpack.c.h.b16 %v774
        %v4695 = vunpack.c.l.b16 %v775
        %v4696 = vunpack.c.h.b16 %v775
        %v4697 = vunpack.c.l.b16 %v776
        %v4698 = vunpack.c.h.b16 %v776
        %v4699 = vunpack.c.l.b16 %v777
        %v4700 = vunpack.c.h.b16 %v777
        %v4701 = vunpack.c.l.b16 %v778
        %v4702 = vunpack.c.h.b16 %v778
        %v4703 = vunpack.c.l.b16 %v779
        %v4704 = vunpack.c.h.b16 %v779
        %v4705 = vunpack.c.l.b16 %v780
        %v4706 = vunpack.c.h.b16 %v780
        %v4707 = vunpack.c.l.b16 %v781
        %v4708 = vunpack.c.h.b16 %v781
        %v4709 = vunpack.c.l.b16 %v782
        %v4710 = vunpack.c.h.b16 %v782
        %v4711 = vunpack.c.l.b16 %v783
        %v4712 = vunpack.c.h.b16 %v783
        %v4713 = vunpack.c.l.b16 %v784
        %v4714 = vunpack.c.h.b16 %v784
        %v4715 = vunpack.c.l.b16 %v785
        %v4716 = vunpack.c.h.b16 %v785
        %v4717 = vunpack.c.l.b16 %v786
        %v4718 = vunpack.c.h.b16 %v786
        %v4719 = vunpack.c.l.b16 %v787
        %v4720 = vunpack.c.h.b16 %v787
        %v4721 = vunpack.c.l.b16 %v788
        %v4722 = vunpack.c.h.b16 %v788
        %v4723 = vunpack.c.l.b16 %v789
        %v4724 = vunpack.c.h.b16 %v789
        %v4725 = vunpack.c.l.b16 %v790
        %v4726 = vunpack.c.h.b16 %v790
        %v4727 = vunpack.c.l.b16 %v791
        %v4728 = vunpack.c.h.b16 %v791
        %v4729 = vunpack.c.l.b16 %v792
        %v4730 = vunpack.c.h.b16 %v792
        %v4731 = vunpack.c.l.b16 %v793
        %v4732 = vunpack.c.h.b16 %v793
        %v4733 = vunpack.c.l.b16 %v794
        %v4734 = vunpack.c.h.b16 %v794
        %v4735 = vunpack.c.l.b16 %v795
        %v4736 = vunpack.c.h.b16 %v795
        %v4737 = vunpack.c.l.b16 %v796
        %v4738 = vunpack.c.h.b16 %v796
        %v4739 = vunpack.c.l.b16 %v797
        %v4740 = vunpack.c.h.b16 %v797
        %v4741 = vunpack.c.l.b16 %v798
        %v4742 = vunpack.c.h.b16 %v798
        %v4743 = vunpack.c.l.b16 %v799
        %v4744 = vunpack.c.h.b16 %v799
        %v4745 = vunpack.c.l.b16 %v800
        %v4746 = vunpack.c.h.b16 %v800
        %v4747 = vunpack.c.l.b16 %v801
        %v4748 = vunpack.c.h.b16 %v801
        %v4749 = vunpack.c.l.b16 %v802
        %v4750 = vunpack.c.h.b16 %v802
        %v4751 = vunpack.c.l.b16 %v803
        %v4752 = vunpack.c.h.b16 %v803
        %v4753 = vunpack.c.l.b16 %v804
        %v4754 = vunpack.c.h.b16 %v804
        %v4755 = vunpack.c.l.b16 %v805
        %v4756 = vunpack.c.h.b16 %v805
        %v4757 = vunpack.c.l.b16 %v806
        %v4758 = vunpack.c.h.b16 %v806
        %v4759 = vunpack.c.l.b16 %v807
        %v4760 = vunpack.c.h.b16 %v807
        %v4761 = vunpack.c.l.b16 %v808
        %v4762 = vunpack.c.h.b16 %v808
        %v4763 = vunpack.c.l.b16 %v809
        %v4764 = vunpack.c.h.b16 %v809
        %v4765 = vunpack.c.l.b16 %v810
        %v4766 = vunpack.c.h.b16 %v810
        %v4767 = vunpack.c.l.b16 %v811
        %v4768 = vunpack.c.h.b16 %v811
        %v4769 = vunpack.c.l.b16 %v812
        %v4770 = vunpack.c.h.b16 %v812
        %v4771 = vunpack.c.l.b16 %v813
        %v4772 = vunpack.c.h.b16 %v813
        %v4773 = vunpack.c.l.b16 %v814
        %v4774 = vunpack.c.h.b16 %v814
        %v4775 = vunpack.c.l.b16 %v815
        %v4776 = vunpack.c.h.b16 %v815
        %v4777 = vunpack.c.l.b16 %v816
        %v4778 = vunpack.c.h.b16 %v816
        %v4779 = vunpack.c.l.b16 %v817
        %v4780 = vunpack.c.h.b16 %v817
        %v4781 = vunpack.c.l.b16 %v818
        %v4782 = vunpack.c.h.b16 %v818
        %v4783 = vunpack.c.l.b16 %v819
        %v4784 = vunpack.c.h.b16 %v819
        %v4785 = vunpack.c.l.b16 %v820
        %v4786 = vunpack.c.h.b16 %v820
        %v4787 = vunpack.c.l.b16 %v821
        %v4788 = vunpack.c.h.b16 %v821
        %v4789 = vunpack.c.l.b16 %v822
        %v4790 = vunpack.c.h.b16 %v822
        %v4791 = vunpack.c.l.b16 %v823
        %v4792 = vunpack.c.h.b16 %v823
        %v4793 = vunpack.c.l.b16 %v824
        %v4794 = vunpack.c.h.b16 %v824
        %v4795 = vunpack.c.l.b16 %v825
        %v4796 = vunpack.c.h.b16 %v825
        %v4797 = vunpack.c.l.b16 %v826
        %v4798 = vunpack.c.h.b16 %v826
        %v4799 = vunpack.c.l.b16 %v827
        %v4800 = vunpack.c.h.b16 %v827
        %v4801 = vunpack.c.l.b16 %v828
        %v4802 = vunpack.c.h.b16 %v828
        %v4803 = vunpack.c.l.b16 %v829
        %v4804 = vunpack.c.h.b16 %v829
        %v4805 = vunpack.c.l.b16 %v830
        %v4806 = vunpack.c.h.b16 %v830
        %v4807 = vunpack.c.l.b16 %v831
        %v4808 = vunpack.c.h.b16 %v831
        %v4809 = vunpack.c.l.b16 %v832
        %v4810 = vunpack.c.h.b16 %v832
        %v4811 = vunpack.c.l.b16 %v833
        %v4812 = vunpack.c.h.b16 %v833
        %v4813 = vunpack.c.l.b16 %v834
        %v4814 = vunpack.c.h.b16 %v834
        %v4815 = vunpack.c.l.b16 %v835
        %v4816 = vunpack.c.h.b16 %v835
        %v4817 = vunpack.c.l.b16 %v836
        %v4818 = vunpack.c.h.b16 %v836
        %v4819 = vunpack.c.l.b16 %v837
        %v4820 = vunpack.c.h.b16 %v837
        %v4821 = vunpack.c.l.b16 %v838
        %v4822 = vunpack.c.h.b16 %v838
        %v4823 = vunpack.c.l.b16 %v839
        %v4824 = vunpack.c.h.b16 %v839
        %v4825 = vunpack.c.l.b16 %v840
        %v4826 = vunpack.c.h.b16 %v840
        %v4827 = vunpack.c.l.b16 %v841
        %v4828 = vunpack.c.h.b16 %v841
        %v4829 = vunpack.c.l.b16 %v842
        %v4830 = vunpack.c.h.b16 %v842
        %v4831 = vunpack.c.l.b16 %v843
        %v4832 = vunpack.c.h.b16 %v843
        %v4833 = vunpack.c.l.b16 %v844
        %v4834 = vunpack.c.h.b16 %v844
        %v4835 = vunpack.c.l.b16 %v845
        %v4836 = vunpack.c.h.b16 %v845
        %v4837 = vunpack.c.l.b16 %v846
        %v4838 = vunpack.c.h.b16 %v846
        %v4839 = vunpack.c.l.b16 %v847
        %v4840 = vunpack.c.h.b16 %v847
        %v4841 = vunpack.c.l.b16 %v848
        %v4842 = vunpack.c.h.b16 %v848
        %v4843 = vunpack.c.l.b16 %v849
        %v4844 = vunpack.c.h.b16 %v849
        %v4845 = vunpack.c.l.b16 %v850
        %v4846 = vunpack.c.h.b16 %v850
        %v4847 = vunpack.c.l.b16 %v851
        %v4848 = vunpack.c.h.b16 %v851
        %v4849 = vunpack.c.l.b16 %v852
        %v4850 = vunpack.c.h.b16 %v852
        %v4851 = vunpack.c.l.b16 %v853
        %v4852 = vunpack.c.h.b16 %v853
        %v4853 = vunpack.c.l.b16 %v854
        %v4854 = vunpack.c.h.b16 %v854
        %v4855 = vunpack.c.l.b16 %v855
        %v4856 = vunpack.c.h.b16 %v855
        %v4857 = vunpack.c.l.b16 %v856
        %v4858 = vunpack.c.h.b16 %v856
        %v4859 = vunpack.c.l.b16 %v857
        %v4860 = vunpack.c.h.b16 %v857
        %v4861 = vunpack.c.l.b16 %v858
        %v4862 = vunpack.c.h.b16 %v858
        %v4863 = vunpack.c.l.b16 %v859
        %v4864 = vunpack.c.h.b16 %v859
        %v4865 = vunpack.c.l.b16 %v860
        %v4866 = vunpack.c.h.b16 %v860
        %v4867 = vunpack.c.l.b16 %v861
        %v4868 = vunpack.c.h.b16 %v861
        %v4869 = vunpack.c.l.b16 %v862
        %v4870 = vunpack.c.h.b16 %v862
        %v4871 = vunpack.c.l.b16 %v863
        %v4872 = vunpack.c.h.b16 %v863
        %v4873 = vunpack.c.l.b16 %v864
        %v4874 = vunpack.c.h.b16 %v864
        %v4875 = vunpack.c.l.b16 %v865
        %v4876 = vunpack.c.h.b16 %v865
        %v4877 = vunpack.c.l.b16 %v866
        %v4878 = vunpack.c.h.b16 %v866
        %v4879 = vunpack.c.l.b16 %v867
        %v4880 = vunpack.c.h.b16 %v867
        %v4881 = vunpack.c.l.b16 %v868
        %v4882 = vunpack.c.h.b16 %v868
        %v4883 = vunpack.c.l.b16 %v869
        %v4884 = vunpack.c.h.b16 %v869
        %v4885 = vunpack.c.l.b16 %v870
        %v4886 = vunpack.c.h.b16 %v870
        %v4887 = vunpack.c.l.b16 %v871
        %v4888 = vunpack.c.h.b16 %v871
        %v4889 = vunpack.c.l.b16 %v872
        %v4890 = vunpack.c.h.b16 %v872
        %v4891 = vunpack.c.l.b16 %v873
        %v4892 = vunpack.c.h.b16 %v873
        %v4893 = vunpack.c.l.b16 %v874
        %v4894 = vunpack.c.h.b16 %v874
        %v4895 = vunpack.c.l.b16 %v875
        %v4896 = vunpack.c.h.b16 %v875
        %v4897 = vunpack.c.l.b16 %v876
        %v4898 = vunpack.c.h.b16 %v876
        %v4899 = vunpack.c.l.b16 %v877
        %v4900 = vunpack.c.h.b16 %v877
        %v4901 = vunpack.c.l.b16 %v878
        %v4902 = vunpack.c.h.b16 %v878
        %v4903 = vunpack.c.l.b16 %v879
        %v4904 = vunpack.c.h.b16 %v879
        %v4905 = vunpack.c.l.b16 %v880
        %v4906 = vunpack.c.h.b16 %v880
        %v4907 = vunpack.c.l.b16 %v881
        %v4908 = vunpack.c.h.b16 %v881
        %v4909 = vunpack.c.l.b16 %v882
        %v4910 = vunpack.c.h.b16 %v882
        %v4911 = vunpack.c.l.b16 %v883
        %v4912 = vunpack.c.h.b16 %v883
        %v4913 = vunpack.c.l.b16 %v884
        %v4914 = vunpack.c.h.b16 %v884
        %v4915 = vunpack.c.l.b16 %v885
        %v4916 = vunpack.c.h.b16 %v885
        %v4917 = vunpack.c.l.b16 %v886
        %v4918 = vunpack.c.h.b16 %v886
        %v4919 = vunpack.c.l.b16 %v887
        %v4920 = vunpack.c.h.b16 %v887
        %v4921 = vunpack.c.l.b16 %v888
        %v4922 = vunpack.c.h.b16 %v888
        %v4923 = vunpack.c.l.b16 %v889
        %v4924 = vunpack.c.h.b16 %v889
        %v4925 = vunpack.c.l.b16 %v890
        %v4926 = vunpack.c.h.b16 %v890
        %v4927 = vunpack.c.l.b16 %v891
        %v4928 = vunpack.c.h.b16 %v891
        %v4929 = vunpack.c.l.b16 %v892
        %v4930 = vunpack.c.h.b16 %v892
        %v4931 = vunpack.c.l.b16 %v893
        %v4932 = vunpack.c.h.b16 %v893
        %v4933 = vunpack.c.l.b16 %v894
        %v4934 = vunpack.c.h.b16 %v894
        %v4935 = vunpack.c.l.b16 %v895
        %v4936 = vunpack.c.h.b16 %v895
        %v4937 = vunpack.c.l.b16 %v896
        %v4938 = vunpack.c.h.b16 %v896
        %v4939 = vunpack.c.l.b16 %v897
        %v4940 = vunpack.c.h.b16 %v897
        %v4941 = vunpack.c.l.b16 %v898
        %v4942 = vunpack.c.h.b16 %v898
        %v4943 = vunpack.c.l.b16 %v899
        %v4944 = vunpack.c.h.b16 %v899
        %v4945 = vunpack.c.l.b16 %v900
        %v4946 = vunpack.c.h.b16 %v900
        %v4947 = vunpack.c.l.b16 %v901
        %v4948 = vunpack.c.h.b16 %v901
        %v4949 = vunpack.c.l.b16 %v902
        %v4950 = vunpack.c.h.b16 %v902
        %v4951 = vunpack.c.l.b16 %v903
        %v4952 = vunpack.c.h.b16 %v903
        %v4953 = vunpack.c.l.b16 %v904
        %v4954 = vunpack.c.h.b16 %v904
        %v4955 = vunpack.c.l.b16 %v905
        %v4956 = vunpack.c.h.b16 %v905
        %v4957 = vunpack.c.l.b16 %v906
        %v4958 = vunpack.c.h.b16 %v906
        %v4959 = vunpack.c.l.b16 %v907
        %v4960 = vunpack.c.h.b16 %v907
        %v4961 = vunpack.c.l.b16 %v908
        %v4962 = vunpack.c.h.b16 %v908
        %v4963 = vunpack.c.l.b16 %v909
        %v4964 = vunpack.c.h.b16 %v909
        %v4965 = vunpack.c.l.b16 %v910
        %v4966 = vunpack.c.h.b16 %v910
        %v4967 = vunpack.c.l.b16 %v911
        %v4968 = vunpack.c.h.b16 %v911
        %v4969 = vunpack.c.l.b16 %v912
        %v4970 = vunpack.c.h.b16 %v912
        %v4971 = vunpack.c.l.b16 %v913
        %v4972 = vunpack.c.h.b16 %v913
        %v4973 = vunpack.c.l.b16 %v914
        %v4974 = vunpack.c.h.b16 %v914
        %v4975 = vunpack.c.l.b16 %v915
        %v4976 = vunpack.c.h.b16 %v915
        %v4977 = vunpack.c.l.b16 %v916
        %v4978 = vunpack.c.h.b16 %v916
        %v4979 = vunpack.c.l.b16 %v917
        %v4980 = vunpack.c.h.b16 %v917
        %v4981 = vunpack.c.l.b16 %v918
        %v4982 = vunpack.c.h.b16 %v918
        %v4983 = vunpack.c.l.b16 %v919
        %v4984 = vunpack.c.h.b16 %v919
        %v4985 = vunpack.c.l.b16 %v920
        %v4986 = vunpack.c.h.b16 %v920
        %v4987 = vunpack.c.l.b16 %v921
        %v4988 = vunpack.c.h.b16 %v921
        %v4989 = vunpack.c.l.b16 %v922
        %v4990 = vunpack.c.h.b16 %v922
        %v4991 = vunpack.c.l.b16 %v923
        %v4992 = vunpack.c.h.b16 %v923
        %v4993 = vunpack.c.l.b16 %v924
        %v4994 = vunpack.c.h.b16 %v924
        %v4995 = vunpack.c.l.b16 %v925
        %v4996 = vunpack.c.h.b16 %v925
        %v4997 = vunpack.c.l.b16 %v926
        %v4998 = vunpack.c.h.b16 %v926
        %v4999 = vunpack.c.l.b16 %v927
        %v5000 = vunpack.c.h.b16 %v927
        %v5001 = vunpack.c.l.b16 %v928
        %v5002 = vunpack.c.h.b16 %v928
        %v5003 = vunpack.c.l.b16 %v929
        %v5004 = vunpack.c.h.b16 %v929
        %v5005 = vunpack.c.l.b16 %v930
        %v5006 = vunpack.c.h.b16 %v930
        %v5007 = vunpack.c.l.b16 %v931
        %v5008 = vunpack.c.h.b16 %v931
        %v5009 = vunpack.c.l.b16 %v932
        %v5010 = vunpack.c.h.b16 %v932
        %v5011 = vunpack.c.l.b16 %v933
        %v5012 = vunpack.c.h.b16 %v933
        %v5013 = vunpack.c.l.b16 %v934
        %v5014 = vunpack.c.h.b16 %v934
        %v5015 = vunpack.c.l.b16 %v935
        %v5016 = vunpack.c.h.b16 %v935
        %v5017 = vunpack.c.l.b16 %v936
        %v5018 = vunpack.c.h.b16 %v936
        %v5019 = vunpack.c.l.b16 %v937
        %v5020 = vunpack.c.h.b16 %v937
        %v5021 = vunpack.c.l.b16 %v938
        %v5022 = vunpack.c.h.b16 %v938
        %v5023 = vunpack.c.l.b16 %v939
        %v5024 = vunpack.c.h.b16 %v939
        %v5025 = vunpack.c.l.b16 %v940
        %v5026 = vunpack.c.h.b16 %v940
        %v5027 = vunpack.c.l.b16 %v941
        %v5028 = vunpack.c.h.b16 %v941
        %v5029 = vunpack.c.l.b16 %v942
        %v5030 = vunpack.c.h.b16 %v942
        %v5031 = vunpack.c.l.b16 %v943
        %v5032 = vunpack.c.h.b16 %v943
        %v5033 = vunpack.c.l.b16 %v944
        %v5034 = vunpack.c.h.b16 %v944
        %v5035 = vunpack.c.l.b16 %v945
        %v5036 = vunpack.c.h.b16 %v945
        %v5037 = vunpack.c.l.b16 %v946
        %v5038 = vunpack.c.h.b16 %v946
        %v5039 = vunpack.c.l.b16 %v947
        %v5040 = vunpack.c.h.b16 %v947
        %v5041 = vunpack.c.l.b16 %v948
        %v5042 = vunpack.c.h.b16 %v948
        %v5043 = vunpack.c.l.b16 %v949
        %v5044 = vunpack.c.h.b16 %v949
        %v5045 = vunpack.c.l.b16 %v950
        %v5046 = vunpack.c.h.b16 %v950
        %v5047 = vunpack.c.l.b16 %v951
        %v5048 = vunpack.c.h.b16 %v951
        %v5049 = vunpack.c.l.b16 %v952
        %v5050 = vunpack.c.h.b16 %v952
        %v5051 = vunpack.c.l.b16 %v953
        %v5052 = vunpack.c.h.b16 %v953
        %v5053 = vunpack.c.l.b16 %v954
        %v5054 = vunpack.c.h.b16 %v954
        %v5055 = vunpack.c.l.b16 %v955
        %v5056 = vunpack.c.h.b16 %v955
        %v5057 = vunpack.c.l.b16 %v956
        %v5058 = vunpack.c.h.b16 %v956
        %v5059 = vunpack.c.l.b16 %v957
        %v5060 = vunpack.c.h.b16 %v957
        %v5061 = vunpack.c.l.b16 %v958
        %v5062 = vunpack.c.h.b16 %v958
        %v5063 = vunpack.c.l.b16 %v959
        %v5064 = vunpack.c.h.b16 %v959
        %v5065 = vunpack.c.l.b16 %v960
        %v5066 = vunpack.c.h.b16 %v960
        %v5067 = vunpack.c.l.b16 %v961
        %v5068 = vunpack.c.h.b16 %v961
        %v5069 = vunpack.c.l.b16 %v962
        %v5070 = vunpack.c.h.b16 %v962
        %v5071 = vunpack.c.l.b16 %v963
        %v5072 = vunpack.c.h.b16 %v963
        %v5073 = vunpack.c.l.b16 %v964
        %v5074 = vunpack.c.h.b16 %v964
        %v5075 = vunpack.c.l.b16 %v965
        %v5076 = vunpack.c.h.b16 %v965
        %v5077 = vunpack.c.l.b16 %v966
        %v5078 = vunpack.c.h.b16 %v966
        %v5079 = vunpack.c.l.b16 %v967
        %v5080 = vunpack.c.h.b16 %v967
        %v5081 = vunpack.c.l.b16 %v968
        %v5082 = vunpack.c.h.b16 %v968
        %v5083 = vunpack.c.l.b16 %v969
        %v5084 = vunpack.c.h.b16 %v969
        %v5085 = vunpack.c.l.b16 %v970
        %v5086 = vunpack.c.h.b16 %v970
        %v5087 = vunpack.c.l.b16 %v971
        %v5088 = vunpack.c.h.b16 %v971
        %v5089 = vunpack.c.l.b16 %v972
        %v5090 = vunpack.c.h.b16 %v972
        %v5091 = vunpack.c.l.b16 %v973
        %v5092 = vunpack.c.h.b16 %v973
        %v5093 = vunpack.c.l.b16 %v974
        %v5094 = vunpack.c.h.b16 %v974
        %v5095 = vunpack.c.l.b16 %v975
        %v5096 = vunpack.c.h.b16 %v975
        %v5097 = vunpack.c.l.b16 %v976
        %v5098 = vunpack.c.h.b16 %v976
        %v5099 = vunpack.c.l.b16 %v977
        %v5100 = vunpack.c.h.b16 %v977
        %v5101 = vunpack.c.l.b16 %v978
        %v5102 = vunpack.c.h.b16 %v978
        %v5103 = vunpack.c.l.b16 %v979
        %v5104 = vunpack.c.h.b16 %v979
        %v5105 = vunpack.c.l.b16 %v980
        %v5106 = vunpack.c.h.b16 %v980
        %v5107 = vunpack.c.l.b16 %v981
        %v5108 = vunpack.c.h.b16 %v981
        %v5109 = vunpack.c.l.b16 %v982
        %v5110 = vunpack.c.h.b16 %v982
        %v5111 = vunpack.c.l.b16 %v983
        %v5112 = vunpack.c.h.b16 %v983
        %v5113 = vunpack.c.l.b16 %v984
        %v5114 = vunpack.c.h.b16 %v984
        %v5115 = vunpack.c.l.b16 %v985
        %v5116 = vunpack.c.h.b16 %v985
        %v5117 = vunpack.c.l.b16 %v986
        %v5118 = vunpack.c.h.b16 %v986
        %v5119 = vunpack.c.l.b16 %v987
        %v5120 = vunpack.c.h.b16 %v987
        %v5121 = vunpack.c.l.b16 %v988
        %v5122 = vunpack.c.h.b16 %v988
        %v5123 = vunpack.c.l.b16 %v989
        %v5124 = vunpack.c.h.b16 %v989
        %v5125 = vunpack.c.l.b16 %v990
        %v5126 = vunpack.c.h.b16 %v990
        %v5127 = vunpack.c.l.b16 %v991
        %v5128 = vunpack.c.h.b16 %v991
        %v5129 = vunpack.c.l.b16 %v992
        %v5130 = vunpack.c.h.b16 %v992
        %v5131 = vunpack.c.l.b16 %v993
        %v5132 = vunpack.c.h.b16 %v993
        %v5133 = vunpack.c.l.b16 %v994
        %v5134 = vunpack.c.h.b16 %v994
        %v5135 = vunpack.c.l.b16 %v995
        %v5136 = vunpack.c.h.b16 %v995
        %v5137 = vunpack.c.l.b16 %v996
        %v5138 = vunpack.c.h.b16 %v996
        %v5139 = vunpack.c.l.b16 %v997
        %v5140 = vunpack.c.h.b16 %v997
        %v5141 = vunpack.c.l.b16 %v998
        %v5142 = vunpack.c.h.b16 %v998
        %v5143 = vunpack.c.l.b16 %v999
        %v5144 = vunpack.c.h.b16 %v999
        %v5145 = vunpack.c.l.b16 %v1000
        %v5146 = vunpack.c.h.b16 %v1000
        %v5147 = vunpack.c.l.b16 %v1001
        %v5148 = vunpack.c.h.b16 %v1001
        %v5149 = vunpack.c.l.b16 %v1002
        %v5150 = vunpack.c.h.b16 %v1002
        %v5151 = vunpack.c.l.b16 %v1003
        %v5152 = vunpack.c.h.b16 %v1003
        %v5153 = vunpack.c.l.b16 %v1004
        %v5154 = vunpack.c.h.b16 %v1004
        %v5155 = vunpack.c.l.b16 %v1005
        %v5156 = vunpack.c.h.b16 %v1005
        %v5157 = vunpack.c.l.b16 %v1006
        %v5158 = vunpack.c.h.b16 %v1006
        %v5159 = vunpack.c.l.b16 %v1007
        %v5160 = vunpack.c.h.b16 %v1007
        %v5161 = vunpack.c.l.b16 %v1008
        %v5162 = vunpack.c.h.b16 %v1008
        %v5163 = vunpack.c.l.b16 %v1009
        %v5164 = vunpack.c.h.b16 %v1009
        %v5165 = vunpack.c.l.b16 %v1010
        %v5166 = vunpack.c.h.b16 %v1010
        %v5167 = vunpack.c.l.b16 %v1011
        %v5168 = vunpack.c.h.b16 %v1011
        %v5169 = vunpack.c.l.b16 %v1012
        %v5170 = vunpack.c.h.b16 %v1012
        %v5171 = vunpack.c.l.b16 %v1013
        %v5172 = vunpack.c.h.b16 %v1013
        %v5173 = vunpack.c.l.b16 %v1014
        %v5174 = vunpack.c.h.b16 %v1014
        %v5175 = vunpack.c.l.b16 %v1015
        %v5176 = vunpack.c.h.b16 %v1015
        %v5177 = vunpack.c.l.b16 %v1016
        %v5178 = vunpack.c.h.b16 %v1016
        %v5179 = vunpack.c.l.b16 %v1017
        %v5180 = vunpack.c.h.b16 %v1017
        %v5181 = vunpack.c.l.b16 %v1018
        %v5182 = vunpack.c.h.b16 %v1018
        %v5183 = vunpack.c.l.b16 %v1019
        %v5184 = vunpack.c.h.b16 %v1019
        %v5185 = vunpack.c.l.b16 %v1020
        %v5186 = vunpack.c.h.b16 %v1020
        %v5187 = vunpack.c.l.b16 %v1021
        %v5188 = vunpack.c.h.b16 %v1021
        %v5189 = vunpack.c.l.b16 %v1022
        %v5190 = vunpack.c.h.b16 %v1022
        %v5191 = vunpack.c.l.b16 %v1023
        %v5192 = vunpack.c.h.b16 %v1023
        %v5193 = vunpack.c.l.b16 %v1024
        %v5194 = vunpack.c.h.b16 %v1024
        %v5195 = vunpack.c.l.b16 %v1025
        %v5196 = vunpack.c.h.b16 %v1025
        %v5197 = vunpack.c.l.b16 %v1026
        %v5198 = vunpack.c.h.b16 %v1026
        %v5199 = vunpack.c.l.b16 %v1027
        %v5200 = vunpack.c.h.b16 %v1027
        %v5201 = vunpack.c.l.b16 %v1028
        %v5202 = vunpack.c.h.b16 %v1028
        %v5203 = vunpack.c.l.b16 %v1029
        %v5204 = vunpack.c.h.b16 %v1029
        %v5205 = vunpack.c.l.b16 %v1030
        %v5206 = vunpack.c.h.b16 %v1030
        %v5207 = vunpack.c.l.b16 %v1031
        %v5208 = vunpack.c.h.b16 %v1031
        %v5209 = vunpack.c.l.b16 %v1032
        %v5210 = vunpack.c.h.b16 %v1032
        %v5211 = vunpack.c.l.b16 %v1033
        %v5212 = vunpack.c.h.b16 %v1033
        %v5213 = vunpack.c.l.b16 %v1034
        %v5214 = vunpack.c.h.b16 %v1034
        %v5215 = vunpack.c.l.b16 %v1035
        %v5216 = vunpack.c.h.b16 %v1035
        %v5217 = vunpack.c.l.b16 %v1036
        %v5218 = vunpack.c.h.b16 %v1036
        %v5219 = vunpack.c.l.b16 %v1037
        %v5220 = vunpack.c.h.b16 %v1037
        %v5221 = vunpack.c.l.b16 %v1038
        %v5222 = vunpack.c.h.b16 %v1038
        %v5223 = vunpack.c.l.b16 %v1039
        %v5224 = vunpack.c.h.b16 %v1039
        %v5225 = vunpack.c.l.b16 %v1040
        %v5226 = vunpack.c.h.b16 %v1040
        %v5227 = vunpack.c.l.b16 %v1041
        %v5228 = vunpack.c.h.b16 %v1041
        %v5229 = vunpack.c.l.b16 %v1042
        %v5230 = vunpack.c.h.b16 %v1042
        %v5231 = vunpack.c.l.b16 %v1043
        %v5232 = vunpack.c.h.b16 %v1043
        %v5233 = vunpack.c.l.b16 %v1044
        %v5234 = vunpack.c.h.b16 %v1044
        %v5235 = vunpack.c.l.b16 %v1045
        %v5236 = vunpack.c.h.b16 %v1045
        %v5237 = vunpack.c.l.b16 %v1046
        %v5238 = vunpack.c.h.b16 %v1046
        %v5239 = vunpack.c.l.b16 %v1047
        %v5240 = vunpack.c.h.b16 %v1047
        %v5241 = vunpack.c.l.b16 %v1048
        %v5242 = vunpack.c.h.b16 %v1048
        %v5243 = vunpack.c.l.b16 %v1049
        %v5244 = vunpack.c.h.b16 %v1049
        %v5245 = vunpack.c.l.b16 %v1050
        %v5246 = vunpack.c.h.b16 %v1050
        %v5247 = vunpack.c.l.b16 %v1051
        %v5248 = vunpack.c.h.b16 %v1051
        %v5249 = vunpack.c.l.b16 %v1052
        %v5250 = vunpack.c.h.b16 %v1052
        %v5251 = vunpack.c.l.b16 %v1053
        %v5252 = vunpack.c.h.b16 %v1053
        %v5253 = vunpack.c.l.b16 %v1054
        %v5254 = vunpack.c.h.b16 %v1054
        %v5255 = vunpack.c.l.b16 %v1055
        %v5256 = vunpack.c.h.b16 %v1055
        %v5257 = vunpack.c.l.b16 %v1056
        %v5258 = vunpack.c.h.b16 %v1056
        %v5259 = vunpack.c.l.b16 %v1057
        %v5260 = vunpack.c.h.b16 %v1057
        %v5261 = vunpack.c.l.b16 %v1058
        %v5262 = vunpack.c.h.b16 %v1058
        %v5263 = vunpack.c.l.b16 %v1059
        %v5264 = vunpack.c.h.b16 %v1059
        %v5265 = vunpack.c.l.b16 %v1060
        %v5266 = vunpack.c.h.b16 %v1060
        %v5267 = vunpack.c.l.b16 %v1061
        %v5268 = vunpack.c.h.b16 %v1061
        %v5269 = vunpack.c.l.b16 %v1062
        %v5270 = vunpack.c.h.b16 %v1062
        %v5271 = vunpack.c.l.b16 %v1063
        %v5272 = vunpack.c.h.b16 %v1063
        %v5273 = vunpack.c.l.b16 %v1064
        %v5274 = vunpack.c.h.b16 %v1064
        %v5275 = vunpack.c.l.b16 %v1065
        %v5276 = vunpack.c.h.b16 %v1065
        %v5277 = vunpack.c.l.b16 %v1066
        %v5278 = vunpack.c.h.b16 %v1066
        %v5279 = vunpack.c.l.b16 %v1067
        %v5280 = vunpack.c.h.b16 %v1067
        %v5281 = vunpack.c.l.b16 %v1068
        %v5282 = vunpack.c.h.b16 %v1068
        %v5283 = vunpack.c.l.b16 %v1069
        %v5284 = vunpack.c.h.b16 %v1069
        %v5285 = vunpack.c.l.b16 %v1070
        %v5286 = vunpack.c.h.b16 %v1070
        %v5287 = vunpack.c.l.b16 %v1071
        %v5288 = vunpack.c.h.b16 %v1071
        %v5289 = vunpack.c.l.b16 %v1072
        %v5290 = vunpack.c.h.b16 %v1072
        %v5291 = vunpack.c.l.b16 %v1073
        %v5292 = vunpack.c.h.b16 %v1073
        %v5293 = vunpack.c.l.b16 %v1074
        %v5294 = vunpack.c.h.b16 %v1074
        %v5295 = vunpack.c.l.b16 %v1075
        %v5296 = vunpack.c.h.b16 %v1075
        %v5297 = vunpack.c.l.b16 %v1076
        %v5298 = vunpack.c.h.b16 %v1076
        %v5299 = vunpack.c.l.b16 %v1077
        %v5300 = vunpack.c.h.b16 %v1077
        %v5301 = vunpack.c.l.b16 %v1078
        %v5302 = vunpack.c.h.b16 %v1078
        %v5303 = vunpack.c.l.b16 %v1079
        %v5304 = vunpack.c.h.b16 %v1079
        %v5305 = vunpack.c.l.b16 %v1080
        %v5306 = vunpack.c.h.b16 %v1080
        %v5307 = vunpack.c.l.b16 %v1081
        %v5308 = vunpack.c.h.b16 %v1081
        %v5309 = vunpack.c.l.b16 %v1082
        %v5310 = vunpack.c.h.b16 %v1082
        %v5311 = vunpack.c.l.b16 %v1083
        %v5312 = vunpack.c.h.b16 %v1083
        %v5313 = vunpack.c.l.b16 %v1084
        %v5314 = vunpack.c.h.b16 %v1084
        %v5315 = vunpack.c.l.b16 %v1085
        %v5316 = vunpack.c.h.b16 %v1085
        %v5317 = vunpack.c.l.b16 %v1086
        %v5318 = vunpack.c.h.b16 %v1086
        %v5319 = vunpack.c.l.b16 %v1087
        %v5320 = vunpack.c.h.b16 %v1087
        %v5321 = vunpack.c.l.b16 %v1088
        %v5322 = vunpack.c.h.b16 %v1088
        %v5323 = vunpack.c.l.b16 %v1089
        %v5324 = vunpack.c.h.b16 %v1089
        %v5325 = vunpack.c.l.b16 %v1090
        %v5326 = vunpack.c.h.b16 %v1090
        %v5327 = vunpack.c.l.b16 %v1091
        %v5328 = vunpack.c.h.b16 %v1091
        %v5329 = vunpack.c.l.b16 %v1092
        %v5330 = vunpack.c.h.b16 %v1092
        %v5331 = vunpack.c.l.b16 %v1093
        %v5332 = vunpack.c.h.b16 %v1093
        %v5333 = vunpack.c.l.b16 %v1094
        %v5334 = vunpack.c.h.b16 %v1094
        %v5335 = vunpack.c.l.b16 %v1095
        %v5336 = vunpack.c.h.b16 %v1095
        %v5337 = vunpack.c.l.b16 %v1096
        %v5338 = vunpack.c.h.b16 %v1096
        %v5339 = vunpack.c.l.b16 %v1097
        %v5340 = vunpack.c.h.b16 %v1097
        %v5341 = vunpack.c.l.b16 %v1098
        %v5342 = vunpack.c.h.b16 %v1098
        %v5343 = vunpack.c.l.b16 %v1099
        %v5344 = vunpack.c.h.b16 %v1099
        %v5345 = vunpack.c.l.b16 %v1100
        %v5346 = vunpack.c.h.b16 %v1100
        %v5347 = vunpack.c.l.b16 %v1101
        %v5348 = vunpack.c.h.b16 %v1101
        %v5349 = vunpack.c.l.b16 %v1102
        %v5350 = vunpack.c.h.b16 %v1102
        %v5351 = vunpack.c.l.b16 %v1103
        %v5352 = vunpack.c.h.b16 %v1103
        %v5353 = vunpack.c.l.b16 %v1104
        %v5354 = vunpack.c.h.b16 %v1104
        %v5355 = vunpack.c.l.b16 %v1105
        %v5356 = vunpack.c.h.b16 %v1105
        %v5357 = vunpack.c.l.b16 %v1106
        %v5358 = vunpack.c.h.b16 %v1106
        %v5359 = vunpack.c.l.b16 %v1107
        %v5360 = vunpack.c.h.b16 %v1107
        %v5361 = vunpack.c.l.b16 %v1108
        %v5362 = vunpack.c.h.b16 %v1108
        %v5363 = vunpack.c.l.b16 %v1109
        %v5364 = vunpack.c.h.b16 %v1109
        %v5365 = vunpack.c.l.b16 %v1110
        %v5366 = vunpack.c.h.b16 %v1110
        %v5367 = vunpack.c.l.b16 %v1111
        %v5368 = vunpack.c.h.b16 %v1111
        %v5369 = vunpack.c.l.b16 %v1112
        %v5370 = vunpack.c.h.b16 %v1112
        %v5371 = vunpack.c.l.b16 %v1113
        %v5372 = vunpack.c.h.b16 %v1113
        %v5373 = vunpack.c.l.b16 %v1114
        %v5374 = vunpack.c.h.b16 %v1114
        %v5375 = vunpack.c.l.b16 %v1115
        %v5376 = vunpack.c.h.b16 %v1115
        %v5377 = vunpack.c.l.b16 %v1116
        %v5378 = vunpack.c.h.b16 %v1116
        %v5379 = vunpack.c.l.b16 %v1117
        %v5380 = vunpack.c.h.b16 %v1117
        %v5381 = vunpack.c.l.b16 %v1118
        %v5382 = vunpack.c.h.b16 %v1118
        %v5383 = vunpack.c.l.b16 %v1119
        %v5384 = vunpack.c.h.b16 %v1119
        %v5385 = vunpack.c.l.b16 %v1120
        %v5386 = vunpack.c.h.b16 %v1120
        %v5387 = vunpack.c.l.b16 %v1121
        %v5388 = vunpack.c.h.b16 %v1121
        %v5389 = vunpack.c.l.b16 %v1122
        %v5390 = vunpack.c.h.b16 %v1122
        %v5391 = vunpack.c.l.b16 %v1123
        %v5392 = vunpack.c.h.b16 %v1123
        %v5393 = vunpack.c.l.b16 %v1124
        %v5394 = vunpack.c.h.b16 %v1124
        %v5395 = vunpack.c.l.b16 %v1125
        %v5396 = vunpack.c.h.b16 %v1125
        %v5397 = vunpack.c.l.b16 %v1126
        %v5398 = vunpack.c.h.b16 %v1126
        %v5399 = vunpack.c.l.b16 %v1127
        %v5400 = vunpack.c.h.b16 %v1127
        %v5401 = vunpack.c.l.b16 %v1128
        %v5402 = vunpack.c.h.b16 %v1128
        %v5403 = vunpack.c.l.b16 %v1129
        %v5404 = vunpack.c.h.b16 %v1129
        %v5405 = vunpack.c.l.b16 %v1130
        %v5406 = vunpack.c.h.b16 %v1130
        %v5407 = vunpack.c.l.b16 %v1131
        %v5408 = vunpack.c.h.b16 %v1131
        %v5409 = vunpack.c.l.b16 %v1132
        %v5410 = vunpack.c.h.b16 %v1132
        %v5411 = vunpack.c.l.b16 %v1133
        %v5412 = vunpack.c.h.b16 %v1133
        %v5413 = vunpack.c.l.b16 %v1134
        %v5414 = vunpack.c.h.b16 %v1134
        %v5415 = vunpack.c.l.b16 %v1135
        %v5416 = vunpack.c.h.b16 %v1135
        %v5417 = vunpack.c.l.b16 %v1136
        %v5418 = vunpack.c.h.b16 %v1136
        %v5419 = vunpack.c.l.b16 %v1137
        %v5420 = vunpack.c.h.b16 %v1137
        %v5421 = vunpack.c.l.b16 %v1138
        %v5422 = vunpack.c.h.b16 %v1138
        %v5423 = vunpack.c.l.b16 %v1139
        %v5424 = vunpack.c.h.b16 %v1139
        %v5425 = vunpack.c.l.b16 %v1140
        %v5426 = vunpack.c.h.b16 %v1140
        %v5427 = vunpack.c.l.b16 %v1141
        %v5428 = vunpack.c.h.b16 %v1141
        %v5429 = vunpack.c.l.b16 %v1142
        %v5430 = vunpack.c.h.b16 %v1142
        %v5431 = vunpack.c.l.b16 %v1143
        %v5432 = vunpack.c.h.b16 %v1143
        %v5433 = vunpack.c.l.b16 %v1144
        %v5434 = vunpack.c.h.b16 %v1144
        %v5435 = vunpack.c.l.b16 %v1145
        %v5436 = vunpack.c.h.b16 %v1145
        %v5437 = vunpack.c.l.b16 %v1146
        %v5438 = vunpack.c.h.b16 %v1146
        %v5439 = vunpack.c.l.b16 %v1147
        %v5440 = vunpack.c.h.b16 %v1147
        %v5441 = vunpack.c.l.b16 %v1148
        %v5442 = vunpack.c.h.b16 %v1148
        %v5443 = vunpack.c.l.b16 %v1149
        %v5444 = vunpack.c.h.b16 %v1149
        %v5445 = vunpack.c.l.b16 %v1150
        %v5446 = vunpack.c.h.b16 %v1150
        %v5447 = vunpack.c.l.b16 %v1151
        %v5448 = vunpack.c.h.b16 %v1151
        %v5449 = vunpack.c.l.b16 %v1152
        %v5450 = vunpack.c.h.b16 %v1152
        %v5451 = vunpack.c.l.b16 %v1153
        %v5452 = vunpack.c.h.b16 %v1153
        %v5453 = vunpack.c.l.b16 %v1154
        %v5454 = vunpack.c.h.b16 %v1154
        %v5455 = vunpack.c.l.b16 %v1155
        %v5456 = vunpack.c.h.b16 %v1155
        %v5457 = vunpack.c.l.b16 %v1156
        %v5458 = vunpack.c.h.b16 %v1156
        %v5459 = vunpack.c.l.b16 %v1157
        %v5460 = vunpack.c.h.b16 %v1157
        %v5461 = vunpack.c.l.b16 %v1158
        %v5462 = vunpack.c.h.b16 %v1158
        %v5463 = vunpack.c.l.b16 %v1159
        %v5464 = vunpack.c.h.b16 %v1159
        %v5465 = vunpack.c.l.b16 %v1160
        %v5466 = vunpack.c.h.b16 %v1160
        %v5467 = vunpack.c.l.b16 %v1161
        %v5468 = vunpack.c.h.b16 %v1161
        %v5469 = vunpack.c.l.b16 %v1162
        %v5470 = vunpack.c.h.b16 %v1162
        %v5471 = vunpack.c.l.b16 %v1163
        %v5472 = vunpack.c.h.b16 %v1163
        %v5473 = vunpack.c.l.b16 %v1164
        %v5474 = vunpack.c.h.b16 %v1164
        %v5475 = vunpack.c.l.b16 %v1165
        %v5476 = vunpack.c.h.b16 %v1165
        %v5477 = vunpack.c.l.b16 %v1166
        %v5478 = vunpack.c.h.b16 %v1166
        %v5479 = vunpack.c.l.b16 %v1167
        %v5480 = vunpack.c.h.b16 %v1167
        %v5481 = vunpack.c.l.b16 %v1168
        %v5482 = vunpack.c.h.b16 %v1168
        %v5483 = vunpack.c.l.b16 %v1169
        %v5484 = vunpack.c.h.b16 %v1169
        %v5485 = vunpack.c.l.b16 %v1170
        %v5486 = vunpack.c.h.b16 %v1170
        %v5487 = vunpack.c.l.b16 %v1171
        %v5488 = vunpack.c.h.b16 %v1171
        %v5489 = vunpack.c.l.b16 %v1172
        %v5490 = vunpack.c.h.b16 %v1172
        %v5491 = vunpack.c.l.b16 %v1173
        %v5492 = vunpack.c.h.b16 %v1173
        %v5493 = vunpack.c.l.b16 %v1174
        %v5494 = vunpack.c.h.b16 %v1174
        %v5495 = vunpack.c.l.b16 %v1175
        %v5496 = vunpack.c.h.b16 %v1175
        %v5497 = vunpack.c.l.b16 %v1176
        %v5498 = vunpack.c.h.b16 %v1176
        %v5499 = vunpack.c.l.b16 %v1177
        %v5500 = vunpack.c.h.b16 %v1177
        %v5501 = vunpack.c.l.b16 %v1178
        %v5502 = vunpack.c.h.b16 %v1178
        %v5503 = vunpack.c.l.b16 %v1179
        %v5504 = vunpack.c.h.b16 %v1179
        %v5505 = vunpack.c.l.b16 %v1180
        %v5506 = vunpack.c.h.b16 %v1180
        %v5507 = vunpack.c.l.b16 %v1181
        %v5508 = vunpack.c.h.b16 %v1181
        %v5509 = vunpack.c.l.b16 %v1182
        %v5510 = vunpack.c.h.b16 %v1182
        %v5511 = vunpack.c.l.b16 %v1183
        %v5512 = vunpack.c.h.b16 %v1183
        %v5513 = vunpack.c.l.b16 %v1184
        %v5514 = vunpack.c.h.b16 %v1184
        %v5515 = vunpack.c.l.b16 %v1185
        %v5516 = vunpack.c.h.b16 %v1185
        %v5517 = vunpack.c.l.b16 %v1186
        %v5518 = vunpack.c.h.b16 %v1186
        %v5519 = vunpack.c.l.b16 %v1187
        %v5520 = vunpack.c.h.b16 %v1187
        %v5521 = vunpack.c.l.b16 %v1188
        %v5522 = vunpack.c.h.b16 %v1188
        %v5523 = vunpack.c.l.b16 %v1189
        %v5524 = vunpack.c.h.b16 %v1189
        %v5525 = vunpack.c.l.b16 %v1190
        %v5526 = vunpack.c.h.b16 %v1190
        %v5527 = vunpack.c.l.b16 %v1191
        %v5528 = vunpack.c.h.b16 %v1191
        %v5529 = vunpack.c.l.b16 %v1192
        %v5530 = vunpack.c.h.b16 %v1192
        %v5531 = vunpack.c.l.b16 %v1193
        %v5532 = vunpack.c.h.b16 %v1193
        %v5533 = vunpack.c.l.b16 %v1194
        %v5534 = vunpack.c.h.b16 %v1194
        %v5535 = vunpack.c.l.b16 %v1195
        %v5536 = vunpack.c.h.b16 %v1195
        %v5537 = vunpack.c.l.b16 %v1196
        %v5538 = vunpack.c.h.b16 %v1196
        %v5539 = vunpack.c.l.b16 %v1197
        %v5540 = vunpack.c.h.b16 %v1197
        %v5541 = vunpack.c.l.b16 %v1198
        %v5542 = vunpack.c.h.b16 %v1198
        %v5543 = vunpack.c.l.b16 %v1199
        %v5544 = vunpack.c.h.b16 %v1199
        %v5545 = vunpack.c.l.b16 %v1200
        %v5546 = vunpack.c.h.b16 %v1200
        %v5547 = vunpack.c.l.b16 %v1201
        %v5548 = vunpack.c.h.b16 %v1201
        %v5549 = vunpack.c.l.b16 %v1202
        %v5550 = vunpack.c.h.b16 %v1202
        %v5551 = vunpack.c.l.b16 %v1203
        %v5552 = vunpack.c.h.b16 %v1203
        %v5553 = vunpack.c.l.b16 %v1204
        %v5554 = vunpack.c.h.b16 %v1204
        %v5555 = vunpack.c.l.b16 %v1205
        %v5556 = vunpack.c.h.b16 %v1205
        %v5557 = vunpack.c.l.b16 %v1206
        %v5558 = vunpack.c.h.b16 %v1206
        %v5559 = vunpack.c.l.b16 %v1207
        %v5560 = vunpack.c.h.b16 %v1207
        %v5561 = vunpack.c.l.b16 %v1208
        %v5562 = vunpack.c.h.b16 %v1208
        %v5563 = vunpack.c.l.b16 %v1209
        %v5564 = vunpack.c.h.b16 %v1209
        %v5565 = vunpack.c.l.b16 %v1210
        %v5566 = vunpack.c.h.b16 %v1210
        %v5567 = vunpack.c.l.b16 %v1211
        %v5568 = vunpack.c.h.b16 %v1211
        %v5569 = vunpack.c.l.b16 %v1212
        %v5570 = vunpack.c.h.b16 %v1212
        %v5571 = vunpack.c.l.b16 %v1213
        %v5572 = vunpack.c.h.b16 %v1213
        %v5573 = vunpack.c.l.b16 %v1214
        %v5574 = vunpack.c.h.b16 %v1214
        %v5575 = vunpack.c.l.b16 %v1215
        %v5576 = vunpack.c.h.b16 %v1215
        %v5577 = vunpack.c.l.b16 %v1216
        %v5578 = vunpack.c.h.b16 %v1216
        %v5579 = vunpack.c.l.b16 %v1217
        %v5580 = vunpack.c.h.b16 %v1217
        %v5581 = vunpack.c.l.b16 %v1218
        %v5582 = vunpack.c.h.b16 %v1218
        %v5583 = vunpack.c.l.b16 %v1219
        %v5584 = vunpack.c.h.b16 %v1219
        %v5585 = vunpack.c.l.b16 %v1220
        %v5586 = vunpack.c.h.b16 %v1220
        %v5587 = vunpack.c.l.b16 %v1221
        %v5588 = vunpack.c.h.b16 %v1221
        %v5589 = vunpack.c.l.b16 %v1222
        %v5590 = vunpack.c.h.b16 %v1222
        %v5591 = vunpack.c.l.b16 %v1223
        %v5592 = vunpack.c.h.b16 %v1223
        %v5593 = vunpack.c.l.b16 %v1224
        %v5594 = vunpack.c.h.b16 %v1224
        %v5595 = vunpack.c.l.b16 %v1225
        %v5596 = vunpack.c.h.b16 %v1225
        %v5597 = vunpack.c.l.b16 %v1226
        %v5598 = vunpack.c.h.b16 %v1226
        %v5599 = vunpack.c.l.b16 %v1227
        %v5600 = vunpack.c.h.b16 %v1227
        %v5601 = vunpack.c.l.b16 %v1228
        %v5602 = vunpack.c.h.b16 %v1228
        %v5603 = vunpack.c.l.b16 %v1229
        %v5604 = vunpack.c.h.b16 %v1229
        %v5605 = vunpack.c.l.b16 %v1230
        %v5606 = vunpack.c.h.b16 %v1230
        %v5607 = vunpack.c.l.b16 %v1231
        %v5608 = vunpack.c.h.b16 %v1231
        %v5609 = vunpack.c.l.b16 %v1232
        %v5610 = vunpack.c.h.b16 %v1232
        %v5611 = vunpack.c.l.b16 %v1233
        %v5612 = vunpack.c.h.b16 %v1233
        %v5613 = vunpack.c.l.b16 %v1234
        %v5614 = vunpack.c.h.b16 %v1234
        %v5615 = vunpack.c.l.b16 %v1235
        %v5616 = vunpack.c.h.b16 %v1235
        %v5617 = vunpack.c.l.b16 %v1236
        %v5618 = vunpack.c.h.b16 %v1236
        %v5619 = vunpack.c.l.b16 %v1237
        %v5620 = vunpack.c.h.b16 %v1237
        %v5621 = vunpack.c.l.b16 %v1238
        %v5622 = vunpack.c.h.b16 %v1238
        %v5623 = vunpack.c.l.b16 %v1239
        %v5624 = vunpack.c.h.b16 %v1239
        %v5625 = vunpack.c.l.b16 %v1240
        %v5626 = vunpack.c.h.b16 %v1240
        %v5627 = vunpack.c.l.b16 %v1241
        %v5628 = vunpack.c.h.b16 %v1241
        %v5629 = vunpack.c.l.b16 %v1242
        %v5630 = vunpack.c.h.b16 %v1242
        %v5631 = vunpack.c.l.b16 %v1243
        %v5632 = vunpack.c.h.b16 %v1243
        %v5633 = vunpack.c.l.b16 %v1244
        %v5634 = vunpack.c.h.b16 %v1244
        %v5635 = vunpack.c.l.b16 %v1245
        %v5636 = vunpack.c.h.b16 %v1245
        %v5637 = vunpack.c.l.b16 %v1246
        %v5638 = vunpack.c.h.b16 %v1246
        %v5639 = vunpack.c.l.b16 %v1247
        %v5640 = vunpack.c.h.b16 %v1247
        %v5641 = vunpack.c.l.b16 %v1248
        %v5642 = vunpack.c.h.b16 %v1248
        %v5643 = vunpack.c.l.b16 %v1249
        %v5644 = vunpack.c.h.b16 %v1249
        %v5645 = vunpack.c.l.b16 %v1250
        %v5646 = vunpack.c.h.b16 %v1250
        %v5647 = vunpack.c.l.b16 %v1251
        %v5648 = vunpack.c.h.b16 %v1251
        %v5649 = vunpack.c.l.b16 %v1252
        %v5650 = vunpack.c.h.b16 %v1252
        %v5651 = vunpack.c.l.b16 %v1253
        %v5652 = vunpack.c.h.b16 %v1253
        %v5653 = vunpack.c.l.b16 %v1254
        %v5654 = vunpack.c.h.b16 %v1254
        %v5655 = vunpack.c.l.b16 %v1255
        %v5656 = vunpack.c.h.b16 %v1255
        %v5657 = vunpack.c.l.b16 %v1256
        %v5658 = vunpack.c.h.b16 %v1256
        %v5659 = vunpack.c.l.b16 %v1257
        %v5660 = vunpack.c.h.b16 %v1257
        %v5661 = vunpack.c.l.b16 %v1258
        %v5662 = vunpack.c.h.b16 %v1258
        %v5663 = vunpack.c.l.b16 %v1259
        %v5664 = vunpack.c.h.b16 %v1259
        %v5665 = vunpack.c.l.b16 %v1260
        %v5666 = vunpack.c.h.b16 %v1260
        %v5667 = vunpack.c.l.b16 %v1261
        %v5668 = vunpack.c.h.b16 %v1261
        %v5669 = vunpack.c.l.b16 %v1262
        %v5670 = vunpack.c.h.b16 %v1262
        %v5671 = vunpack.c.l.b16 %v1263
        %v5672 = vunpack.c.h.b16 %v1263
        %v5673 = vunpack.c.l.b16 %v1264
        %v5674 = vunpack.c.h.b16 %v1264
        %v5675 = vunpack.c.l.b16 %v1265
        %v5676 = vunpack.c.h.b16 %v1265
        %v5677 = vunpack.c.l.b16 %v1266
        %v5678 = vunpack.c.h.b16 %v1266
        %v5679 = vunpack.c.l.b16 %v1267
        %v5680 = vunpack.c.h.b16 %v1267
        %v5681 = vunpack.c.l.b16 %v1268
        %v5682 = vunpack.c.h.b16 %v1268
        %v5683 = vunpack.c.l.b16 %v1269
        %v5684 = vunpack.c.h.b16 %v1269
        %v5685 = vunpack.c.l.b16 %v1270
        %v5686 = vunpack.c.h.b16 %v1270
        %v5687 = vunpack.c.l.b16 %v1271
        %v5688 = vunpack.c.h.b16 %v1271
        %v5689 = vunpack.c.l.b16 %v1272
        %v5690 = vunpack.c.h.b16 %v1272
        %v5691 = vunpack.c.l.b16 %v1273
        %v5692 = vunpack.c.h.b16 %v1273
        %v5693 = vunpack.c.l.b16 %v1274
        %v5694 = vunpack.c.h.b16 %v1274
        %v5695 = vunpack.c.l.b16 %v1275
        %v5696 = vunpack.c.h.b16 %v1275
        %v5697 = vunpack.c.l.b16 %v1276
        %v5698 = vunpack.c.h.b16 %v1276
        %v5699 = vunpack.c.l.b16 %v1277
        %v5700 = vunpack.c.h.b16 %v1277
        %v5701 = vunpack.c.l.b16 %v1278
        %v5702 = vunpack.c.h.b16 %v1278
        %v5703 = vunpack.c.l.b16 %v1279
        %v5704 = vunpack.c.h.b16 %v1279
        %v5705 = vunpack.c.l.b16 %v1280
        %v5706 = vunpack.c.h.b16 %v1280
        %v5707 = vunpack.c.l.b16 %v1281
        %v5708 = vunpack.c.h.b16 %v1281
        %v5709 = vunpack.c.l.b16 %v1282
        %v5710 = vunpack.c.h.b16 %v1282
        %v5711 = vunpack.c.l.b16 %v1283
        %v5712 = vunpack.c.h.b16 %v1283
        %v5713 = vunpack.c.l.b16 %v1284
        %v5714 = vunpack.c.h.b16 %v1284
        %v5715 = vunpack.c.l.b16 %v1285
        %v5716 = vunpack.c.h.b16 %v1285
        %v5717 = vunpack.c.l.b16 %v1286
        %v5718 = vunpack.c.h.b16 %v1286
        %v5719 = vunpack.c.l.b16 %v1287
        %v5720 = vunpack.c.h.b16 %v1287
        %v5721 = vunpack.c.l.b16 %v1288
        %v5722 = vunpack.c.h.b16 %v1288
        %v5723 = vunpack.c.l.b16 %v1289
        %v5724 = vunpack.c.h.b16 %v1289
        %v5725 = vunpack.c.l.b16 %v1290
        %v5726 = vunpack.c.h.b16 %v1290
        %v5727 = vunpack.c.l.b16 %v1291
        %v5728 = vunpack.c.h.b16 %v1291
        %v5729 = vunpack.c.l.b16 %v1292
        %v5730 = vunpack.c.h.b16 %v1292
        %v5731 = vunpack.c.l.b16 %v1293
        %v5732 = vunpack.c.h.b16 %v1293
        %v5733 = vunpack.c.l.b16 %v1294
        %v5734 = vunpack.c.h.b16 %v1294
        %v5735 = vunpack.c.l.b16 %v1295
        %v5736 = vunpack.c.h.b16 %v1295
        %v5737 = vunpack.c.l.b16 %v1296
        %v5738 = vunpack.c.h.b16 %v1296
        %v5739 = vunpack.c.l.b16 %v1297
        %v5740 = vunpack.c.h.b16 %v1297
        %v5741 = vunpack.c.l.b16 %v1298
        %v5742 = vunpack.c.h.b16 %v1298
        %v5743 = vunpack.c.l.b16 %v1299
        %v5744 = vunpack.c.h.b16 %v1299
        %v5745 = vunpack.c.l.b16 %v1300
        %v5746 = vunpack.c.h.b16 %v1300
        %v5747 = vunpack.c.l.b16 %v1301
        %v5748 = vunpack.c.h.b16 %v1301
        %v5749 = vunpack.c.l.b16 %v1302
        %v5750 = vunpack.c.h.b16 %v1302
        %v5751 = vunpack.c.l.b16 %v1303
        %v5752 = vunpack.c.h.b16 %v1303
        %v5753 = vunpack.c.l.b16 %v1304
        %v5754 = vunpack.c.h.b16 %v1304
        %v5755 = vunpack.c.l.b16 %v1305
        %v5756 = vunpack.c.h.b16 %v1305
        %v5757 = vunpack.c.l.b16 %v1306
        %v5758 = vunpack.c.h.b16 %v1306
        %v5759 = vunpack.c.l.b16 %v1307
        %v5760 = vunpack.c.h.b16 %v1307
        %v5761 = vunpack.c.l.b16 %v1308
        %v5762 = vunpack.c.h.b16 %v1308
        %v5763 = vunpack.c.l.b16 %v1309
        %v5764 = vunpack.c.h.b16 %v1309
        %v5765 = vunpack.c.l.b16 %v1310
        %v5766 = vunpack.c.h.b16 %v1310
        %v5767 = vunpack.c.l.b16 %v1311
        %v5768 = vunpack.c.h.b16 %v1311
        %v5769 = vunpack.c.l.b16 %v1312
        %v5770 = vunpack.c.h.b16 %v1312
        %v5771 = vunpack.c.l.b16 %v1313
        %v5772 = vunpack.c.h.b16 %v1313
        %v5773 = vunpack.c.l.b16 %v1314
        %v5774 = vunpack.c.h.b16 %v1314
        %v5775 = vunpack.c.l.b16 %v1315
        %v5776 = vunpack.c.h.b16 %v1315
        %v5777 = vunpack.c.l.b16 %v1316
        %v5778 = vunpack.c.h.b16 %v1316
        %v5779 = vunpack.c.l.b16 %v1317
        %v5780 = vunpack.c.h.b16 %v1317
        %v5781 = vunpack.c.l.b16 %v1318
        %v5782 = vunpack.c.h.b16 %v1318
        %v5783 = vunpack.c.l.b16 %v1319
        %v5784 = vunpack.c.h.b16 %v1319
        %v5785 = vunpack.c.l.b16 %v1320
        %v5786 = vunpack.c.h.b16 %v1320
        %v5787 = vunpack.c.l.b16 %v1321
        %v5788 = vunpack.c.h.b16 %v1321
        %v5789 = vunpack.c.l.b16 %v1322
        %v5790 = vunpack.c.h.b16 %v1322
        %v5791 = vunpack.c.l.b16 %v1323
        %v5792 = vunpack.c.h.b16 %v1323
        %v5793 = vunpack.c.l.b16 %v1324
        %v5794 = vunpack.c.h.b16 %v1324
        %v5795 = vunpack.c.l.b16 %v1325
        %v5796 = vunpack.c.h.b16 %v1325
        %v5797 = vunpack.c.l.b16 %v1326
        %v5798 = vunpack.c.h.b16 %v1326
        %v5799 = vunpack.c.l.b16 %v1327
        %v5800 = vunpack.c.h.b16 %v1327
        %v5801 = vunpack.c.l.b16 %v1328
        %v5802 = vunpack.c.h.b16 %v1328
        %v5803 = vunpack.c.l.b16 %v1329
        %v5804 = vunpack.c.h.b16 %v1329
        %v5805 = vunpack.c.l.b16 %v1330
        %v5806 = vunpack.c.h.b16 %v1330
        %v5807 = vunpack.c.l.b16 %v1331
        %v5808 = vunpack.c.h.b16 %v1331
        %v5809 = vunpack.c.l.b16 %v1332
        %v5810 = vunpack.c.h.b16 %v1332
        %v5811 = vunpack.c.l.b16 %v1333
        %v5812 = vunpack.c.h.b16 %v1333
        %v5813 = vunpack.c.l.b16 %v1334
        %v5814 = vunpack.c.h.b16 %v1334
        %v5815 = vunpack.c.l.b16 %v1335
        %v5816 = vunpack.c.h.b16 %v1335
        %v5817 = vunpack.c.l.b16 %v1336
        %v5818 = vunpack.c.h.b16 %v1336
        %v5819 = vunpack.c.l.b16 %v1337
        %v5820 = vunpack.c.h.b16 %v1337
        %v5821 = vunpack.c.l.b16 %v1338
        %v5822 = vunpack.c.h.b16 %v1338
        %v5823 = vunpack.c.l.b16 %v1339
        %v5824 = vunpack.c.h.b16 %v1339
        %v5825 = vunpack.c.l.b16 %v1340
        %v5826 = vunpack.c.h.b16 %v1340
        %v5827 = vunpack.c.l.b16 %v1341
        %v5828 = vunpack.c.h.b16 %v1341
        %v5829 = vunpack.c.l.b16 %v1342
        %v5830 = vunpack.c.h.b16 %v1342
        %v5831 = vunpack.c.l.b16 %v1343
        %v5832 = vunpack.c.h.b16 %v1343
        %v5833 = vunpack.c.l.b16 %v1344
        %v5834 = vunpack.c.h.b16 %v1344
        %v5835 = vunpack.c.l.b16 %v1345
        %v5836 = vunpack.c.h.b16 %v1345
        %v5837 = vunpack.c.l.b16 %v1346
        %v5838 = vunpack.c.h.b16 %v1346
        %v5839 = vunpack.c.l.b16 %v1347
        %v5840 = vunpack.c.h.b16 %v1347
        %v5841 = vunpack.c.l.b16 %v1348
        %v5842 = vunpack.c.h.b16 %v1348
        %v5843 = vunpack.c.l.b16 %v1349
        %v5844 = vunpack.c.h.b16 %v1349
        %v5845 = vunpack.c.l.b16 %v1350
        %v5846 = vunpack.c.h.b16 %v1350
        %v5847 = vunpack.c.l.b16 %v1351
        %v5848 = vunpack.c.h.b16 %v1351
        %v5849 = vunpack.c.l.b16 %v1352
        %v5850 = vunpack.c.h.b16 %v1352
        %v5851 = vunpack.c.l.b16 %v1353
        %v5852 = vunpack.c.h.b16 %v1353
        %v5853 = vunpack.c.l.b16 %v1354
        %v5854 = vunpack.c.h.b16 %v1354
        %v5855 = vunpack.c.l.b16 %v1355
        %v5856 = vunpack.c.h.b16 %v1355
        %v5857 = vunpack.c.l.b16 %v1356
        %v5858 = vunpack.c.h.b16 %v1356
        %v5859 = vunpack.c.l.b16 %v1357
        %v5860 = vunpack.c.h.b16 %v1357
        %v5861 = vunpack.c.l.b16 %v1358
        %v5862 = vunpack.c.h.b16 %v1358
        %v5863 = vunpack.c.l.b16 %v1359
        %v5864 = vunpack.c.h.b16 %v1359
        %v5865 = vunpack.c.l.b16 %v1360
        %v5866 = vunpack.c.h.b16 %v1360
        %v5867 = vunpack.c.l.b16 %v1361
        %v5868 = vunpack.c.h.b16 %v1361
        %v5869 = vunpack.c.l.b16 %v1362
        %v5870 = vunpack.c.h.b16 %v1362
        %v5871 = vunpack.c.l.b16 %v1363
        %v5872 = vunpack.c.h.b16 %v1363
        %v5873 = vunpack.c.l.b16 %v1364
        %v5874 = vunpack.c.h.b16 %v1364
        %v5875 = vunpack.c.l.b16 %v1365
        %v5876 = vunpack.c.h.b16 %v1365
        %v5877 = vunpack.c.l.b16 %v1366
        %v5878 = vunpack.c.h.b16 %v1366
        %v5879 = vunpack.c.l.b16 %v1367
        %v5880 = vunpack.c.h.b16 %v1367
        %v5881 = vunpack.c.l.b16 %v1368
        %v5882 = vunpack.c.h.b16 %v1368
        %v5883 = vunpack.c.l.b16 %v1369
        %v5884 = vunpack.c.h.b16 %v1369
        %v5885 = vunpack.c.l.b16 %v1370
        %v5886 = vunpack.c.h.b16 %v1370
        %v5887 = vunpack.c.l.b16 %v1371
        %v5888 = vunpack.c.h.b16 %v1371
        %v5889 = vunpack.c.l.b16 %v1372
        %v5890 = vunpack.c.h.b16 %v1372
        %v5891 = vunpack.c.l.b16 %v1373
        %v5892 = vunpack.c.h.b16 %v1373
        %v5893 = vunpack.c.l.b16 %v1374
        %v5894 = vunpack.c.h.b16 %v1374
        %v5895 = vunpack.c.l.b16 %v1375
        %v5896 = vunpack.c.h.b16 %v1375
        %v5897 = vunpack.c.l.b16 %v1376
        %v5898 = vunpack.c.h.b16 %v1376
        %v5899 = vunpack.c.l.b16 %v1377
        %v5900 = vunpack.c.h.b16 %v1377
        %v5901 = vunpack.c.l.b16 %v1378
        %v5902 = vunpack.c.h.b16 %v1378
        %v5903 = vunpack.c.l.b16 %v1379
        %v5904 = vunpack.c.h.b16 %v1379
        %v5905 = vunpack.c.l.b16 %v1380
        %v5906 = vunpack.c.h.b16 %v1380
        %v5907 = vunpack.c.l.b16 %v1381
        %v5908 = vunpack.c.h.b16 %v1381
        %v5909 = vunpack.c.l.b16 %v1382
        %v5910 = vunpack.c.h.b16 %v1382
        %v5911 = vunpack.c.l.b16 %v1383
        %v5912 = vunpack.c.h.b16 %v1383
        %v5913 = vunpack.c.l.b16 %v1384
        %v5914 = vunpack.c.h.b16 %v1384
        %v5915 = vunpack.c.l.b16 %v1385
        %v5916 = vunpack.c.h.b16 %v1385
        %v5917 = vunpack.c.l.b16 %v1386
        %v5918 = vunpack.c.h.b16 %v1386
        %v5919 = vunpack.c.l.b16 %v1387
        %v5920 = vunpack.c.h.b16 %v1387
        %v5921 = vunpack.c.l.b16 %v1388
        %v5922 = vunpack.c.h.b16 %v1388
        %v5923 = vunpack.c.l.b16 %v1389
        %v5924 = vunpack.c.h.b16 %v1389
        %v5925 = vunpack.c.l.b16 %v1390
        %v5926 = vunpack.c.h.b16 %v1390
        %v5927 = vunpack.c.l.b16 %v1391
        %v5928 = vunpack.c.h.b16 %v1391
        %v5929 = vunpack.c.l.b16 %v1392
        %v5930 = vunpack.c.h.b16 %v1392
        %v5931 = vunpack.c.l.b16 %v1393
        %v5932 = vunpack.c.h.b16 %v1393
        %v5933 = vunpack.c.l.b16 %v1394
        %v5934 = vunpack.c.h.b16 %v1394
        %v5935 = vunpack.c.l.b16 %v1395
        %v5936 = vunpack.c.h.b16 %v1395
        %v5937 = vunpack.c.l.b16 %v1396
        %v5938 = vunpack.c.h.b16 %v1396
        %v5939 = vunpack.c.l.b16 %v1397
        %v5940 = vunpack.c.h.b16 %v1397
        %v5941 = vunpack.c.l.b16 %v1398
        %v5942 = vunpack.c.h.b16 %v1398
        %v5943 = vunpack.c.l.b16 %v1399
        %v5944 = vunpack.c.h.b16 %v1399
        %v5945 = vunpack.c.l.b16 %v1400
        %v5946 = vunpack.c.h.b16 %v1400
        %v5947 = vunpack.c.l.b16 %v1401
        %v5948 = vunpack.c.h.b16 %v1401
        %v5949 = vunpack.c.l.b16 %v1402
        %v5950 = vunpack.c.h.b16 %v1402
        %v5951 = vunpack.c.l.b16 %v1403
        %v5952 = vunpack.c.h.b16 %v1403
        %v5953 = vunpack.c.l.b16 %v1404
        %v5954 = vunpack.c.h.b16 %v1404
        %v5955 = vunpack.c.l.b16 %v1405
        %v5956 = vunpack.c.h.b16 %v1405
        %v5957 = vunpack.c.l.b16 %v1406
        %v5958 = vunpack.c.h.b16 %v1406
        %v5959 = vunpack.c.l.b16 %v1407
        %v5960 = vunpack.c.h.b16 %v1407
        %v5961 = vunpack.c.l.b16 %v1408
        %v5962 = vunpack.c.h.b16 %v1408
        %v5963 = vunpack.c.l.b16 %v1409
        %v5964 = vunpack.c.h.b16 %v1409
        %v5965 = vunpack.c.l.b16 %v1410
        %v5966 = vunpack.c.h.b16 %v1410
        %v5967 = vunpack.c.l.b16 %v1411
        %v5968 = vunpack.c.h.b16 %v1411
        %v5969 = vunpack.c.l.b16 %v1412
        %v5970 = vunpack.c.h.b16 %v1412
        %v5971 = vunpack.c.l.b16 %v1413
        %v5972 = vunpack.c.h.b16 %v1413
        %v5973 = vunpack.c.l.b16 %v1414
        %v5974 = vunpack.c.h.b16 %v1414
        %v5975 = vunpack.c.l.b16 %v1415
        %v5976 = vunpack.c.h.b16 %v1415
        %v5977 = vunpack.c.l.b16 %v1416
        %v5978 = vunpack.c.h.b16 %v1416
        %v5979 = vunpack.c.l.b16 %v1417
        %v5980 = vunpack.c.h.b16 %v1417
        %v5981 = vunpack.c.l.b16 %v1418
        %v5982 = vunpack.c.h.b16 %v1418
        %v5983 = vunpack.c.l.b16 %v1419
        %v5984 = vunpack.c.h.b16 %v1419
        %v5985 = vunpack.c.l.b16 %v1420
        %v5986 = vunpack.c.h.b16 %v1420
        %v5987 = vunpack.c.l.b16 %v1421
        %v5988 = vunpack.c.h.b16 %v1421
        %v5989 = vunpack.c.l.b16 %v1422
        %v5990 = vunpack.c.h.b16 %v1422
        %v5991 = vunpack.c.l.b16 %v1423
        %v5992 = vunpack.c.h.b16 %v1423
        %v5993 = vunpack.c.l.b16 %v1424
        %v5994 = vunpack.c.h.b16 %v1424
        %v5995 = vunpack.c.l.b16 %v1425
        %v5996 = vunpack.c.h.b16 %v1425
        %v5997 = vunpack.c.l.b16 %v1426
        %v5998 = vunpack.c.h.b16 %v1426
        %v5999 = vunpack.c.l.b16 %v1427
        %v6000 = vunpack.c.h.b16 %v1427
        %v6001 = vunpack.c.l.b16 %v1428
        %v6002 = vunpack.c.h.b16 %v1428
        %v6003 = vunpack.c.l.b16 %v1429
        %v6004 = vunpack.c.h.b16 %v1429
        %v6005 = vunpack.c.l.b16 %v1430
        %v6006 = vunpack.c.h.b16 %v1430
        %v6007 = vunpack.c.l.b16 %v1431
        %v6008 = vunpack.c.h.b16 %v1431
        %v6009 = vunpack.c.l.b16 %v1432
        %v6010 = vunpack.c.h.b16 %v1432
        %v6011 = vunpack.c.l.b16 %v1433
        %v6012 = vunpack.c.h.b16 %v1433
        %v6013 = vunpack.c.l.b16 %v1434
        %v6014 = vunpack.c.h.b16 %v1434
        %v6015 = vunpack.c.l.b16 %v1435
        %v6016 = vunpack.c.h.b16 %v1435
        %v6017 = vunpack.c.l.b16 %v1436
        %v6018 = vunpack.c.h.b16 %v1436
        %v6019 = vunpack.c.l.b16 %v1437
        %v6020 = vunpack.c.h.b16 %v1437
        %v6021 = vunpack.c.l.b16 %v1438
        %v6022 = vunpack.c.h.b16 %v1438
        %v6023 = vunpack.c.l.b16 %v1439
        %v6024 = vunpack.c.h.b16 %v1439
        %v6025 = vunpack.c.l.b16 %v1440
        %v6026 = vunpack.c.h.b16 %v1440
        %v6027 = vunpack.c.l.b16 %v1441
        %v6028 = vunpack.c.h.b16 %v1441
        %v6029 = vunpack.c.l.b16 %v1442
        %v6030 = vunpack.c.h.b16 %v1442
        %v6031 = vunpack.c.l.b16 %v1443
        %v6032 = vunpack.c.h.b16 %v1443
        %v6033 = vunpack.c.l.b16 %v1444
        %v6034 = vunpack.c.h.b16 %v1444
        %v6035 = vunpack.c.l.b16 %v1445
        %v6036 = vunpack.c.h.b16 %v1445
        %v6037 = vunpack.c.l.b16 %v1446
        %v6038 = vunpack.c.h.b16 %v1446
        %v6039 = vunpack.c.l.b16 %v1447
        %v6040 = vunpack.c.h.b16 %v1447
        %v6041 = vunpack.c.l.b16 %v1448
        %v6042 = vunpack.c.h.b16 %v1448
        %v6043 = vunpack.c.l.b16 %v1449
        %v6044 = vunpack.c.h.b16 %v1449
        %v6045 = vunpack.c.l.b16 %v1450
        %v6046 = vunpack.c.h.b16 %v1450
        %v6047 = vunpack.c.l.b16 %v1451
        %v6048 = vunpack.c.h.b16 %v1451
        %v6049 = vunpack.c.l.b16 %v1452
        %v6050 = vunpack.c.h.b16 %v1452
        %v6051 = vunpack.c.l.b16 %v1453
        %v6052 = vunpack.c.h.b16 %v1453
        %v6053 = vunpack.c.l.b16 %v1454
        %v6054 = vunpack.c.h.b16 %v1454
        %v6055 = vunpack.c.l.b16 %v1455
        %v6056 = vunpack.c.h.b16 %v1455
        %v6057 = vunpack.c.l.b16 %v1456
        %v6058 = vunpack.c.h.b16 %v1456
        %v6059 = vunpack.c.l.b16 %v1457
        %v6060 = vunpack.c.h.b16 %v1457
        %v6061 = vunpack.c.l.b16 %v1458
        %v6062 = vunpack.c.h.b16 %v1458
        %v6063 = vunpack.c.l.b16 %v1459
        %v6064 = vunpack.c.h.b16 %v1459
        %v6065 = vunpack.c.l.b16 %v1460
        %v6066 = vunpack.c.h.b16 %v1460
        %v6067 = vunpack.c.l.b16 %v1461
        %v6068 = vunpack.c.h.b16 %v1461
        %v6069 = vunpack.c.l.b16 %v1462
        %v6070 = vunpack.c.h.b16 %v1462
        %v6071 = vunpack.c.l.b16 %v1463
        %v6072 = vunpack.c.h.b16 %v1463
        %v6073 = vunpack.c.l.b16 %v1464
        %v6074 = vunpack.c.h.b16 %v1464
        %v6075 = vunpack.c.l.b16 %v1465
        %v6076 = vunpack.c.h.b16 %v1465
        %v6077 = vunpack.c.l.b16 %v1466
        %v6078 = vunpack.c.h.b16 %v1466
        %v6079 = vunpack.c.l.b16 %v1467
        %v6080 = vunpack.c.h.b16 %v1467
        %v6081 = vunpack.c.l.b16 %v1468
        %v6082 = vunpack.c.h.b16 %v1468
        %v6083 = vunpack.c.l.b16 %v1469
        %v6084 = vunpack.c.h.b16 %v1469
        %v6085 = vunpack.c.l.b16 %v1470
        %v6086 = vunpack.c.h.b16 %v1470
        %v6087 = vunpack.c.l.b16 %v1471
        %v6088 = vunpack.c.h.b16 %v1471
        %v6089 = vunpack.c.l.b16 %v1472
        %v6090 = vunpack.c.h.b16 %v1472
        %v6091 = vunpack.c.l.b16 %v1473
        %v6092 = vunpack.c.h.b16 %v1473
        %v6093 = vunpack.c.l.b16 %v1474
        %v6094 = vunpack.c.h.b16 %v1474
        %v6095 = vunpack.c.l.b16 %v1475
        %v6096 = vunpack.c.h.b16 %v1475
        %v6097 = vunpack.c.l.b16 %v1476
        %v6098 = vunpack.c.h.b16 %v1476
        %v6099 = vunpack.c.l.b16 %v1477
        %v6100 = vunpack.c.h.b16 %v1477
        %v6101 = vunpack.c.l.b16 %v1478
        %v6102 = vunpack.c.h.b16 %v1478
        %v6103 = vunpack.c.l.b16 %v1479
        %v6104 = vunpack.c.h.b16 %v1479
        %v6105 = vunpack.c.l.b16 %v1480
        %v6106 = vunpack.c.h.b16 %v1480
        %v6107 = vunpack.c.l.b16 %v1481
        %v6108 = vunpack.c.h.b16 %v1481
        %v6109 = vunpack.c.l.b16 %v1482
        %v6110 = vunpack.c.h.b16 %v1482
        %v6111 = vunpack.c.l.b16 %v1483
        %v6112 = vunpack.c.h.b16 %v1483
        %v6113 = vunpack.c.l.b16 %v1484
        %v6114 = vunpack.c.h.b16 %v1484
        %v6115 = vunpack.c.l.b16 %v1485
        %v6116 = vunpack.c.h.b16 %v1485
        %v6117 = vunpack.c.l.b16 %v1486
        %v6118 = vunpack.c.h.b16 %v1486
        %v6119 = vunpack.c.l.b16 %v1487
        %v6120 = vunpack.c.h.b16 %v1487
        %v6121 = vunpack.c.l.b16 %v1488
        %v6122 = vunpack.c.h.b16 %v1488
        %v6123 = vunpack.c.l.b16 %v1489
        %v6124 = vunpack.c.h.b16 %v1489
        %v6125 = vunpack.c.l.b16 %v1490
        %v6126 = vunpack.c.h.b16 %v1490
        %v6127 = vunpack.c.l.b16 %v1491
        %v6128 = vunpack.c.h.b16 %v1491
        %v6129 = vunpack.c.l.b16 %v1492
        %v6130 = vunpack.c.h.b16 %v1492
        %v6131 = vunpack.c.l.b16 %v1493
        %v6132 = vunpack.c.h.b16 %v1493
        %v6133 = vunpack.c.l.b16 %v1494
        %v6134 = vunpack.c.h.b16 %v1494
        %v6135 = vunpack.c.l.b16 %v1495
        %v6136 = vunpack.c.h.b16 %v1495
        %v6137 = vunpack.c.l.b16 %v1496
        %v6138 = vunpack.c.h.b16 %v1496
        %v6139 = vunpack.c.l.b16 %v1497
        %v6140 = vunpack.c.h.b16 %v1497
        %v6141 = vunpack.c.l.b16 %v1498
        %v6142 = vunpack.c.h.b16 %v1498
        %v6143 = vunpack.c.l.b16 %v1499
        %v6144 = vunpack.c.h.b16 %v1499
        %v6145 = vunpack.c.l.b16 %v1500
        %v6146 = vunpack.c.h.b16 %v1500
        %v6147 = vunpack.c.l.b16 %v1501
        %v6148 = vunpack.c.h.b16 %v1501
        %v6149 = vunpack.c.l.b16 %v1502
        %v6150 = vunpack.c.h.b16 %v1502
        %v6151 = vunpack.c.l.b16 %v1503
        %v6152 = vunpack.c.h.b16 %v1503
        %v6153 = vunpack.c.l.b16 %v1504
        %v6154 = vunpack.c.h.b16 %v1504
        %v6155 = vunpack.c.l.b16 %v1505
        %v6156 = vunpack.c.h.b16 %v1505
        %v6157 = vunpack.c.l.b16 %v1506
        %v6158 = vunpack.c.h.b16 %v1506
        %v6159 = vunpack.c.l.b16 %v1507
        %v6160 = vunpack.c.h.b16 %v1507
        %v6161 = vunpack.c.l.b16 %v1508
        %v6162 = vunpack.c.h.b16 %v1508
        %v6163 = vunpack.c.l.b16 %v1509
        %v6164 = vunpack.c.h.b16 %v1509
        %v6165 = vunpack.c.l.b16 %v1510
        %v6166 = vunpack.c.h.b16 %v1510
        %v6167 = vunpack.c.l.b16 %v1511
        %v6168 = vunpack.c.h.b16 %v1511
        %v6169 = vunpack.c.l.b16 %v1512
        %v6170 = vunpack.c.h.b16 %v1512
        %v6171 = vunpack.c.l.b16 %v1513
        %v6172 = vunpack.c.h.b16 %v1513
        %v6173 = vunpack.c.l.b16 %v1514
        %v6174 = vunpack.c.h.b16 %v1514
        %v6175 = vunpack.c.l.b16 %v1515
        %v6176 = vunpack.c.h.b16 %v1515
        %v6177 = vunpack.c.l.b16 %v1516
        %v6178 = vunpack.c.h.b16 %v1516
        %v6179 = vunpack.c.l.b16 %v1517
        %v6180 = vunpack.c.h.b16 %v1517
        %v6181 = vunpack.c.l.b16 %v1518
        %v6182 = vunpack.c.h.b16 %v1518
        %v6183 = vunpack.c.l.b16 %v1519
        %v6184 = vunpack.c.h.b16 %v1519
        %v6185 = vunpack.c.l.b16 %v1520
        %v6186 = vunpack.c.h.b16 %v1520
        %v6187 = vunpack.c.l.b16 %v1521
        %v6188 = vunpack.c.h.b16 %v1521
        %v6189 = vunpack.c.l.b16 %v1522
        %v6190 = vunpack.c.h.b16 %v1522
        %v6191 = vunpack.c.l.b16 %v1523
        %v6192 = vunpack.c.h.b16 %v1523
        %v6193 = vunpack.c.l.b16 %v1524
        %v6194 = vunpack.c.h.b16 %v1524
        %v6195 = vunpack.c.l.b16 %v1525
        %v6196 = vunpack.c.h.b16 %v1525
        %v6197 = vunpack.c.l.b16 %v1526
        %v6198 = vunpack.c.h.b16 %v1526
        %v6199 = vunpack.c.l.b16 %v1527
        %v6200 = vunpack.c.h.b16 %v1527
        %v6201 = vunpack.c.l.b16 %v1528
        %v6202 = vunpack.c.h.b16 %v1528
        %v6203 = vunpack.c.l.b16 %v1529
        %v6204 = vunpack.c.h.b16 %v1529
        %v6205 = vunpack.c.l.b16 %v1530
        %v6206 = vunpack.c.h.b16 %v1530
        %v6207 = vunpack.c.l.b16 %v1531
        %v6208 = vunpack.c.h.b16 %v1531
        %v6209 = vunpack.c.l.b16 %v1532
        %v6210 = vunpack.c.h.b16 %v1532
        %v6211 = vunpack.c.l.b16 %v1533
        %v6212 = vunpack.c.h.b16 %v1533
        %v6213 = vunpack.c.l.b16 %v1534
        %v6214 = vunpack.c.h.b16 %v1534
        %v6215 = vunpack.c.l.b16 %v1535
        %v6216 = vunpack.c.h.b16 %v1535
        %v6217 = vunpack.c.l.b16 %v1536
        %v6218 = vunpack.c.h.b16 %v1536
        %v6219 = vunpack.c.l.b16 %v1537
        %v6220 = vunpack.c.h.b16 %v1537
        %v6221 = vunpack.c.l.b16 %v1538
        %v6222 = vunpack.c.h.b16 %v1538
        %v6223 = vunpack.c.l.b16 %v1539
        %v6224 = vunpack.c.h.b16 %v1539
        %v6225 = vunpack.c.l.b16 %v1540
        %v6226 = vunpack.c.h.b16 %v1540
        %v6227 = vunpack.c.l.b16 %v1541
        %v6228 = vunpack.c.h.b16 %v1541
        %v6229 = vunpack.c.l.b16 %v1542
        %v6230 = vunpack.c.h.b16 %v1542
        %v6231 = vunpack.c.l.b16 %v1543
        %v6232 = vunpack.c.h.b16 %v1543
        %v6233 = vunpack.c.l.b16 %v1544
        %v6234 = vunpack.c.h.b16 %v1544
        %v6235 = vunpack.c.l.b16 %v1545
        %v6236 = vunpack.c.h.b16 %v1545
        %v6237 = vunpack.c.l.b16 %v1546
        %v6238 = vunpack.c.h.b16 %v1546
        %v6239 = vunpack.c.l.b16 %v1547
        %v6240 = vunpack.c.h.b16 %v1547
        %v6241 = vunpack.c.l.b16 %v1548
        %v6242 = vunpack.c.h.b16 %v1548
        %v6243 = vunpack.c.l.b16 %v1549
        %v6244 = vunpack.c.h.b16 %v1549
        %v6245 = vunpack.c.l.b16 %v1550
        %v6246 = vunpack.c.h.b16 %v1550
        %v6247 = vunpack.c.l.b16 %v1551
        %v6248 = vunpack.c.h.b16 %v1551
        %v6249 = vunpack.c.l.b16 %v1552
        %v6250 = vunpack.c.h.b16 %v1552
        %v6251 = vunpack.c.l.b16 %v1553
        %v6252 = vunpack.c.h.b16 %v1553
        %v6253 = vunpack.c.l.b16 %v1554
        %v6254 = vunpack.c.h.b16 %v1554
        %v6255 = vunpack.c.l.b16 %v1555
        %v6256 = vunpack.c.h.b16 %v1555
        %v6257 = vunpack.c.l.b16 %v1556
        %v6258 = vunpack.c.h.b16 %v1556
        %v6259 = vunpack.c.l.b16 %v1557
        %v6260 = vunpack.c.h.b16 %v1557
        %v6261 = vunpack.c.l.b16 %v1558
        %v6262 = vunpack.c.h.b16 %v1558
        %v6263 = vunpack.c.l.b16 %v1559
        %v6264 = vunpack.c.h.b16 %v1559
        %v6265 = vunpack.c.l.b16 %v1560
        %v6266 = vunpack.c.h.b16 %v1560
        %v6267 = vunpack.c.l.b16 %v1561
        %v6268 = vunpack.c.h.b16 %v1561
        %v6269 = vunpack.c.l.b16 %v1562
        %v6270 = vunpack.c.h.b16 %v1562
        %v6271 = vunpack.c.l.b16 %v1563
        %v6272 = vunpack.c.h.b16 %v1563
        %v6273 = vunpack.c.l.b16 %v1564
        %v6274 = vunpack.c.h.b16 %v1564
        %v6275 = vunpack.c.l.b16 %v1565
        %v6276 = vunpack.c.h.b16 %v1565
        %v6277 = vunpack.c.l.b16 %v1566
        %v6278 = vunpack.c.h.b16 %v1566
        %v6279 = vunpack.c.l.b16 %v1567
        %v6280 = vunpack.c.h.b16 %v1567
        %v6281 = vunpack.c.l.b16 %v1568
        %v6282 = vunpack.c.h.b16 %v1568
        %v6283 = vunpack.c.l.b16 %v1569
        %v6284 = vunpack.c.h.b16 %v1569
        %v6285 = vunpack.c.l.b16 %v1570
        %v6286 = vunpack.c.h.b16 %v1570
        %v6287 = vunpack.c.l.b16 %v1571
        %v6288 = vunpack.c.h.b16 %v1571
        %v6289 = vunpack.c.l.b16 %v1572
        %v6290 = vunpack.c.h.b16 %v1572
        %v6291 = vunpack.c.l.b16 %v1573
        %v6292 = vunpack.c.h.b16 %v1573
        %v6293 = vunpack.c.l.b16 %v1574
        %v6294 = vunpack.c.h.b16 %v1574
        %v6295 = vunpack.c.l.b16 %v1575
        %v6296 = vunpack.c.h.b16 %v1575
        %v6297 = vunpack.c.l.b16 %v1576
        %v6298 = vunpack.c.h.b16 %v1576
        %v6299 = vunpack.c.l.b16 %v1577
        %v6300 = vunpack.c.h.b16 %v1577
        %v6301 = vunpack.c.l.b16 %v1578
        %v6302 = vunpack.c.h.b16 %v1578
        %v6303 = vunpack.c.l.b16 %v1579
        %v6304 = vunpack.c.h.b16 %v1579
        %v6305 = vunpack.c.l.b16 %v1580
        %v6306 = vunpack.c.h.b16 %v1580
        %v6307 = vunpack.c.l.b16 %v1581
        %v6308 = vunpack.c.h.b16 %v1581
        %v6309 = vunpack.c.l.b16 %v1582
        %v6310 = vunpack.c.h.b16 %v1582
        %v6311 = vunpack.c.l.b16 %v1583
        %v6312 = vunpack.c.h.b16 %v1583
        %v6313 = vunpack.c.l.b16 %v1584
        %v6314 = vunpack.c.h.b16 %v1584
        %v6315 = vunpack.c.l.b16 %v1585
        %v6316 = vunpack.c.h.b16 %v1585
        %v6317 = vunpack.c.l.b16 %v1586
        %v6318 = vunpack.c.h.b16 %v1586
        %v6319 = vunpack.c.l.b16 %v1587
        %v6320 = vunpack.c.h.b16 %v1587
        %v6321 = vunpack.c.l.b16 %v1588
        %v6322 = vunpack.c.h.b16 %v1588
        %v6323 = vunpack.c.l.b16 %v1589
        %v6324 = vunpack.c.h.b16 %v1589
        %v6325 = vunpack.c.l.b16 %v1590
        %v6326 = vunpack.c.h.b16 %v1590
        %v6327 = vunpack.c.l.b16 %v1591
        %v6328 = vunpack.c.h.b16 %v1591
        %v6329 = vunpack.c.l.b16 %v1592
        %v6330 = vunpack.c.h.b16 %v1592
        %v6331 = vunpack.c.l.b16 %v1593
        %v6332 = vunpack.c.h.b16 %v1593
        %v6333 = vunpack.c.l.b16 %v1594
        %v6334 = vunpack.c.h.b16 %v1594
        %v6335 = vunpack.c.l.b16 %v1595
        %v6336 = vunpack.c.h.b16 %v1595
        %v6337 = vunpack.c.l.b16 %v1596
        %v6338 = vunpack.c.h.b16 %v1596
        %v6339 = vunpack.c.l.b16 %v1597
        %v6340 = vunpack.c.h.b16 %v1597
        %v6341 = vunpack.c.l.b16 %v1598
        %v6342 = vunpack.c.h.b16 %v1598
        %v6343 = vunpack.c.l.b16 %v1599
        %v6344 = vunpack.c.h.b16 %v1599
        %v6345 = vunpack.c.l.b16 %v1600
        %v6346 = vunpack.c.h.b16 %v1600
        %v6347 = vunpack.c.l.b16 %v1601
        %v6348 = vunpack.c.h.b16 %v1601
        %v6349 = vunpack.c.l.b16 %v1602
        %v6350 = vunpack.c.h.b16 %v1602
        %v6351 = vunpack.c.l.b16 %v1603
        %v6352 = vunpack.c.h.b16 %v1603
        %v6353 = vunpack.c.l.b16 %v1604
        %v6354 = vunpack.c.h.b16 %v1604
        %v6355 = vunpack.c.l.b16 %v1605
        %v6356 = vunpack.c.h.b16 %v1605
        %v6357 = vunpack.c.l.b16 %v1606
        %v6358 = vunpack.c.h.b16 %v1606
        %v6359 = vunpack.c.l.b16 %v1607
        %v6360 = vunpack.c.h.b16 %v1607
        %v6361 = vunpack.c.l.b16 %v1608
        %v6362 = vunpack.c.h.b16 %v1608
        %v6363 = vunpack.c.l.b16 %v1609
        %v6364 = vunpack.c.h.b16 %v1609
        %v6365 = vunpack.c.l.b16 %v1610
        %v6366 = vunpack.c.h.b16 %v1610
        %v6367 = vunpack.c.l.b16 %v1611
        %v6368 = vunpack.c.h.b16 %v1611
        %v6369 = vunpack.c.l.b16 %v1612
        %v6370 = vunpack.c.h.b16 %v1612
        %v6371 = vunpack.c.l.b16 %v1613
        %v6372 = vunpack.c.h.b16 %v1613
        %v6373 = vunpack.c.l.b16 %v1614
        %v6374 = vunpack.c.h.b16 %v1614
        %v6375 = vunpack.c.l.b16 %v1615
        %v6376 = vunpack.c.h.b16 %v1615
        %v6377 = vunpack.c.l.b16 %v1616
        %v6378 = vunpack.c.h.b16 %v1616
        %v6379 = vunpack.c.l.b16 %v1617
        %v6380 = vunpack.c.h.b16 %v1617
        %v6381 = vunpack.c.l.b16 %v1618
        %v6382 = vunpack.c.h.b16 %v1618
        %v6383 = vunpack.c.l.b16 %v1619
        %v6384 = vunpack.c.h.b16 %v1619
        %v6385 = vunpack.c.l.b16 %v1620
        %v6386 = vunpack.c.h.b16 %v1620
        %v6387 = vunpack.c.l.b16 %v1621
        %v6388 = vunpack.c.h.b16 %v1621
        %v6389 = vunpack.c.l.b16 %v1622
        %v6390 = vunpack.c.h.b16 %v1622
        %v6391 = vunpack.c.l.b16 %v1623
        %v6392 = vunpack.c.h.b16 %v1623
        %v6393 = vunpack.c.l.b16 %v1624
        %v6394 = vunpack.c.h.b16 %v1624
        %v6395 = vunpack.c.l.b16 %v1625
        %v6396 = vunpack.c.h.b16 %v1625
        %v6397 = vunpack.c.l.b16 %v1626
        %v6398 = vunpack.c.h.b16 %v1626
        %v6399 = vunpack.c.l.b16 %v1627
        %v6400 = vunpack.c.h.b16 %v1627
        %v6401 = vunpack.c.l.b16 %v1628
        %v6402 = vunpack.c.h.b16 %v1628
        %v6403 = vunpack.c.l.b16 %v1629
        %v6404 = vunpack.c.h.b16 %v1629
        %v6405 = vunpack.c.l.b16 %v1630
        %v6406 = vunpack.c.h.b16 %v1630
        %v6407 = vunpack.c.l.b16 %v1631
        %v6408 = vunpack.c.h.b16 %v1631
        %v6409 = vunpack.c.l.b16 %v1632
        %v6410 = vunpack.c.h.b16 %v1632
        %v6411 = vunpack.c.l.b16 %v1633
        %v6412 = vunpack.c.h.b16 %v1633
        %v6413 = vunpack.c.l.b16 %v1634
        %v6414 = vunpack.c.h.b16 %v1634
        %v6415 = vunpack.c.l.b16 %v1635
        %v6416 = vunpack.c.h.b16 %v1635
        %v6417 = vunpack.c.l.b16 %v1636
        %v6418 = vunpack.c.h.b16 %v1636
        %v6419 = vunpack.c.l.b16 %v1637
        %v6420 = vunpack.c.h.b16 %v1637
        %v6421 = vunpack.c.l.b16 %v1638
        %v6422 = vunpack.c.h.b16 %v1638
        %v6423 = vunpack.c.l.b16 %v1639
        %v6424 = vunpack.c.h.b16 %v1639
        %v6425 = vunpack.c.l.b16 %v1640
        %v6426 = vunpack.c.h.b16 %v1640
        %v6427 = vunpack.c.l.b16 %v1641
        %v6428 = vunpack.c.h.b16 %v1641
        %v6429 = vunpack.c.l.b16 %v1642
        %v6430 = vunpack.c.h.b16 %v1642
        %v6431 = vunpack.c.l.b16 %v1643
        %v6432 = vunpack.c.h.b16 %v1643
        %v6433 = vunpack.c.l.b16 %v1644
        %v6434 = vunpack.c.h.b16 %v1644
        %v6435 = vunpack.c.l.b16 %v1645
        %v6436 = vunpack.c.h.b16 %v1645
        %v6437 = vunpack.c.l.b16 %v1646
        %v6438 = vunpack.c.h.b16 %v1646
        %v6439 = vunpack.c.l.b16 %v1647
        %v6440 = vunpack.c.h.b16 %v1647
        %v6441 = vunpack.c.l.b16 %v1648
        %v6442 = vunpack.c.h.b16 %v1648
        %v6443 = vunpack.c.l.b16 %v1649
        %v6444 = vunpack.c.h.b16 %v1649
        %v6445 = vunpack.c.l.b16 %v1650
        %v6446 = vunpack.c.h.b16 %v1650
        %v6447 = vunpack.c.l.b16 %v1651
        %v6448 = vunpack.c.h.b16 %v1651
        %v6449 = vunpack.c.l.b16 %v1652
        %v6450 = vunpack.c.h.b16 %v1652
        %v6451 = vunpack.c.l.b16 %v1653
        %v6452 = vunpack.c.h.b16 %v1653
        %v6453 = vunpack.c.l.b16 %v1654
        %v6454 = vunpack.c.h.b16 %v1654
        %v6455 = vunpack.c.l.b16 %v1655
        %v6456 = vunpack.c.h.b16 %v1655
        %v6457 = vunpack.c.l.b16 %v1656
        %v6458 = vunpack.c.h.b16 %v1656
        %v6459 = vunpack.c.l.b16 %v1657
        %v6460 = vunpack.c.h.b16 %v1657
        %v6461 = vunpack.c.l.b16 %v1658
        %v6462 = vunpack.c.h.b16 %v1658
        %v6463 = vunpack.c.l.b16 %v1659
        %v6464 = vunpack.c.h.b16 %v1659
        %v6465 = vunpack.c.l.b16 %v1660
        %v6466 = vunpack.c.h.b16 %v1660
        %v6467 = vunpack.c.l.b16 %v1661
        %v6468 = vunpack.c.h.b16 %v1661
        %v6469 = vunpack.c.l.b16 %v1662
        %v6470 = vunpack.c.h.b16 %v1662
        %v6471 = vunpack.c.l.b16 %v1663
        %v6472 = vunpack.c.h.b16 %v1663
        %v6473 = vunpack.c.l.b16 %v1664
        %v6474 = vunpack.c.h.b16 %v1664
        %v6475 = vunpack.c.l.b16 %v1665
        %v6476 = vunpack.c.h.b16 %v1665
        %v6477 = vunpack.c.l.b16 %v1666
        %v6478 = vunpack.c.h.b16 %v1666
        %v6479 = vunpack.c.l.b16 %v1667
        %v6480 = vunpack.c.h.b16 %v1667
        %v6481 = vunpack.c.l.b16 %v1668
        %v6482 = vunpack.c.h.b16 %v1668
        %v6483 = vunpack.c.l.b16 %v1669
        %v6484 = vunpack.c.h.b16 %v1669
        %v6485 = vunpack.c.l.b16 %v1670
        %v6486 = vunpack.c.h.b16 %v1670
        %v6487 = vunpack.c.l.b16 %v1671
        %v6488 = vunpack.c.h.b16 %v1671
        %v6489 = vunpack.c.l.b16 %v1672
        %v6490 = vunpack.c.h.b16 %v1672
        %v6491 = vunpack.c.l.b16 %v1673
        %v6492 = vunpack.c.h.b16 %v1673
        %v6493 = vunpack.c.l.b16 %v1674
        %v6494 = vunpack.c.h.b16 %v1674
        %v6495 = vunpack.c.l.b16 %v1675
        %v6496 = vunpack.c.h.b16 %v1675
        %v6497 = vunpack.c.l.b16 %v1676
        %v6498 = vunpack.c.h.b16 %v1676
        %v6499 = vunpack.c.l.b16 %v1677
        %v6500 = vunpack.c.h.b16 %v1677
        %v6501 = vunpack.c.l.b16 %v1678
        %v6502 = vunpack.c.h.b16 %v1678
        %v6503 = vunpack.c.l.b16 %v1679
        %v6504 = vunpack.c.h.b16 %v1679
        %v6505 = vunpack.c.l.b16 %v1680
        %v6506 = vunpack.c.h.b16 %v1680
        %v6507 = vunpack.c.l.b16 %v1681
        %v6508 = vunpack.c.h.b16 %v1681
        %v6509 = vunpack.c.l.b16 %v1682
        %v6510 = vunpack.c.h.b16 %v1682
        %v6511 = vunpack.c.l.b16 %v1683
        %v6512 = vunpack.c.h.b16 %v1683
        %v6513 = vunpack.c.l.b16 %v1684
        %v6514 = vunpack.c.h.b16 %v1684
        %v6515 = vunpack.c.l.b16 %v1685
        %v6516 = vunpack.c.h.b16 %v1685
        %v6517 = vunpack.c.l.b16 %v1686
        %v6518 = vunpack.c.h.b16 %v1686
        %v6519 = vunpack.c.l.b16 %v1687
        %v6520 = vunpack.c.h.b16 %v1687
        %v6521 = vunpack.c.l.b16 %v1688
        %v6522 = vunpack.c.h.b16 %v1688
        %v6523 = vunpack.c.l.b16 %v1689
        %v6524 = vunpack.c.h.b16 %v1689
        %v6525 = vunpack.c.l.b16 %v1690
        %v6526 = vunpack.c.h.b16 %v1690
        %v6527 = vunpack.c.l.b16 %v1691
        %v6528 = vunpack.c.h.b16 %v1691
        %v6529 = vunpack.c.l.b16 %v1692
        %v6530 = vunpack.c.h.b16 %v1692
        %v6531 = vunpack.c.l.b16 %v1693
        %v6532 = vunpack.c.h.b16 %v1693
        %v6533 = vunpack.c.l.b16 %v1694
        %v6534 = vunpack.c.h.b16 %v1694
        %v6535 = vunpack.c.l.b16 %v1695
        %v6536 = vunpack.c.h.b16 %v1695
        %v6537 = vunpack.c.l.b16 %v1696
        %v6538 = vunpack.c.h.b16 %v1696
        %v6539 = vunpack.c.l.b16 %v1697
        %v6540 = vunpack.c.h.b16 %v1697
        %v6541 = vunpack.c.l.b16 %v1698
        %v6542 = vunpack.c.h.b16 %v1698
        %v6543 = vunpack.c.l.b16 %v1699
        %v6544 = vunpack.c.h.b16 %v1699
        %v6545 = vunpack.c.l.b16 %v1700
        %v6546 = vunpack.c.h.b16 %v1700
        %v6547 = vunpack.c.l.b16 %v1701
        %v6548 = vunpack.c.h.b16 %v1701
        %v6549 = vunpack.c.l.b16 %v1702
        %v6550 = vunpack.c.h.b16 %v1702
        %v6551 = vunpack.c.l.b16 %v1703
        %v6552 = vunpack.c.h.b16 %v1703
        %v6553 = vunpack.c.l.b16 %v1704
        %v6554 = vunpack.c.h.b16 %v1704
        %v6555 = vunpack.c.l.b16 %v1705
        %v6556 = vunpack.c.h.b16 %v1705
        %v6557 = vunpack.c.l.b16 %v1706
        %v6558 = vunpack.c.h.b16 %v1706
        %v6559 = vunpack.c.l.b16 %v1707
        %v6560 = vunpack.c.h.b16 %v1707
        %v6561 = vunpack.c.l.b16 %v1708
        %v6562 = vunpack.c.h.b16 %v1708
        %v6563 = vunpack.c.l.b16 %v1709
        %v6564 = vunpack.c.h.b16 %v1709
        %v6565 = vunpack.c.l.b16 %v1710
        %v6566 = vunpack.c.h.b16 %v1710
        %v6567 = vunpack.c.l.b16 %v1711
        %v6568 = vunpack.c.h.b16 %v1711
        %v6569 = vunpack.c.l.b16 %v1712
        %v6570 = vunpack.c.h.b16 %v1712
        %v6571 = vunpack.c.l.b16 %v1713
        %v6572 = vunpack.c.h.b16 %v1713
        %v6573 = vunpack.c.l.b16 %v1714
        %v6574 = vunpack.c.h.b16 %v1714
        %v6575 = vunpack.c.l.b16 %v1715
        %v6576 = vunpack.c.h.b16 %v1715
        %v6577 = vunpack.c.l.b16 %v1716
        %v6578 = vunpack.c.h.b16 %v1716
        %v6579 = vunpack.c.l.b16 %v1717
        %v6580 = vunpack.c.h.b16 %v1717
        %v6581 = vunpack.c.l.b16 %v1718
        %v6582 = vunpack.c.h.b16 %v1718
        %v6583 = vunpack.c.l.b16 %v1719
        %v6584 = vunpack.c.h.b16 %v1719
        %v6585 = vunpack.c.l.b16 %v1720
        %v6586 = vunpack.c.h.b16 %v1720
        %v6587 = vunpack.c.l.b16 %v1721
        %v6588 = vunpack.c.h.b16 %v1721
        %v6589 = vunpack.c.l.b16 %v1722
        %v6590 = vunpack.c.h.b16 %v1722
        %v6591 = vunpack.c.l.b16 %v1723
        %v6592 = vunpack.c.h.b16 %v1723
        %v6593 = vunpack.c.l.b16 %v1724
        %v6594 = vunpack.c.h.b16 %v1724
        %v6595 = vunpack.c.l.b16 %v1725
        %v6596 = vunpack.c.h.b16 %v1725
        %v6597 = vunpack.c.l.b16 %v1726
        %v6598 = vunpack.c.h.b16 %v1726
        %v6599 = vunpack.c.l.b16 %v1727
        %v6600 = vunpack.c.h.b16 %v1727
        %v6601 = vunpack.c.l.b16 %v1728
        %v6602 = vunpack.c.h.b16 %v1728
        %v6603 = vunpack.c.l.b16 %v1729
        %v6604 = vunpack.c.h.b16 %v1729
        %v6605 = vunpack.c.l.b16 %v1730
        %v6606 = vunpack.c.h.b16 %v1730
        %v6607 = vunpack.c.l.b16 %v1731
        %v6608 = vunpack.c.h.b16 %v1731
        %v6609 = vunpack.c.l.b16 %v1732
        %v6610 = vunpack.c.h.b16 %v1732
        %v6611 = vunpack.c.l.b16 %v1733
        %v6612 = vunpack.c.h.b16 %v1733
        %v6613 = vunpack.c.l.b16 %v1734
        %v6614 = vunpack.c.h.b16 %v1734
        %v6615 = vunpack.c.l.b16 %v1735
        %v6616 = vunpack.c.h.b16 %v1735
        %v6617 = vunpack.c.l.b16 %v1736
        %v6618 = vunpack.c.h.b16 %v1736
        %v6619 = vunpack.c.l.b16 %v1737
        %v6620 = vunpack.c.h.b16 %v1737
        %v6621 = vunpack.c.l.b16 %v1738
        %v6622 = vunpack.c.h.b16 %v1738
        %v6623 = vunpack.c.l.b16 %v1739
        %v6624 = vunpack.c.h.b16 %v1739
        %v6625 = vunpack.c.l.b16 %v1740
        %v6626 = vunpack.c.h.b16 %v1740
        %v6627 = vunpack.c.l.b16 %v1741
        %v6628 = vunpack.c.h.b16 %v1741
        %v6629 = vunpack.c.l.b16 %v1742
        %v6630 = vunpack.c.h.b16 %v1742
        %v6631 = vunpack.c.l.b16 %v1743
        %v6632 = vunpack.c.h.b16 %v1743
        %v6633 = vunpack.c.l.b16 %v1744
        %v6634 = vunpack.c.h.b16 %v1744
        %v6635 = vunpack.c.l.b16 %v1745
        %v6636 = vunpack.c.h.b16 %v1745
        %v6637 = vunpack.c.l.b16 %v1746
        %v6638 = vunpack.c.h.b16 %v1746
        %v6639 = vunpack.c.l.b16 %v1747
        %v6640 = vunpack.c.h.b16 %v1747
        %v6641 = vunpack.c.l.b16 %v1748
        %v6642 = vunpack.c.h.b16 %v1748
        %v6643 = vunpack.c.l.b16 %v1749
        %v6644 = vunpack.c.h.b16 %v1749
        %v6645 = vunpack.c.l.b16 %v1750
        %v6646 = vunpack.c.h.b16 %v1750
        %v6647 = vunpack.c.l.b16 %v1751
        %v6648 = vunpack.c.h.b16 %v1751
        %v6649 = vunpack.c.l.b16 %v1752
        %v6650 = vunpack.c.h.b16 %v1752
        %v6651 = vunpack.c.l.b16 %v1753
        %v6652 = vunpack.c.h.b16 %v1753
        %v6653 = vunpack.c.l.b16 %v1754
        %v6654 = vunpack.c.h.b16 %v1754
        %v6655 = vunpack.c.l.b16 %v1755
        %v6656 = vunpack.c.h.b16 %v1755
        %v6657 = vunpack.c.l.b16 %v1756
        %v6658 = vunpack.c.h.b16 %v1756
        %v6659 = vunpack.c.l.b16 %v1757
        %v6660 = vunpack.c.h.b16 %v1757
        %v6661 = vunpack.c.l.b16 %v1758
        %v6662 = vunpack.c.h.b16 %v1758
        %v6663 = vunpack.c.l.b16 %v1759
        %v6664 = vunpack.c.h.b16 %v1759
        %v6665 = vunpack.c.l.b16 %v1760
        %v6666 = vunpack.c.h.b16 %v1760
        %v6667 = vunpack.c.l.b16 %v1761
        %v6668 = vunpack.c.h.b16 %v1761
        %v6669 = vunpack.c.l.b16 %v1762
        %v6670 = vunpack.c.h.b16 %v1762
        %v6671 = vunpack.c.l.b16 %v1763
        %v6672 = vunpack.c.h.b16 %v1763
        %v6673 = vunpack.c.l.b16 %v1764
        %v6674 = vunpack.c.h.b16 %v1764
        %v6675 = vunpack.c.l.b16 %v1765
        %v6676 = vunpack.c.h.b16 %v1765
        %v6677 = vunpack.c.l.b16 %v1766
        %v6678 = vunpack.c.h.b16 %v1766
        %v6679 = vunpack.c.l.b16 %v1767
        %v6680 = vunpack.c.h.b16 %v1767
        %v6681 = vunpack.c.l.b16 %v1768
        %v6682 = vunpack.c.h.b16 %v1768
        %v6683 = vunpack.c.l.b16 %v1769
        %v6684 = vunpack.c.h.b16 %v1769
        %v6685 = vunpack.c.l.b16 %v1770
        %v6686 = vunpack.c.h.b16 %v1770
        %v6687 = vunpack.c.l.b16 %v1771
        %v6688 = vunpack.c.h.b16 %v1771
        %v6689 = vunpack.c.l.b16 %v1772
        %v6690 = vunpack.c.h.b16 %v1772
        %v6691 = vunpack.c.l.b16 %v1773
        %v6692 = vunpack.c.h.b16 %v1773
        %v6693 = vunpack.c.l.b16 %v1774
        %v6694 = vunpack.c.h.b16 %v1774
        %v6695 = vunpack.c.l.b16 %v1775
        %v6696 = vunpack.c.h.b16 %v1775
        %v6697 = vunpack.c.l.b16 %v1776
        %v6698 = vunpack.c.h.b16 %v1776
        %v6699 = vunpack.c.l.b16 %v1777
        %v6700 = vunpack.c.h.b16 %v1777
        %v6701 = vunpack.c.l.b16 %v1778
        %v6702 = vunpack.c.h.b16 %v1778
        %v6703 = vunpack.c.l.b16 %v1779
        %v6704 = vunpack.c.h.b16 %v1779
        %v6705 = vunpack.c.l.b16 %v1780
        %v6706 = vunpack.c.h.b16 %v1780
        %v6707 = vunpack.c.l.b16 %v1781
        %v6708 = vunpack.c.h.b16 %v1781
        %v6709 = vunpack.c.l.b16 %v1782
        %v6710 = vunpack.c.h.b16 %v1782
        %v6711 = vunpack.c.l.b16 %v1783
        %v6712 = vunpack.c.h.b16 %v1783
        %v6713 = vunpack.c.l.b16 %v1784
        %v6714 = vunpack.c.h.b16 %v1784
        %v6715 = vunpack.c.l.b16 %v1785
        %v6716 = vunpack.c.h.b16 %v1785
        %v6717 = vunpack.c.l.b16 %v1786
        %v6718 = vunpack.c.h.b16 %v1786
        %v6719 = vunpack.c.l.b16 %v1787
        %v6720 = vunpack.c.h.b16 %v1787
        %v6721 = vunpack.c.l.b16 %v1788
        %v6722 = vunpack.c.h.b16 %v1788
        %v6723 = vunpack.c.l.b16 %v1789
        %v6724 = vunpack.c.h.b16 %v1789
        %v6725 = vunpack.c.l.b16 %v1790
        %v6726 = vunpack.c.h.b16 %v1790
        %v6727 = vunpack.c.l.b16 %v1791
        %v6728 = vunpack.c.h.b16 %v1791
        %v6729 = vunpack.c.l.b16 %v1792
        %v6730 = vunpack.c.h.b16 %v1792
        %v6731 = vunpack.c.l.b16 %v1793
        %v6732 = vunpack.c.h.b16 %v1793
        %v6733 = vunpack.c.l.b16 %v1794
        %v6734 = vunpack.c.h.b16 %v1794
        %v6735 = vunpack.c.l.b16 %v1795
        %v6736 = vunpack.c.h.b16 %v1795
        %v6737 = vunpack.c.l.b16 %v1796
        %v6738 = vunpack.c.h.b16 %v1796
        %v6739 = vunpack.c.l.b16 %v1797
        %v6740 = vunpack.c.h.b16 %v1797
        %v6741 = vunpack.c.l.b16 %v1798
        %v6742 = vunpack.c.h.b16 %v1798
        %v6743 = vunpack.c.l.b16 %v1799
        %v6744 = vunpack.c.h.b16 %v1799
        %v6745 = vunpack.c.l.b16 %v1800
        %v6746 = vunpack.c.h.b16 %v1800
        %v6747 = vunpack.c.l.b16 %v1801
        %v6748 = vunpack.c.h.b16 %v1801
        %v6749 = vunpack.c.l.b16 %v1802
        %v6750 = vunpack.c.h.b16 %v1802
        %v6751 = vunpack.c.l.b16 %v1803
        %v6752 = vunpack.c.h.b16 %v1803
        %v6753 = vunpack.c.l.b16 %v1804
        %v6754 = vunpack.c.h.b16 %v1804
        %v6755 = vunpack.c.l.b16 %v1805
        %v6756 = vunpack.c.h.b16 %v1805
        %v6757 = vunpack.c.l.b16 %v1806
        %v6758 = vunpack.c.h.b16 %v1806
        %v6759 = vunpack.c.l.b16 %v1807
        %v6760 = vunpack.c.h.b16 %v1807
        %v6761 = vunpack.c.l.b16 %v1808
        %v6762 = vunpack.c.h.b16 %v1808
        %v6763 = vunpack.c.l.b16 %v1809
        %v6764 = vunpack.c.h.b16 %v1809
        %v6765 = vunpack.c.l.b16 %v1810
        %v6766 = vunpack.c.h.b16 %v1810
        %v6767 = vunpack.c.l.b16 %v1811
        %v6768 = vunpack.c.h.b16 %v1811
        %v6769 = vunpack.c.l.b16 %v1812
        %v6770 = vunpack.c.h.b16 %v1812
        %v6771 = vunpack.c.l.b16 %v1813
        %v6772 = vunpack.c.h.b16 %v1813
        %v6773 = vunpack.c.l.b16 %v1814
        %v6774 = vunpack.c.h.b16 %v1814
        %v6775 = vunpack.c.l.b16 %v1815
        %v6776 = vunpack.c.h.b16 %v1815
        %v6777 = vunpack.c.l.b16 %v1816
        %v6778 = vunpack.c.h.b16 %v1816
        %v6779 = vunpack.c.l.b16 %v1817
        %v6780 = vunpack.c.h.b16 %v1817
        %v6781 = vunpack.c.l.b16 %v1818
        %v6782 = vunpack.c.h.b16 %v1818
        %v6783 = vunpack.c.l.b16 %v1819
        %v6784 = vunpack.c.h.b16 %v1819
        %v6785 = vunpack.c.l.b16 %v1820
        %v6786 = vunpack.c.h.b16 %v1820
        %v6787 = vunpack.c.l.b16 %v1821
        %v6788 = vunpack.c.h.b16 %v1821
        %v6789 = vunpack.c.l.b16 %v1822
        %v6790 = vunpack.c.h.b16 %v1822
        %v6791 = vunpack.c.l.b16 %v1823
        %v6792 = vunpack.c.h.b16 %v1823
        %v6793 = vunpack.c.l.b16 %v1824
        %v6794 = vunpack.c.h.b16 %v1824
        %v6795 = vunpack.c.l.b16 %v1825
        %v6796 = vunpack.c.h.b16 %v1825
        %v6797 = vunpack.c.l.b16 %v1826
        %v6798 = vunpack.c.h.b16 %v1826
        %v6799 = vunpack.c.l.b16 %v1827
        %v6800 = vunpack.c.h.b16 %v1827
        %v6801 = vunpack.c.l.b16 %v1828
        %v6802 = vunpack.c.h.b16 %v1828
        %v6803 = vunpack.c.l.b16 %v1829
        %v6804 = vunpack.c.h.b16 %v1829
        %v6805 = vunpack.c.l.b16 %v1830
        %v6806 = vunpack.c.h.b16 %v1830
        %v6807 = vunpack.c.l.b16 %v1831
        %v6808 = vunpack.c.h.b16 %v1831
        %v6809 = vunpack.c.l.b16 %v1832
        %v6810 = vunpack.c.h.b16 %v1832
        %v6811 = vunpack.c.l.b16 %v1833
        %v6812 = vunpack.c.h.b16 %v1833
        %v6813 = vunpack.c.l.b16 %v1834
        %v6814 = vunpack.c.h.b16 %v1834
        %v6815 = vunpack.c.l.b16 %v1835
        %v6816 = vunpack.c.h.b16 %v1835
        %v6817 = vunpack.c.l.b16 %v1836
        %v6818 = vunpack.c.h.b16 %v1836
        %v6819 = vunpack.c.l.b16 %v1837
        %v6820 = vunpack.c.h.b16 %v1837
        %v6821 = vunpack.c.l.b16 %v1838
        %v6822 = vunpack.c.h.b16 %v1838
        %v6823 = vunpack.c.l.b16 %v1839
        %v6824 = vunpack.c.h.b16 %v1839
        %v6825 = vunpack.c.l.b16 %v1840
        %v6826 = vunpack.c.h.b16 %v1840
        %v6827 = vunpack.c.l.b16 %v1841
        %v6828 = vunpack.c.h.b16 %v1841
        %v6829 = vunpack.c.l.b16 %v1842
        %v6830 = vunpack.c.h.b16 %v1842
        %v6831 = vunpack.c.l.b16 %v1843
        %v6832 = vunpack.c.h.b16 %v1843
        %v6833 = vunpack.c.l.b16 %v1844
        %v6834 = vunpack.c.h.b16 %v1844
        %v6835 = vunpack.c.l.b16 %v1845
        %v6836 = vunpack.c.h.b16 %v1845
        %v6837 = vunpack.c.l.b16 %v1846
        %v6838 = vunpack.c.h.b16 %v1846
        %v6839 = vunpack.c.l.b16 %v1847
        %v6840 = vunpack.c.h.b16 %v1847
        %v6841 = vunpack.c.l.b16 %v1848
        %v6842 = vunpack.c.h.b16 %v1848
        %v6843 = vunpack.c.l.b16 %v1849
        %v6844 = vunpack.c.h.b16 %v1849
        %v6845 = vunpack.c.l.b16 %v1850
        %v6846 = vunpack.c.h.b16 %v1850
        %v6847 = vunpack.c.l.b16 %v1851
        %v6848 = vunpack.c.h.b16 %v1851
        %v6849 = vunpack.c.l.b16 %v1852
        %v6850 = vunpack.c.h.b16 %v1852
        %v6851 = vunpack.c.l.b16 %v1853
        %v6852 = vunpack.c.h.b16 %v1853
        %v6853 = vunpack.c.l.b16 %v1854
        %v6854 = vunpack.c.h.b16 %v1854
        %v6855 = vunpack.c.l.b16 %v1855
        %v6856 = vunpack.c.h.b16 %v1855
        %v6857 = vunpack.c.l.b16 %v1856
        %v6858 = vunpack.c.h.b16 %v1856
        %v6859 = vunpack.c.l.b16 %v1857
        %v6860 = vunpack.c.h.b16 %v1857
        %v6861 = vunpack.c.l.b16 %v1858
        %v6862 = vunpack.c.h.b16 %v1858
        %v6863 = vunpack.c.l.b16 %v1859
        %v6864 = vunpack.c.h.b16 %v1859
        %v6865 = vunpack.c.l.b16 %v1860
        %v6866 = vunpack.c.h.b16 %v1860
        %v6867 = vunpack.c.l.b16 %v1861
        %v6868 = vunpack.c.h.b16 %v1861
        %v6869 = vunpack.c.l.b16 %v1862
        %v6870 = vunpack.c.h.b16 %v1862
        %v6871 = vunpack.c.l.b16 %v1863
        %v6872 = vunpack.c.h.b16 %v1863
        %v6873 = vunpack.c.l.b16 %v1864
        %v6874 = vunpack.c.h.b16 %v1864
        %v6875 = vunpack.c.l.b16 %v1865
        %v6876 = vunpack.c.h.b16 %v1865
        %v6877 = vunpack.c.l.b16 %v1866
        %v6878 = vunpack.c.h.b16 %v1866
        %v6879 = vunpack.c.l.b16 %v1867
        %v6880 = vunpack.c.h.b16 %v1867
        %v6881 = vunpack.c.l.b16 %v1868
        %v6882 = vunpack.c.h.b16 %v1868
        %v6883 = vunpack.c.l.b16 %v1869
        %v6884 = vunpack.c.h.b16 %v1869
        %v6885 = vunpack.c.l.b16 %v1870
        %v6886 = vunpack.c.h.b16 %v1870
        %v6887 = vunpack.c.l.b16 %v1871
        %v6888 = vunpack.c.h.b16 %v1871
        %v6889 = vunpack.c.l.b16 %v1872
        %v6890 = vunpack.c.h.b16 %v1872
        %v6891 = vunpack.c.l.b16 %v1873
        %v6892 = vunpack.c.h.b16 %v1873
        %v6893 = vunpack.c.l.b16 %v1874
        %v6894 = vunpack.c.h.b16 %v1874
        %v6895 = vunpack.c.l.b16 %v1875
        %v6896 = vunpack.c.h.b16 %v1875
        %v6897 = vunpack.c.l.b16 %v1876
        %v6898 = vunpack.c.h.b16 %v1876
        %v6899 = vunpack.c.l.b16 %v1877
        %v6900 = vunpack.c.h.b16 %v1877
        %v6901 = vunpack.c.l.b16 %v1878
        %v6902 = vunpack.c.h.b16 %v1878
        %v6903 = vunpack.c.l.b16 %v1879
        %v6904 = vunpack.c.h.b16 %v1879
        %v6905 = vunpack.c.l.b16 %v1880
        %v6906 = vunpack.c.h.b16 %v1880
        %v6907 = vunpack.c.l.b16 %v1881
        %v6908 = vunpack.c.h.b16 %v1881
        %v6909 = vunpack.c.l.b16 %v1882
        %v6910 = vunpack.c.h.b16 %v1882
        %v6911 = vunpack.c.l.b16 %v1883
        %v6912 = vunpack.c.h.b16 %v1883
        %v6913 = vunpack.c.l.b16 %v1884
        %v6914 = vunpack.c.h.b16 %v1884
        %v6915 = vunpack.c.l.b16 %v1885
        %v6916 = vunpack.c.h.b16 %v1885
        %v6917 = vunpack.c.l.b16 %v1886
        %v6918 = vunpack.c.h.b16 %v1886
        %v6919 = vunpack.c.l.b16 %v1887
        %v6920 = vunpack.c.h.b16 %v1887
        %v6921 = vunpack.c.l.b16 %v1888
        %v6922 = vunpack.c.h.b16 %v1888
        %v6923 = vunpack.c.l.b16 %v1889
        %v6924 = vunpack.c.h.b16 %v1889
        %v6925 = vunpack.c.l.b16 %v1890
        %v6926 = vunpack.c.h.b16 %v1890
        %v6927 = vunpack.c.l.b16 %v1891
        %v6928 = vunpack.c.h.b16 %v1891
        %v6929 = vunpack.c.l.b16 %v1892
        %v6930 = vunpack.c.h.b16 %v1892
        %v6931 = vunpack.c.l.b16 %v1893
        %v6932 = vunpack.c.h.b16 %v1893
        %v6933 = vunpack.c.l.b16 %v1894
        %v6934 = vunpack.c.h.b16 %v1894
        %v6935 = vunpack.c.l.b16 %v1895
        %v6936 = vunpack.c.h.b16 %v1895
        %v6937 = vunpack.c.l.b16 %v1896
        %v6938 = vunpack.c.h.b16 %v1896
        %v6939 = vunpack.c.l.b16 %v1897
        %v6940 = vunpack.c.h.b16 %v1897
        %v6941 = vunpack.c.l.b16 %v1898
        %v6942 = vunpack.c.h.b16 %v1898
        %v6943 = vunpack.c.l.b16 %v1899
        %v6944 = vunpack.c.h.b16 %v1899
        %v6945 = vunpack.c.l.b16 %v1900
        %v6946 = vunpack.c.h.b16 %v1900
        %v6947 = vunpack.c.l.b16 %v1901
        %v6948 = vunpack.c.h.b16 %v1901
        %v6949 = vpack.c.b16 %v3815, %v3813
        %v6950 = vpack.c.b16 %v3816, %v3814
        %v6951 = vpack.c.b16 %v3819, %v3817
        %v6952 = vpack.c.b16 %v3820, %v3818
        %v6953 = vpack.c.b16 %v3823, %v3821
        %v6954 = vpack.c.b16 %v3824, %v3822
        %v6955 = vpack.c.b16 %v3827, %v3825
        %v6956 = vpack.c.b16 %v3828, %v3826
        %v6957 = vpack.c.b16 %v3831, %v3829
        %v6958 = vpack.c.b16 %v3832, %v3830
        %v6959 = vpack.c.b16 %v3835, %v3833
        %v6960 = vpack.c.b16 %v3836, %v3834
        %v6961 = vpack.c.b16 %v3839, %v3837
        %v6962 = vpack.c.b16 %v3840, %v3838
        %v6963 = vpack.c.b16 %v3843, %v3841
        %v6964 = vpack.c.b16 %v3844, %v3842
        %v6965 = vpack.c.b16 %v3847, %v3845
        %v6966 = vpack.c.b16 %v3848, %v3846
        %v6967 = vpack.c.b16 %v3851, %v3849
        %v6968 = vpack.c.b16 %v3852, %v3850
        %v6969 = vpack.c.b16 %v3855, %v3853
        %v6970 = vpack.c.b16 %v3856, %v3854
        %v6971 = vpack.c.b16 %v3859, %v3857
        %v6972 = vpack.c.b16 %v3860, %v3858
        %v6973 = vpack.c.b16 %v3863, %v3861
        %v6974 = vpack.c.b16 %v3864, %v3862
        %v6975 = vpack.c.b16 %v3867, %v3865
        %v6976 = vpack.c.b16 %v3868, %v3866
        %v6977 = vpack.c.b16 %v3871, %v3869
        %v6978 = vpack.c.b16 %v3872, %v3870
        %v6979 = vpack.c.b16 %v3875, %v3873
        %v6980 = vpack.c.b16 %v3876, %v3874
        %v6981 = vpack.c.b16 %v3879, %v3877
        %v6982 = vpack.c.b16 %v3880, %v3878
        %v6983 = vpack.c.b16 %v3883, %v3881
        %v6984 = vpack.c.b16 %v3884, %v3882
        %v6985 = vpack.c.b16 %v3887, %v3885
        %v6986 = vpack.c.b16 %v3888, %v3886
        %v6987 = vpack.c.b16 %v3891, %v3889
        %v6988 = vpack.c.b16 %v3892, %v3890
        %v6989 = vpack.c.b16 %v3895, %v3893
        %v6990 = vpack.c.b16 %v3896, %v3894
        %v6991 = vpack.c.b16 %v3899, %v3897
        %v6992 = vpack.c.b16 %v3900, %v3898
        %v6993 = vpack.c.b16 %v3903, %v3901
        %v6994 = vpack.c.b16 %v3904, %v3902
        %v6995 = vpack.c.b16 %v3907, %v3905
        %v6996 = vpack.c.b16 %v3908, %v3906
        %v6997 = vpack.c.b16 %v3911, %v3909
        %v6998 = vpack.c.b16 %v3912, %v3910
        %v6999 = vpack.c.b16 %v3915, %v3913
        %v7000 = vpack.c.b16 %v3916, %v3914
        %v7001 = vpack.c.b16 %v3919, %v3917
        %v7002 = vpack.c.b16 %v3920, %v3918
        %v7003 = vpack.c.b16 %v3923, %v3921
        %v7004 = vpack.c.b16 %v3924, %v3922
        %v7005 = vpack.c.b16 %v3927, %v3925
        %v7006 = vpack.c.b16 %v3928, %v3926
        %v7007 = vpack.c.b16 %v3931, %v3929
        %v7008 = vpack.c.b16 %v3932, %v3930
        %v7009 = vpack.c.b16 %v3935, %v3933
        %v7010 = vpack.c.b16 %v3936, %v3934
        %v7011 = vpack.c.b16 %v3939, %v3937
        %v7012 = vpack.c.b16 %v3940, %v3938
        %v7013 = vpack.c.b16 %v3943, %v3941
        %v7014 = vpack.c.b16 %v3944, %v3942
        %v7015 = vpack.c.b16 %v3947, %v3945
        %v7016 = vpack.c.b16 %v3948, %v3946
        %v7017 = vpack.c.b16 %v3951, %v3949
        %v7018 = vpack.c.b16 %v3952, %v3950
        %v7019 = vpack.c.b16 %v3955, %v3953
        %v7020 = vpack.c.b16 %v3956, %v3954
        %v7021 = vpack.c.b16 %v3959, %v3957
        %v7022 = vpack.c.b16 %v3960, %v3958
        %v7023 = vpack.c.b16 %v3963, %v3961
        %v7024 = vpack.c.b16 %v3964, %v3962
        %v7025 = vpack.c.b16 %v3967, %v3965
        %v7026 = vpack.c.b16 %v3968, %v3966
        %v7027 = vpack.c.b16 %v3971, %v3969
        %v7028 = vpack.c.b16 %v3972, %v3970
        %v7029 = vpack.c.b16 %v3975, %v3973
        %v7030 = vpack.c.b16 %v3976, %v3974
        %v7031 = vpack.c.b16 %v3979, %v3977
        %v7032 = vpack.c.b16 %v3980, %v3978
        %v7033 = vpack.c.b16 %v3983, %v3981
        %v7034 = vpack.c.b16 %v3984, %v3982
        %v7035 = vpack.c.b16 %v3987, %v3985
        %v7036 = vpack.c.b16 %v3988, %v3986
        %v7037 = vpack.c.b16 %v3991, %v3989
        %v7038 = vpack.c.b16 %v3992, %v3990
        %v7039 = vpack.c.b16 %v3995, %v3993
        %v7040 = vpack.c.b16 %v3996, %v3994
        %v7041 = vpack.c.b16 %v3999, %v3997
        %v7042 = vpack.c.b16 %v4000, %v3998
        %v7043 = vpack.c.b16 %v4003, %v4001
        %v7044 = vpack.c.b16 %v4004, %v4002
        %v7045 = vpack.c.b16 %v4007, %v4005
        %v7046 = vpack.c.b16 %v4008, %v4006
        %v7047 = vpack.c.b16 %v4011, %v4009
        %v7048 = vpack.c.b16 %v4012, %v4010
        %v7049 = vpack.c.b16 %v4015, %v4013
        %v7050 = vpack.c.b16 %v4016, %v4014
        %v7051 = vpack.c.b16 %v4019, %v4017
        %v7052 = vpack.c.b16 %v4020, %v4018
        %v7053 = vpack.c.b16 %v4023, %v4021
        %v7054 = vpack.c.b16 %v4024, %v4022
        %v7055 = vpack.c.b16 %v4027, %v4025
        %v7056 = vpack.c.b16 %v4028, %v4026
        %v7057 = vpack.c.b16 %v4031, %v4029
        %v7058 = vpack.c.b16 %v4032, %v4030
        %v7059 = vpack.c.b16 %v4035, %v4033
        %v7060 = vpack.c.b16 %v4036, %v4034
        %v7061 = vpack.c.b16 %v4039, %v4037
        %v7062 = vpack.c.b16 %v4040, %v4038
        %v7063 = vpack.c.b16 %v4043, %v4041
        %v7064 = vpack.c.b16 %v4044, %v4042
        %v7065 = vpack.c.b16 %v4047, %v4045
        %v7066 = vpack.c.b16 %v4048, %v4046
        %v7067 = vpack.c.b16 %v4051, %v4049
        %v7068 = vpack.c.b16 %v4052, %v4050
        %v7069 = vpack.c.b16 %v4055, %v4053
        %v7070 = vpack.c.b16 %v4056, %v4054
        %v7071 = vpack.c.b16 %v4059, %v4057
        %v7072 = vpack.c.b16 %v4060, %v4058
        %v7073 = vpack.c.b16 %v4063, %v4061
        %v7074 = vpack.c.b16 %v4064, %v4062
        %v7075 = vpack.c.b16 %v4067, %v4065
        %v7076 = vpack.c.b16 %v4068, %v4066
        %v7077 = vpack.c.b16 %v4071, %v4069
        %v7078 = vpack.c.b16 %v4072, %v4070
        %v7079 = vpack.c.b16 %v4075, %v4073
        %v7080 = vpack.c.b16 %v4076, %v4074
        %v7081 = vpack.c.b16 %v4079, %v4077
        %v7082 = vpack.c.b16 %v4080, %v4078
        %v7083 = vpack.c.b16 %v4083, %v4081
        %v7084 = vpack.c.b16 %v4084, %v4082
        %v7085 = vpack.c.b16 %v4087, %v4085
        %v7086 = vpack.c.b16 %v4088, %v4086
        %v7087 = vpack.c.b16 %v4091, %v4089
        %v7088 = vpack.c.b16 %v4092, %v4090
        %v7089 = vpack.c.b16 %v4095, %v4093
        %v7090 = vpack.c.b16 %v4096, %v4094
        %v7091 = vpack.c.b16 %v4099, %v4097
        %v7092 = vpack.c.b16 %v4100, %v4098
        %v7093 = vpack.c.b16 %v4103, %v4101
        %v7094 = vpack.c.b16 %v4104, %v4102
        %v7095 = vpack.c.b16 %v4107, %v4105
        %v7096 = vpack.c.b16 %v4108, %v4106
        %v7097 = vpack.c.b16 %v4111, %v4109
        %v7098 = vpack.c.b16 %v4112, %v4110
        %v7099 = vpack.c.b16 %v4115, %v4113
        %v7100 = vpack.c.b16 %v4116, %v4114
        %v7101 = vpack.c.b16 %v4119, %v4117
        %v7102 = vpack.c.b16 %v4120, %v4118
        %v7103 = vpack.c.b16 %v4123, %v4121
        %v7104 = vpack.c.b16 %v4124, %v4122
        %v7105 = vpack.c.b16 %v4127, %v4125
        %v7106 = vpack.c.b16 %v4128, %v4126
        %v7107 = vpack.c.b16 %v4131, %v4129
        %v7108 = vpack.c.b16 %v4132, %v4130
        %v7109 = vpack.c.b16 %v4135, %v4133
        %v7110 = vpack.c.b16 %v4136, %v4134
        %v7111 = vpack.c.b16 %v4139, %v4137
        %v7112 = vpack.c.b16 %v4140, %v4138
        %v7113 = vpack.c.b16 %v4143, %v4141
        %v7114 = vpack.c.b16 %v4144, %v4142
        %v7115 = vpack.c.b16 %v4147, %v4145
        %v7116 = vpack.c.b16 %v4148, %v4146
        %v7117 = vpack.c.b16 %v4151, %v4149
        %v7118 = vpack.c.b16 %v4152, %v4150
        %v7119 = vpack.c.b16 %v4155, %v4153
        %v7120 = vpack.c.b16 %v4156, %v4154
        %v7121 = vpack.c.b16 %v4159, %v4157
        %v7122 = vpack.c.b16 %v4160, %v4158
        %v7123 = vpack.c.b16 %v4163, %v4161
        %v7124 = vpack.c.b16 %v4164, %v4162
        %v7125 = vpack.c.b16 %v4167, %v4165
        %v7126 = vpack.c.b16 %v4168, %v4166
        %v7127 = vpack.c.b16 %v4171, %v4169
        %v7128 = vpack.c.b16 %v4172, %v4170
        %v7129 = vpack.c.b16 %v4175, %v4173
        %v7130 = vpack.c.b16 %v4176, %v4174
        %v7131 = vpack.c.b16 %v4179, %v4177
        %v7132 = vpack.c.b16 %v4180, %v4178
        %v7133 = vpack.c.b16 %v4183, %v4181
        %v7134 = vpack.c.b16 %v4184, %v4182
        %v7135 = vpack.c.b16 %v4187, %v4185
        %v7136 = vpack.c.b16 %v4188, %v4186
        %v7137 = vpack.c.b16 %v4191, %v4189
        %v7138 = vpack.c.b16 %v4192, %v4190
        %v7139 = vpack.c.b16 %v4195, %v4193
        %v7140 = vpack.c.b16 %v4196, %v4194
        %v7141 = vpack.c.b16 %v4199, %v4197
        %v7142 = vpack.c.b16 %v4200, %v4198
        %v7143 = vpack.c.b16 %v4203, %v4201
        %v7144 = vpack.c.b16 %v4204, %v4202
        %v7145 = vpack.c.b16 %v4207, %v4205
        %v7146 = vpack.c.b16 %v4208, %v4206
        %v7147 = vpack.c.b16 %v4211, %v4209
        %v7148 = vpack.c.b16 %v4212, %v4210
        %v7149 = vpack.c.b16 %v4215, %v4213
        %v7150 = vpack.c.b16 %v4216, %v4214
        %v7151 = vpack.c.b16 %v4219, %v4217
        %v7152 = vpack.c.b16 %v4220, %v4218
        %v7153 = vpack.c.b16 %v4223, %v4221
        %v7154 = vpack.c.b16 %v4224, %v4222
        %v7155 = vpack.c.b16 %v4227, %v4225
        %v7156 = vpack.c.b16 %v4228, %v4226
        %v7157 = vpack.c.b16 %v4231, %v4229
        %v7158 = vpack.c.b16 %v4232, %v4230
        %v7159 = vpack.c.b16 %v4235, %v4233
        %v7160 = vpack.c.b16 %v4236, %v4234
        %v7161 = vpack.c.b16 %v4239, %v4237
        %v7162 = vpack.c.b16 %v4240, %v4238
        %v7163 = vpack.c.b16 %v4243, %v4241
        %v7164 = vpack.c.b16 %v4244, %v4242
        %v7165 = vpack.c.b16 %v4247, %v4245
        %v7166 = vpack.c.b16 %v4248, %v4246
        %v7167 = vpack.c.b16 %v4251, %v4249
        %v7168 = vpack.c.b16 %v4252, %v4250
        %v7169 = vpack.c.b16 %v4255, %v4253
        %v7170 = vpack.c.b16 %v4256, %v4254
        %v7171 = vpack.c.b16 %v4259, %v4257
        %v7172 = vpack.c.b16 %v4260, %v4258
        %v7173 = vpack.c.b16 %v4263, %v4261
        %v7174 = vpack.c.b16 %v4264, %v4262
        %v7175 = vpack.c.b16 %v4267, %v4265
        %v7176 = vpack.c.b16 %v4268, %v4266
        %v7177 = vpack.c.b16 %v4271, %v4269
        %v7178 = vpack.c.b16 %v4272, %v4270
        %v7179 = vpack.c.b16 %v4275, %v4273
        %v7180 = vpack.c.b16 %v4276, %v4274
        %v7181 = vpack.c.b16 %v4279, %v4277
        %v7182 = vpack.c.b16 %v4280, %v4278
        %v7183 = vpack.c.b16 %v4283, %v4281
        %v7184 = vpack.c.b16 %v4284, %v4282
        %v7185 = vpack.c.b16 %v4287, %v4285
        %v7186 = vpack.c.b16 %v4288, %v4286
        %v7187 = vpack.c.b16 %v4291, %v4289
        %v7188 = vpack.c.b16 %v4292, %v4290
        %v7189 = vpack.c.b16 %v4295, %v4293
        %v7190 = vpack.c.b16 %v4296, %v4294
        %v7191 = vpack.c.b16 %v4299, %v4297
        %v7192 = vpack.c.b16 %v4300, %v4298
        %v7193 = vpack.c.b16 %v4303, %v4301
        %v7194 = vpack.c.b16 %v4304, %v4302
        %v7195 = vpack.c.b16 %v4307, %v4305
        %v7196 = vpack.c.b16 %v4308, %v4306
        %v7197 = vpack.c.b16 %v4311, %v4309
        %v7198 = vpack.c.b16 %v4312, %v4310
        %v7199 = vpack.c.b16 %v4315, %v4313
        %v7200 = vpack.c.b16 %v4316, %v4314
        %v7201 = vpack.c.b16 %v4319, %v4317
        %v7202 = vpack.c.b16 %v4320, %v4318
        %v7203 = vpack.c.b16 %v4323, %v4321
        %v7204 = vpack.c.b16 %v4324, %v4322
        %v7205 = vpack.c.b16 %v4327, %v4325
        %v7206 = vpack.c.b16 %v4328, %v4326
        %v7207 = vpack.c.b16 %v4331, %v4329
        %v7208 = vpack.c.b16 %v4332, %v4330
        %v7209 = vpack.c.b16 %v4335, %v4333
        %v7210 = vpack.c.b16 %v4336, %v4334
        %v7211 = vpack.c.b16 %v4339, %v4337
        %v7212 = vpack.c.b16 %v4340, %v4338
        %v7213 = vpack.c.b16 %v4343, %v4341
        %v7214 = vpack.c.b16 %v4344, %v4342
        %v7215 = vpack.c.b16 %v4347, %v4345
        %v7216 = vpack.c.b16 %v4348, %v4346
        %v7217 = vpack.c.b16 %v4351, %v4349
        %v7218 = vpack.c.b16 %v4352, %v4350
        %v7219 = vpack.c.b16 %v4355, %v4353
        %v7220 = vpack.c.b16 %v4356, %v4354
        %v7221 = vpack.c.b16 %v4359, %v4357
        %v7222 = vpack.c.b16 %v4360, %v4358
        %v7223 = vpack.c.b16 %v4363, %v4361
        %v7224 = vpack.c.b16 %v4364, %v4362
        %v7225 = vpack.c.b16 %v4367, %v4365
        %v7226 = vpack.c.b16 %v4368, %v4366
        %v7227 = vpack.c.b16 %v4371, %v4369
        %v7228 = vpack.c.b16 %v4372, %v4370
        %v7229 = vpack.c.b16 %v4375, %v4373
        %v7230 = vpack.c.b16 %v4376, %v4374
        %v7231 = vpack.c.b16 %v4379, %v4377
        %v7232 = vpack.c.b16 %v4380, %v4378
        %v7233 = vpack.c.b16 %v4383, %v4381
        %v7234 = vpack.c.b16 %v4384, %v4382
        %v7235 = vpack.c.b16 %v4387, %v4385
        %v7236 = vpack.c.b16 %v4388, %v4386
        %v7237 = vpack.c.b16 %v4391, %v4389
        %v7238 = vpack.c.b16 %v4392, %v4390
        %v7239 = vpack.c.b16 %v4395, %v4393
        %v7240 = vpack.c.b16 %v4396, %v4394
        %v7241 = vpack.c.b16 %v4399, %v4397
        %v7242 = vpack.c.b16 %v4400, %v4398
        %v7243 = vpack.c.b16 %v4403, %v4401
        %v7244 = vpack.c.b16 %v4404, %v4402
        %v7245 = vpack.c.b16 %v4407, %v4405
        %v7246 = vpack.c.b16 %v4408, %v4406
        %v7247 = vpack.c.b16 %v4411, %v4409
        %v7248 = vpack.c.b16 %v4412, %v4410
        %v7249 = vpack.c.b16 %v4415, %v4413
        %v7250 = vpack.c.b16 %v4416, %v4414
        %v7251 = vpack.c.b16 %v4419, %v4417
        %v7252 = vpack.c.b16 %v4420, %v4418
        %v7253 = vpack.c.b16 %v4423, %v4421
        %v7254 = vpack.c.b16 %v4424, %v4422
        %v7255 = vpack.c.b16 %v4427, %v4425
        %v7256 = vpack.c.b16 %v4428, %v4426
        %v7257 = vpack.c.b16 %v4431, %v4429
        %v7258 = vpack.c.b16 %v4432, %v4430
        %v7259 = vpack.c.b16 %v4435, %v4433
        %v7260 = vpack.c.b16 %v4436, %v4434
        %v7261 = vpack.c.b16 %v4439, %v4437
        %v7262 = vpack.c.b16 %v4440, %v4438
        %v7263 = vpack.c.b16 %v4443, %v4441
        %v7264 = vpack.c.b16 %v4444, %v4442
        %v7265 = vpack.c.b16 %v4447, %v4445
        %v7266 = vpack.c.b16 %v4448, %v4446
        %v7267 = vpack.c.b16 %v4451, %v4449
        %v7268 = vpack.c.b16 %v4452, %v4450
        %v7269 = vpack.c.b16 %v4455, %v4453
        %v7270 = vpack.c.b16 %v4456, %v4454
        %v7271 = vpack.c.b16 %v4459, %v4457
        %v7272 = vpack.c.b16 %v4460, %v4458
        %v7273 = vpack.c.b16 %v4463, %v4461
        %v7274 = vpack.c.b16 %v4464, %v4462
        %v7275 = vpack.c.b16 %v4467, %v4465
        %v7276 = vpack.c.b16 %v4468, %v4466
        %v7277 = vpack.c.b16 %v4471, %v4469
        %v7278 = vpack.c.b16 %v4472, %v4470
        %v7279 = vpack.c.b16 %v4475, %v4473
        %v7280 = vpack.c.b16 %v4476, %v4474
        %v7281 = vpack.c.b16 %v4479, %v4477
        %v7282 = vpack.c.b16 %v4480, %v4478
        %v7283 = vpack.c.b16 %v4483, %v4481
        %v7284 = vpack.c.b16 %v4484, %v4482
        %v7285 = vpack.c.b16 %v4487, %v4485
        %v7286 = vpack.c.b16 %v4488, %v4486
        %v7287 = vpack.c.b16 %v4491, %v4489
        %v7288 = vpack.c.b16 %v4492, %v4490
        %v7289 = vpack.c.b16 %v4495, %v4493
        %v7290 = vpack.c.b16 %v4496, %v4494
        %v7291 = vpack.c.b16 %v4499, %v4497
        %v7292 = vpack.c.b16 %v4500, %v4498
        %v7293 = vpack.c.b16 %v4503, %v4501
        %v7294 = vpack.c.b16 %v4504, %v4502
        %v7295 = vpack.c.b16 %v4507, %v4505
        %v7296 = vpack.c.b16 %v4508, %v4506
        %v7297 = vpack.c.b16 %v4511, %v4509
        %v7298 = vpack.c.b16 %v4512, %v4510
        %v7299 = vpack.c.b16 %v4515, %v4513
        %v7300 = vpack.c.b16 %v4516, %v4514
        %v7301 = vpack.c.b16 %v4519, %v4517
        %v7302 = vpack.c.b16 %v4520, %v4518
        %v7303 = vpack.c.b16 %v4523, %v4521
        %v7304 = vpack.c.b16 %v4524, %v4522
        %v7305 = vpack.c.b16 %v4527, %v4525
        %v7306 = vpack.c.b16 %v4528, %v4526
        %v7307 = vpack.c.b16 %v4531, %v4529
        %v7308 = vpack.c.b16 %v4532, %v4530
        %v7309 = vpack.c.b16 %v4535, %v4533
        %v7310 = vpack.c.b16 %v4536, %v4534
        %v7311 = vpack.c.b16 %v4539, %v4537
        %v7312 = vpack.c.b16 %v4540, %v4538
        %v7313 = vpack.c.b16 %v4543, %v4541
        %v7314 = vpack.c.b16 %v4544, %v4542
        %v7315 = vpack.c.b16 %v4547, %v4545
        %v7316 = vpack.c.b16 %v4548, %v4546
        %v7317 = vpack.c.b16 %v4551, %v4549
        %v7318 = vpack.c.b16 %v4552, %v4550
        %v7319 = vpack.c.b16 %v4555, %v4553
        %v7320 = vpack.c.b16 %v4556, %v4554
        %v7321 = vpack.c.b16 %v4559, %v4557
        %v7322 = vpack.c.b16 %v4560, %v4558
        %v7323 = vpack.c.b16 %v4563, %v4561
        %v7324 = vpack.c.b16 %v4564, %v4562
        %v7325 = vpack.c.b16 %v4567, %v4565
        %v7326 = vpack.c.b16 %v4568, %v4566
        %v7327 = vpack.c.b16 %v4571, %v4569
        %v7328 = vpack.c.b16 %v4572, %v4570
        %v7329 = vpack.c.b16 %v4575, %v4573
        %v7330 = vpack.c.b16 %v4576, %v4574
        %v7331 = vpack.c.b16 %v4579, %v4577
        %v7332 = vpack.c.b16 %v4580, %v4578
        %v7333 = vpack.c.b16 %v4583, %v4581
        %v7334 = vpack.c.b16 %v4584, %v4582
        %v7335 = vpack.c.b16 %v4587, %v4585
        %v7336 = vpack.c.b16 %v4588, %v4586
        %v7337 = vpack.c.b16 %v4591, %v4589
        %v7338 = vpack.c.b16 %v4592, %v4590
        %v7339 = vpack.c.b16 %v4595, %v4593
        %v7340 = vpack.c.b16 %v4596, %v4594
        %v7341 = vpack.c.b16 %v4599, %v4597
        %v7342 = vpack.c.b16 %v4600, %v4598
        %v7343 = vpack.c.b16 %v4603, %v4601
        %v7344 = vpack.c.b16 %v4604, %v4602
        %v7345 = vpack.c.b16 %v4607, %v4605
        %v7346 = vpack.c.b16 %v4608, %v4606
        %v7347 = vpack.c.b16 %v4611, %v4609
        %v7348 = vpack.c.b16 %v4612, %v4610
        %v7349 = vpack.c.b16 %v4615, %v4613
        %v7350 = vpack.c.b16 %v4616, %v4614
        %v7351 = vpack.c.b16 %v4619, %v4617
        %v7352 = vpack.c.b16 %v4620, %v4618
        %v7353 = vpack.c.b16 %v4623, %v4621
        %v7354 = vpack.c.b16 %v4624, %v4622
        %v7355 = vpack.c.b16 %v4627, %v4625
        %v7356 = vpack.c.b16 %v4628, %v4626
        %v7357 = vpack.c.b16 %v4631, %v4629
        %v7358 = vpack.c.b16 %v4632, %v4630
        %v7359 = vpack.c.b16 %v4635, %v4633
        %v7360 = vpack.c.b16 %v4636, %v4634
        %v7361 = vpack.c.b16 %v4639, %v4637
        %v7362 = vpack.c.b16 %v4640, %v4638
        %v7363 = vpack.c.b16 %v4643, %v4641
        %v7364 = vpack.c.b16 %v4644, %v4642
        %v7365 = vpack.c.b16 %v4647, %v4645
        %v7366 = vpack.c.b16 %v4648, %v4646
        %v7367 = vpack.c.b16 %v4651, %v4649
        %v7368 = vpack.c.b16 %v4652, %v4650
        %v7369 = vpack.c.b16 %v4655, %v4653
        %v7370 = vpack.c.b16 %v4656, %v4654
        %v7371 = vpack.c.b16 %v4659, %v4657
        %v7372 = vpack.c.b16 %v4660, %v4658
        %v7373 = vpack.c.b16 %v4663, %v4661
        %v7374 = vpack.c.b16 %v4664, %v4662
        %v7375 = vpack.c.b16 %v4667, %v4665
        %v7376 = vpack.c.b16 %v4668, %v4666
        %v7377 = vpack.c.b16 %v4671, %v4669
        %v7378 = vpack.c.b16 %v4672, %v4670
        %v7379 = vpack.c.b16 %v4675, %v4673
        %v7380 = vpack.c.b16 %v4676, %v4674
        %v7381 = vpack.c.b16 %v4679, %v4677
        %v7382 = vpack.c.b16 %v4680, %v4678
        %v7383 = vpack.c.b16 %v4683, %v4681
        %v7384 = vpack.c.b16 %v4684, %v4682
        %v7385 = vpack.c.b16 %v4687, %v4685
        %v7386 = vpack.c.b16 %v4688, %v4686
        %v7387 = vpack.c.b16 %v4691, %v4689
        %v7388 = vpack.c.b16 %v4692, %v4690
        %v7389 = vpack.c.b16 %v4695, %v4693
        %v7390 = vpack.c.b16 %v4696, %v4694
        %v7391 = vpack.c.b16 %v4699, %v4697
        %v7392 = vpack.c.b16 %v4700, %v4698
        %v7393 = vpack.c.b16 %v4703, %v4701
        %v7394 = vpack.c.b16 %v4704, %v4702
        %v7395 = vpack.c.b16 %v4707, %v4705
        %v7396 = vpack.c.b16 %v4708, %v4706
        %v7397 = vpack.c.b16 %v4711, %v4709
        %v7398 = vpack.c.b16 %v4712, %v4710
        %v7399 = vpack.c.b16 %v4715, %v4713
        %v7400 = vpack.c.b16 %v4716, %v4714
        %v7401 = vpack.c.b16 %v4719, %v4717
        %v7402 = vpack.c.b16 %v4720, %v4718
        %v7403 = vpack.c.b16 %v4723, %v4721
        %v7404 = vpack.c.b16 %v4724, %v4722
        %v7405 = vpack.c.b16 %v4727, %v4725
        %v7406 = vpack.c.b16 %v4728, %v4726
        %v7407 = vpack.c.b16 %v4731, %v4729
        %v7408 = vpack.c.b16 %v4732, %v4730
        %v7409 = vpack.c.b16 %v4735, %v4733
        %v7410 = vpack.c.b16 %v4736, %v4734
        %v7411 = vpack.c.b16 %v4739, %v4737
        %v7412 = vpack.c.b16 %v4740, %v4738
        %v7413 = vpack.c.b16 %v4743, %v4741
        %v7414 = vpack.c.b16 %v4744, %v4742
        %v7415 = vpack.c.b16 %v4747, %v4745
        %v7416 = vpack.c.b16 %v4748, %v4746
        %v7417 = vpack.c.b16 %v4751, %v4749
        %v7418 = vpack.c.b16 %v4752, %v4750
        %v7419 = vpack.c.b16 %v4755, %v4753
        %v7420 = vpack.c.b16 %v4756, %v4754
        %v7421 = vpack.c.b16 %v4759, %v4757
        %v7422 = vpack.c.b16 %v4760, %v4758
        %v7423 = vpack.c.b16 %v4763, %v4761
        %v7424 = vpack.c.b16 %v4764, %v4762
        %v7425 = vpack.c.b16 %v4767, %v4765
        %v7426 = vpack.c.b16 %v4768, %v4766
        %v7427 = vpack.c.b16 %v4771, %v4769
        %v7428 = vpack.c.b16 %v4772, %v4770
        %v7429 = vpack.c.b16 %v4775, %v4773
        %v7430 = vpack.c.b16 %v4776, %v4774
        %v7431 = vpack.c.b16 %v4779, %v4777
        %v7432 = vpack.c.b16 %v4780, %v4778
        %v7433 = vpack.c.b16 %v4783, %v4781
        %v7434 = vpack.c.b16 %v4784, %v4782
        %v7435 = vpack.c.b16 %v4787, %v4785
        %v7436 = vpack.c.b16 %v4788, %v4786
        %v7437 = vpack.c.b16 %v4791, %v4789
        %v7438 = vpack.c.b16 %v4792, %v4790
        %v7439 = vpack.c.b16 %v4795, %v4793
        %v7440 = vpack.c.b16 %v4796, %v4794
        %v7441 = vpack.c.b16 %v4799, %v4797
        %v7442 = vpack.c.b16 %v4800, %v4798
        %v7443 = vpack.c.b16 %v4803, %v4801
        %v7444 = vpack.c.b16 %v4804, %v4802
        %v7445 = vpack.c.b16 %v4807, %v4805
        %v7446 = vpack.c.b16 %v4808, %v4806
        %v7447 = vpack.c.b16 %v4811, %v4809
        %v7448 = vpack.c.b16 %v4812, %v4810
        %v7449 = vpack.c.b16 %v4815, %v4813
        %v7450 = vpack.c.b16 %v4816, %v4814
        %v7451 = vpack.c.b16 %v4819, %v4817
        %v7452 = vpack.c.b16 %v4820, %v4818
        %v7453 = vpack.c.b16 %v4823, %v4821
        %v7454 = vpack.c.b16 %v4824, %v4822
        %v7455 = vpack.c.b16 %v4827, %v4825
        %v7456 = vpack.c.b16 %v4828, %v4826
        %v7457 = vpack.c.b16 %v4831, %v4829
        %v7458 = vpack.c.b16 %v4832, %v4830
        %v7459 = vpack.c.b16 %v4835, %v4833
        %v7460 = vpack.c.b16 %v4836, %v4834
        %v7461 = vpack.c.b16 %v4839, %v4837
        %v7462 = vpack.c.b16 %v4840, %v4838
        %v7463 = vpack.c.b16 %v4843, %v4841
        %v7464 = vpack.c.b16 %v4844, %v4842
        %v7465 = vpack.c.b16 %v4847, %v4845
        %v7466 = vpack.c.b16 %v4848, %v4846
        %v7467 = vpack.c.b16 %v4851, %v4849
        %v7468 = vpack.c.b16 %v4852, %v4850
        %v7469 = vpack.c.b16 %v4855, %v4853
        %v7470 = vpack.c.b16 %v4856, %v4854
        %v7471 = vpack.c.b16 %v4859, %v4857
        %v7472 = vpack.c.b16 %v4860, %v4858
        %v7473 = vpack.c.b16 %v4863, %v4861
        %v7474 = vpack.c.b16 %v4864, %v4862
        %v7475 = vpack.c.b16 %v4867, %v4865
        %v7476 = vpack.c.b16 %v4868, %v4866
        %v7477 = vpack.c.b16 %v4871, %v4869
        %v7478 = vpack.c.b16 %v4872, %v4870
        %v7479 = vpack.c.b16 %v4875, %v4873
        %v7480 = vpack.c.b16 %v4876, %v4874
        %v7481 = vpack.c.b16 %v4879, %v4877
        %v7482 = vpack.c.b16 %v4880, %v4878
        %v7483 = vpack.c.b16 %v4883, %v4881
        %v7484 = vpack.c.b16 %v4884, %v4882
        %v7485 = vpack.c.b16 %v4887, %v4885
        %v7486 = vpack.c.b16 %v4888, %v4886
        %v7487 = vpack.c.b16 %v4891, %v4889
        %v7488 = vpack.c.b16 %v4892, %v4890
        %v7489 = vpack.c.b16 %v4895, %v4893
        %v7490 = vpack.c.b16 %v4896, %v4894
        %v7491 = vpack.c.b16 %v4899, %v4897
        %v7492 = vpack.c.b16 %v4900, %v4898
        %v7493 = vpack.c.b16 %v4903, %v4901
        %v7494 = vpack.c.b16 %v4904, %v4902
        %v7495 = vpack.c.b16 %v4907, %v4905
        %v7496 = vpack.c.b16 %v4908, %v4906
        %v7497 = vpack.c.b16 %v4911, %v4909
        %v7498 = vpack.c.b16 %v4912, %v4910
        %v7499 = vpack.c.b16 %v4915, %v4913
        %v7500 = vpack.c.b16 %v4916, %v4914
        %v7501 = vpack.c.b16 %v4919, %v4917
        %v7502 = vpack.c.b16 %v4920, %v4918
        %v7503 = vpack.c.b16 %v4923, %v4921
        %v7504 = vpack.c.b16 %v4924, %v4922
        %v7505 = vpack.c.b16 %v4927, %v4925
        %v7506 = vpack.c.b16 %v4928, %v4926
        %v7507 = vpack.c.b16 %v4931, %v4929
        %v7508 = vpack.c.b16 %v4932, %v4930
        %v7509 = vpack.c.b16 %v4935, %v4933
        %v7510 = vpack.c.b16 %v4936, %v4934
        %v7511 = vpack.c.b16 %v4939, %v4937
        %v7512 = vpack.c.b16 %v4940, %v4938
        %v7513 = vpack.c.b16 %v4943, %v4941
        %v7514 = vpack.c.b16 %v4944, %v4942
        %v7515 = vpack.c.b16 %v4947, %v4945
        %v7516 = vpack.c.b16 %v4948, %v4946
        %v7517 = vpack.c.b16 %v4951, %v4949
        %v7518 = vpack.c.b16 %v4952, %v4950
        %v7519 = vpack.c.b16 %v4955, %v4953
        %v7520 = vpack.c.b16 %v4956, %v4954
        %v7521 = vpack.c.b16 %v4959, %v4957
        %v7522 = vpack.c.b16 %v4960, %v4958
        %v7523 = vpack.c.b16 %v4963, %v4961
        %v7524 = vpack.c.b16 %v4964, %v4962
        %v7525 = vpack.c.b16 %v4967, %v4965
        %v7526 = vpack.c.b16 %v4968, %v4966
        %v7527 = vpack.c.b16 %v4971, %v4969
        %v7528 = vpack.c.b16 %v4972, %v4970
        %v7529 = vpack.c.b16 %v4975, %v4973
        %v7530 = vpack.c.b16 %v4976, %v4974
        %v7531 = vpack.c.b16 %v4979, %v4977
        %v7532 = vpack.c.b16 %v4980, %v4978
        %v7533 = vpack.c.b16 %v4983, %v4981
        %v7534 = vpack.c.b16 %v4984, %v4982
        %v7535 = vpack.c.b16 %v4987, %v4985
        %v7536 = vpack.c.b16 %v4988, %v4986
        %v7537 = vpack.c.b16 %v4991, %v4989
        %v7538 = vpack.c.b16 %v4992, %v4990
        %v7539 = vpack.c.b16 %v4995, %v4993
        %v7540 = vpack.c.b16 %v4996, %v4994
        %v7541 = vpack.c.b16 %v4999, %v4997
        %v7542 = vpack.c.b16 %v5000, %v4998
        %v7543 = vpack.c.b16 %v5003, %v5001
        %v7544 = vpack.c.b16 %v5004, %v5002
        %v7545 = vpack.c.b16 %v5007, %v5005
        %v7546 = vpack.c.b16 %v5008, %v5006
        %v7547 = vpack.c.b16 %v5011, %v5009
        %v7548 = vpack.c.b16 %v5012, %v5010
        %v7549 = vpack.c.b16 %v5015, %v5013
        %v7550 = vpack.c.b16 %v5016, %v5014
        %v7551 = vpack.c.b16 %v5019, %v5017
        %v7552 = vpack.c.b16 %v5020, %v5018
        %v7553 = vpack.c.b16 %v5023, %v5021
        %v7554 = vpack.c.b16 %v5024, %v5022
        %v7555 = vpack.c.b16 %v5027, %v5025
        %v7556 = vpack.c.b16 %v5028, %v5026
        %v7557 = vpack.c.b16 %v5031, %v5029
        %v7558 = vpack.c.b16 %v5032, %v5030
        %v7559 = vpack.c.b16 %v5035, %v5033
        %v7560 = vpack.c.b16 %v5036, %v5034
        %v7561 = vpack.c.b16 %v5039, %v5037
        %v7562 = vpack.c.b16 %v5040, %v5038
        %v7563 = vpack.c.b16 %v5043, %v5041
        %v7564 = vpack.c.b16 %v5044, %v5042
        %v7565 = vpack.c.b16 %v5047, %v5045
        %v7566 = vpack.c.b16 %v5048, %v5046
        %v7567 = vpack.c.b16 %v5051, %v5049
        %v7568 = vpack.c.b16 %v5052, %v5050
        %v7569 = vpack.c.b16 %v5055, %v5053
        %v7570 = vpack.c.b16 %v5056, %v5054
        %v7571 = vpack.c.b16 %v5059, %v5057
        %v7572 = vpack.c.b16 %v5060, %v5058
        %v7573 = vpack.c.b16 %v5063, %v5061
        %v7574 = vpack.c.b16 %v5064, %v5062
        %v7575 = vpack.c.b16 %v5067, %v5065
        %v7576 = vpack.c.b16 %v5068, %v5066
        %v7577 = vpack.c.b16 %v5071, %v5069
        %v7578 = vpack.c.b16 %v5072, %v5070
        %v7579 = vpack.c.b16 %v5075, %v5073
        %v7580 = vpack.c.b16 %v5076, %v5074
        %v7581 = vpack.c.b16 %v5079, %v5077
        %v7582 = vpack.c.b16 %v5080, %v5078
        %v7583 = vpack.c.b16 %v5083, %v5081
        %v7584 = vpack.c.b16 %v5084, %v5082
        %v7585 = vpack.c.b16 %v5087, %v5085
        %v7586 = vpack.c.b16 %v5088, %v5086
        %v7587 = vpack.c.b16 %v5091, %v5089
        %v7588 = vpack.c.b16 %v5092, %v5090
        %v7589 = vpack.c.b16 %v5095, %v5093
        %v7590 = vpack.c.b16 %v5096, %v5094
        %v7591 = vpack.c.b16 %v5099, %v5097
        %v7592 = vpack.c.b16 %v5100, %v5098
        %v7593 = vpack.c.b16 %v5103, %v5101
        %v7594 = vpack.c.b16 %v5104, %v5102
        %v7595 = vpack.c.b16 %v5107, %v5105
        %v7596 = vpack.c.b16 %v5108, %v5106
        %v7597 = vpack.c.b16 %v5111, %v5109
        %v7598 = vpack.c.b16 %v5112, %v5110
        %v7599 = vpack.c.b16 %v5115, %v5113
        %v7600 = vpack.c.b16 %v5116, %v5114
        %v7601 = vpack.c.b16 %v5119, %v5117
        %v7602 = vpack.c.b16 %v5120, %v5118
        %v7603 = vpack.c.b16 %v5123, %v5121
        %v7604 = vpack.c.b16 %v5124, %v5122
        %v7605 = vpack.c.b16 %v5127, %v5125
        %v7606 = vpack.c.b16 %v5128, %v5126
        %v7607 = vpack.c.b16 %v5131, %v5129
        %v7608 = vpack.c.b16 %v5132, %v5130
        %v7609 = vpack.c.b16 %v5135, %v5133
        %v7610 = vpack.c.b16 %v5136, %v5134
        %v7611 = vpack.c.b16 %v5139, %v5137
        %v7612 = vpack.c.b16 %v5140, %v5138
        %v7613 = vpack.c.b16 %v5143, %v5141
        %v7614 = vpack.c.b16 %v5144, %v5142
        %v7615 = vpack.c.b16 %v5147, %v5145
        %v7616 = vpack.c.b16 %v5148, %v5146
        %v7617 = vpack.c.b16 %v5151, %v5149
        %v7618 = vpack.c.b16 %v5152, %v5150
        %v7619 = vpack.c.b16 %v5155, %v5153
        %v7620 = vpack.c.b16 %v5156, %v5154
        %v7621 = vpack.c.b16 %v5159, %v5157
        %v7622 = vpack.c.b16 %v5160, %v5158
        %v7623 = vpack.c.b16 %v5163, %v5161
        %v7624 = vpack.c.b16 %v5164, %v5162
        %v7625 = vpack.c.b16 %v5167, %v5165
        %v7626 = vpack.c.b16 %v5168, %v5166
        %v7627 = vpack.c.b16 %v5171, %v5169
        %v7628 = vpack.c.b16 %v5172, %v5170
        %v7629 = vpack.c.b16 %v5175, %v5173
        %v7630 = vpack.c.b16 %v5176, %v5174
        %v7631 = vpack.c.b16 %v5179, %v5177
        %v7632 = vpack.c.b16 %v5180, %v5178
        %v7633 = vpack.c.b16 %v5183, %v5181
        %v7634 = vpack.c.b16 %v5184, %v5182
        %v7635 = vpack.c.b16 %v5187, %v5185
        %v7636 = vpack.c.b16 %v5188, %v5186
        %v7637 = vpack.c.b16 %v5191, %v5189
        %v7638 = vpack.c.b16 %v5192, %v5190
        %v7639 = vpack.c.b16 %v5195, %v5193
        %v7640 = vpack.c.b16 %v5196, %v5194
        %v7641 = vpack.c.b16 %v5199, %v5197
        %v7642 = vpack.c.b16 %v5200, %v5198
        %v7643 = vpack.c.b16 %v5203, %v5201
        %v7644 = vpack.c.b16 %v5204, %v5202
        %v7645 = vpack.c.b16 %v5207, %v5205
        %v7646 = vpack.c.b16 %v5208, %v5206
        %v7647 = vpack.c.b16 %v5211, %v5209
        %v7648 = vpack.c.b16 %v5212, %v5210
        %v7649 = vpack.c.b16 %v5215, %v5213
        %v7650 = vpack.c.b16 %v5216, %v5214
        %v7651 = vpack.c.b16 %v5219, %v5217
        %v7652 = vpack.c.b16 %v5220, %v5218
        %v7653 = vpack.c.b16 %v5223, %v5221
        %v7654 = vpack.c.b16 %v5224, %v5222
        %v7655 = vpack.c.b16 %v5227, %v5225
        %v7656 = vpack.c.b16 %v5228, %v5226
        %v7657 = vpack.c.b16 %v5231, %v5229
        %v7658 = vpack.c.b16 %v5232, %v5230
        %v7659 = vpack.c.b16 %v5235, %v5233
        %v7660 = vpack.c.b16 %v5236, %v5234
        %v7661 = vpack.c.b16 %v5239, %v5237
        %v7662 = vpack.c.b16 %v5240, %v5238
        %v7663 = vpack.c.b16 %v5243, %v5241
        %v7664 = vpack.c.b16 %v5244, %v5242
        %v7665 = vpack.c.b16 %v5247, %v5245
        %v7666 = vpack.c.b16 %v5248, %v5246
        %v7667 = vpack.c.b16 %v5251, %v5249
        %v7668 = vpack.c.b16 %v5252, %v5250
        %v7669 = vpack.c.b16 %v5255, %v5253
        %v7670 = vpack.c.b16 %v5256, %v5254
        %v7671 = vpack.c.b16 %v5259, %v5257
        %v7672 = vpack.c.b16 %v5260, %v5258
        %v7673 = vpack.c.b16 %v5263, %v5261
        %v7674 = vpack.c.b16 %v5264, %v5262
        %v7675 = vpack.c.b16 %v5267, %v5265
        %v7676 = vpack.c.b16 %v5268, %v5266
        %v7677 = vpack.c.b16 %v5271, %v5269
        %v7678 = vpack.c.b16 %v5272, %v5270
        %v7679 = vpack.c.b16 %v5275, %v5273
        %v7680 = vpack.c.b16 %v5276, %v5274
        %v7681 = vpack.c.b16 %v5279, %v5277
        %v7682 = vpack.c.b16 %v5280, %v5278
        %v7683 = vpack.c.b16 %v5283, %v5281
        %v7684 = vpack.c.b16 %v5284, %v5282
        %v7685 = vpack.c.b16 %v5287, %v5285
        %v7686 = vpack.c.b16 %v5288, %v5286
        %v7687 = vpack.c.b16 %v5291, %v5289
        %v7688 = vpack.c.b16 %v5292, %v5290
        %v7689 = vpack.c.b16 %v5295, %v5293
        %v7690 = vpack.c.b16 %v5296, %v5294
        %v7691 = vpack.c.b16 %v5299, %v5297
        %v7692 = vpack.c.b16 %v5300, %v5298
        %v7693 = vpack.c.b16 %v5303, %v5301
        %v7694 = vpack.c.b16 %v5304, %v5302
        %v7695 = vpack.c.b16 %v5307, %v5305
        %v7696 = vpack.c.b16 %v5308, %v5306
        %v7697 = vpack.c.b16 %v5311, %v5309
        %v7698 = vpack.c.b16 %v5312, %v5310
        %v7699 = vpack.c.b16 %v5315, %v5313
        %v7700 = vpack.c.b16 %v5316, %v5314
        %v7701 = vpack.c.b16 %v5319, %v5317
        %v7702 = vpack.c.b16 %v5320, %v5318
        %v7703 = vpack.c.b16 %v5323, %v5321
        %v7704 = vpack.c.b16 %v5324, %v5322
        %v7705 = vpack.c.b16 %v5327, %v5325
        %v7706 = vpack.c.b16 %v5328, %v5326
        %v7707 = vpack.c.b16 %v5331, %v5329
        %v7708 = vpack.c.b16 %v5332, %v5330
        %v7709 = vpack.c.b16 %v5335, %v5333
        %v7710 = vpack.c.b16 %v5336, %v5334
        %v7711 = vpack.c.b16 %v5339, %v5337
        %v7712 = vpack.c.b16 %v5340, %v5338
        %v7713 = vpack.c.b16 %v5343, %v5341
        %v7714 = vpack.c.b16 %v5344, %v5342
        %v7715 = vpack.c.b16 %v5347, %v5345
        %v7716 = vpack.c.b16 %v5348, %v5346
        %v7717 = vpack.c.b16 %v5351, %v5349
        %v7718 = vpack.c.b16 %v5352, %v5350
        %v7719 = vpack.c.b16 %v5355, %v5353
        %v7720 = vpack.c.b16 %v5356, %v5354
        %v7721 = vpack.c.b16 %v5359, %v5357
        %v7722 = vpack.c.b16 %v5360, %v5358
        %v7723 = vpack.c.b16 %v5363, %v5361
        %v7724 = vpack.c.b16 %v5364, %v5362
        %v7725 = vpack.c.b16 %v5367, %v5365
        %v7726 = vpack.c.b16 %v5368, %v5366
        %v7727 = vpack.c.b16 %v5371, %v5369
        %v7728 = vpack.c.b16 %v5372, %v5370
        %v7729 = vpack.c.b16 %v5375, %v5373
        %v7730 = vpack.c.b16 %v5376, %v5374
        %v7731 = vpack.c.b16 %v5379, %v5377
        %v7732 = vpack.c.b16 %v5380, %v5378
        %v7733 = vpack.c.b16 %v5383, %v5381
        %v7734 = vpack.c.b16 %v5384, %v5382
        %v7735 = vpack.c.b16 %v5387, %v5385
        %v7736 = vpack.c.b16 %v5388, %v5386
        %v7737 = vpack.c.b16 %v5391, %v5389
        %v7738 = vpack.c.b16 %v5392, %v5390
        %v7739 = vpack.c.b16 %v5395, %v5393
        %v7740 = vpack.c.b16 %v5396, %v5394
        %v7741 = vpack.c.b16 %v5399, %v5397
        %v7742 = vpack.c.b16 %v5400, %v5398
        %v7743 = vpack.c.b16 %v5403, %v5401
        %v7744 = vpack.c.b16 %v5404, %v5402
        %v7745 = vpack.c.b16 %v5407, %v5405
        %v7746 = vpack.c.b16 %v5408, %v5406
        %v7747 = vpack.c.b16 %v5411, %v5409
        %v7748 = vpack.c.b16 %v5412, %v5410
        %v7749 = vpack.c.b16 %v5415, %v5413
        %v7750 = vpack.c.b16 %v5416, %v5414
        %v7751 = vpack.c.b16 %v5419, %v5417
        %v7752 = vpack.c.b16 %v5420, %v5418
        %v7753 = vpack.c.b16 %v5423, %v5421
        %v7754 = vpack.c.b16 %v5424, %v5422
        %v7755 = vpack.c.b16 %v5427, %v5425
        %v7756 = vpack.c.b16 %v5428, %v5426
        %v7757 = vpack.c.b16 %v5431, %v5429
        %v7758 = vpack.c.b16 %v5432, %v5430
        %v7759 = vpack.c.b16 %v5435, %v5433
        %v7760 = vpack.c.b16 %v5436, %v5434
        %v7761 = vpack.c.b16 %v5439, %v5437
        %v7762 = vpack.c.b16 %v5440, %v5438
        %v7763 = vpack.c.b16 %v5443, %v5441
        %v7764 = vpack.c.b16 %v5444, %v5442
        %v7765 = vpack.c.b16 %v5447, %v5445
        %v7766 = vpack.c.b16 %v5448, %v5446
        %v7767 = vpack.c.b16 %v5451, %v5449
        %v7768 = vpack.c.b16 %v5452, %v5450
        %v7769 = vpack.c.b16 %v5455, %v5453
        %v7770 = vpack.c.b16 %v5456, %v5454
        %v7771 = vpack.c.b16 %v5459, %v5457
        %v7772 = vpack.c.b16 %v5460, %v5458
        %v7773 = vpack.c.b16 %v5463, %v5461
        %v7774 = vpack.c.b16 %v5464, %v5462
        %v7775 = vpack.c.b16 %v5467, %v5465
        %v7776 = vpack.c.b16 %v5468, %v5466
        %v7777 = vpack.c.b16 %v5471, %v5469
        %v7778 = vpack.c.b16 %v5472, %v5470
        %v7779 = vpack.c.b16 %v5475, %v5473
        %v7780 = vpack.c.b16 %v5476, %v5474
        %v7781 = vpack.c.b16 %v5479, %v5477
        %v7782 = vpack.c.b16 %v5480, %v5478
        %v7783 = vpack.c.b16 %v5483, %v5481
        %v7784 = vpack.c.b16 %v5484, %v5482
        %v7785 = vpack.c.b16 %v5487, %v5485
        %v7786 = vpack.c.b16 %v5488, %v5486
        %v7787 = vpack.c.b16 %v5491, %v5489
        %v7788 = vpack.c.b16 %v5492, %v5490
        %v7789 = vpack.c.b16 %v5495, %v5493
        %v7790 = vpack.c.b16 %v5496, %v5494
        %v7791 = vpack.c.b16 %v5499, %v5497
        %v7792 = vpack.c.b16 %v5500, %v5498
        %v7793 = vpack.c.b16 %v5503, %v5501
        %v7794 = vpack.c.b16 %v5504, %v5502
        %v7795 = vpack.c.b16 %v5507, %v5505
        %v7796 = vpack.c.b16 %v5508, %v5506
        %v7797 = vpack.c.b16 %v5511, %v5509
        %v7798 = vpack.c.b16 %v5512, %v5510
        %v7799 = vpack.c.b16 %v5515, %v5513
        %v7800 = vpack.c.b16 %v5516, %v5514
        %v7801 = vpack.c.b16 %v5519, %v5517
        %v7802 = vpack.c.b16 %v5520, %v5518
        %v7803 = vpack.c.b16 %v5523, %v5521
        %v7804 = vpack.c.b16 %v5524, %v5522
        %v7805 = vpack.c.b16 %v5527, %v5525
        %v7806 = vpack.c.b16 %v5528, %v5526
        %v7807 = vpack.c.b16 %v5531, %v5529
        %v7808 = vpack.c.b16 %v5532, %v5530
        %v7809 = vpack.c.b16 %v5535, %v5533
        %v7810 = vpack.c.b16 %v5536, %v5534
        %v7811 = vpack.c.b16 %v5539, %v5537
        %v7812 = vpack.c.b16 %v5540, %v5538
        %v7813 = vpack.c.b16 %v5543, %v5541
        %v7814 = vpack.c.b16 %v5544, %v5542
        %v7815 = vpack.c.b16 %v5547, %v5545
        %v7816 = vpack.c.b16 %v5548, %v5546
        %v7817 = vpack.c.b16 %v5551, %v5549
        %v7818 = vpack.c.b16 %v5552, %v5550
        %v7819 = vpack.c.b16 %v5555, %v5553
        %v7820 = vpack.c.b16 %v5556, %v5554
        %v7821 = vpack.c.b16 %v5559, %v5557
        %v7822 = vpack.c.b16 %v5560, %v5558
        %v7823 = vpack.c.b16 %v5563, %v5561
        %v7824 = vpack.c.b16 %v5564, %v5562
        %v7825 = vpack.c.b16 %v5567, %v5565
        %v7826 = vpack.c.b16 %v5568, %v5566
        %v7827 = vpack.c.b16 %v5571, %v5569
        %v7828 = vpack.c.b16 %v5572, %v5570
        %v7829 = vpack.c.b16 %v5575, %v5573
        %v7830 = vpack.c.b16 %v5576, %v5574
        %v7831 = vpack.c.b16 %v5579, %v5577
        %v7832 = vpack.c.b16 %v5580, %v5578
        %v7833 = vpack.c.b16 %v5583, %v5581
        %v7834 = vpack.c.b16 %v5584, %v5582
        %v7835 = vpack.c.b16 %v5587, %v5585
        %v7836 = vpack.c.b16 %v5588, %v5586
        %v7837 = vpack.c.b16 %v5591, %v5589
        %v7838 = vpack.c.b16 %v5592, %v5590
        %v7839 = vpack.c.b16 %v5595, %v5593
        %v7840 = vpack.c.b16 %v5596, %v5594
        %v7841 = vpack.c.b16 %v5599, %v5597
        %v7842 = vpack.c.b16 %v5600, %v5598
        %v7843 = vpack.c.b16 %v5603, %v5601
        %v7844 = vpack.c.b16 %v5604, %v5602
        %v7845 = vpack.c.b16 %v5607, %v5605
        %v7846 = vpack.c.b16 %v5608, %v5606
        %v7847 = vpack.c.b16 %v5611, %v5609
        %v7848 = vpack.c.b16 %v5612, %v5610
        %v7849 = vpack.c.b16 %v5615, %v5613
        %v7850 = vpack.c.b16 %v5616, %v5614
        %v7851 = vpack.c.b16 %v5619, %v5617
        %v7852 = vpack.c.b16 %v5620, %v5618
        %v7853 = vpack.c.b16 %v5623, %v5621
        %v7854 = vpack.c.b16 %v5624, %v5622
        %v7855 = vpack.c.b16 %v5627, %v5625
        %v7856 = vpack.c.b16 %v5628, %v5626
        %v7857 = vpack.c.b16 %v5631, %v5629
        %v7858 = vpack.c.b16 %v5632, %v5630
        %v7859 = vpack.c.b16 %v5635, %v5633
        %v7860 = vpack.c.b16 %v5636, %v5634
        %v7861 = vpack.c.b16 %v5639, %v5637
        %v7862 = vpack.c.b16 %v5640, %v5638
        %v7863 = vpack.c.b16 %v5643, %v5641
        %v7864 = vpack.c.b16 %v5644, %v5642
        %v7865 = vpack.c.b16 %v5647, %v5645
        %v7866 = vpack.c.b16 %v5648, %v5646
        %v7867 = vpack.c.b16 %v5651, %v5649
        %v7868 = vpack.c.b16 %v5652, %v5650
        %v7869 = vpack.c.b16 %v5655, %v5653
        %v7870 = vpack.c.b16 %v5656, %v5654
        %v7871 = vpack.c.b16 %v5659, %v5657
        %v7872 = vpack.c.b16 %v5660, %v5658
        %v7873 = vpack.c.b16 %v5663, %v5661
        %v7874 = vpack.c.b16 %v5664, %v5662
        %v7875 = vpack.c.b16 %v5667, %v5665
        %v7876 = vpack.c.b16 %v5668, %v5666
        %v7877 = vpack.c.b16 %v5671, %v5669
        %v7878 = vpack.c.b16 %v5672, %v5670
        %v7879 = vpack.c.b16 %v5675, %v5673
        %v7880 = vpack.c.b16 %v5676, %v5674
        %v7881 = vpack.c.b16 %v5679, %v5677
        %v7882 = vpack.c.b16 %v5680, %v5678
        %v7883 = vpack.c.b16 %v5683, %v5681
        %v7884 = vpack.c.b16 %v5684, %v5682
        %v7885 = vpack.c.b16 %v5687, %v5685
        %v7886 = vpack.c.b16 %v5688, %v5686
        %v7887 = vpack.c.b16 %v5691, %v5689
        %v7888 = vpack.c.b16 %v5692, %v5690
        %v7889 = vpack.c.b16 %v5695, %v5693
        %v7890 = vpack.c.b16 %v5696, %v5694
        %v7891 = vpack.c.b16 %v5699, %v5697
        %v7892 = vpack.c.b16 %v5700, %v5698
        %v7893 = vpack.c.b16 %v5703, %v5701
        %v7894 = vpack.c.b16 %v5704, %v5702
        %v7895 = vpack.c.b16 %v5707, %v5705
        %v7896 = vpack.c.b16 %v5708, %v5706
        %v7897 = vpack.c.b16 %v5711, %v5709
        %v7898 = vpack.c.b16 %v5712, %v5710
        %v7899 = vpack.c.b16 %v5715, %v5713
        %v7900 = vpack.c.b16 %v5716, %v5714
        %v7901 = vpack.c.b16 %v5719, %v5717
        %v7902 = vpack.c.b16 %v5720, %v5718
        %v7903 = vpack.c.b16 %v5723, %v5721
        %v7904 = vpack.c.b16 %v5724, %v5722
        %v7905 = vpack.c.b16 %v5727, %v5725
        %v7906 = vpack.c.b16 %v5728, %v5726
        %v7907 = vpack.c.b16 %v5731, %v5729
        %v7908 = vpack.c.b16 %v5732, %v5730
        %v7909 = vpack.c.b16 %v5735, %v5733
        %v7910 = vpack.c.b16 %v5736, %v5734
        %v7911 = vpack.c.b16 %v5739, %v5737
        %v7912 = vpack.c.b16 %v5740, %v5738
        %v7913 = vpack.c.b16 %v5743, %v5741
        %v7914 = vpack.c.b16 %v5744, %v5742
        %v7915 = vpack.c.b16 %v5747, %v5745
        %v7916 = vpack.c.b16 %v5748, %v5746
        %v7917 = vpack.c.b16 %v5751, %v5749
        %v7918 = vpack.c.b16 %v5752, %v5750
        %v7919 = vpack.c.b16 %v5755, %v5753
        %v7920 = vpack.c.b16 %v5756, %v5754
        %v7921 = vpack.c.b16 %v5759, %v5757
        %v7922 = vpack.c.b16 %v5760, %v5758
        %v7923 = vpack.c.b16 %v5763, %v5761
        %v7924 = vpack.c.b16 %v5764, %v5762
        %v7925 = vpack.c.b16 %v5767, %v5765
        %v7926 = vpack.c.b16 %v5768, %v5766
        %v7927 = vpack.c.b16 %v5771, %v5769
        %v7928 = vpack.c.b16 %v5772, %v5770
        %v7929 = vpack.c.b16 %v5775, %v5773
        %v7930 = vpack.c.b16 %v5776, %v5774
        %v7931 = vpack.c.b16 %v5779, %v5777
        %v7932 = vpack.c.b16 %v5780, %v5778
        %v7933 = vpack.c.b16 %v5783, %v5781
        %v7934 = vpack.c.b16 %v5784, %v5782
        %v7935 = vpack.c.b16 %v5787, %v5785
        %v7936 = vpack.c.b16 %v5788, %v5786
        %v7937 = vpack.c.b16 %v5791, %v5789
        %v7938 = vpack.c.b16 %v5792, %v5790
        %v7939 = vpack.c.b16 %v5795, %v5793
        %v7940 = vpack.c.b16 %v5796, %v5794
        %v7941 = vpack.c.b16 %v5799, %v5797
        %v7942 = vpack.c.b16 %v5800, %v5798
        %v7943 = vpack.c.b16 %v5803, %v5801
        %v7944 = vpack.c.b16 %v5804, %v5802
        %v7945 = vpack.c.b16 %v5807, %v5805
        %v7946 = vpack.c.b16 %v5808, %v5806
        %v7947 = vpack.c.b16 %v5811, %v5809
        %v7948 = vpack.c.b16 %v5812, %v5810
        %v7949 = vpack.c.b16 %v5815, %v5813
        %v7950 = vpack.c.b16 %v5816, %v5814
        %v7951 = vpack.c.b16 %v5819, %v5817
        %v7952 = vpack.c.b16 %v5820, %v5818
        %v7953 = vpack.c.b16 %v5823, %v5821
        %v7954 = vpack.c.b16 %v5824, %v5822
        %v7955 = vpack.c.b16 %v5827, %v5825
        %v7956 = vpack.c.b16 %v5828, %v5826
        %v7957 = vpack.c.b16 %v5831, %v5829
        %v7958 = vpack.c.b16 %v5832, %v5830
        %v7959 = vpack.c.b16 %v5835, %v5833
        %v7960 = vpack.c.b16 %v5836, %v5834
        %v7961 = vpack.c.b16 %v5839, %v5837
        %v7962 = vpack.c.b16 %v5840, %v5838
        %v7963 = vpack.c.b16 %v5843, %v5841
        %v7964 = vpack.c.b16 %v5844, %v5842
        %v7965 = vpack.c.b16 %v5847, %v5845
        %v7966 = vpack.c.b16 %v5848, %v5846
        %v7967 = vpack.c.b16 %v5851, %v5849
        %v7968 = vpack.c.b16 %v5852, %v5850
        %v7969 = vpack.c.b16 %v5855, %v5853
        %v7970 = vpack.c.b16 %v5856, %v5854
        %v7971 = vpack.c.b16 %v5859, %v5857
        %v7972 = vpack.c.b16 %v5860, %v5858
        %v7973 = vpack.c.b16 %v5863, %v5861
        %v7974 = vpack.c.b16 %v5864, %v5862
        %v7975 = vpack.c.b16 %v5867, %v5865
        %v7976 = vpack.c.b16 %v5868, %v5866
        %v7977 = vpack.c.b16 %v5871, %v5869
        %v7978 = vpack.c.b16 %v5872, %v5870
        %v7979 = vpack.c.b16 %v5875, %v5873
        %v7980 = vpack.c.b16 %v5876, %v5874
        %v7981 = vpack.c.b16 %v5879, %v5877
        %v7982 = vpack.c.b16 %v5880, %v5878
        %v7983 = vpack.c.b16 %v5883, %v5881
        %v7984 = vpack.c.b16 %v5884, %v5882
        %v7985 = vpack.c.b16 %v5887, %v5885
        %v7986 = vpack.c.b16 %v5888, %v5886
        %v7987 = vpack.c.b16 %v5891, %v5889
        %v7988 = vpack.c.b16 %v5892, %v5890
        %v7989 = vpack.c.b16 %v5895, %v5893
        %v7990 = vpack.c.b16 %v5896, %v5894
        %v7991 = vpack.c.b16 %v5899, %v5897
        %v7992 = vpack.c.b16 %v5900, %v5898
        %v7993 = vpack.c.b16 %v5903, %v5901
        %v7994 = vpack.c.b16 %v5904, %v5902
        %v7995 = vpack.c.b16 %v5907, %v5905
        %v7996 = vpack.c.b16 %v5908, %v5906
        %v7997 = vpack.c.b16 %v5911, %v5909
        %v7998 = vpack.c.b16 %v5912, %v5910
        %v7999 = vpack.c.b16 %v5915, %v5913
        %v8000 = vpack.c.b16 %v5916, %v5914
        %v8001 = vpack.c.b16 %v5919, %v5917
        %v8002 = vpack.c.b16 %v5920, %v5918
        %v8003 = vpack.c.b16 %v5923, %v5921
        %v8004 = vpack.c.b16 %v5924, %v5922
        %v8005 = vpack.c.b16 %v5927, %v5925
        %v8006 = vpack.c.b16 %v5928, %v5926
        %v8007 = vpack.c.b16 %v5931, %v5929
        %v8008 = vpack.c.b16 %v5932, %v5930
        %v8009 = vpack.c.b16 %v5935, %v5933
        %v8010 = vpack.c.b16 %v5936, %v5934
        %v8011 = vpack.c.b16 %v5939, %v5937
        %v8012 = vpack.c.b16 %v5940, %v5938
        %v8013 = vpack.c.b16 %v5943, %v5941
        %v8014 = vpack.c.b16 %v5944, %v5942
        %v8015 = vpack.c.b16 %v5947, %v5945
        %v8016 = vpack.c.b16 %v5948, %v5946
        %v8017 = vpack.c.b16 %v5951, %v5949
        %v8018 = vpack.c.b16 %v5952, %v5950
        %v8019 = vpack.c.b16 %v5955, %v5953
        %v8020 = vpack.c.b16 %v5956, %v5954
        %v8021 = vpack.c.b16 %v5959, %v5957
        %v8022 = vpack.c.b16 %v5960, %v5958
        %v8023 = vpack.c.b16 %v5963, %v5961
        %v8024 = vpack.c.b16 %v5964, %v5962
        %v8025 = vpack.c.b16 %v5967, %v5965
        %v8026 = vpack.c.b16 %v5968, %v5966
        %v8027 = vpack.c.b16 %v5971, %v5969
        %v8028 = vpack.c.b16 %v5972, %v5970
        %v8029 = vpack.c.b16 %v5975, %v5973
        %v8030 = vpack.c.b16 %v5976, %v5974
        %v8031 = vpack.c.b16 %v5979, %v5977
        %v8032 = vpack.c.b16 %v5980, %v5978
        %v8033 = vpack.c.b16 %v5983, %v5981
        %v8034 = vpack.c.b16 %v5984, %v5982
        %v8035 = vpack.c.b16 %v5987, %v5985
        %v8036 = vpack.c.b16 %v5988, %v5986
        %v8037 = vpack.c.b16 %v5991, %v5989
        %v8038 = vpack.c.b16 %v5992, %v5990
        %v8039 = vpack.c.b16 %v5995, %v5993
        %v8040 = vpack.c.b16 %v5996, %v5994
        %v8041 = vpack.c.b16 %v5999, %v5997
        %v8042 = vpack.c.b16 %v6000, %v5998
        %v8043 = vpack.c.b16 %v6003, %v6001
        %v8044 = vpack.c.b16 %v6004, %v6002
        %v8045 = vpack.c.b16 %v6007, %v6005
        %v8046 = vpack.c.b16 %v6008, %v6006
        %v8047 = vpack.c.b16 %v6011, %v6009
        %v8048 = vpack.c.b16 %v6012, %v6010
        %v8049 = vpack.c.b16 %v6015, %v6013
        %v8050 = vpack.c.b16 %v6016, %v6014
        %v8051 = vpack.c.b16 %v6019, %v6017
        %v8052 = vpack.c.b16 %v6020, %v6018
        %v8053 = vpack.c.b16 %v6023, %v6021
        %v8054 = vpack.c.b16 %v6024, %v6022
        %v8055 = vpack.c.b16 %v6027, %v6025
        %v8056 = vpack.c.b16 %v6028, %v6026
        %v8057 = vpack.c.b16 %v6031, %v6029
        %v8058 = vpack.c.b16 %v6032, %v6030
        %v8059 = vpack.c.b16 %v6035, %v6033
        %v8060 = vpack.c.b16 %v6036, %v6034
        %v8061 = vpack.c.b16 %v6039, %v6037
        %v8062 = vpack.c.b16 %v6040, %v6038
        %v8063 = vpack.c.b16 %v6043, %v6041
        %v8064 = vpack.c.b16 %v6044, %v6042
        %v8065 = vpack.c.b16 %v6047, %v6045
        %v8066 = vpack.c.b16 %v6048, %v6046
        %v8067 = vpack.c.b16 %v6051, %v6049
        %v8068 = vpack.c.b16 %v6052, %v6050
        %v8069 = vpack.c.b16 %v6055, %v6053
        %v8070 = vpack.c.b16 %v6056, %v6054
        %v8071 = vpack.c.b16 %v6059, %v6057
        %v8072 = vpack.c.b16 %v6060, %v6058
        %v8073 = vpack.c.b16 %v6063, %v6061
        %v8074 = vpack.c.b16 %v6064, %v6062
        %v8075 = vpack.c.b16 %v6067, %v6065
        %v8076 = vpack.c.b16 %v6068, %v6066
        %v8077 = vpack.c.b16 %v6071, %v6069
        %v8078 = vpack.c.b16 %v6072, %v6070
        %v8079 = vpack.c.b16 %v6075, %v6073
        %v8080 = vpack.c.b16 %v6076, %v6074
        %v8081 = vpack.c.b16 %v6079, %v6077
        %v8082 = vpack.c.b16 %v6080, %v6078
        %v8083 = vpack.c.b16 %v6083, %v6081
        %v8084 = vpack.c.b16 %v6084, %v6082
        %v8085 = vpack.c.b16 %v6087, %v6085
        %v8086 = vpack.c.b16 %v6088, %v6086
        %v8087 = vpack.c.b16 %v6091, %v6089
        %v8088 = vpack.c.b16 %v6092, %v6090
        %v8089 = vpack.c.b16 %v6095, %v6093
        %v8090 = vpack.c.b16 %v6096, %v6094
        %v8091 = vpack.c.b16 %v6099, %v6097
        %v8092 = vpack.c.b16 %v6100, %v6098
        %v8093 = vpack.c.b16 %v6103, %v6101
        %v8094 = vpack.c.b16 %v6104, %v6102
        %v8095 = vpack.c.b16 %v6107, %v6105
        %v8096 = vpack.c.b16 %v6108, %v6106
        %v8097 = vpack.c.b16 %v6111, %v6109
        %v8098 = vpack.c.b16 %v6112, %v6110
        %v8099 = vpack.c.b16 %v6115, %v6113
        %v8100 = vpack.c.b16 %v6116, %v6114
        %v8101 = vpack.c.b16 %v6119, %v6117
        %v8102 = vpack.c.b16 %v6120, %v6118
        %v8103 = vpack.c.b16 %v6123, %v6121
        %v8104 = vpack.c.b16 %v6124, %v6122
        %v8105 = vpack.c.b16 %v6127, %v6125
        %v8106 = vpack.c.b16 %v6128, %v6126
        %v8107 = vpack.c.b16 %v6131, %v6129
        %v8108 = vpack.c.b16 %v6132, %v6130
        %v8109 = vpack.c.b16 %v6135, %v6133
        %v8110 = vpack.c.b16 %v6136, %v6134
        %v8111 = vpack.c.b16 %v6139, %v6137
        %v8112 = vpack.c.b16 %v6140, %v6138
        %v8113 = vpack.c.b16 %v6143, %v6141
        %v8114 = vpack.c.b16 %v6144, %v6142
        %v8115 = vpack.c.b16 %v6147, %v6145
        %v8116 = vpack.c.b16 %v6148, %v6146
        %v8117 = vpack.c.b16 %v6151, %v6149
        %v8118 = vpack.c.b16 %v6152, %v6150
        %v8119 = vpack.c.b16 %v6155, %v6153
        %v8120 = vpack.c.b16 %v6156, %v6154
        %v8121 = vpack.c.b16 %v6159, %v6157
        %v8122 = vpack.c.b16 %v6160, %v6158
        %v8123 = vpack.c.b16 %v6163, %v6161
        %v8124 = vpack.c.b16 %v6164, %v6162
        %v8125 = vpack.c.b16 %v6167, %v6165
        %v8126 = vpack.c.b16 %v6168, %v6166
        %v8127 = vpack.c.b16 %v6171, %v6169
        %v8128 = vpack.c.b16 %v6172, %v6170
        %v8129 = vpack.c.b16 %v6175, %v6173
        %v8130 = vpack.c.b16 %v6176, %v6174
        %v8131 = vpack.c.b16 %v6179, %v6177
        %v8132 = vpack.c.b16 %v6180, %v6178
        %v8133 = vpack.c.b16 %v6183, %v6181
        %v8134 = vpack.c.b16 %v6184, %v6182
        %v8135 = vpack.c.b16 %v6187, %v6185
        %v8136 = vpack.c.b16 %v6188, %v6186
        %v8137 = vpack.c.b16 %v6191, %v6189
        %v8138 = vpack.c.b16 %v6192, %v6190
        %v8139 = vpack.c.b16 %v6195, %v6193
        %v8140 = vpack.c.b16 %v6196, %v6194
        %v8141 = vpack.c.b16 %v6199, %v6197
        %v8142 = vpack.c.b16 %v6200, %v6198
        %v8143 = vpack.c.b16 %v6203, %v6201
        %v8144 = vpack.c.b16 %v6204, %v6202
        %v8145 = vpack.c.b16 %v6207, %v6205
        %v8146 = vpack.c.b16 %v6208, %v6206
        %v8147 = vpack.c.b16 %v6211, %v6209
        %v8148 = vpack.c.b16 %v6212, %v6210
        %v8149 = vpack.c.b16 %v6215, %v6213
        %v8150 = vpack.c.b16 %v6216, %v6214
        %v8151 = vpack.c.b16 %v6219, %v6217
        %v8152 = vpack.c.b16 %v6220, %v6218
        %v8153 = vpack.c.b16 %v6223, %v6221
        %v8154 = vpack.c.b16 %v6224, %v6222
        %v8155 = vpack.c.b16 %v6227, %v6225
        %v8156 = vpack.c.b16 %v6228, %v6226
        %v8157 = vpack.c.b16 %v6231, %v6229
        %v8158 = vpack.c.b16 %v6232, %v6230
        %v8159 = vpack.c.b16 %v6235, %v6233
        %v8160 = vpack.c.b16 %v6236, %v6234
        %v8161 = vpack.c.b16 %v6239, %v6237
        %v8162 = vpack.c.b16 %v6240, %v6238
        %v8163 = vpack.c.b16 %v6243, %v6241
        %v8164 = vpack.c.b16 %v6244, %v6242
        %v8165 = vpack.c.b16 %v6247, %v6245
        %v8166 = vpack.c.b16 %v6248, %v6246
        %v8167 = vpack.c.b16 %v6251, %v6249
        %v8168 = vpack.c.b16 %v6252, %v6250
        %v8169 = vpack.c.b16 %v6255, %v6253
        %v8170 = vpack.c.b16 %v6256, %v6254
        %v8171 = vpack.c.b16 %v6259, %v6257
        %v8172 = vpack.c.b16 %v6260, %v6258
        %v8173 = vpack.c.b16 %v6263, %v6261
        %v8174 = vpack.c.b16 %v6264, %v6262
        %v8175 = vpack.c.b16 %v6267, %v6265
        %v8176 = vpack.c.b16 %v6268, %v6266
        %v8177 = vpack.c.b16 %v6271, %v6269
        %v8178 = vpack.c.b16 %v6272, %v6270
        %v8179 = vpack.c.b16 %v6275, %v6273
        %v8180 = vpack.c.b16 %v6276, %v6274
        %v8181 = vpack.c.b16 %v6279, %v6277
        %v8182 = vpack.c.b16 %v6280, %v6278
        %v8183 = vpack.c.b16 %v6283, %v6281
        %v8184 = vpack.c.b16 %v6284, %v6282
        %v8185 = vpack.c.b16 %v6287, %v6285
        %v8186 = vpack.c.b16 %v6288, %v6286
        %v8187 = vpack.c.b16 %v6291, %v6289
        %v8188 = vpack.c.b16 %v6292, %v6290
        %v8189 = vpack.c.b16 %v6295, %v6293
        %v8190 = vpack.c.b16 %v6296, %v6294
        %v8191 = vpack.c.b16 %v6299, %v6297
        %v8192 = vpack.c.b16 %v6300, %v6298
        %v8193 = vpack.c.b16 %v6303, %v6301
        %v8194 = vpack.c.b16 %v6304, %v6302
        %v8195 = vpack.c.b16 %v6307, %v6305
        %v8196 = vpack.c.b16 %v6308, %v6306
        %v8197 = vpack.c.b16 %v6311, %v6309
        %v8198 = vpack.c.b16 %v6312, %v6310
        %v8199 = vpack.c.b16 %v6315, %v6313
        %v8200 = vpack.c.b16 %v6316, %v6314
        %v8201 = vpack.c.b16 %v6319, %v6317
        %v8202 = vpack.c.b16 %v6320, %v6318
        %v8203 = vpack.c.b16 %v6323, %v6321
        %v8204 = vpack.c.b16 %v6324, %v6322
        %v8205 = vpack.c.b16 %v6327, %v6325
        %v8206 = vpack.c.b16 %v6328, %v6326
        %v8207 = vpack.c.b16 %v6331, %v6329
        %v8208 = vpack.c.b16 %v6332, %v6330
        %v8209 = vpack.c.b16 %v6335, %v6333
        %v8210 = vpack.c.b16 %v6336, %v6334
        %v8211 = vpack.c.b16 %v6339, %v6337
        %v8212 = vpack.c.b16 %v6340, %v6338
        %v8213 = vpack.c.b16 %v6343, %v6341
        %v8214 = vpack.c.b16 %v6344, %v6342
        %v8215 = vpack.c.b16 %v6347, %v6345
        %v8216 = vpack.c.b16 %v6348, %v6346
        %v8217 = vpack.c.b16 %v6351, %v6349
        %v8218 = vpack.c.b16 %v6352, %v6350
        %v8219 = vpack.c.b16 %v6355, %v6353
        %v8220 = vpack.c.b16 %v6356, %v6354
        %v8221 = vpack.c.b16 %v6359, %v6357
        %v8222 = vpack.c.b16 %v6360, %v6358
        %v8223 = vpack.c.b16 %v6363, %v6361
        %v8224 = vpack.c.b16 %v6364, %v6362
        %v8225 = vpack.c.b16 %v6367, %v6365
        %v8226 = vpack.c.b16 %v6368, %v6366
        %v8227 = vpack.c.b16 %v6371, %v6369
        %v8228 = vpack.c.b16 %v6372, %v6370
        %v8229 = vpack.c.b16 %v6375, %v6373
        %v8230 = vpack.c.b16 %v6376, %v6374
        %v8231 = vpack.c.b16 %v6379, %v6377
        %v8232 = vpack.c.b16 %v6380, %v6378
        %v8233 = vpack.c.b16 %v6383, %v6381
        %v8234 = vpack.c.b16 %v6384, %v6382
        %v8235 = vpack.c.b16 %v6387, %v6385
        %v8236 = vpack.c.b16 %v6388, %v6386
        %v8237 = vpack.c.b16 %v6391, %v6389
        %v8238 = vpack.c.b16 %v6392, %v6390
        %v8239 = vpack.c.b16 %v6395, %v6393
        %v8240 = vpack.c.b16 %v6396, %v6394
        %v8241 = vpack.c.b16 %v6399, %v6397
        %v8242 = vpack.c.b16 %v6400, %v6398
        %v8243 = vpack.c.b16 %v6403, %v6401
        %v8244 = vpack.c.b16 %v6404, %v6402
        %v8245 = vpack.c.b16 %v6407, %v6405
        %v8246 = vpack.c.b16 %v6408, %v6406
        %v8247 = vpack.c.b16 %v6411, %v6409
        %v8248 = vpack.c.b16 %v6412, %v6410
        %v8249 = vpack.c.b16 %v6415, %v6413
        %v8250 = vpack.c.b16 %v6416, %v6414
        %v8251 = vpack.c.b16 %v6419, %v6417
        %v8252 = vpack.c.b16 %v6420, %v6418
        %v8253 = vpack.c.b16 %v6423, %v6421
        %v8254 = vpack.c.b16 %v6424, %v6422
        %v8255 = vpack.c.b16 %v6427, %v6425
        %v8256 = vpack.c.b16 %v6428, %v6426
        %v8257 = vpack.c.b16 %v6431, %v6429
        %v8258 = vpack.c.b16 %v6432, %v6430
        %v8259 = vpack.c.b16 %v6435, %v6433
        %v8260 = vpack.c.b16 %v6436, %v6434
        %v8261 = vpack.c.b16 %v6439, %v6437
        %v8262 = vpack.c.b16 %v6440, %v6438
        %v8263 = vpack.c.b16 %v6443, %v6441
        %v8264 = vpack.c.b16 %v6444, %v6442
        %v8265 = vpack.c.b16 %v6447, %v6445
        %v8266 = vpack.c.b16 %v6448, %v6446
        %v8267 = vpack.c.b16 %v6451, %v6449
        %v8268 = vpack.c.b16 %v6452, %v6450
        %v8269 = vpack.c.b16 %v6455, %v6453
        %v8270 = vpack.c.b16 %v6456, %v6454
        %v8271 = vpack.c.b16 %v6459, %v6457
        %v8272 = vpack.c.b16 %v6460, %v6458
        %v8273 = vpack.c.b16 %v6463, %v6461
        %v8274 = vpack.c.b16 %v6464, %v6462
        %v8275 = vpack.c.b16 %v6467, %v6465
        %v8276 = vpack.c.b16 %v6468, %v6466
        %v8277 = vpack.c.b16 %v6471, %v6469
        %v8278 = vpack.c.b16 %v6472, %v6470
        %v8279 = vpack.c.b16 %v6475, %v6473
        %v8280 = vpack.c.b16 %v6476, %v6474
        %v8281 = vpack.c.b16 %v6479, %v6477
        %v8282 = vpack.c.b16 %v6480, %v6478
        %v8283 = vpack.c.b16 %v6483, %v6481
        %v8284 = vpack.c.b16 %v6484, %v6482
        %v8285 = vpack.c.b16 %v6487, %v6485
        %v8286 = vpack.c.b16 %v6488, %v6486
        %v8287 = vpack.c.b16 %v6491, %v6489
        %v8288 = vpack.c.b16 %v6492, %v6490
        %v8289 = vpack.c.b16 %v6495, %v6493
        %v8290 = vpack.c.b16 %v6496, %v6494
        %v8291 = vpack.c.b16 %v6499, %v6497
        %v8292 = vpack.c.b16 %v6500, %v6498
        %v8293 = vpack.c.b16 %v6503, %v6501
        %v8294 = vpack.c.b16 %v6504, %v6502
        %v8295 = vpack.c.b16 %v6507, %v6505
        %v8296 = vpack.c.b16 %v6508, %v6506
        %v8297 = vpack.c.b16 %v6511, %v6509
        %v8298 = vpack.c.b16 %v6512, %v6510
        %v8299 = vpack.c.b16 %v6515, %v6513
        %v8300 = vpack.c.b16 %v6516, %v6514
        %v8301 = vpack.c.b16 %v6519, %v6517
        %v8302 = vpack.c.b16 %v6520, %v6518
        %v8303 = vpack.c.b16 %v6523, %v6521
        %v8304 = vpack.c.b16 %v6524, %v6522
        %v8305 = vpack.c.b16 %v6527, %v6525
        %v8306 = vpack.c.b16 %v6528, %v6526
        %v8307 = vpack.c.b16 %v6531, %v6529
        %v8308 = vpack.c.b16 %v6532, %v6530
        %v8309 = vpack.c.b16 %v6535, %v6533
        %v8310 = vpack.c.b16 %v6536, %v6534
        %v8311 = vpack.c.b16 %v6539, %v6537
        %v8312 = vpack.c.b16 %v6540, %v6538
        %v8313 = vpack.c.b16 %v6543, %v6541
        %v8314 = vpack.c.b16 %v6544, %v6542
        %v8315 = vpack.c.b16 %v6547, %v6545
        %v8316 = vpack.c.b16 %v6548, %v6546
        %v8317 = vpack.c.b16 %v6551, %v6549
        %v8318 = vpack.c.b16 %v6552, %v6550
        %v8319 = vpack.c.b16 %v6555, %v6553
        %v8320 = vpack.c.b16 %v6556, %v6554
        %v8321 = vpack.c.b16 %v6559, %v6557
        %v8322 = vpack.c.b16 %v6560, %v6558
        %v8323 = vpack.c.b16 %v6563, %v6561
        %v8324 = vpack.c.b16 %v6564, %v6562
        %v8325 = vpack.c.b16 %v6567, %v6565
        %v8326 = vpack.c.b16 %v6568, %v6566
        %v8327 = vpack.c.b16 %v6571, %v6569
        %v8328 = vpack.c.b16 %v6572, %v6570
        %v8329 = vpack.c.b16 %v6575, %v6573
        %v8330 = vpack.c.b16 %v6576, %v6574
        %v8331 = vpack.c.b16 %v6579, %v6577
        %v8332 = vpack.c.b16 %v6580, %v6578
        %v8333 = vpack.c.b16 %v6583, %v6581
        %v8334 = vpack.c.b16 %v6584, %v6582
        %v8335 = vpack.c.b16 %v6587, %v6585
        %v8336 = vpack.c.b16 %v6588, %v6586
        %v8337 = vpack.c.b16 %v6591, %v6589
        %v8338 = vpack.c.b16 %v6592, %v6590
        %v8339 = vpack.c.b16 %v6595, %v6593
        %v8340 = vpack.c.b16 %v6596, %v6594
        %v8341 = vpack.c.b16 %v6599, %v6597
        %v8342 = vpack.c.b16 %v6600, %v6598
        %v8343 = vpack.c.b16 %v6603, %v6601
        %v8344 = vpack.c.b16 %v6604, %v6602
        %v8345 = vpack.c.b16 %v6607, %v6605
        %v8346 = vpack.c.b16 %v6608, %v6606
        %v8347 = vpack.c.b16 %v6611, %v6609
        %v8348 = vpack.c.b16 %v6612, %v6610
        %v8349 = vpack.c.b16 %v6615, %v6613
        %v8350 = vpack.c.b16 %v6616, %v6614
        %v8351 = vpack.c.b16 %v6619, %v6617
        %v8352 = vpack.c.b16 %v6620, %v6618
        %v8353 = vpack.c.b16 %v6623, %v6621
        %v8354 = vpack.c.b16 %v6624, %v6622
        %v8355 = vpack.c.b16 %v6627, %v6625
        %v8356 = vpack.c.b16 %v6628, %v6626
        %v8357 = vpack.c.b16 %v6631, %v6629
        %v8358 = vpack.c.b16 %v6632, %v6630
        %v8359 = vpack.c.b16 %v6635, %v6633
        %v8360 = vpack.c.b16 %v6636, %v6634
        %v8361 = vpack.c.b16 %v6639, %v6637
        %v8362 = vpack.c.b16 %v6640, %v6638
        %v8363 = vpack.c.b16 %v6643, %v6641
        %v8364 = vpack.c.b16 %v6644, %v6642
        %v8365 = vpack.c.b16 %v6647, %v6645
        %v8366 = vpack.c.b16 %v6648, %v6646
        %v8367 = vpack.c.b16 %v6651, %v6649
        %v8368 = vpack.c.b16 %v6652, %v6650
        %v8369 = vpack.c.b16 %v6655, %v6653
        %v8370 = vpack.c.b16 %v6656, %v6654
        %v8371 = vpack.c.b16 %v6659, %v6657
        %v8372 = vpack.c.b16 %v6660, %v6658
        %v8373 = vpack.c.b16 %v6663, %v6661
        %v8374 = vpack.c.b16 %v6664, %v6662
        %v8375 = vpack.c.b16 %v6667, %v6665
        %v8376 = vpack.c.b16 %v6668, %v6666
        %v8377 = vpack.c.b16 %v6671, %v6669
        %v8378 = vpack.c.b16 %v6672, %v6670
        %v8379 = vpack.c.b16 %v6675, %v6673
        %v8380 = vpack.c.b16 %v6676, %v6674
        %v8381 = vpack.c.b16 %v6679, %v6677
        %v8382 = vpack.c.b16 %v6680, %v6678
        %v8383 = vpack.c.b16 %v6683, %v6681
        %v8384 = vpack.c.b16 %v6684, %v6682
        %v8385 = vpack.c.b16 %v6687, %v6685
        %v8386 = vpack.c.b16 %v6688, %v6686
        %v8387 = vpack.c.b16 %v6691, %v6689
        %v8388 = vpack.c.b16 %v6692, %v6690
        %v8389 = vpack.c.b16 %v6695, %v6693
        %v8390 = vpack.c.b16 %v6696, %v6694
        %v8391 = vpack.c.b16 %v6699, %v6697
        %v8392 = vpack.c.b16 %v6700, %v6698
        %v8393 = vpack.c.b16 %v6703, %v6701
        %v8394 = vpack.c.b16 %v6704, %v6702
        %v8395 = vpack.c.b16 %v6707, %v6705
        %v8396 = vpack.c.b16 %v6708, %v6706
        %v8397 = vpack.c.b16 %v6711, %v6709
        %v8398 = vpack.c.b16 %v6712, %v6710
        %v8399 = vpack.c.b16 %v6715, %v6713
        %v8400 = vpack.c.b16 %v6716, %v6714
        %v8401 = vpack.c.b16 %v6719, %v6717
        %v8402 = vpack.c.b16 %v6720, %v6718
        %v8403 = vpack.c.b16 %v6723, %v6721
        %v8404 = vpack.c.b16 %v6724, %v6722
        %v8405 = vpack.c.b16 %v6727, %v6725
        %v8406 = vpack.c.b16 %v6728, %v6726
        %v8407 = vpack.c.b16 %v6731, %v6729
        %v8408 = vpack.c.b16 %v6732, %v6730
        %v8409 = vpack.c.b16 %v6735, %v6733
        %v8410 = vpack.c.b16 %v6736, %v6734
        %v8411 = vpack.c.b16 %v6739, %v6737
        %v8412 = vpack.c.b16 %v6740, %v6738
        %v8413 = vpack.c.b16 %v6743, %v6741
        %v8414 = vpack.c.b16 %v6744, %v6742
        %v8415 = vpack.c.b16 %v6747, %v6745
        %v8416 = vpack.c.b16 %v6748, %v6746
        %v8417 = vpack.c.b16 %v6751, %v6749
        %v8418 = vpack.c.b16 %v6752, %v6750
        %v8419 = vpack.c.b16 %v6755, %v6753
        %v8420 = vpack.c.b16 %v6756, %v6754
        %v8421 = vpack.c.b16 %v6759, %v6757
        %v8422 = vpack.c.b16 %v6760, %v6758
        %v8423 = vpack.c.b16 %v6763, %v6761
        %v8424 = vpack.c.b16 %v6764, %v6762
        %v8425 = vpack.c.b16 %v6767, %v6765
        %v8426 = vpack.c.b16 %v6768, %v6766
        %v8427 = vpack.c.b16 %v6771, %v6769
        %v8428 = vpack.c.b16 %v6772, %v6770
        %v8429 = vpack.c.b16 %v6775, %v6773
        %v8430 = vpack.c.b16 %v6776, %v6774
        %v8431 = vpack.c.b16 %v6779, %v6777
        %v8432 = vpack.c.b16 %v6780, %v6778
        %v8433 = vpack.c.b16 %v6783, %v6781
        %v8434 = vpack.c.b16 %v6784, %v6782
        %v8435 = vpack.c.b16 %v6787, %v6785
        %v8436 = vpack.c.b16 %v6788, %v6786
        %v8437 = vpack.c.b16 %v6791, %v6789
        %v8438 = vpack.c.b16 %v6792, %v6790
        %v8439 = vpack.c.b16 %v6795, %v6793
        %v8440 = vpack.c.b16 %v6796, %v6794
        %v8441 = vpack.c.b16 %v6799, %v6797
        %v8442 = vpack.c.b16 %v6800, %v6798
        %v8443 = vpack.c.b16 %v6803, %v6801
        %v8444 = vpack.c.b16 %v6804, %v6802
        %v8445 = vpack.c.b16 %v6807, %v6805
        %v8446 = vpack.c.b16 %v6808, %v6806
        %v8447 = vpack.c.b16 %v6811, %v6809
        %v8448 = vpack.c.b16 %v6812, %v6810
        %v8449 = vpack.c.b16 %v6815, %v6813
        %v8450 = vpack.c.b16 %v6816, %v6814
        %v8451 = vpack.c.b16 %v6819, %v6817
        %v8452 = vpack.c.b16 %v6820, %v6818
        %v8453 = vpack.c.b16 %v6823, %v6821
        %v8454 = vpack.c.b16 %v6824, %v6822
        %v8455 = vpack.c.b16 %v6827, %v6825
        %v8456 = vpack.c.b16 %v6828, %v6826
        %v8457 = vpack.c.b16 %v6831, %v6829
        %v8458 = vpack.c.b16 %v6832, %v6830
        %v8459 = vpack.c.b16 %v6835, %v6833
        %v8460 = vpack.c.b16 %v6836, %v6834
        %v8461 = vpack.c.b16 %v6839, %v6837
        %v8462 = vpack.c.b16 %v6840, %v6838
        %v8463 = vpack.c.b16 %v6843, %v6841
        %v8464 = vpack.c.b16 %v6844, %v6842
        %v8465 = vpack.c.b16 %v6847, %v6845
        %v8466 = vpack.c.b16 %v6848, %v6846
        %v8467 = vpack.c.b16 %v6851, %v6849
        %v8468 = vpack.c.b16 %v6852, %v6850
        %v8469 = vpack.c.b16 %v6855, %v6853
        %v8470 = vpack.c.b16 %v6856, %v6854
        %v8471 = vpack.c.b16 %v6859, %v6857
        %v8472 = vpack.c.b16 %v6860, %v6858
        %v8473 = vpack.c.b16 %v6863, %v6861
        %v8474 = vpack.c.b16 %v6864, %v6862
        %v8475 = vpack.c.b16 %v6867, %v6865
        %v8476 = vpack.c.b16 %v6868, %v6866
        %v8477 = vpack.c.b16 %v6871, %v6869
        %v8478 = vpack.c.b16 %v6872, %v6870
        %v8479 = vpack.c.b16 %v6875, %v6873
        %v8480 = vpack.c.b16 %v6876, %v6874
        %v8481 = vpack.c.b16 %v6879, %v6877
        %v8482 = vpack.c.b16 %v6880, %v6878
        %v8483 = vpack.c.b16 %v6883, %v6881
        %v8484 = vpack.c.b16 %v6884, %v6882
        %v8485 = vpack.c.b16 %v6887, %v6885
        %v8486 = vpack.c.b16 %v6888, %v6886
        %v8487 = vpack.c.b16 %v6891, %v6889
        %v8488 = vpack.c.b16 %v6892, %v6890
        %v8489 = vpack.c.b16 %v6895, %v6893
        %v8490 = vpack.c.b16 %v6896, %v6894
        %v8491 = vpack.c.b16 %v6899, %v6897
        %v8492 = vpack.c.b16 %v6900, %v6898
        %v8493 = vpack.c.b16 %v6903, %v6901
        %v8494 = vpack.c.b16 %v6904, %v6902
        %v8495 = vpack.c.b16 %v6907, %v6905
        %v8496 = vpack.c.b16 %v6908, %v6906
        %v8497 = vpack.c.b16 %v6911, %v6909
        %v8498 = vpack.c.b16 %v6912, %v6910
        %v8499 = vpack.c.b16 %v6915, %v6913
        %v8500 = vpack.c.b16 %v6916, %v6914
        %v8501 = vpack.c.b16 %v6919, %v6917
        %v8502 = vpack.c.b16 %v6920, %v6918
        %v8503 = vpack.c.b16 %v6923, %v6921
        %v8504 = vpack.c.b16 %v6924, %v6922
        %v8505 = vpack.c.b16 %v6927, %v6925
        %v8506 = vpack.c.b16 %v6928, %v6926
        %v8507 = vpack.c.b16 %v6931, %v6929
        %v8508 = vpack.c.b16 %v6932, %v6930
        %v8509 = vpack.c.b16 %v6935, %v6933
        %v8510 = vpack.c.b16 %v6936, %v6934
        %v8511 = vpack.c.b16 %v6939, %v6937
        %v8512 = vpack.c.b16 %v6940, %v6938
        %v8513 = vpack.c.b16 %v6943, %v6941
        %v8514 = vpack.c.b16 %v6944, %v6942
        %v8515 = vpack.c.b16 %v6947, %v6945
        %v8516 = vpack.c.b16 %v6948, %v6946
        %10085 = vmatprep.subr.bf16.mxu0 %v6964
        %10086 = vmatpush1.bf16.msra.mxu0 %v6963
        %10087 = vmatprep.subr.bf16.mxu0 %v6962
        %10088 = vmatpush1.bf16.msra.mxu0 %v6961
        %10089 = vmatprep.subr.bf16.mxu0 %v6960
        %10090 = vmatpush1.bf16.msra.mxu0 %v6959
        %10091 = vmatprep.subr.bf16.mxu0 %v6958
        %10092 = vmatpush1.bf16.msra.mxu0 %v6957
        %10093 = vmatprep.subr.bf16.mxu0 %v6956
        %10094 = vmatpush1.bf16.msra.mxu0 %v6955
        %10095 = vmatprep.subr.bf16.mxu0 %v6954
        %10096 = vmatpush1.bf16.msra.mxu0 %v6953
        %10097 = vmatprep.subr.bf16.mxu0 %v6952
        %10098 = vmatpush1.bf16.msra.mxu0 %v6951
        %10099 = vmatprep.subr.bf16.mxu0 %v6950
        %10100 = vmatpush1.bf16.msra.mxu0 %v6949
        %10101 = vmatprep.subr.bf16.mxu0 %v6980
        %10102 = vmatpush2.bf16.msra.mxu0 %v6979
        %10103 = vmatprep.subr.bf16.mxu0 %v6978
        %10104 = vmatpush2.bf16.msra.mxu0 %v6977
        %10105 = vmatprep.subr.bf16.mxu0 %v6976
        %10106 = vmatpush2.bf16.msra.mxu0 %v6975
        %10107 = vmatprep.subr.bf16.mxu0 %v6974
        %10108 = vmatpush2.bf16.msra.mxu0 %v6973
        %10109 = vmatprep.subr.bf16.mxu0 %v6972
        %10110 = vmatpush2.bf16.msra.mxu0 %v6971
        %10111 = vmatprep.subr.bf16.mxu0 %v6970
        %10112 = vmatpush2.bf16.msra.mxu0 %v6969
        %10113 = vmatprep.subr.bf16.mxu0 %v6968
        %10114 = vmatpush2.bf16.msra.mxu0 %v6967
        %10115 = vmatprep.subr.bf16.mxu0 %v6966
        %10116 = vmatpush2.bf16.msra.mxu0 %v6965
        %10117 = vmatprep.mubr.bf16.mxu0 %v2050
        %10118 = vmatmul.mubr.bf16.gmra.mxu0 %v2049
        %v10119 = vpop.f32.mrf.mxu0
        %v10120 = vadd.f32 0.0, %v10119
        %v10121 = vpop.f32.mrf.mxu0
        %v10122 = vadd.f32 0.0, %v10121
        %v10123 = vpop.f32.mrf.mxu0
        %v10124 = vpop.f32.mrf.mxu0
        %10125 = vdwg.mxu0
        %10126 = vmatprep.subr.bf16.mxu0 %v6996
        %10127 = vmatpush1.bf16.msra.mxu0 %v6995
        %10128 = vmatprep.subr.bf16.mxu0 %v6994
        %10129 = vmatpush1.bf16.msra.mxu0 %v6993
        %10130 = vmatprep.subr.bf16.mxu0 %v6992
        %10131 = vmatpush1.bf16.msra.mxu0 %v6991
        %10132 = vmatprep.subr.bf16.mxu0 %v6990
        %10133 = vmatpush1.bf16.msra.mxu0 %v6989
        %10134 = vmatprep.subr.bf16.mxu0 %v6988
        %10135 = vmatpush1.bf16.msra.mxu0 %v6987
        %10136 = vmatprep.subr.bf16.mxu0 %v6986
        %10137 = vmatpush1.bf16.msra.mxu0 %v6985
        %10138 = vmatprep.subr.bf16.mxu0 %v6984
        %10139 = vmatpush1.bf16.msra.mxu0 %v6983
        %10140 = vmatprep.subr.bf16.mxu0 %v6982
        %10141 = vmatpush1.bf16.msra.mxu0 %v6981
        %10142 = vmatprep.subr.bf16.mxu0 %v7012
        %10143 = vmatpush2.bf16.msra.mxu0 %v7011
        %10144 = vmatprep.subr.bf16.mxu0 %v7010
        %10145 = vmatpush2.bf16.msra.mxu0 %v7009
        %10146 = vmatprep.subr.bf16.mxu0 %v7008
        %10147 = vmatpush2.bf16.msra.mxu0 %v7007
        %10148 = vmatprep.subr.bf16.mxu0 %v7006
        %10149 = vmatpush2.bf16.msra.mxu0 %v7005
        %10150 = vmatprep.subr.bf16.mxu0 %v7004
        %10151 = vmatpush2.bf16.msra.mxu0 %v7003
        %10152 = vmatprep.subr.bf16.mxu0 %v7002
        %10153 = vmatpush2.bf16.msra.mxu0 %v7001
        %10154 = vmatprep.subr.bf16.mxu0 %v7000
        %10155 = vmatpush2.bf16.msra.mxu0 %v6999
        %10156 = vmatprep.subr.bf16.mxu0 %v6998
        %10157 = vmatpush2.bf16.msra.mxu0 %v6997
        %10158 = vmatprep.mubr.bf16.mxu0 %v2052
        %10159 = vmatmul.mubr.bf16.gmra.mxu0 %v2051
        %v10160 = vpop.f32.mrf.mxu0
        %v10161 = vadd.f32 %v10120, %v10160
        %v10162 = vpop.f32.mrf.mxu0
        %v10163 = vadd.f32 %v10122, %v10162
        %v10164 = vpop.f32.mrf.mxu0
        %v10165 = vpop.f32.mrf.mxu0
        %10166 = vdwg.mxu0
        %10167 = vmatprep.subr.bf16.mxu0 %v7028
        %10168 = vmatpush1.bf16.msra.mxu0 %v7027
        %10169 = vmatprep.subr.bf16.mxu0 %v7026
        %10170 = vmatpush1.bf16.msra.mxu0 %v7025
        %10171 = vmatprep.subr.bf16.mxu0 %v7024
        %10172 = vmatpush1.bf16.msra.mxu0 %v7023
        %10173 = vmatprep.subr.bf16.mxu0 %v7022
        %10174 = vmatpush1.bf16.msra.mxu0 %v7021
        %10175 = vmatprep.subr.bf16.mxu0 %v7020
        %10176 = vmatpush1.bf16.msra.mxu0 %v7019
        %10177 = vmatprep.subr.bf16.mxu0 %v7018
        %10178 = vmatpush1.bf16.msra.mxu0 %v7017
        %10179 = vmatprep.subr.bf16.mxu0 %v7016
        %10180 = vmatpush1.bf16.msra.mxu0 %v7015
        %10181 = vmatprep.subr.bf16.mxu0 %v7014
        %10182 = vmatpush1.bf16.msra.mxu0 %v7013
        %10183 = vmatprep.subr.bf16.mxu0 %v7044
        %10184 = vmatpush2.bf16.msra.mxu0 %v7043
        %10185 = vmatprep.subr.bf16.mxu0 %v7042
        %10186 = vmatpush2.bf16.msra.mxu0 %v7041
        %10187 = vmatprep.subr.bf16.mxu0 %v7040
        %10188 = vmatpush2.bf16.msra.mxu0 %v7039
        %10189 = vmatprep.subr.bf16.mxu0 %v7038
        %10190 = vmatpush2.bf16.msra.mxu0 %v7037
        %10191 = vmatprep.subr.bf16.mxu0 %v7036
        %10192 = vmatpush2.bf16.msra.mxu0 %v7035
        %10193 = vmatprep.subr.bf16.mxu0 %v7034
        %10194 = vmatpush2.bf16.msra.mxu0 %v7033
        %10195 = vmatprep.subr.bf16.mxu0 %v7032
        %10196 = vmatpush2.bf16.msra.mxu0 %v7031
        %10197 = vmatprep.subr.bf16.mxu0 %v7030
        %10198 = vmatpush2.bf16.msra.mxu0 %v7029
        %10199 = vmatprep.mubr.bf16.mxu0 %v2054
        %10200 = vmatmul.mubr.bf16.gmra.mxu0 %v2053
        %v10201 = vpop.f32.mrf.mxu0
        %v10202 = vadd.f32 %v10161, %v10201
        %v10203 = vpop.f32.mrf.mxu0
        %v10204 = vadd.f32 %v10163, %v10203
        %v10205 = vpop.f32.mrf.mxu0
        %v10206 = vpop.f32.mrf.mxu0
        %10207 = vdwg.mxu0
        %10208 = vmatprep.subr.bf16.mxu0 %v7060
        %10209 = vmatpush1.bf16.msra.mxu0 %v7059
        %10210 = vmatprep.subr.bf16.mxu0 %v7058
        %10211 = vmatpush1.bf16.msra.mxu0 %v7057
        %10212 = vmatprep.subr.bf16.mxu0 %v7056
        %10213 = vmatpush1.bf16.msra.mxu0 %v7055
        %10214 = vmatprep.subr.bf16.mxu0 %v7054
        %10215 = vmatpush1.bf16.msra.mxu0 %v7053
        %10216 = vmatprep.subr.bf16.mxu0 %v7052
        %10217 = vmatpush1.bf16.msra.mxu0 %v7051
        %10218 = vmatprep.subr.bf16.mxu0 %v7050
        %10219 = vmatpush1.bf16.msra.mxu0 %v7049
        %10220 = vmatprep.subr.bf16.mxu0 %v7048
        %10221 = vmatpush1.bf16.msra.mxu0 %v7047
        %10222 = vmatprep.subr.bf16.mxu0 %v7046
        %10223 = vmatpush1.bf16.msra.mxu0 %v7045
        %10224 = vmatprep.subr.bf16.mxu0 %v7076
        %10225 = vmatpush2.bf16.msra.mxu0 %v7075
        %10226 = vmatprep.subr.bf16.mxu0 %v7074
        %10227 = vmatpush2.bf16.msra.mxu0 %v7073
        %10228 = vmatprep.subr.bf16.mxu0 %v7072
        %10229 = vmatpush2.bf16.msra.mxu0 %v7071
        %10230 = vmatprep.subr.bf16.mxu0 %v7070
        %10231 = vmatpush2.bf16.msra.mxu0 %v7069
        %10232 = vmatprep.subr.bf16.mxu0 %v7068
        %10233 = vmatpush2.bf16.msra.mxu0 %v7067
        %10234 = vmatprep.subr.bf16.mxu0 %v7066
        %10235 = vmatpush2.bf16.msra.mxu0 %v7065
        %10236 = vmatprep.subr.bf16.mxu0 %v7064
        %10237 = vmatpush2.bf16.msra.mxu0 %v7063
        %10238 = vmatprep.subr.bf16.mxu0 %v7062
        %10239 = vmatpush2.bf16.msra.mxu0 %v7061
        %10240 = vmatprep.mubr.bf16.mxu0 %v2056
        %10241 = vmatmul.mubr.bf16.gmra.mxu0 %v2055
        %v10242 = vpop.f32.mrf.mxu0
        %v10243 = vadd.f32 %v10202, %v10242
        %v10244 = vpop.f32.mrf.mxu0
        %v10245 = vadd.f32 %v10204, %v10244
        %v10246 = vpop.f32.mrf.mxu0
        %v10247 = vpop.f32.mrf.mxu0
        %10248 = vdwg.mxu0
        %10249 = vmatprep.subr.bf16.mxu0 %v7092
        %10250 = vmatpush1.bf16.msra.mxu0 %v7091
        %10251 = vmatprep.subr.bf16.mxu0 %v7090
        %10252 = vmatpush1.bf16.msra.mxu0 %v7089
        %10253 = vmatprep.subr.bf16.mxu0 %v7088
        %10254 = vmatpush1.bf16.msra.mxu0 %v7087
        %10255 = vmatprep.subr.bf16.mxu0 %v7086
        %10256 = vmatpush1.bf16.msra.mxu0 %v7085
        %10257 = vmatprep.subr.bf16.mxu0 %v7084
        %10258 = vmatpush1.bf16.msra.mxu0 %v7083
        %10259 = vmatprep.subr.bf16.mxu0 %v7082
        %10260 = vmatpush1.bf16.msra.mxu0 %v7081
        %10261 = vmatprep.subr.bf16.mxu0 %v7080
        %10262 = vmatpush1.bf16.msra.mxu0 %v7079
        %10263 = vmatprep.subr.bf16.mxu0 %v7078
        %10264 = vmatpush1.bf16.msra.mxu0 %v7077
        %10265 = vmatprep.subr.bf16.mxu0 %v7108
        %10266 = vmatpush2.bf16.msra.mxu0 %v7107
        %10267 = vmatprep.subr.bf16.mxu0 %v7106
        %10268 = vmatpush2.bf16.msra.mxu0 %v7105
        %10269 = vmatprep.subr.bf16.mxu0 %v7104
        %10270 = vmatpush2.bf16.msra.mxu0 %v7103
        %10271 = vmatprep.subr.bf16.mxu0 %v7102
        %10272 = vmatpush2.bf16.msra.mxu0 %v7101
        %10273 = vmatprep.subr.bf16.mxu0 %v7100
        %10274 = vmatpush2.bf16.msra.mxu0 %v7099
        %10275 = vmatprep.subr.bf16.mxu0 %v7098
        %10276 = vmatpush2.bf16.msra.mxu0 %v7097
        %10277 = vmatprep.subr.bf16.mxu0 %v7096
        %10278 = vmatpush2.bf16.msra.mxu0 %v7095
        %10279 = vmatprep.subr.bf16.mxu0 %v7094
        %10280 = vmatpush2.bf16.msra.mxu0 %v7093
        %10281 = vmatprep.mubr.bf16.mxu0 %v2058
        %10282 = vmatmul.mubr.bf16.gmra.mxu0 %v2057
        %v10283 = vpop.f32.mrf.mxu0
        %v10284 = vadd.f32 %v10243, %v10283
        %v10285 = vpop.f32.mrf.mxu0
        %v10286 = vadd.f32 %v10245, %v10285
        %v10287 = vpop.f32.mrf.mxu0
        %v10288 = vpop.f32.mrf.mxu0
        %10289 = vdwg.mxu0
        %10290 = vmatprep.subr.bf16.mxu0 %v7124
        %10291 = vmatpush1.bf16.msra.mxu0 %v7123
        %10292 = vmatprep.subr.bf16.mxu0 %v7122
        %10293 = vmatpush1.bf16.msra.mxu0 %v7121
        %10294 = vmatprep.subr.bf16.mxu0 %v7120
        %10295 = vmatpush1.bf16.msra.mxu0 %v7119
        %10296 = vmatprep.subr.bf16.mxu0 %v7118
        %10297 = vmatpush1.bf16.msra.mxu0 %v7117
        %10298 = vmatprep.subr.bf16.mxu0 %v7116
        %10299 = vmatpush1.bf16.msra.mxu0 %v7115
        %10300 = vmatprep.subr.bf16.mxu0 %v7114
        %10301 = vmatpush1.bf16.msra.mxu0 %v7113
        %10302 = vmatprep.subr.bf16.mxu0 %v7112
        %10303 = vmatpush1.bf16.msra.mxu0 %v7111
        %10304 = vmatprep.subr.bf16.mxu0 %v7110
        %10305 = vmatpush1.bf16.msra.mxu0 %v7109
        %10306 = vmatprep.subr.bf16.mxu0 %v7140
        %10307 = vmatpush2.bf16.msra.mxu0 %v7139
        %10308 = vmatprep.subr.bf16.mxu0 %v7138
        %10309 = vmatpush2.bf16.msra.mxu0 %v7137
        %10310 = vmatprep.subr.bf16.mxu0 %v7136
        %10311 = vmatpush2.bf16.msra.mxu0 %v7135
        %10312 = vmatprep.subr.bf16.mxu0 %v7134
        %10313 = vmatpush2.bf16.msra.mxu0 %v7133
        %10314 = vmatprep.subr.bf16.mxu0 %v7132
        %10315 = vmatpush2.bf16.msra.mxu0 %v7131
        %10316 = vmatprep.subr.bf16.mxu0 %v7130
        %10317 = vmatpush2.bf16.msra.mxu0 %v7129
        %10318 = vmatprep.subr.bf16.mxu0 %v7128
        %10319 = vmatpush2.bf16.msra.mxu0 %v7127
        %10320 = vmatprep.subr.bf16.mxu0 %v7126
        %10321 = vmatpush2.bf16.msra.mxu0 %v7125
        %10322 = vmatprep.mubr.bf16.mxu0 %v2060
        %10323 = vmatmul.mubr.bf16.gmra.mxu0 %v2059
        %v10324 = vpop.f32.mrf.mxu0
        %v10325 = vadd.f32 %v10284, %v10324
        %v10326 = vpop.f32.mrf.mxu0
        %v10327 = vadd.f32 %v10286, %v10326
        %v10328 = vpop.f32.mrf.mxu0
        %v10329 = vpop.f32.mrf.mxu0
        %10330 = vdwg.mxu0
        %10331 = vmatprep.subr.bf16.mxu0 %v7156
        %10332 = vmatpush1.bf16.msra.mxu0 %v7155
        %10333 = vmatprep.subr.bf16.mxu0 %v7154
        %10334 = vmatpush1.bf16.msra.mxu0 %v7153
        %10335 = vmatprep.subr.bf16.mxu0 %v7152
        %10336 = vmatpush1.bf16.msra.mxu0 %v7151
        %10337 = vmatprep.subr.bf16.mxu0 %v7150
        %10338 = vmatpush1.bf16.msra.mxu0 %v7149
        %10339 = vmatprep.subr.bf16.mxu0 %v7148
        %10340 = vmatpush1.bf16.msra.mxu0 %v7147
        %10341 = vmatprep.subr.bf16.mxu0 %v7146
        %10342 = vmatpush1.bf16.msra.mxu0 %v7145
        %10343 = vmatprep.subr.bf16.mxu0 %v7144
        %10344 = vmatpush1.bf16.msra.mxu0 %v7143
        %10345 = vmatprep.subr.bf16.mxu0 %v7142
        %10346 = vmatpush1.bf16.msra.mxu0 %v7141
        %10347 = vmatprep.subr.bf16.mxu0 %v7172
        %10348 = vmatpush2.bf16.msra.mxu0 %v7171
        %10349 = vmatprep.subr.bf16.mxu0 %v7170
        %10350 = vmatpush2.bf16.msra.mxu0 %v7169
        %10351 = vmatprep.subr.bf16.mxu0 %v7168
        %10352 = vmatpush2.bf16.msra.mxu0 %v7167
        %10353 = vmatprep.subr.bf16.mxu0 %v7166
        %10354 = vmatpush2.bf16.msra.mxu0 %v7165
        %10355 = vmatprep.subr.bf16.mxu0 %v7164
        %10356 = vmatpush2.bf16.msra.mxu0 %v7163
        %10357 = vmatprep.subr.bf16.mxu0 %v7162
        %10358 = vmatpush2.bf16.msra.mxu0 %v7161
        %10359 = vmatprep.subr.bf16.mxu0 %v7160
        %10360 = vmatpush2.bf16.msra.mxu0 %v7159
        %10361 = vmatprep.subr.bf16.mxu0 %v7158
        %10362 = vmatpush2.bf16.msra.mxu0 %v7157
        %10363 = vmatprep.mubr.bf16.mxu0 %v2062
        %10364 = vmatmul.mubr.bf16.gmra.mxu0 %v2061
        %v10365 = vpop.f32.mrf.mxu0
        %v10366 = vadd.f32 %v10325, %v10365
        %v10367 = vpop.f32.mrf.mxu0
        %v10368 = vadd.f32 %v10327, %v10367
        %v10369 = vpop.f32.mrf.mxu0
        %v10370 = vpop.f32.mrf.mxu0
        %10371 = vdwg.mxu0
        %10372 = vmatprep.subr.bf16.mxu0 %v7188
        %10373 = vmatpush1.bf16.msra.mxu0 %v7187
        %10374 = vmatprep.subr.bf16.mxu0 %v7186
        %10375 = vmatpush1.bf16.msra.mxu0 %v7185
        %10376 = vmatprep.subr.bf16.mxu0 %v7184
        %10377 = vmatpush1.bf16.msra.mxu0 %v7183
        %10378 = vmatprep.subr.bf16.mxu0 %v7182
        %10379 = vmatpush1.bf16.msra.mxu0 %v7181
        %10380 = vmatprep.subr.bf16.mxu0 %v7180
        %10381 = vmatpush1.bf16.msra.mxu0 %v7179
        %10382 = vmatprep.subr.bf16.mxu0 %v7178
        %10383 = vmatpush1.bf16.msra.mxu0 %v7177
        %10384 = vmatprep.subr.bf16.mxu0 %v7176
        %10385 = vmatpush1.bf16.msra.mxu0 %v7175
        %10386 = vmatprep.subr.bf16.mxu0 %v7174
        %10387 = vmatpush1.bf16.msra.mxu0 %v7173
        %10388 = vmatprep.subr.bf16.mxu0 %v7204
        %10389 = vmatpush2.bf16.msra.mxu0 %v7203
        %10390 = vmatprep.subr.bf16.mxu0 %v7202
        %10391 = vmatpush2.bf16.msra.mxu0 %v7201
        %10392 = vmatprep.subr.bf16.mxu0 %v7200
        %10393 = vmatpush2.bf16.msra.mxu0 %v7199
        %10394 = vmatprep.subr.bf16.mxu0 %v7198
        %10395 = vmatpush2.bf16.msra.mxu0 %v7197
        %10396 = vmatprep.subr.bf16.mxu0 %v7196
        %10397 = vmatpush2.bf16.msra.mxu0 %v7195
        %10398 = vmatprep.subr.bf16.mxu0 %v7194
        %10399 = vmatpush2.bf16.msra.mxu0 %v7193
        %10400 = vmatprep.subr.bf16.mxu0 %v7192
        %10401 = vmatpush2.bf16.msra.mxu0 %v7191
        %10402 = vmatprep.subr.bf16.mxu0 %v7190
        %10403 = vmatpush2.bf16.msra.mxu0 %v7189
        %10404 = vmatprep.mubr.bf16.mxu0 %v2064
        %10405 = vmatmul.mubr.bf16.gmra.mxu0 %v2063
        %v10406 = vpop.f32.mrf.mxu0
        %v10407 = vadd.f32 %v10366, %v10406
        %v10408 = vpop.f32.mrf.mxu0
        %v10409 = vadd.f32 %v10368, %v10408
        %v10410 = vpop.f32.mrf.mxu0
        %v10411 = vpop.f32.mrf.mxu0
        %10412 = vdwg.mxu0
        %10413 = vmatprep.subr.bf16.mxu0 %v7220
        %10414 = vmatpush1.bf16.msra.mxu0 %v7219
        %10415 = vmatprep.subr.bf16.mxu0 %v7218
        %10416 = vmatpush1.bf16.msra.mxu0 %v7217
        %10417 = vmatprep.subr.bf16.mxu0 %v7216
        %10418 = vmatpush1.bf16.msra.mxu0 %v7215
        %10419 = vmatprep.subr.bf16.mxu0 %v7214
        %10420 = vmatpush1.bf16.msra.mxu0 %v7213
        %10421 = vmatprep.subr.bf16.mxu0 %v7212
        %10422 = vmatpush1.bf16.msra.mxu0 %v7211
        %10423 = vmatprep.subr.bf16.mxu0 %v7210
        %10424 = vmatpush1.bf16.msra.mxu0 %v7209
        %10425 = vmatprep.subr.bf16.mxu0 %v7208
        %10426 = vmatpush1.bf16.msra.mxu0 %v7207
        %10427 = vmatprep.subr.bf16.mxu0 %v7206
        %10428 = vmatpush1.bf16.msra.mxu0 %v7205
        %10429 = vmatprep.subr.bf16.mxu0 %v7236
        %10430 = vmatpush2.bf16.msra.mxu0 %v7235
        %10431 = vmatprep.subr.bf16.mxu0 %v7234
        %10432 = vmatpush2.bf16.msra.mxu0 %v7233
        %10433 = vmatprep.subr.bf16.mxu0 %v7232
        %10434 = vmatpush2.bf16.msra.mxu0 %v7231
        %10435 = vmatprep.subr.bf16.mxu0 %v7230
        %10436 = vmatpush2.bf16.msra.mxu0 %v7229
        %10437 = vmatprep.subr.bf16.mxu0 %v7228
        %10438 = vmatpush2.bf16.msra.mxu0 %v7227
        %10439 = vmatprep.subr.bf16.mxu0 %v7226
        %10440 = vmatpush2.bf16.msra.mxu0 %v7225
        %10441 = vmatprep.subr.bf16.mxu0 %v7224
        %10442 = vmatpush2.bf16.msra.mxu0 %v7223
        %10443 = vmatprep.subr.bf16.mxu0 %v7222
        %10444 = vmatpush2.bf16.msra.mxu0 %v7221
        %10445 = vmatprep.mubr.bf16.mxu0 %v2066
        %10446 = vmatmul.mubr.bf16.gmra.mxu0 %v2065
        %v10447 = vpop.f32.mrf.mxu0
        %v10448 = vadd.f32 %v10407, %v10447
        %v10449 = vpop.f32.mrf.mxu0
        %v10450 = vadd.f32 %v10409, %v10449
        %v10451 = vpop.f32.mrf.mxu0
        %v10452 = vpop.f32.mrf.mxu0
        %10453 = vdwg.mxu0
        %10454 = vmatprep.subr.bf16.mxu0 %v7252
        %10455 = vmatpush1.bf16.msra.mxu0 %v7251
        %10456 = vmatprep.subr.bf16.mxu0 %v7250
        %10457 = vmatpush1.bf16.msra.mxu0 %v7249
        %10458 = vmatprep.subr.bf16.mxu0 %v7248
        %10459 = vmatpush1.bf16.msra.mxu0 %v7247
        %10460 = vmatprep.subr.bf16.mxu0 %v7246
        %10461 = vmatpush1.bf16.msra.mxu0 %v7245
        %10462 = vmatprep.subr.bf16.mxu0 %v7244
        %10463 = vmatpush1.bf16.msra.mxu0 %v7243
        %10464 = vmatprep.subr.bf16.mxu0 %v7242
        %10465 = vmatpush1.bf16.msra.mxu0 %v7241
        %10466 = vmatprep.subr.bf16.mxu0 %v7240
        %10467 = vmatpush1.bf16.msra.mxu0 %v7239
        %10468 = vmatprep.subr.bf16.mxu0 %v7238
        %10469 = vmatpush1.bf16.msra.mxu0 %v7237
        %10470 = vmatprep.subr.bf16.mxu0 %v7268
        %10471 = vmatpush2.bf16.msra.mxu0 %v7267
        %10472 = vmatprep.subr.bf16.mxu0 %v7266
        %10473 = vmatpush2.bf16.msra.mxu0 %v7265
        %10474 = vmatprep.subr.bf16.mxu0 %v7264
        %10475 = vmatpush2.bf16.msra.mxu0 %v7263
        %10476 = vmatprep.subr.bf16.mxu0 %v7262
        %10477 = vmatpush2.bf16.msra.mxu0 %v7261
        %10478 = vmatprep.subr.bf16.mxu0 %v7260
        %10479 = vmatpush2.bf16.msra.mxu0 %v7259
        %10480 = vmatprep.subr.bf16.mxu0 %v7258
        %10481 = vmatpush2.bf16.msra.mxu0 %v7257
        %10482 = vmatprep.subr.bf16.mxu0 %v7256
        %10483 = vmatpush2.bf16.msra.mxu0 %v7255
        %10484 = vmatprep.subr.bf16.mxu0 %v7254
        %10485 = vmatpush2.bf16.msra.mxu0 %v7253
        %10486 = vmatprep.mubr.bf16.mxu0 %v2068
        %10487 = vmatmul.mubr.bf16.gmra.mxu0 %v2067
        %v10488 = vpop.f32.mrf.mxu0
        %v10489 = vadd.f32 %v10448, %v10488
        %v10490 = vpop.f32.mrf.mxu0
        %v10491 = vadd.f32 %v10450, %v10490
        %v10492 = vpop.f32.mrf.mxu0
        %v10493 = vpop.f32.mrf.mxu0
        %10494 = vdwg.mxu0
        %10495 = vmatprep.subr.bf16.mxu0 %v7284
        %10496 = vmatpush1.bf16.msra.mxu0 %v7283
        %10497 = vmatprep.subr.bf16.mxu0 %v7282
        %10498 = vmatpush1.bf16.msra.mxu0 %v7281
        %10499 = vmatprep.subr.bf16.mxu0 %v7280
        %10500 = vmatpush1.bf16.msra.mxu0 %v7279
        %10501 = vmatprep.subr.bf16.mxu0 %v7278
        %10502 = vmatpush1.bf16.msra.mxu0 %v7277
        %10503 = vmatprep.subr.bf16.mxu0 %v7276
        %10504 = vmatpush1.bf16.msra.mxu0 %v7275
        %10505 = vmatprep.subr.bf16.mxu0 %v7274
        %10506 = vmatpush1.bf16.msra.mxu0 %v7273
        %10507 = vmatprep.subr.bf16.mxu0 %v7272
        %10508 = vmatpush1.bf16.msra.mxu0 %v7271
        %10509 = vmatprep.subr.bf16.mxu0 %v7270
        %10510 = vmatpush1.bf16.msra.mxu0 %v7269
        %10511 = vmatprep.subr.bf16.mxu0 %v7300
        %10512 = vmatpush2.bf16.msra.mxu0 %v7299
        %10513 = vmatprep.subr.bf16.mxu0 %v7298
        %10514 = vmatpush2.bf16.msra.mxu0 %v7297
        %10515 = vmatprep.subr.bf16.mxu0 %v7296
        %10516 = vmatpush2.bf16.msra.mxu0 %v7295
        %10517 = vmatprep.subr.bf16.mxu0 %v7294
        %10518 = vmatpush2.bf16.msra.mxu0 %v7293
        %10519 = vmatprep.subr.bf16.mxu0 %v7292
        %10520 = vmatpush2.bf16.msra.mxu0 %v7291
        %10521 = vmatprep.subr.bf16.mxu0 %v7290
        %10522 = vmatpush2.bf16.msra.mxu0 %v7289
        %10523 = vmatprep.subr.bf16.mxu0 %v7288
        %10524 = vmatpush2.bf16.msra.mxu0 %v7287
        %10525 = vmatprep.subr.bf16.mxu0 %v7286
        %10526 = vmatpush2.bf16.msra.mxu0 %v7285
        %10527 = vmatprep.mubr.bf16.mxu0 %v2070
        %10528 = vmatmul.mubr.bf16.gmra.mxu0 %v2069
        %v10529 = vpop.f32.mrf.mxu0
        %v10530 = vadd.f32 %v10489, %v10529
        %v10531 = vpop.f32.mrf.mxu0
        %v10532 = vadd.f32 %v10491, %v10531
        %v10533 = vpop.f32.mrf.mxu0
        %v10534 = vpop.f32.mrf.mxu0
        %10535 = vdwg.mxu0
        %10536 = vmatprep.subr.bf16.mxu0 %v7316
        %10537 = vmatpush1.bf16.msra.mxu0 %v7315
        %10538 = vmatprep.subr.bf16.mxu0 %v7314
        %10539 = vmatpush1.bf16.msra.mxu0 %v7313
        %10540 = vmatprep.subr.bf16.mxu0 %v7312
        %10541 = vmatpush1.bf16.msra.mxu0 %v7311
        %10542 = vmatprep.subr.bf16.mxu0 %v7310
        %10543 = vmatpush1.bf16.msra.mxu0 %v7309
        %10544 = vmatprep.subr.bf16.mxu0 %v7308
        %10545 = vmatpush1.bf16.msra.mxu0 %v7307
        %10546 = vmatprep.subr.bf16.mxu0 %v7306
        %10547 = vmatpush1.bf16.msra.mxu0 %v7305
        %10548 = vmatprep.subr.bf16.mxu0 %v7304
        %10549 = vmatpush1.bf16.msra.mxu0 %v7303
        %10550 = vmatprep.subr.bf16.mxu0 %v7302
        %10551 = vmatpush1.bf16.msra.mxu0 %v7301
        %10552 = vmatprep.subr.bf16.mxu0 %v7332
        %10553 = vmatpush2.bf16.msra.mxu0 %v7331
        %10554 = vmatprep.subr.bf16.mxu0 %v7330
        %10555 = vmatpush2.bf16.msra.mxu0 %v7329
        %10556 = vmatprep.subr.bf16.mxu0 %v7328
        %10557 = vmatpush2.bf16.msra.mxu0 %v7327
        %10558 = vmatprep.subr.bf16.mxu0 %v7326
        %10559 = vmatpush2.bf16.msra.mxu0 %v7325
        %10560 = vmatprep.subr.bf16.mxu0 %v7324
        %10561 = vmatpush2.bf16.msra.mxu0 %v7323
        %10562 = vmatprep.subr.bf16.mxu0 %v7322
        %10563 = vmatpush2.bf16.msra.mxu0 %v7321
        %10564 = vmatprep.subr.bf16.mxu0 %v7320
        %10565 = vmatpush2.bf16.msra.mxu0 %v7319
        %10566 = vmatprep.subr.bf16.mxu0 %v7318
        %10567 = vmatpush2.bf16.msra.mxu0 %v7317
        %10568 = vmatprep.mubr.bf16.mxu0 %v2072
        %10569 = vmatmul.mubr.bf16.gmra.mxu0 %v2071
        %v10570 = vpop.f32.mrf.mxu0
        %v10571 = vadd.f32 %v10530, %v10570
        %v10572 = vpop.f32.mrf.mxu0
        %v10573 = vadd.f32 %v10532, %v10572
        %v10574 = vpop.f32.mrf.mxu0
        %v10575 = vpop.f32.mrf.mxu0
        %10576 = vdwg.mxu0
        %10577 = vmatprep.subr.bf16.mxu0 %v7348
        %10578 = vmatpush1.bf16.msra.mxu0 %v7347
        %10579 = vmatprep.subr.bf16.mxu0 %v7346
        %10580 = vmatpush1.bf16.msra.mxu0 %v7345
        %10581 = vmatprep.subr.bf16.mxu0 %v7344
        %10582 = vmatpush1.bf16.msra.mxu0 %v7343
        %10583 = vmatprep.subr.bf16.mxu0 %v7342
        %10584 = vmatpush1.bf16.msra.mxu0 %v7341
        %10585 = vmatprep.subr.bf16.mxu0 %v7340
        %10586 = vmatpush1.bf16.msra.mxu0 %v7339
        %10587 = vmatprep.subr.bf16.mxu0 %v7338
        %10588 = vmatpush1.bf16.msra.mxu0 %v7337
        %10589 = vmatprep.subr.bf16.mxu0 %v7336
        %10590 = vmatpush1.bf16.msra.mxu0 %v7335
        %10591 = vmatprep.subr.bf16.mxu0 %v7334
        %10592 = vmatpush1.bf16.msra.mxu0 %v7333
        %10593 = vmatprep.subr.bf16.mxu0 %v7364
        %10594 = vmatpush2.bf16.msra.mxu0 %v7363
        %10595 = vmatprep.subr.bf16.mxu0 %v7362
        %10596 = vmatpush2.bf16.msra.mxu0 %v7361
        %10597 = vmatprep.subr.bf16.mxu0 %v7360
        %10598 = vmatpush2.bf16.msra.mxu0 %v7359
        %10599 = vmatprep.subr.bf16.mxu0 %v7358
        %10600 = vmatpush2.bf16.msra.mxu0 %v7357
        %10601 = vmatprep.subr.bf16.mxu0 %v7356
        %10602 = vmatpush2.bf16.msra.mxu0 %v7355
        %10603 = vmatprep.subr.bf16.mxu0 %v7354
        %10604 = vmatpush2.bf16.msra.mxu0 %v7353
        %10605 = vmatprep.subr.bf16.mxu0 %v7352
        %10606 = vmatpush2.bf16.msra.mxu0 %v7351
        %10607 = vmatprep.subr.bf16.mxu0 %v7350
        %10608 = vmatpush2.bf16.msra.mxu0 %v7349
        %10609 = vmatprep.mubr.bf16.mxu0 %v2074
        %10610 = vmatmul.mubr.bf16.gmra.mxu0 %v2073
        %v10611 = vpop.f32.mrf.mxu0
        %v10612 = vadd.f32 %v10571, %v10611
        %v10613 = vpop.f32.mrf.mxu0
        %v10614 = vadd.f32 %v10573, %v10613
        %v10615 = vpop.f32.mrf.mxu0
        %v10616 = vpop.f32.mrf.mxu0
        %10617 = vdwg.mxu0
        %10618 = vmatprep.subr.bf16.mxu0 %v7380
        %10619 = vmatpush1.bf16.msra.mxu0 %v7379
        %10620 = vmatprep.subr.bf16.mxu0 %v7378
        %10621 = vmatpush1.bf16.msra.mxu0 %v7377
        %10622 = vmatprep.subr.bf16.mxu0 %v7376
        %10623 = vmatpush1.bf16.msra.mxu0 %v7375
        %10624 = vmatprep.subr.bf16.mxu0 %v7374
        %10625 = vmatpush1.bf16.msra.mxu0 %v7373
        %10626 = vmatprep.subr.bf16.mxu0 %v7372
        %10627 = vmatpush1.bf16.msra.mxu0 %v7371
        %10628 = vmatprep.subr.bf16.mxu0 %v7370
        %10629 = vmatpush1.bf16.msra.mxu0 %v7369
        %10630 = vmatprep.subr.bf16.mxu0 %v7368
        %10631 = vmatpush1.bf16.msra.mxu0 %v7367
        %10632 = vmatprep.subr.bf16.mxu0 %v7366
        %10633 = vmatpush1.bf16.msra.mxu0 %v7365
        %10634 = vmatprep.subr.bf16.mxu0 %v7396
        %10635 = vmatpush2.bf16.msra.mxu0 %v7395
        %10636 = vmatprep.subr.bf16.mxu0 %v7394
        %10637 = vmatpush2.bf16.msra.mxu0 %v7393
        %10638 = vmatprep.subr.bf16.mxu0 %v7392
        %10639 = vmatpush2.bf16.msra.mxu0 %v7391
        %10640 = vmatprep.subr.bf16.mxu0 %v7390
        %10641 = vmatpush2.bf16.msra.mxu0 %v7389
        %10642 = vmatprep.subr.bf16.mxu0 %v7388
        %10643 = vmatpush2.bf16.msra.mxu0 %v7387
        %10644 = vmatprep.subr.bf16.mxu0 %v7386
        %10645 = vmatpush2.bf16.msra.mxu0 %v7385
        %10646 = vmatprep.subr.bf16.mxu0 %v7384
        %10647 = vmatpush2.bf16.msra.mxu0 %v7383
        %10648 = vmatprep.subr.bf16.mxu0 %v7382
        %10649 = vmatpush2.bf16.msra.mxu0 %v7381
        %10650 = vmatprep.mubr.bf16.mxu0 %v2076
        %10651 = vmatmul.mubr.bf16.gmra.mxu0 %v2075
        %v10652 = vpop.f32.mrf.mxu0
        %v10653 = vadd.f32 %v10612, %v10652
        %v10654 = vpop.f32.mrf.mxu0
        %v10655 = vadd.f32 %v10614, %v10654
        %v10656 = vpop.f32.mrf.mxu0
        %v10657 = vpop.f32.mrf.mxu0
        %10658 = vdwg.mxu0
        %10659 = vmatprep.subr.bf16.mxu0 %v7412
        %10660 = vmatpush1.bf16.msra.mxu0 %v7411
        %10661 = vmatprep.subr.bf16.mxu0 %v7410
        %10662 = vmatpush1.bf16.msra.mxu0 %v7409
        %10663 = vmatprep.subr.bf16.mxu0 %v7408
        %10664 = vmatpush1.bf16.msra.mxu0 %v7407
        %10665 = vmatprep.subr.bf16.mxu0 %v7406
        %10666 = vmatpush1.bf16.msra.mxu0 %v7405
        %10667 = vmatprep.subr.bf16.mxu0 %v7404
        %10668 = vmatpush1.bf16.msra.mxu0 %v7403
        %10669 = vmatprep.subr.bf16.mxu0 %v7402
        %10670 = vmatpush1.bf16.msra.mxu0 %v7401
        %10671 = vmatprep.subr.bf16.mxu0 %v7400
        %10672 = vmatpush1.bf16.msra.mxu0 %v7399
        %10673 = vmatprep.subr.bf16.mxu0 %v7398
        %10674 = vmatpush1.bf16.msra.mxu0 %v7397
        %10675 = vmatprep.subr.bf16.mxu0 %v7428
        %10676 = vmatpush2.bf16.msra.mxu0 %v7427
        %10677 = vmatprep.subr.bf16.mxu0 %v7426
        %10678 = vmatpush2.bf16.msra.mxu0 %v7425
        %10679 = vmatprep.subr.bf16.mxu0 %v7424
        %10680 = vmatpush2.bf16.msra.mxu0 %v7423
        %10681 = vmatprep.subr.bf16.mxu0 %v7422
        %10682 = vmatpush2.bf16.msra.mxu0 %v7421
        %10683 = vmatprep.subr.bf16.mxu0 %v7420
        %10684 = vmatpush2.bf16.msra.mxu0 %v7419
        %10685 = vmatprep.subr.bf16.mxu0 %v7418
        %10686 = vmatpush2.bf16.msra.mxu0 %v7417
        %10687 = vmatprep.subr.bf16.mxu0 %v7416
        %10688 = vmatpush2.bf16.msra.mxu0 %v7415
        %10689 = vmatprep.subr.bf16.mxu0 %v7414
        %10690 = vmatpush2.bf16.msra.mxu0 %v7413
        %10691 = vmatprep.mubr.bf16.mxu0 %v2078
        %10692 = vmatmul.mubr.bf16.gmra.mxu0 %v2077
        %v10693 = vpop.f32.mrf.mxu0
        %v10694 = vadd.f32 %v10653, %v10693
        %v10695 = vpop.f32.mrf.mxu0
        %v10696 = vadd.f32 %v10655, %v10695
        %v10697 = vpop.f32.mrf.mxu0
        %v10698 = vpop.f32.mrf.mxu0
        %10699 = vdwg.mxu0
        %10700 = vmatprep.subr.bf16.mxu0 %v7444
        %10701 = vmatpush1.bf16.msra.mxu0 %v7443
        %10702 = vmatprep.subr.bf16.mxu0 %v7442
        %10703 = vmatpush1.bf16.msra.mxu0 %v7441
        %10704 = vmatprep.subr.bf16.mxu0 %v7440
        %10705 = vmatpush1.bf16.msra.mxu0 %v7439
        %10706 = vmatprep.subr.bf16.mxu0 %v7438
        %10707 = vmatpush1.bf16.msra.mxu0 %v7437
        %10708 = vmatprep.subr.bf16.mxu0 %v7436
        %10709 = vmatpush1.bf16.msra.mxu0 %v7435
        %10710 = vmatprep.subr.bf16.mxu0 %v7434
        %10711 = vmatpush1.bf16.msra.mxu0 %v7433
        %10712 = vmatprep.subr.bf16.mxu0 %v7432
        %10713 = vmatpush1.bf16.msra.mxu0 %v7431
        %10714 = vmatprep.subr.bf16.mxu0 %v7430
        %10715 = vmatpush1.bf16.msra.mxu0 %v7429
        %10716 = vmatprep.subr.bf16.mxu0 %v7460
        %10717 = vmatpush2.bf16.msra.mxu0 %v7459
        %10718 = vmatprep.subr.bf16.mxu0 %v7458
        %10719 = vmatpush2.bf16.msra.mxu0 %v7457
        %10720 = vmatprep.subr.bf16.mxu0 %v7456
        %10721 = vmatpush2.bf16.msra.mxu0 %v7455
        %10722 = vmatprep.subr.bf16.mxu0 %v7454
        %10723 = vmatpush2.bf16.msra.mxu0 %v7453
        %10724 = vmatprep.subr.bf16.mxu0 %v7452
        %10725 = vmatpush2.bf16.msra.mxu0 %v7451
        %10726 = vmatprep.subr.bf16.mxu0 %v7450
        %10727 = vmatpush2.bf16.msra.mxu0 %v7449
        %10728 = vmatprep.subr.bf16.mxu0 %v7448
        %10729 = vmatpush2.bf16.msra.mxu0 %v7447
        %10730 = vmatprep.subr.bf16.mxu0 %v7446
        %10731 = vmatpush2.bf16.msra.mxu0 %v7445
        %10732 = vmatprep.mubr.bf16.mxu0 %v2080
        %10733 = vmatmul.mubr.bf16.gmra.mxu0 %v2079
        %v10734 = vpop.f32.mrf.mxu0
        %v10735 = vadd.f32 %v10694, %v10734
        %v10736 = vpop.f32.mrf.mxu0
        %v10737 = vadd.f32 %v10696, %v10736
        %v10738 = vpop.f32.mrf.mxu0
        %v10739 = vpop.f32.mrf.mxu0
        %10740 = vdwg.mxu0
        %10741 = vmatprep.subr.bf16.mxu0 %v7476
        %10742 = vmatpush1.bf16.msra.mxu0 %v7475
        %10743 = vmatprep.subr.bf16.mxu0 %v7474
        %10744 = vmatpush1.bf16.msra.mxu0 %v7473
        %10745 = vmatprep.subr.bf16.mxu0 %v7472
        %10746 = vmatpush1.bf16.msra.mxu0 %v7471
        %10747 = vmatprep.subr.bf16.mxu0 %v7470
        %10748 = vmatpush1.bf16.msra.mxu0 %v7469
        %10749 = vmatprep.subr.bf16.mxu0 %v7468
        %10750 = vmatpush1.bf16.msra.mxu0 %v7467
        %10751 = vmatprep.subr.bf16.mxu0 %v7466
        %10752 = vmatpush1.bf16.msra.mxu0 %v7465
        %10753 = vmatprep.subr.bf16.mxu0 %v7464
        %10754 = vmatpush1.bf16.msra.mxu0 %v7463
        %10755 = vmatprep.subr.bf16.mxu0 %v7462
        %10756 = vmatpush1.bf16.msra.mxu0 %v7461
        %10757 = vmatprep.subr.bf16.mxu0 %v7492
        %10758 = vmatpush2.bf16.msra.mxu0 %v7491
        %10759 = vmatprep.subr.bf16.mxu0 %v7490
        %10760 = vmatpush2.bf16.msra.mxu0 %v7489
        %10761 = vmatprep.subr.bf16.mxu0 %v7488
        %10762 = vmatpush2.bf16.msra.mxu0 %v7487
        %10763 = vmatprep.subr.bf16.mxu0 %v7486
        %10764 = vmatpush2.bf16.msra.mxu0 %v7485
        %10765 = vmatprep.subr.bf16.mxu0 %v7484
        %10766 = vmatpush2.bf16.msra.mxu0 %v7483
        %10767 = vmatprep.subr.bf16.mxu0 %v7482
        %10768 = vmatpush2.bf16.msra.mxu0 %v7481
        %10769 = vmatprep.subr.bf16.mxu0 %v7480
        %10770 = vmatpush2.bf16.msra.mxu0 %v7479
        %10771 = vmatprep.subr.bf16.mxu0 %v7478
        %10772 = vmatpush2.bf16.msra.mxu0 %v7477
        %10773 = vmatprep.mubr.bf16.mxu0 %v2082
        %10774 = vmatmul.mubr.bf16.gmra.mxu0 %v2081
        %v10775 = vpop.f32.mrf.mxu0
        %v10776 = vadd.f32 %v10735, %v10775
        %v10777 = vpop.f32.mrf.mxu0
        %v10778 = vadd.f32 %v10737, %v10777
        %v10779 = vpop.f32.mrf.mxu0
        %v10780 = vpop.f32.mrf.mxu0
        %10781 = vdwg.mxu0
        %10782 = vmatprep.subr.bf16.mxu0 %v7508
        %10783 = vmatpush1.bf16.msra.mxu0 %v7507
        %10784 = vmatprep.subr.bf16.mxu0 %v7506
        %10785 = vmatpush1.bf16.msra.mxu0 %v7505
        %10786 = vmatprep.subr.bf16.mxu0 %v7504
        %10787 = vmatpush1.bf16.msra.mxu0 %v7503
        %10788 = vmatprep.subr.bf16.mxu0 %v7502
        %10789 = vmatpush1.bf16.msra.mxu0 %v7501
        %10790 = vmatprep.subr.bf16.mxu0 %v7500
        %10791 = vmatpush1.bf16.msra.mxu0 %v7499
        %10792 = vmatprep.subr.bf16.mxu0 %v7498
        %10793 = vmatpush1.bf16.msra.mxu0 %v7497
        %10794 = vmatprep.subr.bf16.mxu0 %v7496
        %10795 = vmatpush1.bf16.msra.mxu0 %v7495
        %10796 = vmatprep.subr.bf16.mxu0 %v7494
        %10797 = vmatpush1.bf16.msra.mxu0 %v7493
        %10798 = vmatprep.subr.bf16.mxu0 %v7524
        %10799 = vmatpush2.bf16.msra.mxu0 %v7523
        %10800 = vmatprep.subr.bf16.mxu0 %v7522
        %10801 = vmatpush2.bf16.msra.mxu0 %v7521
        %10802 = vmatprep.subr.bf16.mxu0 %v7520
        %10803 = vmatpush2.bf16.msra.mxu0 %v7519
        %10804 = vmatprep.subr.bf16.mxu0 %v7518
        %10805 = vmatpush2.bf16.msra.mxu0 %v7517
        %10806 = vmatprep.subr.bf16.mxu0 %v7516
        %10807 = vmatpush2.bf16.msra.mxu0 %v7515
        %10808 = vmatprep.subr.bf16.mxu0 %v7514
        %10809 = vmatpush2.bf16.msra.mxu0 %v7513
        %10810 = vmatprep.subr.bf16.mxu0 %v7512
        %10811 = vmatpush2.bf16.msra.mxu0 %v7511
        %10812 = vmatprep.subr.bf16.mxu0 %v7510
        %10813 = vmatpush2.bf16.msra.mxu0 %v7509
        %10814 = vmatprep.mubr.bf16.mxu0 %v2084
        %10815 = vmatmul.mubr.bf16.gmra.mxu0 %v2083
        %v10816 = vpop.f32.mrf.mxu0
        %v10817 = vadd.f32 %v10776, %v10816
        %v10818 = vpop.f32.mrf.mxu0
        %v10819 = vadd.f32 %v10778, %v10818
        %v10820 = vpop.f32.mrf.mxu0
        %v10821 = vpop.f32.mrf.mxu0
        %10822 = vdwg.mxu0
        %10823 = vmatprep.subr.bf16.mxu0 %v7540
        %10824 = vmatpush1.bf16.msra.mxu0 %v7539
        %10825 = vmatprep.subr.bf16.mxu0 %v7538
        %10826 = vmatpush1.bf16.msra.mxu0 %v7537
        %10827 = vmatprep.subr.bf16.mxu0 %v7536
        %10828 = vmatpush1.bf16.msra.mxu0 %v7535
        %10829 = vmatprep.subr.bf16.mxu0 %v7534
        %10830 = vmatpush1.bf16.msra.mxu0 %v7533
        %10831 = vmatprep.subr.bf16.mxu0 %v7532
        %10832 = vmatpush1.bf16.msra.mxu0 %v7531
        %10833 = vmatprep.subr.bf16.mxu0 %v7530
        %10834 = vmatpush1.bf16.msra.mxu0 %v7529
        %10835 = vmatprep.subr.bf16.mxu0 %v7528
        %10836 = vmatpush1.bf16.msra.mxu0 %v7527
        %10837 = vmatprep.subr.bf16.mxu0 %v7526
        %10838 = vmatpush1.bf16.msra.mxu0 %v7525
        %10839 = vmatprep.subr.bf16.mxu0 %v7556
        %10840 = vmatpush2.bf16.msra.mxu0 %v7555
        %10841 = vmatprep.subr.bf16.mxu0 %v7554
        %10842 = vmatpush2.bf16.msra.mxu0 %v7553
        %10843 = vmatprep.subr.bf16.mxu0 %v7552
        %10844 = vmatpush2.bf16.msra.mxu0 %v7551
        %10845 = vmatprep.subr.bf16.mxu0 %v7550
        %10846 = vmatpush2.bf16.msra.mxu0 %v7549
        %10847 = vmatprep.subr.bf16.mxu0 %v7548
        %10848 = vmatpush2.bf16.msra.mxu0 %v7547
        %10849 = vmatprep.subr.bf16.mxu0 %v7546
        %10850 = vmatpush2.bf16.msra.mxu0 %v7545
        %10851 = vmatprep.subr.bf16.mxu0 %v7544
        %10852 = vmatpush2.bf16.msra.mxu0 %v7543
        %10853 = vmatprep.subr.bf16.mxu0 %v7542
        %10854 = vmatpush2.bf16.msra.mxu0 %v7541
        %10855 = vmatprep.mubr.bf16.mxu0 %v2086
        %10856 = vmatmul.mubr.bf16.gmra.mxu0 %v2085
        %v10857 = vpop.f32.mrf.mxu0
        %v10858 = vadd.f32 %v10817, %v10857
        %v10859 = vpop.f32.mrf.mxu0
        %v10860 = vadd.f32 %v10819, %v10859
        %v10861 = vpop.f32.mrf.mxu0
        %v10862 = vpop.f32.mrf.mxu0
        %10863 = vdwg.mxu0
        %10864 = vmatprep.subr.bf16.mxu0 %v7572
        %10865 = vmatpush1.bf16.msra.mxu0 %v7571
        %10866 = vmatprep.subr.bf16.mxu0 %v7570
        %10867 = vmatpush1.bf16.msra.mxu0 %v7569
        %10868 = vmatprep.subr.bf16.mxu0 %v7568
        %10869 = vmatpush1.bf16.msra.mxu0 %v7567
        %10870 = vmatprep.subr.bf16.mxu0 %v7566
        %10871 = vmatpush1.bf16.msra.mxu0 %v7565
        %10872 = vmatprep.subr.bf16.mxu0 %v7564
        %10873 = vmatpush1.bf16.msra.mxu0 %v7563
        %10874 = vmatprep.subr.bf16.mxu0 %v7562
        %10875 = vmatpush1.bf16.msra.mxu0 %v7561
        %10876 = vmatprep.subr.bf16.mxu0 %v7560
        %10877 = vmatpush1.bf16.msra.mxu0 %v7559
        %10878 = vmatprep.subr.bf16.mxu0 %v7558
        %10879 = vmatpush1.bf16.msra.mxu0 %v7557
        %10880 = vmatprep.subr.bf16.mxu0 %v7588
        %10881 = vmatpush2.bf16.msra.mxu0 %v7587
        %10882 = vmatprep.subr.bf16.mxu0 %v7586
        %10883 = vmatpush2.bf16.msra.mxu0 %v7585
        %10884 = vmatprep.subr.bf16.mxu0 %v7584
        %10885 = vmatpush2.bf16.msra.mxu0 %v7583
        %10886 = vmatprep.subr.bf16.mxu0 %v7582
        %10887 = vmatpush2.bf16.msra.mxu0 %v7581
        %10888 = vmatprep.subr.bf16.mxu0 %v7580
        %10889 = vmatpush2.bf16.msra.mxu0 %v7579
        %10890 = vmatprep.subr.bf16.mxu0 %v7578
        %10891 = vmatpush2.bf16.msra.mxu0 %v7577
        %10892 = vmatprep.subr.bf16.mxu0 %v7576
        %10893 = vmatpush2.bf16.msra.mxu0 %v7575
        %10894 = vmatprep.subr.bf16.mxu0 %v7574
        %10895 = vmatpush2.bf16.msra.mxu0 %v7573
        %10896 = vmatprep.mubr.bf16.mxu0 %v2088
        %10897 = vmatmul.mubr.bf16.gmra.mxu0 %v2087
        %v10898 = vpop.f32.mrf.mxu0
        %v10899 = vadd.f32 %v10858, %v10898
        %v10900 = vpop.f32.mrf.mxu0
        %v10901 = vadd.f32 %v10860, %v10900
        %v10902 = vpop.f32.mrf.mxu0
        %v10903 = vpop.f32.mrf.mxu0
        %10904 = vdwg.mxu0
        %10905 = vmatprep.subr.bf16.mxu0 %v7604
        %10906 = vmatpush1.bf16.msra.mxu0 %v7603
        %10907 = vmatprep.subr.bf16.mxu0 %v7602
        %10908 = vmatpush1.bf16.msra.mxu0 %v7601
        %10909 = vmatprep.subr.bf16.mxu0 %v7600
        %10910 = vmatpush1.bf16.msra.mxu0 %v7599
        %10911 = vmatprep.subr.bf16.mxu0 %v7598
        %10912 = vmatpush1.bf16.msra.mxu0 %v7597
        %10913 = vmatprep.subr.bf16.mxu0 %v7596
        %10914 = vmatpush1.bf16.msra.mxu0 %v7595
        %10915 = vmatprep.subr.bf16.mxu0 %v7594
        %10916 = vmatpush1.bf16.msra.mxu0 %v7593
        %10917 = vmatprep.subr.bf16.mxu0 %v7592
        %10918 = vmatpush1.bf16.msra.mxu0 %v7591
        %10919 = vmatprep.subr.bf16.mxu0 %v7590
        %10920 = vmatpush1.bf16.msra.mxu0 %v7589
        %10921 = vmatprep.subr.bf16.mxu0 %v7620
        %10922 = vmatpush2.bf16.msra.mxu0 %v7619
        %10923 = vmatprep.subr.bf16.mxu0 %v7618
        %10924 = vmatpush2.bf16.msra.mxu0 %v7617
        %10925 = vmatprep.subr.bf16.mxu0 %v7616
        %10926 = vmatpush2.bf16.msra.mxu0 %v7615
        %10927 = vmatprep.subr.bf16.mxu0 %v7614
        %10928 = vmatpush2.bf16.msra.mxu0 %v7613
        %10929 = vmatprep.subr.bf16.mxu0 %v7612
        %10930 = vmatpush2.bf16.msra.mxu0 %v7611
        %10931 = vmatprep.subr.bf16.mxu0 %v7610
        %10932 = vmatpush2.bf16.msra.mxu0 %v7609
        %10933 = vmatprep.subr.bf16.mxu0 %v7608
        %10934 = vmatpush2.bf16.msra.mxu0 %v7607
        %10935 = vmatprep.subr.bf16.mxu0 %v7606
        %10936 = vmatpush2.bf16.msra.mxu0 %v7605
        %10937 = vmatprep.mubr.bf16.mxu0 %v2090
        %10938 = vmatmul.mubr.bf16.gmra.mxu0 %v2089
        %v10939 = vpop.f32.mrf.mxu0
        %v10940 = vadd.f32 %v10899, %v10939
        %v10941 = vpop.f32.mrf.mxu0
        %v10942 = vadd.f32 %v10901, %v10941
        %v10943 = vpop.f32.mrf.mxu0
        %v10944 = vpop.f32.mrf.mxu0
        %10945 = vdwg.mxu0
        %10946 = vmatprep.subr.bf16.mxu0 %v7636
        %10947 = vmatpush1.bf16.msra.mxu0 %v7635
        %10948 = vmatprep.subr.bf16.mxu0 %v7634
        %10949 = vmatpush1.bf16.msra.mxu0 %v7633
        %10950 = vmatprep.subr.bf16.mxu0 %v7632
        %10951 = vmatpush1.bf16.msra.mxu0 %v7631
        %10952 = vmatprep.subr.bf16.mxu0 %v7630
        %10953 = vmatpush1.bf16.msra.mxu0 %v7629
        %10954 = vmatprep.subr.bf16.mxu0 %v7628
        %10955 = vmatpush1.bf16.msra.mxu0 %v7627
        %10956 = vmatprep.subr.bf16.mxu0 %v7626
        %10957 = vmatpush1.bf16.msra.mxu0 %v7625
        %10958 = vmatprep.subr.bf16.mxu0 %v7624
        %10959 = vmatpush1.bf16.msra.mxu0 %v7623
        %10960 = vmatprep.subr.bf16.mxu0 %v7622
        %10961 = vmatpush1.bf16.msra.mxu0 %v7621
        %10962 = vmatprep.subr.bf16.mxu0 %v7652
        %10963 = vmatpush2.bf16.msra.mxu0 %v7651
        %10964 = vmatprep.subr.bf16.mxu0 %v7650
        %10965 = vmatpush2.bf16.msra.mxu0 %v7649
        %10966 = vmatprep.subr.bf16.mxu0 %v7648
        %10967 = vmatpush2.bf16.msra.mxu0 %v7647
        %10968 = vmatprep.subr.bf16.mxu0 %v7646
        %10969 = vmatpush2.bf16.msra.mxu0 %v7645
        %10970 = vmatprep.subr.bf16.mxu0 %v7644
        %10971 = vmatpush2.bf16.msra.mxu0 %v7643
        %10972 = vmatprep.subr.bf16.mxu0 %v7642
        %10973 = vmatpush2.bf16.msra.mxu0 %v7641
        %10974 = vmatprep.subr.bf16.mxu0 %v7640
        %10975 = vmatpush2.bf16.msra.mxu0 %v7639
        %10976 = vmatprep.subr.bf16.mxu0 %v7638
        %10977 = vmatpush2.bf16.msra.mxu0 %v7637
        %10978 = vmatprep.mubr.bf16.mxu0 %v2092
        %10979 = vmatmul.mubr.bf16.gmra.mxu0 %v2091
        %v10980 = vpop.f32.mrf.mxu0
        %v10981 = vadd.f32 %v10940, %v10980
        %v10982 = vpop.f32.mrf.mxu0
        %v10983 = vadd.f32 %v10942, %v10982
        %v10984 = vpop.f32.mrf.mxu0
        %v10985 = vpop.f32.mrf.mxu0
        %10986 = vdwg.mxu0
        %10987 = vmatprep.subr.bf16.mxu0 %v7668
        %10988 = vmatpush1.bf16.msra.mxu0 %v7667
        %10989 = vmatprep.subr.bf16.mxu0 %v7666
        %10990 = vmatpush1.bf16.msra.mxu0 %v7665
        %10991 = vmatprep.subr.bf16.mxu0 %v7664
        %10992 = vmatpush1.bf16.msra.mxu0 %v7663
        %10993 = vmatprep.subr.bf16.mxu0 %v7662
        %10994 = vmatpush1.bf16.msra.mxu0 %v7661
        %10995 = vmatprep.subr.bf16.mxu0 %v7660
        %10996 = vmatpush1.bf16.msra.mxu0 %v7659
        %10997 = vmatprep.subr.bf16.mxu0 %v7658
        %10998 = vmatpush1.bf16.msra.mxu0 %v7657
        %10999 = vmatprep.subr.bf16.mxu0 %v7656
        %11000 = vmatpush1.bf16.msra.mxu0 %v7655
        %11001 = vmatprep.subr.bf16.mxu0 %v7654
        %11002 = vmatpush1.bf16.msra.mxu0 %v7653
        %11003 = vmatprep.subr.bf16.mxu0 %v7684
        %11004 = vmatpush2.bf16.msra.mxu0 %v7683
        %11005 = vmatprep.subr.bf16.mxu0 %v7682
        %11006 = vmatpush2.bf16.msra.mxu0 %v7681
        %11007 = vmatprep.subr.bf16.mxu0 %v7680
        %11008 = vmatpush2.bf16.msra.mxu0 %v7679
        %11009 = vmatprep.subr.bf16.mxu0 %v7678
        %11010 = vmatpush2.bf16.msra.mxu0 %v7677
        %11011 = vmatprep.subr.bf16.mxu0 %v7676
        %11012 = vmatpush2.bf16.msra.mxu0 %v7675
        %11013 = vmatprep.subr.bf16.mxu0 %v7674
        %11014 = vmatpush2.bf16.msra.mxu0 %v7673
        %11015 = vmatprep.subr.bf16.mxu0 %v7672
        %11016 = vmatpush2.bf16.msra.mxu0 %v7671
        %11017 = vmatprep.subr.bf16.mxu0 %v7670
        %11018 = vmatpush2.bf16.msra.mxu0 %v7669
        %11019 = vmatprep.mubr.bf16.mxu0 %v2094
        %11020 = vmatmul.mubr.bf16.gmra.mxu0 %v2093
        %v11021 = vpop.f32.mrf.mxu0
        %v11022 = vadd.f32 %v10981, %v11021
        %v11023 = vpop.f32.mrf.mxu0
        %v11024 = vadd.f32 %v10983, %v11023
        %v11025 = vpop.f32.mrf.mxu0
        %v11026 = vpop.f32.mrf.mxu0
        %11027 = vdwg.mxu0
        %11028 = vmatprep.subr.bf16.mxu0 %v7700
        %11029 = vmatpush1.bf16.msra.mxu0 %v7699
        %11030 = vmatprep.subr.bf16.mxu0 %v7698
        %11031 = vmatpush1.bf16.msra.mxu0 %v7697
        %11032 = vmatprep.subr.bf16.mxu0 %v7696
        %11033 = vmatpush1.bf16.msra.mxu0 %v7695
        %11034 = vmatprep.subr.bf16.mxu0 %v7694
        %11035 = vmatpush1.bf16.msra.mxu0 %v7693
        %11036 = vmatprep.subr.bf16.mxu0 %v7692
        %11037 = vmatpush1.bf16.msra.mxu0 %v7691
        %11038 = vmatprep.subr.bf16.mxu0 %v7690
        %11039 = vmatpush1.bf16.msra.mxu0 %v7689
        %11040 = vmatprep.subr.bf16.mxu0 %v7688
        %11041 = vmatpush1.bf16.msra.mxu0 %v7687
        %11042 = vmatprep.subr.bf16.mxu0 %v7686
        %11043 = vmatpush1.bf16.msra.mxu0 %v7685
        %11044 = vmatprep.subr.bf16.mxu0 %v7716
        %11045 = vmatpush2.bf16.msra.mxu0 %v7715
        %11046 = vmatprep.subr.bf16.mxu0 %v7714
        %11047 = vmatpush2.bf16.msra.mxu0 %v7713
        %11048 = vmatprep.subr.bf16.mxu0 %v7712
        %11049 = vmatpush2.bf16.msra.mxu0 %v7711
        %11050 = vmatprep.subr.bf16.mxu0 %v7710
        %11051 = vmatpush2.bf16.msra.mxu0 %v7709
        %11052 = vmatprep.subr.bf16.mxu0 %v7708
        %11053 = vmatpush2.bf16.msra.mxu0 %v7707
        %11054 = vmatprep.subr.bf16.mxu0 %v7706
        %11055 = vmatpush2.bf16.msra.mxu0 %v7705
        %11056 = vmatprep.subr.bf16.mxu0 %v7704
        %11057 = vmatpush2.bf16.msra.mxu0 %v7703
        %11058 = vmatprep.subr.bf16.mxu0 %v7702
        %11059 = vmatpush2.bf16.msra.mxu0 %v7701
        %11060 = vmatprep.mubr.bf16.mxu0 %v2096
        %11061 = vmatmul.mubr.bf16.gmra.mxu0 %v2095
        %v11062 = vpop.f32.mrf.mxu0
        %v11063 = vadd.f32 %v11022, %v11062
        %v11064 = vpop.f32.mrf.mxu0
        %v11065 = vadd.f32 %v11024, %v11064
        %v11066 = vpop.f32.mrf.mxu0
        %v11067 = vpop.f32.mrf.mxu0
        %11068 = vdwg.mxu0
        %11069 = vmatprep.subr.bf16.mxu0 %v7732
        %11070 = vmatpush1.bf16.msra.mxu0 %v7731
        %11071 = vmatprep.subr.bf16.mxu0 %v7730
        %11072 = vmatpush1.bf16.msra.mxu0 %v7729
        %11073 = vmatprep.subr.bf16.mxu0 %v7728
        %11074 = vmatpush1.bf16.msra.mxu0 %v7727
        %11075 = vmatprep.subr.bf16.mxu0 %v7726
        %11076 = vmatpush1.bf16.msra.mxu0 %v7725
        %11077 = vmatprep.subr.bf16.mxu0 %v7724
        %11078 = vmatpush1.bf16.msra.mxu0 %v7723
        %11079 = vmatprep.subr.bf16.mxu0 %v7722
        %11080 = vmatpush1.bf16.msra.mxu0 %v7721
        %11081 = vmatprep.subr.bf16.mxu0 %v7720
        %11082 = vmatpush1.bf16.msra.mxu0 %v7719
        %11083 = vmatprep.subr.bf16.mxu0 %v7718
        %11084 = vmatpush1.bf16.msra.mxu0 %v7717
        %11085 = vmatprep.subr.bf16.mxu0 %v7748
        %11086 = vmatpush2.bf16.msra.mxu0 %v7747
        %11087 = vmatprep.subr.bf16.mxu0 %v7746
        %11088 = vmatpush2.bf16.msra.mxu0 %v7745
        %11089 = vmatprep.subr.bf16.mxu0 %v7744
        %11090 = vmatpush2.bf16.msra.mxu0 %v7743
        %11091 = vmatprep.subr.bf16.mxu0 %v7742
        %11092 = vmatpush2.bf16.msra.mxu0 %v7741
        %11093 = vmatprep.subr.bf16.mxu0 %v7740
        %11094 = vmatpush2.bf16.msra.mxu0 %v7739
        %11095 = vmatprep.subr.bf16.mxu0 %v7738
        %11096 = vmatpush2.bf16.msra.mxu0 %v7737
        %11097 = vmatprep.subr.bf16.mxu0 %v7736
        %11098 = vmatpush2.bf16.msra.mxu0 %v7735
        %11099 = vmatprep.subr.bf16.mxu0 %v7734
        %11100 = vmatpush2.bf16.msra.mxu0 %v7733
        %11101 = vmatprep.mubr.bf16.mxu0 %v2098
        %11102 = vmatmul.mubr.bf16.gmra.mxu0 %v2097
        %v11103 = vpop.f32.mrf.mxu0
        %v11104 = vadd.f32 %v11063, %v11103
        %v11105 = vpop.f32.mrf.mxu0
        %v11106 = vadd.f32 %v11065, %v11105
        %v11107 = vpop.f32.mrf.mxu0
        %v11108 = vpop.f32.mrf.mxu0
        %11109 = vdwg.mxu0
        %11110 = vmatprep.subr.bf16.mxu0 %v7764
        %11111 = vmatpush1.bf16.msra.mxu0 %v7763
        %11112 = vmatprep.subr.bf16.mxu0 %v7762
        %11113 = vmatpush1.bf16.msra.mxu0 %v7761
        %11114 = vmatprep.subr.bf16.mxu0 %v7760
        %11115 = vmatpush1.bf16.msra.mxu0 %v7759
        %11116 = vmatprep.subr.bf16.mxu0 %v7758
        %11117 = vmatpush1.bf16.msra.mxu0 %v7757
        %11118 = vmatprep.subr.bf16.mxu0 %v7756
        %11119 = vmatpush1.bf16.msra.mxu0 %v7755
        %11120 = vmatprep.subr.bf16.mxu0 %v7754
        %11121 = vmatpush1.bf16.msra.mxu0 %v7753
        %11122 = vmatprep.subr.bf16.mxu0 %v7752
        %11123 = vmatpush1.bf16.msra.mxu0 %v7751
        %11124 = vmatprep.subr.bf16.mxu0 %v7750
        %11125 = vmatpush1.bf16.msra.mxu0 %v7749
        %11126 = vmatprep.subr.bf16.mxu0 %v7780
        %11127 = vmatpush2.bf16.msra.mxu0 %v7779
        %11128 = vmatprep.subr.bf16.mxu0 %v7778
        %11129 = vmatpush2.bf16.msra.mxu0 %v7777
        %11130 = vmatprep.subr.bf16.mxu0 %v7776
        %11131 = vmatpush2.bf16.msra.mxu0 %v7775
        %11132 = vmatprep.subr.bf16.mxu0 %v7774
        %11133 = vmatpush2.bf16.msra.mxu0 %v7773
        %11134 = vmatprep.subr.bf16.mxu0 %v7772
        %11135 = vmatpush2.bf16.msra.mxu0 %v7771
        %11136 = vmatprep.subr.bf16.mxu0 %v7770
        %11137 = vmatpush2.bf16.msra.mxu0 %v7769
        %11138 = vmatprep.subr.bf16.mxu0 %v7768
        %11139 = vmatpush2.bf16.msra.mxu0 %v7767
        %11140 = vmatprep.subr.bf16.mxu0 %v7766
        %11141 = vmatpush2.bf16.msra.mxu0 %v7765
        %11142 = vmatprep.mubr.bf16.mxu0 %v2100
        %11143 = vmatmul.mubr.bf16.gmra.mxu0 %v2099
        %v11144 = vpop.f32.mrf.mxu0
        %v11145 = vadd.f32 %v11104, %v11144
        %v11146 = vpop.f32.mrf.mxu0
        %v11147 = vadd.f32 %v11106, %v11146
        %v11148 = vpop.f32.mrf.mxu0
        %v11149 = vpop.f32.mrf.mxu0
        %11150 = vdwg.mxu0
        %11151 = vmatprep.subr.bf16.mxu0 %v7796
        %11152 = vmatpush1.bf16.msra.mxu0 %v7795
        %11153 = vmatprep.subr.bf16.mxu0 %v7794
        %11154 = vmatpush1.bf16.msra.mxu0 %v7793
        %11155 = vmatprep.subr.bf16.mxu0 %v7792
        %11156 = vmatpush1.bf16.msra.mxu0 %v7791
        %11157 = vmatprep.subr.bf16.mxu0 %v7790
        %11158 = vmatpush1.bf16.msra.mxu0 %v7789
        %11159 = vmatprep.subr.bf16.mxu0 %v7788
        %11160 = vmatpush1.bf16.msra.mxu0 %v7787
        %11161 = vmatprep.subr.bf16.mxu0 %v7786
        %11162 = vmatpush1.bf16.msra.mxu0 %v7785
        %11163 = vmatprep.subr.bf16.mxu0 %v7784
        %11164 = vmatpush1.bf16.msra.mxu0 %v7783
        %11165 = vmatprep.subr.bf16.mxu0 %v7782
        %11166 = vmatpush1.bf16.msra.mxu0 %v7781
        %11167 = vmatprep.subr.bf16.mxu0 %v7812
        %11168 = vmatpush2.bf16.msra.mxu0 %v7811
        %11169 = vmatprep.subr.bf16.mxu0 %v7810
        %11170 = vmatpush2.bf16.msra.mxu0 %v7809
        %11171 = vmatprep.subr.bf16.mxu0 %v7808
        %11172 = vmatpush2.bf16.msra.mxu0 %v7807
        %11173 = vmatprep.subr.bf16.mxu0 %v7806
        %11174 = vmatpush2.bf16.msra.mxu0 %v7805
        %11175 = vmatprep.subr.bf16.mxu0 %v7804
        %11176 = vmatpush2.bf16.msra.mxu0 %v7803
        %11177 = vmatprep.subr.bf16.mxu0 %v7802
        %11178 = vmatpush2.bf16.msra.mxu0 %v7801
        %11179 = vmatprep.subr.bf16.mxu0 %v7800
        %11180 = vmatpush2.bf16.msra.mxu0 %v7799
        %11181 = vmatprep.subr.bf16.mxu0 %v7798
        %11182 = vmatpush2.bf16.msra.mxu0 %v7797
        %11183 = vmatprep.mubr.bf16.mxu0 %v2102
        %11184 = vmatmul.mubr.bf16.gmra.mxu0 %v2101
        %v11185 = vpop.f32.mrf.mxu0
        %v11186 = vadd.f32 %v11145, %v11185
        %v11187 = vpop.f32.mrf.mxu0
        %v11188 = vadd.f32 %v11147, %v11187
        %v11189 = vpop.f32.mrf.mxu0
        %v11190 = vpop.f32.mrf.mxu0
        %11191 = vdwg.mxu0
        %11192 = vmatprep.subr.bf16.mxu0 %v7828
        %11193 = vmatpush1.bf16.msra.mxu0 %v7827
        %11194 = vmatprep.subr.bf16.mxu0 %v7826
        %11195 = vmatpush1.bf16.msra.mxu0 %v7825
        %11196 = vmatprep.subr.bf16.mxu0 %v7824
        %11197 = vmatpush1.bf16.msra.mxu0 %v7823
        %11198 = vmatprep.subr.bf16.mxu0 %v7822
        %11199 = vmatpush1.bf16.msra.mxu0 %v7821
        %11200 = vmatprep.subr.bf16.mxu0 %v7820
        %11201 = vmatpush1.bf16.msra.mxu0 %v7819
        %11202 = vmatprep.subr.bf16.mxu0 %v7818
        %11203 = vmatpush1.bf16.msra.mxu0 %v7817
        %11204 = vmatprep.subr.bf16.mxu0 %v7816
        %11205 = vmatpush1.bf16.msra.mxu0 %v7815
        %11206 = vmatprep.subr.bf16.mxu0 %v7814
        %11207 = vmatpush1.bf16.msra.mxu0 %v7813
        %11208 = vmatprep.subr.bf16.mxu0 %v7844
        %11209 = vmatpush2.bf16.msra.mxu0 %v7843
        %11210 = vmatprep.subr.bf16.mxu0 %v7842
        %11211 = vmatpush2.bf16.msra.mxu0 %v7841
        %11212 = vmatprep.subr.bf16.mxu0 %v7840
        %11213 = vmatpush2.bf16.msra.mxu0 %v7839
        %11214 = vmatprep.subr.bf16.mxu0 %v7838
        %11215 = vmatpush2.bf16.msra.mxu0 %v7837
        %11216 = vmatprep.subr.bf16.mxu0 %v7836
        %11217 = vmatpush2.bf16.msra.mxu0 %v7835
        %11218 = vmatprep.subr.bf16.mxu0 %v7834
        %11219 = vmatpush2.bf16.msra.mxu0 %v7833
        %11220 = vmatprep.subr.bf16.mxu0 %v7832
        %11221 = vmatpush2.bf16.msra.mxu0 %v7831
        %11222 = vmatprep.subr.bf16.mxu0 %v7830
        %11223 = vmatpush2.bf16.msra.mxu0 %v7829
        %11224 = vmatprep.mubr.bf16.mxu0 %v2104
        %11225 = vmatmul.mubr.bf16.gmra.mxu0 %v2103
        %v11226 = vpop.f32.mrf.mxu0
        %v11227 = vadd.f32 %v11186, %v11226
        %v11228 = vpop.f32.mrf.mxu0
        %v11229 = vadd.f32 %v11188, %v11228
        %v11230 = vpop.f32.mrf.mxu0
        %v11231 = vpop.f32.mrf.mxu0
        %11232 = vdwg.mxu0
        %11233 = vmatprep.subr.bf16.mxu0 %v7860
        %11234 = vmatpush1.bf16.msra.mxu0 %v7859
        %11235 = vmatprep.subr.bf16.mxu0 %v7858
        %11236 = vmatpush1.bf16.msra.mxu0 %v7857
        %11237 = vmatprep.subr.bf16.mxu0 %v7856
        %11238 = vmatpush1.bf16.msra.mxu0 %v7855
        %11239 = vmatprep.subr.bf16.mxu0 %v7854
        %11240 = vmatpush1.bf16.msra.mxu0 %v7853
        %11241 = vmatprep.subr.bf16.mxu0 %v7852
        %11242 = vmatpush1.bf16.msra.mxu0 %v7851
        %11243 = vmatprep.subr.bf16.mxu0 %v7850
        %11244 = vmatpush1.bf16.msra.mxu0 %v7849
        %11245 = vmatprep.subr.bf16.mxu0 %v7848
        %11246 = vmatpush1.bf16.msra.mxu0 %v7847
        %11247 = vmatprep.subr.bf16.mxu0 %v7846
        %11248 = vmatpush1.bf16.msra.mxu0 %v7845
        %11249 = vmatprep.subr.bf16.mxu0 %v7876
        %11250 = vmatpush2.bf16.msra.mxu0 %v7875
        %11251 = vmatprep.subr.bf16.mxu0 %v7874
        %11252 = vmatpush2.bf16.msra.mxu0 %v7873
        %11253 = vmatprep.subr.bf16.mxu0 %v7872
        %11254 = vmatpush2.bf16.msra.mxu0 %v7871
        %11255 = vmatprep.subr.bf16.mxu0 %v7870
        %11256 = vmatpush2.bf16.msra.mxu0 %v7869
        %11257 = vmatprep.subr.bf16.mxu0 %v7868
        %11258 = vmatpush2.bf16.msra.mxu0 %v7867
        %11259 = vmatprep.subr.bf16.mxu0 %v7866
        %11260 = vmatpush2.bf16.msra.mxu0 %v7865
        %11261 = vmatprep.subr.bf16.mxu0 %v7864
        %11262 = vmatpush2.bf16.msra.mxu0 %v7863
        %11263 = vmatprep.subr.bf16.mxu0 %v7862
        %11264 = vmatpush2.bf16.msra.mxu0 %v7861
        %11265 = vmatprep.mubr.bf16.mxu0 %v2106
        %11266 = vmatmul.mubr.bf16.gmra.mxu0 %v2105
        %v11267 = vpop.f32.mrf.mxu0
        %v11268 = vadd.f32 %v11227, %v11267
        %v11269 = vpop.f32.mrf.mxu0
        %v11270 = vadd.f32 %v11229, %v11269
        %v11271 = vpop.f32.mrf.mxu0
        %v11272 = vpop.f32.mrf.mxu0
        %11273 = vdwg.mxu0
        %11274 = vmatprep.subr.bf16.mxu0 %v7892
        %11275 = vmatpush1.bf16.msra.mxu0 %v7891
        %11276 = vmatprep.subr.bf16.mxu0 %v7890
        %11277 = vmatpush1.bf16.msra.mxu0 %v7889
        %11278 = vmatprep.subr.bf16.mxu0 %v7888
        %11279 = vmatpush1.bf16.msra.mxu0 %v7887
        %11280 = vmatprep.subr.bf16.mxu0 %v7886
        %11281 = vmatpush1.bf16.msra.mxu0 %v7885
        %11282 = vmatprep.subr.bf16.mxu0 %v7884
        %11283 = vmatpush1.bf16.msra.mxu0 %v7883
        %11284 = vmatprep.subr.bf16.mxu0 %v7882
        %11285 = vmatpush1.bf16.msra.mxu0 %v7881
        %11286 = vmatprep.subr.bf16.mxu0 %v7880
        %11287 = vmatpush1.bf16.msra.mxu0 %v7879
        %11288 = vmatprep.subr.bf16.mxu0 %v7878
        %11289 = vmatpush1.bf16.msra.mxu0 %v7877
        %11290 = vmatprep.subr.bf16.mxu0 %v7908
        %11291 = vmatpush2.bf16.msra.mxu0 %v7907
        %11292 = vmatprep.subr.bf16.mxu0 %v7906
        %11293 = vmatpush2.bf16.msra.mxu0 %v7905
        %11294 = vmatprep.subr.bf16.mxu0 %v7904
        %11295 = vmatpush2.bf16.msra.mxu0 %v7903
        %11296 = vmatprep.subr.bf16.mxu0 %v7902
        %11297 = vmatpush2.bf16.msra.mxu0 %v7901
        %11298 = vmatprep.subr.bf16.mxu0 %v7900
        %11299 = vmatpush2.bf16.msra.mxu0 %v7899
        %11300 = vmatprep.subr.bf16.mxu0 %v7898
        %11301 = vmatpush2.bf16.msra.mxu0 %v7897
        %11302 = vmatprep.subr.bf16.mxu0 %v7896
        %11303 = vmatpush2.bf16.msra.mxu0 %v7895
        %11304 = vmatprep.subr.bf16.mxu0 %v7894
        %11305 = vmatpush2.bf16.msra.mxu0 %v7893
        %11306 = vmatprep.mubr.bf16.mxu0 %v2108
        %11307 = vmatmul.mubr.bf16.gmra.mxu0 %v2107
        %v11308 = vpop.f32.mrf.mxu0
        %v11309 = vadd.f32 %v11268, %v11308
        %v11310 = vpop.f32.mrf.mxu0
        %v11311 = vadd.f32 %v11270, %v11310
        %v11312 = vpop.f32.mrf.mxu0
        %v11313 = vpop.f32.mrf.mxu0
        %11314 = vdwg.mxu0
        %11315 = vmatprep.subr.bf16.mxu0 %v7924
        %11316 = vmatpush1.bf16.msra.mxu0 %v7923
        %11317 = vmatprep.subr.bf16.mxu0 %v7922
        %11318 = vmatpush1.bf16.msra.mxu0 %v7921
        %11319 = vmatprep.subr.bf16.mxu0 %v7920
        %11320 = vmatpush1.bf16.msra.mxu0 %v7919
        %11321 = vmatprep.subr.bf16.mxu0 %v7918
        %11322 = vmatpush1.bf16.msra.mxu0 %v7917
        %11323 = vmatprep.subr.bf16.mxu0 %v7916
        %11324 = vmatpush1.bf16.msra.mxu0 %v7915
        %11325 = vmatprep.subr.bf16.mxu0 %v7914
        %11326 = vmatpush1.bf16.msra.mxu0 %v7913
        %11327 = vmatprep.subr.bf16.mxu0 %v7912
        %11328 = vmatpush1.bf16.msra.mxu0 %v7911
        %11329 = vmatprep.subr.bf16.mxu0 %v7910
        %11330 = vmatpush1.bf16.msra.mxu0 %v7909
        %11331 = vmatprep.subr.bf16.mxu0 %v7940
        %11332 = vmatpush2.bf16.msra.mxu0 %v7939
        %11333 = vmatprep.subr.bf16.mxu0 %v7938
        %11334 = vmatpush2.bf16.msra.mxu0 %v7937
        %11335 = vmatprep.subr.bf16.mxu0 %v7936
        %11336 = vmatpush2.bf16.msra.mxu0 %v7935
        %11337 = vmatprep.subr.bf16.mxu0 %v7934
        %11338 = vmatpush2.bf16.msra.mxu0 %v7933
        %11339 = vmatprep.subr.bf16.mxu0 %v7932
        %11340 = vmatpush2.bf16.msra.mxu0 %v7931
        %11341 = vmatprep.subr.bf16.mxu0 %v7930
        %11342 = vmatpush2.bf16.msra.mxu0 %v7929
        %11343 = vmatprep.subr.bf16.mxu0 %v7928
        %11344 = vmatpush2.bf16.msra.mxu0 %v7927
        %11345 = vmatprep.subr.bf16.mxu0 %v7926
        %11346 = vmatpush2.bf16.msra.mxu0 %v7925
        %11347 = vmatprep.mubr.bf16.mxu0 %v2110
        %11348 = vmatmul.mubr.bf16.gmra.mxu0 %v2109
        %v11349 = vpop.f32.mrf.mxu0
        %v11350 = vadd.f32 %v11309, %v11349
        %v11351 = vpop.f32.mrf.mxu0
        %v11352 = vadd.f32 %v11311, %v11351
        %v11353 = vpop.f32.mrf.mxu0
        %v11354 = vpop.f32.mrf.mxu0
        %11355 = vdwg.mxu0
        %11356 = vmatprep.subr.bf16.mxu0 %v7956
        %11357 = vmatpush1.bf16.msra.mxu0 %v7955
        %11358 = vmatprep.subr.bf16.mxu0 %v7954
        %11359 = vmatpush1.bf16.msra.mxu0 %v7953
        %11360 = vmatprep.subr.bf16.mxu0 %v7952
        %11361 = vmatpush1.bf16.msra.mxu0 %v7951
        %11362 = vmatprep.subr.bf16.mxu0 %v7950
        %11363 = vmatpush1.bf16.msra.mxu0 %v7949
        %11364 = vmatprep.subr.bf16.mxu0 %v7948
        %11365 = vmatpush1.bf16.msra.mxu0 %v7947
        %11366 = vmatprep.subr.bf16.mxu0 %v7946
        %11367 = vmatpush1.bf16.msra.mxu0 %v7945
        %11368 = vmatprep.subr.bf16.mxu0 %v7944
        %11369 = vmatpush1.bf16.msra.mxu0 %v7943
        %11370 = vmatprep.subr.bf16.mxu0 %v7942
        %11371 = vmatpush1.bf16.msra.mxu0 %v7941
        %11372 = vmatprep.subr.bf16.mxu0 %v7972
        %11373 = vmatpush2.bf16.msra.mxu0 %v7971
        %11374 = vmatprep.subr.bf16.mxu0 %v7970
        %11375 = vmatpush2.bf16.msra.mxu0 %v7969
        %11376 = vmatprep.subr.bf16.mxu0 %v7968
        %11377 = vmatpush2.bf16.msra.mxu0 %v7967
        %11378 = vmatprep.subr.bf16.mxu0 %v7966
        %11379 = vmatpush2.bf16.msra.mxu0 %v7965
        %11380 = vmatprep.subr.bf16.mxu0 %v7964
        %11381 = vmatpush2.bf16.msra.mxu0 %v7963
        %11382 = vmatprep.subr.bf16.mxu0 %v7962
        %11383 = vmatpush2.bf16.msra.mxu0 %v7961
        %11384 = vmatprep.subr.bf16.mxu0 %v7960
        %11385 = vmatpush2.bf16.msra.mxu0 %v7959
        %11386 = vmatprep.subr.bf16.mxu0 %v7958
        %11387 = vmatpush2.bf16.msra.mxu0 %v7957
        %11388 = vmatprep.mubr.bf16.mxu0 %v2112
        %11389 = vmatmul.mubr.bf16.gmra.mxu0 %v2111
        %v11390 = vpop.f32.mrf.mxu0
        %v11391 = vadd.f32 %v11350, %v11390
        %v11392 = vpop.f32.mrf.mxu0
        %v11393 = vadd.f32 %v11352, %v11392
        %v11394 = vpop.f32.mrf.mxu0
        %v11395 = vpop.f32.mrf.mxu0
        %11396 = vdwg.mxu0
        %11397 = vmatprep.subr.bf16.mxu0 %v7988
        %11398 = vmatpush1.bf16.msra.mxu0 %v7987
        %11399 = vmatprep.subr.bf16.mxu0 %v7986
        %11400 = vmatpush1.bf16.msra.mxu0 %v7985
        %11401 = vmatprep.subr.bf16.mxu0 %v7984
        %11402 = vmatpush1.bf16.msra.mxu0 %v7983
        %11403 = vmatprep.subr.bf16.mxu0 %v7982
        %11404 = vmatpush1.bf16.msra.mxu0 %v7981
        %11405 = vmatprep.subr.bf16.mxu0 %v7980
        %11406 = vmatpush1.bf16.msra.mxu0 %v7979
        %11407 = vmatprep.subr.bf16.mxu0 %v7978
        %11408 = vmatpush1.bf16.msra.mxu0 %v7977
        %11409 = vmatprep.subr.bf16.mxu0 %v7976
        %11410 = vmatpush1.bf16.msra.mxu0 %v7975
        %11411 = vmatprep.subr.bf16.mxu0 %v7974
        %11412 = vmatpush1.bf16.msra.mxu0 %v7973
        %11413 = vmatprep.subr.bf16.mxu0 %v8004
        %11414 = vmatpush2.bf16.msra.mxu0 %v8003
        %11415 = vmatprep.subr.bf16.mxu0 %v8002
        %11416 = vmatpush2.bf16.msra.mxu0 %v8001
        %11417 = vmatprep.subr.bf16.mxu0 %v8000
        %11418 = vmatpush2.bf16.msra.mxu0 %v7999
        %11419 = vmatprep.subr.bf16.mxu0 %v7998
        %11420 = vmatpush2.bf16.msra.mxu0 %v7997
        %11421 = vmatprep.subr.bf16.mxu0 %v7996
        %11422 = vmatpush2.bf16.msra.mxu0 %v7995
        %11423 = vmatprep.subr.bf16.mxu0 %v7994
        %11424 = vmatpush2.bf16.msra.mxu0 %v7993
        %11425 = vmatprep.subr.bf16.mxu0 %v7992
        %11426 = vmatpush2.bf16.msra.mxu0 %v7991
        %11427 = vmatprep.subr.bf16.mxu0 %v7990
        %11428 = vmatpush2.bf16.msra.mxu0 %v7989
        %11429 = vmatprep.mubr.bf16.mxu0 %v2114
        %11430 = vmatmul.mubr.bf16.gmra.mxu0 %v2113
        %v11431 = vpop.f32.mrf.mxu0
        %v11432 = vadd.f32 %v11391, %v11431
        %v11433 = vpop.f32.mrf.mxu0
        %v11434 = vadd.f32 %v11393, %v11433
        %v11435 = vpop.f32.mrf.mxu0
        %v11436 = vpop.f32.mrf.mxu0
        %11437 = vdwg.mxu0
        %11438 = vmatprep.subr.bf16.mxu0 %v8020
        %11439 = vmatpush1.bf16.msra.mxu0 %v8019
        %11440 = vmatprep.subr.bf16.mxu0 %v8018
        %11441 = vmatpush1.bf16.msra.mxu0 %v8017
        %11442 = vmatprep.subr.bf16.mxu0 %v8016
        %11443 = vmatpush1.bf16.msra.mxu0 %v8015
        %11444 = vmatprep.subr.bf16.mxu0 %v8014
        %11445 = vmatpush1.bf16.msra.mxu0 %v8013
        %11446 = vmatprep.subr.bf16.mxu0 %v8012
        %11447 = vmatpush1.bf16.msra.mxu0 %v8011
        %11448 = vmatprep.subr.bf16.mxu0 %v8010
        %11449 = vmatpush1.bf16.msra.mxu0 %v8009
        %11450 = vmatprep.subr.bf16.mxu0 %v8008
        %11451 = vmatpush1.bf16.msra.mxu0 %v8007
        %11452 = vmatprep.subr.bf16.mxu0 %v8006
        %11453 = vmatpush1.bf16.msra.mxu0 %v8005
        %11454 = vmatprep.subr.bf16.mxu0 %v8036
        %11455 = vmatpush2.bf16.msra.mxu0 %v8035
        %11456 = vmatprep.subr.bf16.mxu0 %v8034
        %11457 = vmatpush2.bf16.msra.mxu0 %v8033
        %11458 = vmatprep.subr.bf16.mxu0 %v8032
        %11459 = vmatpush2.bf16.msra.mxu0 %v8031
        %11460 = vmatprep.subr.bf16.mxu0 %v8030
        %11461 = vmatpush2.bf16.msra.mxu0 %v8029
        %11462 = vmatprep.subr.bf16.mxu0 %v8028
        %11463 = vmatpush2.bf16.msra.mxu0 %v8027
        %11464 = vmatprep.subr.bf16.mxu0 %v8026
        %11465 = vmatpush2.bf16.msra.mxu0 %v8025
        %11466 = vmatprep.subr.bf16.mxu0 %v8024
        %11467 = vmatpush2.bf16.msra.mxu0 %v8023
        %11468 = vmatprep.subr.bf16.mxu0 %v8022
        %11469 = vmatpush2.bf16.msra.mxu0 %v8021
        %11470 = vmatprep.mubr.bf16.mxu0 %v2116
        %11471 = vmatmul.mubr.bf16.gmra.mxu0 %v2115
        %v11472 = vpop.f32.mrf.mxu0
        %v11473 = vadd.f32 %v11432, %v11472
        %v11474 = vpop.f32.mrf.mxu0
        %v11475 = vadd.f32 %v11434, %v11474
        %v11476 = vpop.f32.mrf.mxu0
        %v11477 = vpop.f32.mrf.mxu0
        %11478 = vdwg.mxu0
        %11479 = vmatprep.subr.bf16.mxu0 %v8052
        %11480 = vmatpush1.bf16.msra.mxu0 %v8051
        %11481 = vmatprep.subr.bf16.mxu0 %v8050
        %11482 = vmatpush1.bf16.msra.mxu0 %v8049
        %11483 = vmatprep.subr.bf16.mxu0 %v8048
        %11484 = vmatpush1.bf16.msra.mxu0 %v8047
        %11485 = vmatprep.subr.bf16.mxu0 %v8046
        %11486 = vmatpush1.bf16.msra.mxu0 %v8045
        %11487 = vmatprep.subr.bf16.mxu0 %v8044
        %11488 = vmatpush1.bf16.msra.mxu0 %v8043
        %11489 = vmatprep.subr.bf16.mxu0 %v8042
        %11490 = vmatpush1.bf16.msra.mxu0 %v8041
        %11491 = vmatprep.subr.bf16.mxu0 %v8040
        %11492 = vmatpush1.bf16.msra.mxu0 %v8039
        %11493 = vmatprep.subr.bf16.mxu0 %v8038
        %11494 = vmatpush1.bf16.msra.mxu0 %v8037
        %11495 = vmatprep.subr.bf16.mxu0 %v8068
        %11496 = vmatpush2.bf16.msra.mxu0 %v8067
        %11497 = vmatprep.subr.bf16.mxu0 %v8066
        %11498 = vmatpush2.bf16.msra.mxu0 %v8065
        %11499 = vmatprep.subr.bf16.mxu0 %v8064
        %11500 = vmatpush2.bf16.msra.mxu0 %v8063
        %11501 = vmatprep.subr.bf16.mxu0 %v8062
        %11502 = vmatpush2.bf16.msra.mxu0 %v8061
        %11503 = vmatprep.subr.bf16.mxu0 %v8060
        %11504 = vmatpush2.bf16.msra.mxu0 %v8059
        %11505 = vmatprep.subr.bf16.mxu0 %v8058
        %11506 = vmatpush2.bf16.msra.mxu0 %v8057
        %11507 = vmatprep.subr.bf16.mxu0 %v8056
        %11508 = vmatpush2.bf16.msra.mxu0 %v8055
        %11509 = vmatprep.subr.bf16.mxu0 %v8054
        %11510 = vmatpush2.bf16.msra.mxu0 %v8053
        %11511 = vmatprep.mubr.bf16.mxu0 %v2118
        %11512 = vmatmul.mubr.bf16.gmra.mxu0 %v2117
        %v11513 = vpop.f32.mrf.mxu0
        %v11514 = vadd.f32 %v11473, %v11513
        %v11515 = vpop.f32.mrf.mxu0
        %v11516 = vadd.f32 %v11475, %v11515
        %v11517 = vpop.f32.mrf.mxu0
        %v11518 = vpop.f32.mrf.mxu0
        %11519 = vdwg.mxu0
        %11520 = vmatprep.subr.bf16.mxu0 %v8084
        %11521 = vmatpush1.bf16.msra.mxu0 %v8083
        %11522 = vmatprep.subr.bf16.mxu0 %v8082
        %11523 = vmatpush1.bf16.msra.mxu0 %v8081
        %11524 = vmatprep.subr.bf16.mxu0 %v8080
        %11525 = vmatpush1.bf16.msra.mxu0 %v8079
        %11526 = vmatprep.subr.bf16.mxu0 %v8078
        %11527 = vmatpush1.bf16.msra.mxu0 %v8077
        %11528 = vmatprep.subr.bf16.mxu0 %v8076
        %11529 = vmatpush1.bf16.msra.mxu0 %v8075
        %11530 = vmatprep.subr.bf16.mxu0 %v8074
        %11531 = vmatpush1.bf16.msra.mxu0 %v8073
        %11532 = vmatprep.subr.bf16.mxu0 %v8072
        %11533 = vmatpush1.bf16.msra.mxu0 %v8071
        %11534 = vmatprep.subr.bf16.mxu0 %v8070
        %11535 = vmatpush1.bf16.msra.mxu0 %v8069
        %11536 = vmatprep.subr.bf16.mxu0 %v8100
        %11537 = vmatpush2.bf16.msra.mxu0 %v8099
        %11538 = vmatprep.subr.bf16.mxu0 %v8098
        %11539 = vmatpush2.bf16.msra.mxu0 %v8097
        %11540 = vmatprep.subr.bf16.mxu0 %v8096
        %11541 = vmatpush2.bf16.msra.mxu0 %v8095
        %11542 = vmatprep.subr.bf16.mxu0 %v8094
        %11543 = vmatpush2.bf16.msra.mxu0 %v8093
        %11544 = vmatprep.subr.bf16.mxu0 %v8092
        %11545 = vmatpush2.bf16.msra.mxu0 %v8091
        %11546 = vmatprep.subr.bf16.mxu0 %v8090
        %11547 = vmatpush2.bf16.msra.mxu0 %v8089
        %11548 = vmatprep.subr.bf16.mxu0 %v8088
        %11549 = vmatpush2.bf16.msra.mxu0 %v8087
        %11550 = vmatprep.subr.bf16.mxu0 %v8086
        %11551 = vmatpush2.bf16.msra.mxu0 %v8085
        %11552 = vmatprep.mubr.bf16.mxu0 %v2120
        %11553 = vmatmul.mubr.bf16.gmra.mxu0 %v2119
        %v11554 = vpop.f32.mrf.mxu0
        %v11555 = vadd.f32 %v11514, %v11554
        %v11556 = vpop.f32.mrf.mxu0
        %v11557 = vadd.f32 %v11516, %v11556
        %v11558 = vpop.f32.mrf.mxu0
        %v11559 = vpop.f32.mrf.mxu0
        %11560 = vdwg.mxu0
        %11561 = vmatprep.subr.bf16.mxu0 %v8116
        %11562 = vmatpush1.bf16.msra.mxu0 %v8115
        %11563 = vmatprep.subr.bf16.mxu0 %v8114
        %11564 = vmatpush1.bf16.msra.mxu0 %v8113
        %11565 = vmatprep.subr.bf16.mxu0 %v8112
        %11566 = vmatpush1.bf16.msra.mxu0 %v8111
        %11567 = vmatprep.subr.bf16.mxu0 %v8110
        %11568 = vmatpush1.bf16.msra.mxu0 %v8109
        %11569 = vmatprep.subr.bf16.mxu0 %v8108
        %11570 = vmatpush1.bf16.msra.mxu0 %v8107
        %11571 = vmatprep.subr.bf16.mxu0 %v8106
        %11572 = vmatpush1.bf16.msra.mxu0 %v8105
        %11573 = vmatprep.subr.bf16.mxu0 %v8104
        %11574 = vmatpush1.bf16.msra.mxu0 %v8103
        %11575 = vmatprep.subr.bf16.mxu0 %v8102
        %11576 = vmatpush1.bf16.msra.mxu0 %v8101
        %11577 = vmatprep.subr.bf16.mxu0 %v8132
        %11578 = vmatpush2.bf16.msra.mxu0 %v8131
        %11579 = vmatprep.subr.bf16.mxu0 %v8130
        %11580 = vmatpush2.bf16.msra.mxu0 %v8129
        %11581 = vmatprep.subr.bf16.mxu0 %v8128
        %11582 = vmatpush2.bf16.msra.mxu0 %v8127
        %11583 = vmatprep.subr.bf16.mxu0 %v8126
        %11584 = vmatpush2.bf16.msra.mxu0 %v8125
        %11585 = vmatprep.subr.bf16.mxu0 %v8124
        %11586 = vmatpush2.bf16.msra.mxu0 %v8123
        %11587 = vmatprep.subr.bf16.mxu0 %v8122
        %11588 = vmatpush2.bf16.msra.mxu0 %v8121
        %11589 = vmatprep.subr.bf16.mxu0 %v8120
        %11590 = vmatpush2.bf16.msra.mxu0 %v8119
        %11591 = vmatprep.subr.bf16.mxu0 %v8118
        %11592 = vmatpush2.bf16.msra.mxu0 %v8117
        %11593 = vmatprep.mubr.bf16.mxu0 %v2122
        %11594 = vmatmul.mubr.bf16.gmra.mxu0 %v2121
        %v11595 = vpop.f32.mrf.mxu0
        %v11596 = vadd.f32 %v11555, %v11595
        %v11597 = vpop.f32.mrf.mxu0
        %v11598 = vadd.f32 %v11557, %v11597
        %v11599 = vpop.f32.mrf.mxu0
        %v11600 = vpop.f32.mrf.mxu0
        %11601 = vdwg.mxu0
        %11602 = vmatprep.subr.bf16.mxu0 %v8148
        %11603 = vmatpush1.bf16.msra.mxu0 %v8147
        %11604 = vmatprep.subr.bf16.mxu0 %v8146
        %11605 = vmatpush1.bf16.msra.mxu0 %v8145
        %11606 = vmatprep.subr.bf16.mxu0 %v8144
        %11607 = vmatpush1.bf16.msra.mxu0 %v8143
        %11608 = vmatprep.subr.bf16.mxu0 %v8142
        %11609 = vmatpush1.bf16.msra.mxu0 %v8141
        %11610 = vmatprep.subr.bf16.mxu0 %v8140
        %11611 = vmatpush1.bf16.msra.mxu0 %v8139
        %11612 = vmatprep.subr.bf16.mxu0 %v8138
        %11613 = vmatpush1.bf16.msra.mxu0 %v8137
        %11614 = vmatprep.subr.bf16.mxu0 %v8136
        %11615 = vmatpush1.bf16.msra.mxu0 %v8135
        %11616 = vmatprep.subr.bf16.mxu0 %v8134
        %11617 = vmatpush1.bf16.msra.mxu0 %v8133
        %11618 = vmatprep.subr.bf16.mxu0 %v8164
        %11619 = vmatpush2.bf16.msra.mxu0 %v8163
        %11620 = vmatprep.subr.bf16.mxu0 %v8162
        %11621 = vmatpush2.bf16.msra.mxu0 %v8161
        %11622 = vmatprep.subr.bf16.mxu0 %v8160
        %11623 = vmatpush2.bf16.msra.mxu0 %v8159
        %11624 = vmatprep.subr.bf16.mxu0 %v8158
        %11625 = vmatpush2.bf16.msra.mxu0 %v8157
        %11626 = vmatprep.subr.bf16.mxu0 %v8156
        %11627 = vmatpush2.bf16.msra.mxu0 %v8155
        %11628 = vmatprep.subr.bf16.mxu0 %v8154
        %11629 = vmatpush2.bf16.msra.mxu0 %v8153
        %11630 = vmatprep.subr.bf16.mxu0 %v8152
        %11631 = vmatpush2.bf16.msra.mxu0 %v8151
        %11632 = vmatprep.subr.bf16.mxu0 %v8150
        %11633 = vmatpush2.bf16.msra.mxu0 %v8149
        %11634 = vmatprep.mubr.bf16.mxu0 %v2124
        %11635 = vmatmul.mubr.bf16.gmra.mxu0 %v2123
        %v11636 = vpop.f32.mrf.mxu0
        %v11637 = vadd.f32 %v11596, %v11636
        %v11638 = vpop.f32.mrf.mxu0
        %v11639 = vadd.f32 %v11598, %v11638
        %v11640 = vpop.f32.mrf.mxu0
        %v11641 = vpop.f32.mrf.mxu0
        %11642 = vdwg.mxu0
        %11643 = vmatprep.subr.bf16.mxu0 %v8180
        %11644 = vmatpush1.bf16.msra.mxu0 %v8179
        %11645 = vmatprep.subr.bf16.mxu0 %v8178
        %11646 = vmatpush1.bf16.msra.mxu0 %v8177
        %11647 = vmatprep.subr.bf16.mxu0 %v8176
        %11648 = vmatpush1.bf16.msra.mxu0 %v8175
        %11649 = vmatprep.subr.bf16.mxu0 %v8174
        %11650 = vmatpush1.bf16.msra.mxu0 %v8173
        %11651 = vmatprep.subr.bf16.mxu0 %v8172
        %11652 = vmatpush1.bf16.msra.mxu0 %v8171
        %11653 = vmatprep.subr.bf16.mxu0 %v8170
        %11654 = vmatpush1.bf16.msra.mxu0 %v8169
        %11655 = vmatprep.subr.bf16.mxu0 %v8168
        %11656 = vmatpush1.bf16.msra.mxu0 %v8167
        %11657 = vmatprep.subr.bf16.mxu0 %v8166
        %11658 = vmatpush1.bf16.msra.mxu0 %v8165
        %11659 = vmatprep.subr.bf16.mxu0 %v8196
        %11660 = vmatpush2.bf16.msra.mxu0 %v8195
        %11661 = vmatprep.subr.bf16.mxu0 %v8194
        %11662 = vmatpush2.bf16.msra.mxu0 %v8193
        %11663 = vmatprep.subr.bf16.mxu0 %v8192
        %11664 = vmatpush2.bf16.msra.mxu0 %v8191
        %11665 = vmatprep.subr.bf16.mxu0 %v8190
        %11666 = vmatpush2.bf16.msra.mxu0 %v8189
        %11667 = vmatprep.subr.bf16.mxu0 %v8188
        %11668 = vmatpush2.bf16.msra.mxu0 %v8187
        %11669 = vmatprep.subr.bf16.mxu0 %v8186
        %11670 = vmatpush2.bf16.msra.mxu0 %v8185
        %11671 = vmatprep.subr.bf16.mxu0 %v8184
        %11672 = vmatpush2.bf16.msra.mxu0 %v8183
        %11673 = vmatprep.subr.bf16.mxu0 %v8182
        %11674 = vmatpush2.bf16.msra.mxu0 %v8181
        %11675 = vmatprep.mubr.bf16.mxu0 %v2126
        %11676 = vmatmul.mubr.bf16.gmra.mxu0 %v2125
        %v11677 = vpop.f32.mrf.mxu0
        %v11678 = vadd.f32 %v11637, %v11677
        %v11679 = vpop.f32.mrf.mxu0
        %v11680 = vadd.f32 %v11639, %v11679
        %v11681 = vpop.f32.mrf.mxu0
        %v11682 = vpop.f32.mrf.mxu0
        %11683 = vdwg.mxu0
        %11684 = vmatprep.subr.bf16.mxu0 %v8212
        %11685 = vmatpush1.bf16.msra.mxu0 %v8211
        %11686 = vmatprep.subr.bf16.mxu0 %v8210
        %11687 = vmatpush1.bf16.msra.mxu0 %v8209
        %11688 = vmatprep.subr.bf16.mxu0 %v8208
        %11689 = vmatpush1.bf16.msra.mxu0 %v8207
        %11690 = vmatprep.subr.bf16.mxu0 %v8206
        %11691 = vmatpush1.bf16.msra.mxu0 %v8205
        %11692 = vmatprep.subr.bf16.mxu0 %v8204
        %11693 = vmatpush1.bf16.msra.mxu0 %v8203
        %11694 = vmatprep.subr.bf16.mxu0 %v8202
        %11695 = vmatpush1.bf16.msra.mxu0 %v8201
        %11696 = vmatprep.subr.bf16.mxu0 %v8200
        %11697 = vmatpush1.bf16.msra.mxu0 %v8199
        %11698 = vmatprep.subr.bf16.mxu0 %v8198
        %11699 = vmatpush1.bf16.msra.mxu0 %v8197
        %11700 = vmatprep.subr.bf16.mxu0 %v8228
        %11701 = vmatpush2.bf16.msra.mxu0 %v8227
        %11702 = vmatprep.subr.bf16.mxu0 %v8226
        %11703 = vmatpush2.bf16.msra.mxu0 %v8225
        %11704 = vmatprep.subr.bf16.mxu0 %v8224
        %11705 = vmatpush2.bf16.msra.mxu0 %v8223
        %11706 = vmatprep.subr.bf16.mxu0 %v8222
        %11707 = vmatpush2.bf16.msra.mxu0 %v8221
        %11708 = vmatprep.subr.bf16.mxu0 %v8220
        %11709 = vmatpush2.bf16.msra.mxu0 %v8219
        %11710 = vmatprep.subr.bf16.mxu0 %v8218
        %11711 = vmatpush2.bf16.msra.mxu0 %v8217
        %11712 = vmatprep.subr.bf16.mxu0 %v8216
        %11713 = vmatpush2.bf16.msra.mxu0 %v8215
        %11714 = vmatprep.subr.bf16.mxu0 %v8214
        %11715 = vmatpush2.bf16.msra.mxu0 %v8213
        %11716 = vmatprep.mubr.bf16.mxu0 %v2128
        %11717 = vmatmul.mubr.bf16.gmra.mxu0 %v2127
        %v11718 = vpop.f32.mrf.mxu0
        %v11719 = vadd.f32 %v11678, %v11718
        %v11720 = vpop.f32.mrf.mxu0
        %v11721 = vadd.f32 %v11680, %v11720
        %v11722 = vpop.f32.mrf.mxu0
        %v11723 = vpop.f32.mrf.mxu0
        %11724 = vdwg.mxu0
        %11725 = vmatprep.subr.bf16.mxu0 %v8244
        %11726 = vmatpush1.bf16.msra.mxu0 %v8243
        %11727 = vmatprep.subr.bf16.mxu0 %v8242
        %11728 = vmatpush1.bf16.msra.mxu0 %v8241
        %11729 = vmatprep.subr.bf16.mxu0 %v8240
        %11730 = vmatpush1.bf16.msra.mxu0 %v8239
        %11731 = vmatprep.subr.bf16.mxu0 %v8238
        %11732 = vmatpush1.bf16.msra.mxu0 %v8237
        %11733 = vmatprep.subr.bf16.mxu0 %v8236
        %11734 = vmatpush1.bf16.msra.mxu0 %v8235
        %11735 = vmatprep.subr.bf16.mxu0 %v8234
        %11736 = vmatpush1.bf16.msra.mxu0 %v8233
        %11737 = vmatprep.subr.bf16.mxu0 %v8232
        %11738 = vmatpush1.bf16.msra.mxu0 %v8231
        %11739 = vmatprep.subr.bf16.mxu0 %v8230
        %11740 = vmatpush1.bf16.msra.mxu0 %v8229
        %11741 = vmatprep.subr.bf16.mxu0 %v8260
        %11742 = vmatpush2.bf16.msra.mxu0 %v8259
        %11743 = vmatprep.subr.bf16.mxu0 %v8258
        %11744 = vmatpush2.bf16.msra.mxu0 %v8257
        %11745 = vmatprep.subr.bf16.mxu0 %v8256
        %11746 = vmatpush2.bf16.msra.mxu0 %v8255
        %11747 = vmatprep.subr.bf16.mxu0 %v8254
        %11748 = vmatpush2.bf16.msra.mxu0 %v8253
        %11749 = vmatprep.subr.bf16.mxu0 %v8252
        %11750 = vmatpush2.bf16.msra.mxu0 %v8251
        %11751 = vmatprep.subr.bf16.mxu0 %v8250
        %11752 = vmatpush2.bf16.msra.mxu0 %v8249
        %11753 = vmatprep.subr.bf16.mxu0 %v8248
        %11754 = vmatpush2.bf16.msra.mxu0 %v8247
        %11755 = vmatprep.subr.bf16.mxu0 %v8246
        %11756 = vmatpush2.bf16.msra.mxu0 %v8245
        %11757 = vmatprep.mubr.bf16.mxu0 %v2130
        %11758 = vmatmul.mubr.bf16.gmra.mxu0 %v2129
        %v11759 = vpop.f32.mrf.mxu0
        %v11760 = vadd.f32 %v11719, %v11759
        %v11761 = vpop.f32.mrf.mxu0
        %v11762 = vadd.f32 %v11721, %v11761
        %v11763 = vpop.f32.mrf.mxu0
        %v11764 = vpop.f32.mrf.mxu0
        %11765 = vdwg.mxu0
        %11766 = vmatprep.subr.bf16.mxu0 %v8276
        %11767 = vmatpush1.bf16.msra.mxu0 %v8275
        %11768 = vmatprep.subr.bf16.mxu0 %v8274
        %11769 = vmatpush1.bf16.msra.mxu0 %v8273
        %11770 = vmatprep.subr.bf16.mxu0 %v8272
        %11771 = vmatpush1.bf16.msra.mxu0 %v8271
        %11772 = vmatprep.subr.bf16.mxu0 %v8270
        %11773 = vmatpush1.bf16.msra.mxu0 %v8269
        %11774 = vmatprep.subr.bf16.mxu0 %v8268
        %11775 = vmatpush1.bf16.msra.mxu0 %v8267
        %11776 = vmatprep.subr.bf16.mxu0 %v8266
        %11777 = vmatpush1.bf16.msra.mxu0 %v8265
        %11778 = vmatprep.subr.bf16.mxu0 %v8264
        %11779 = vmatpush1.bf16.msra.mxu0 %v8263
        %11780 = vmatprep.subr.bf16.mxu0 %v8262
        %11781 = vmatpush1.bf16.msra.mxu0 %v8261
        %11782 = vmatprep.subr.bf16.mxu0 %v8292
        %11783 = vmatpush2.bf16.msra.mxu0 %v8291
        %11784 = vmatprep.subr.bf16.mxu0 %v8290
        %11785 = vmatpush2.bf16.msra.mxu0 %v8289
        %11786 = vmatprep.subr.bf16.mxu0 %v8288
        %11787 = vmatpush2.bf16.msra.mxu0 %v8287
        %11788 = vmatprep.subr.bf16.mxu0 %v8286
        %11789 = vmatpush2.bf16.msra.mxu0 %v8285
        %11790 = vmatprep.subr.bf16.mxu0 %v8284
        %11791 = vmatpush2.bf16.msra.mxu0 %v8283
        %11792 = vmatprep.subr.bf16.mxu0 %v8282
        %11793 = vmatpush2.bf16.msra.mxu0 %v8281
        %11794 = vmatprep.subr.bf16.mxu0 %v8280
        %11795 = vmatpush2.bf16.msra.mxu0 %v8279
        %11796 = vmatprep.subr.bf16.mxu0 %v8278
        %11797 = vmatpush2.bf16.msra.mxu0 %v8277
        %11798 = vmatprep.mubr.bf16.mxu0 %v2132
        %11799 = vmatmul.mubr.bf16.gmra.mxu0 %v2131
        %v11800 = vpop.f32.mrf.mxu0
        %v11801 = vadd.f32 %v11760, %v11800
        %v11802 = vpop.f32.mrf.mxu0
        %v11803 = vadd.f32 %v11762, %v11802
        %v11804 = vpop.f32.mrf.mxu0
        %v11805 = vpop.f32.mrf.mxu0
        %11806 = vdwg.mxu0
        %11807 = vmatprep.subr.bf16.mxu0 %v8308
        %11808 = vmatpush1.bf16.msra.mxu0 %v8307
        %11809 = vmatprep.subr.bf16.mxu0 %v8306
        %11810 = vmatpush1.bf16.msra.mxu0 %v8305
        %11811 = vmatprep.subr.bf16.mxu0 %v8304
        %11812 = vmatpush1.bf16.msra.mxu0 %v8303
        %11813 = vmatprep.subr.bf16.mxu0 %v8302
        %11814 = vmatpush1.bf16.msra.mxu0 %v8301
        %11815 = vmatprep.subr.bf16.mxu0 %v8300
        %11816 = vmatpush1.bf16.msra.mxu0 %v8299
        %11817 = vmatprep.subr.bf16.mxu0 %v8298
        %11818 = vmatpush1.bf16.msra.mxu0 %v8297
        %11819 = vmatprep.subr.bf16.mxu0 %v8296
        %11820 = vmatpush1.bf16.msra.mxu0 %v8295
        %11821 = vmatprep.subr.bf16.mxu0 %v8294
        %11822 = vmatpush1.bf16.msra.mxu0 %v8293
        %11823 = vmatprep.subr.bf16.mxu0 %v8324
        %11824 = vmatpush2.bf16.msra.mxu0 %v8323
        %11825 = vmatprep.subr.bf16.mxu0 %v8322
        %11826 = vmatpush2.bf16.msra.mxu0 %v8321
        %11827 = vmatprep.subr.bf16.mxu0 %v8320
        %11828 = vmatpush2.bf16.msra.mxu0 %v8319
        %11829 = vmatprep.subr.bf16.mxu0 %v8318
        %11830 = vmatpush2.bf16.msra.mxu0 %v8317
        %11831 = vmatprep.subr.bf16.mxu0 %v8316
        %11832 = vmatpush2.bf16.msra.mxu0 %v8315
        %11833 = vmatprep.subr.bf16.mxu0 %v8314
        %11834 = vmatpush2.bf16.msra.mxu0 %v8313
        %11835 = vmatprep.subr.bf16.mxu0 %v8312
        %11836 = vmatpush2.bf16.msra.mxu0 %v8311
        %11837 = vmatprep.subr.bf16.mxu0 %v8310
        %11838 = vmatpush2.bf16.msra.mxu0 %v8309
        %11839 = vmatprep.mubr.bf16.mxu0 %v2134
        %11840 = vmatmul.mubr.bf16.gmra.mxu0 %v2133
        %v11841 = vpop.f32.mrf.mxu0
        %v11842 = vadd.f32 %v11801, %v11841
        %v11843 = vpop.f32.mrf.mxu0
        %v11844 = vadd.f32 %v11803, %v11843
        %v11845 = vpop.f32.mrf.mxu0
        %v11846 = vpop.f32.mrf.mxu0
        %11847 = vdwg.mxu0
        %11848 = vmatprep.subr.bf16.mxu0 %v8340
        %11849 = vmatpush1.bf16.msra.mxu0 %v8339
        %11850 = vmatprep.subr.bf16.mxu0 %v8338
        %11851 = vmatpush1.bf16.msra.mxu0 %v8337
        %11852 = vmatprep.subr.bf16.mxu0 %v8336
        %11853 = vmatpush1.bf16.msra.mxu0 %v8335
        %11854 = vmatprep.subr.bf16.mxu0 %v8334
        %11855 = vmatpush1.bf16.msra.mxu0 %v8333
        %11856 = vmatprep.subr.bf16.mxu0 %v8332
        %11857 = vmatpush1.bf16.msra.mxu0 %v8331
        %11858 = vmatprep.subr.bf16.mxu0 %v8330
        %11859 = vmatpush1.bf16.msra.mxu0 %v8329
        %11860 = vmatprep.subr.bf16.mxu0 %v8328
        %11861 = vmatpush1.bf16.msra.mxu0 %v8327
        %11862 = vmatprep.subr.bf16.mxu0 %v8326
        %11863 = vmatpush1.bf16.msra.mxu0 %v8325
        %11864 = vmatprep.subr.bf16.mxu0 %v8356
        %11865 = vmatpush2.bf16.msra.mxu0 %v8355
        %11866 = vmatprep.subr.bf16.mxu0 %v8354
        %11867 = vmatpush2.bf16.msra.mxu0 %v8353
        %11868 = vmatprep.subr.bf16.mxu0 %v8352
        %11869 = vmatpush2.bf16.msra.mxu0 %v8351
        %11870 = vmatprep.subr.bf16.mxu0 %v8350
        %11871 = vmatpush2.bf16.msra.mxu0 %v8349
        %11872 = vmatprep.subr.bf16.mxu0 %v8348
        %11873 = vmatpush2.bf16.msra.mxu0 %v8347
        %11874 = vmatprep.subr.bf16.mxu0 %v8346
        %11875 = vmatpush2.bf16.msra.mxu0 %v8345
        %11876 = vmatprep.subr.bf16.mxu0 %v8344
        %11877 = vmatpush2.bf16.msra.mxu0 %v8343
        %11878 = vmatprep.subr.bf16.mxu0 %v8342
        %11879 = vmatpush2.bf16.msra.mxu0 %v8341
        %11880 = vmatprep.mubr.bf16.mxu0 %v2136
        %11881 = vmatmul.mubr.bf16.gmra.mxu0 %v2135
        %v11882 = vpop.f32.mrf.mxu0
        %v11883 = vadd.f32 %v11842, %v11882
        %v11884 = vpop.f32.mrf.mxu0
        %v11885 = vadd.f32 %v11844, %v11884
        %v11886 = vpop.f32.mrf.mxu0
        %v11887 = vpop.f32.mrf.mxu0
        %11888 = vdwg.mxu0
        %11889 = vmatprep.subr.bf16.mxu0 %v8372
        %11890 = vmatpush1.bf16.msra.mxu0 %v8371
        %11891 = vmatprep.subr.bf16.mxu0 %v8370
        %11892 = vmatpush1.bf16.msra.mxu0 %v8369
        %11893 = vmatprep.subr.bf16.mxu0 %v8368
        %11894 = vmatpush1.bf16.msra.mxu0 %v8367
        %11895 = vmatprep.subr.bf16.mxu0 %v8366
        %11896 = vmatpush1.bf16.msra.mxu0 %v8365
        %11897 = vmatprep.subr.bf16.mxu0 %v8364
        %11898 = vmatpush1.bf16.msra.mxu0 %v8363
        %11899 = vmatprep.subr.bf16.mxu0 %v8362
        %11900 = vmatpush1.bf16.msra.mxu0 %v8361
        %11901 = vmatprep.subr.bf16.mxu0 %v8360
        %11902 = vmatpush1.bf16.msra.mxu0 %v8359
        %11903 = vmatprep.subr.bf16.mxu0 %v8358
        %11904 = vmatpush1.bf16.msra.mxu0 %v8357
        %11905 = vmatprep.subr.bf16.mxu0 %v8388
        %11906 = vmatpush2.bf16.msra.mxu0 %v8387
        %11907 = vmatprep.subr.bf16.mxu0 %v8386
        %11908 = vmatpush2.bf16.msra.mxu0 %v8385
        %11909 = vmatprep.subr.bf16.mxu0 %v8384
        %11910 = vmatpush2.bf16.msra.mxu0 %v8383
        %11911 = vmatprep.subr.bf16.mxu0 %v8382
        %11912 = vmatpush2.bf16.msra.mxu0 %v8381
        %11913 = vmatprep.subr.bf16.mxu0 %v8380
        %11914 = vmatpush2.bf16.msra.mxu0 %v8379
        %11915 = vmatprep.subr.bf16.mxu0 %v8378
        %11916 = vmatpush2.bf16.msra.mxu0 %v8377
        %11917 = vmatprep.subr.bf16.mxu0 %v8376
        %11918 = vmatpush2.bf16.msra.mxu0 %v8375
        %11919 = vmatprep.subr.bf16.mxu0 %v8374
        %11920 = vmatpush2.bf16.msra.mxu0 %v8373
        %11921 = vmatprep.mubr.bf16.mxu0 %v2138
        %11922 = vmatmul.mubr.bf16.gmra.mxu0 %v2137
        %v11923 = vpop.f32.mrf.mxu0
        %v11924 = vadd.f32 %v11883, %v11923
        %v11925 = vpop.f32.mrf.mxu0
        %v11926 = vadd.f32 %v11885, %v11925
        %v11927 = vpop.f32.mrf.mxu0
        %v11928 = vpop.f32.mrf.mxu0
        %11929 = vdwg.mxu0
        %11930 = vmatprep.subr.bf16.mxu0 %v8404
        %11931 = vmatpush1.bf16.msra.mxu0 %v8403
        %11932 = vmatprep.subr.bf16.mxu0 %v8402
        %11933 = vmatpush1.bf16.msra.mxu0 %v8401
        %11934 = vmatprep.subr.bf16.mxu0 %v8400
        %11935 = vmatpush1.bf16.msra.mxu0 %v8399
        %11936 = vmatprep.subr.bf16.mxu0 %v8398
        %11937 = vmatpush1.bf16.msra.mxu0 %v8397
        %11938 = vmatprep.subr.bf16.mxu0 %v8396
        %11939 = vmatpush1.bf16.msra.mxu0 %v8395
        %11940 = vmatprep.subr.bf16.mxu0 %v8394
        %11941 = vmatpush1.bf16.msra.mxu0 %v8393
        %11942 = vmatprep.subr.bf16.mxu0 %v8392
        %11943 = vmatpush1.bf16.msra.mxu0 %v8391
        %11944 = vmatprep.subr.bf16.mxu0 %v8390
        %11945 = vmatpush1.bf16.msra.mxu0 %v8389
        %11946 = vmatprep.subr.bf16.mxu0 %v8420
        %11947 = vmatpush2.bf16.msra.mxu0 %v8419
        %11948 = vmatprep.subr.bf16.mxu0 %v8418
        %11949 = vmatpush2.bf16.msra.mxu0 %v8417
        %11950 = vmatprep.subr.bf16.mxu0 %v8416
        %11951 = vmatpush2.bf16.msra.mxu0 %v8415
        %11952 = vmatprep.subr.bf16.mxu0 %v8414
        %11953 = vmatpush2.bf16.msra.mxu0 %v8413
        %11954 = vmatprep.subr.bf16.mxu0 %v8412
        %11955 = vmatpush2.bf16.msra.mxu0 %v8411
        %11956 = vmatprep.subr.bf16.mxu0 %v8410
        %11957 = vmatpush2.bf16.msra.mxu0 %v8409
        %11958 = vmatprep.subr.bf16.mxu0 %v8408
        %11959 = vmatpush2.bf16.msra.mxu0 %v8407
        %11960 = vmatprep.subr.bf16.mxu0 %v8406
        %11961 = vmatpush2.bf16.msra.mxu0 %v8405
        %11962 = vmatprep.mubr.bf16.mxu0 %v2140
        %11963 = vmatmul.mubr.bf16.gmra.mxu0 %v2139
        %v11964 = vpop.f32.mrf.mxu0
        %v11965 = vadd.f32 %v11924, %v11964
        %v11966 = vpop.f32.mrf.mxu0
        %v11967 = vadd.f32 %v11926, %v11966
        %v11968 = vpop.f32.mrf.mxu0
        %v11969 = vpop.f32.mrf.mxu0
        %11970 = vdwg.mxu0
        %11971 = vmatprep.subr.bf16.mxu0 %v8436
        %11972 = vmatpush1.bf16.msra.mxu0 %v8435
        %11973 = vmatprep.subr.bf16.mxu0 %v8434
        %11974 = vmatpush1.bf16.msra.mxu0 %v8433
        %11975 = vmatprep.subr.bf16.mxu0 %v8432
        %11976 = vmatpush1.bf16.msra.mxu0 %v8431
        %11977 = vmatprep.subr.bf16.mxu0 %v8430
        %11978 = vmatpush1.bf16.msra.mxu0 %v8429
        %11979 = vmatprep.subr.bf16.mxu0 %v8428
        %11980 = vmatpush1.bf16.msra.mxu0 %v8427
        %11981 = vmatprep.subr.bf16.mxu0 %v8426
        %11982 = vmatpush1.bf16.msra.mxu0 %v8425
        %11983 = vmatprep.subr.bf16.mxu0 %v8424
        %11984 = vmatpush1.bf16.msra.mxu0 %v8423
        %11985 = vmatprep.subr.bf16.mxu0 %v8422
        %11986 = vmatpush1.bf16.msra.mxu0 %v8421
        %11987 = vmatprep.subr.bf16.mxu0 %v8452
        %11988 = vmatpush2.bf16.msra.mxu0 %v8451
        %11989 = vmatprep.subr.bf16.mxu0 %v8450
        %11990 = vmatpush2.bf16.msra.mxu0 %v8449
        %11991 = vmatprep.subr.bf16.mxu0 %v8448
        %11992 = vmatpush2.bf16.msra.mxu0 %v8447
        %11993 = vmatprep.subr.bf16.mxu0 %v8446
        %11994 = vmatpush2.bf16.msra.mxu0 %v8445
        %11995 = vmatprep.subr.bf16.mxu0 %v8444
        %11996 = vmatpush2.bf16.msra.mxu0 %v8443
        %11997 = vmatprep.subr.bf16.mxu0 %v8442
        %11998 = vmatpush2.bf16.msra.mxu0 %v8441
        %11999 = vmatprep.subr.bf16.mxu0 %v8440
        %12000 = vmatpush2.bf16.msra.mxu0 %v8439
        %12001 = vmatprep.subr.bf16.mxu0 %v8438
        %12002 = vmatpush2.bf16.msra.mxu0 %v8437
        %12003 = vmatprep.mubr.bf16.mxu0 %v2142
        %12004 = vmatmul.mubr.bf16.gmra.mxu0 %v2141
        %v12005 = vpop.f32.mrf.mxu0
        %v12006 = vadd.f32 %v11965, %v12005
        %v12007 = vpop.f32.mrf.mxu0
        %v12008 = vadd.f32 %v11967, %v12007
        %v12009 = vpop.f32.mrf.mxu0
        %v12010 = vpop.f32.mrf.mxu0
        %12011 = vdwg.mxu0
        %12012 = vmatprep.subr.bf16.mxu0 %v8468
        %12013 = vmatpush1.bf16.msra.mxu0 %v8467
        %12014 = vmatprep.subr.bf16.mxu0 %v8466
        %12015 = vmatpush1.bf16.msra.mxu0 %v8465
        %12016 = vmatprep.subr.bf16.mxu0 %v8464
        %12017 = vmatpush1.bf16.msra.mxu0 %v8463
        %12018 = vmatprep.subr.bf16.mxu0 %v8462
        %12019 = vmatpush1.bf16.msra.mxu0 %v8461
        %12020 = vmatprep.subr.bf16.mxu0 %v8460
        %12021 = vmatpush1.bf16.msra.mxu0 %v8459
        %12022 = vmatprep.subr.bf16.mxu0 %v8458
        %12023 = vmatpush1.bf16.msra.mxu0 %v8457
        %12024 = vmatprep.subr.bf16.mxu0 %v8456
        %12025 = vmatpush1.bf16.msra.mxu0 %v8455
        %12026 = vmatprep.subr.bf16.mxu0 %v8454
        %12027 = vmatpush1.bf16.msra.mxu0 %v8453
        %12028 = vmatprep.subr.bf16.mxu0 %v8484
        %12029 = vmatpush2.bf16.msra.mxu0 %v8483
        %12030 = vmatprep.subr.bf16.mxu0 %v8482
        %12031 = vmatpush2.bf16.msra.mxu0 %v8481
        %12032 = vmatprep.subr.bf16.mxu0 %v8480
        %12033 = vmatpush2.bf16.msra.mxu0 %v8479
        %12034 = vmatprep.subr.bf16.mxu0 %v8478
        %12035 = vmatpush2.bf16.msra.mxu0 %v8477
        %12036 = vmatprep.subr.bf16.mxu0 %v8476
        %12037 = vmatpush2.bf16.msra.mxu0 %v8475
        %12038 = vmatprep.subr.bf16.mxu0 %v8474
        %12039 = vmatpush2.bf16.msra.mxu0 %v8473
        %12040 = vmatprep.subr.bf16.mxu0 %v8472
        %12041 = vmatpush2.bf16.msra.mxu0 %v8471
        %12042 = vmatprep.subr.bf16.mxu0 %v8470
        %12043 = vmatpush2.bf16.msra.mxu0 %v8469
        %12044 = vmatprep.mubr.bf16.mxu0 %v2144
        %12045 = vmatmul.mubr.bf16.gmra.mxu0 %v2143
        %v12046 = vpop.f32.mrf.mxu0
        %v12047 = vadd.f32 %v12006, %v12046
        %v12048 = vpop.f32.mrf.mxu0
        %v12049 = vadd.f32 %v12008, %v12048
        %v12050 = vpop.f32.mrf.mxu0
        %v12051 = vpop.f32.mrf.mxu0
        %12052 = vdwg.mxu0
        %12053 = vmatprep.subr.bf16.mxu0 %v8500
        %12054 = vmatpush1.bf16.msra.mxu0 %v8499
        %12055 = vmatprep.subr.bf16.mxu0 %v8498
        %12056 = vmatpush1.bf16.msra.mxu0 %v8497
        %12057 = vmatprep.subr.bf16.mxu0 %v8496
        %12058 = vmatpush1.bf16.msra.mxu0 %v8495
        %12059 = vmatprep.subr.bf16.mxu0 %v8494
        %12060 = vmatpush1.bf16.msra.mxu0 %v8493
        %12061 = vmatprep.subr.bf16.mxu0 %v8492
        %12062 = vmatpush1.bf16.msra.mxu0 %v8491
        %12063 = vmatprep.subr.bf16.mxu0 %v8490
        %12064 = vmatpush1.bf16.msra.mxu0 %v8489
        %12065 = vmatprep.subr.bf16.mxu0 %v8488
        %12066 = vmatpush1.bf16.msra.mxu0 %v8487
        %12067 = vmatprep.subr.bf16.mxu0 %v8486
        %12068 = vmatpush1.bf16.msra.mxu0 %v8485
        %12069 = vmatprep.subr.bf16.mxu0 %v8516
        %12070 = vmatpush2.bf16.msra.mxu0 %v8515
        %12071 = vmatprep.subr.bf16.mxu0 %v8514
        %12072 = vmatpush2.bf16.msra.mxu0 %v8513
        %12073 = vmatprep.subr.bf16.mxu0 %v8512
        %12074 = vmatpush2.bf16.msra.mxu0 %v8511
        %12075 = vmatprep.subr.bf16.mxu0 %v8510
        %12076 = vmatpush2.bf16.msra.mxu0 %v8509
        %12077 = vmatprep.subr.bf16.mxu0 %v8508
        %12078 = vmatpush2.bf16.msra.mxu0 %v8507
        %12079 = vmatprep.subr.bf16.mxu0 %v8506
        %12080 = vmatpush2.bf16.msra.mxu0 %v8505
        %12081 = vmatprep.subr.bf16.mxu0 %v8504
        %12082 = vmatpush2.bf16.msra.mxu0 %v8503
        %12083 = vmatprep.subr.bf16.mxu0 %v8502
        %12084 = vmatpush2.bf16.msra.mxu0 %v8501
        %12085 = vmatprep.mubr.bf16.mxu0 %v2146
        %12086 = vmatmul.mubr.bf16.gmra.mxu0 %v2145
        %v12087 = vpop.f32.mrf.mxu0
        %v12088 = vadd.f32 %v12047, %v12087
        %v12089 = vpop.f32.mrf.mxu0
        %v12090 = vadd.f32 %v12049, %v12089
        %v12091 = vpop.f32.mrf.mxu0
        %v12092 = vpop.f32.mrf.mxu0
        %12093 = vdwg.mxu0
        %v12094 = vadd.f32 %v332, %v12088
        %v12095 = vadd.f32 %v333, %v12090
        %12096 = vst [vmem:[#allocation2] sm:$0xff] %v12094
        %12097 = vst [vmem:[#allocation2 + $0x8] sm:$0xff] %v12095
        %p12098 = scmp.eq.s32.totalorder %s23, 1
        // Predicated region
        $region61: #{tpu_custom_call.1} parent=39 // pred_check
          %p12099 = pneg %p12098
        $region62: #{tpu_custom_call.1} parent=39 // pred_check_branch
          %12101 = sbr.rel (%p12099) target = $region64
        $region63: #{tpu_custom_call.1} parent=39 // pred_region
          %v12102 = vld [vmem:[#allocation2] sm:$0xff]
          %v12103 = vld [vmem:[#allocation2 + $0x8] sm:$0xff]
          %v12104 = vld [vmem:[#allocation8] sm:$0x3]
          %v12106 = vlaneseq
          %v12107 = vshrl.u32 %v12106, 7
          %v12108 = vsub.s32 0, %v12107
          %v12109 = vrot.slane %v12104, %v12108
          %v12110 = vlaneseq
          %v12111 = vshrl.u32 %v12110, 7
          %v12112 = vsub.s32 1, %v12111
          %v12113 = vrot.slane %v12104, %v12112
          %v12116 = vadd.f32 %v12102, %v12109
          %v12117 = vadd.f32 %v12103, %v12113
          %v12118 = vld [vmem:[#allocation9] sm:$0x3]
          %v12120 = vlaneseq
          %v12121 = vshrl.u32 %v12120, 7
          %v12122 = vsub.s32 0, %v12121
          %v12123 = vrot.slane %v12118, %v12122
          %v12124 = vlaneseq
          %v12125 = vshrl.u32 %v12124, 7
          %v12126 = vsub.s32 1, %v12125
          %v12127 = vrot.slane %v12118, %v12126
          %v12130 = vmul.f32 %v12116, %v12123
          %v12131 = vmul.f32 %v12117, %v12127
          %v12132 = vadd.f32 %v12130, %v12131
          %12133 = vadd.xlane.f32.xlu0 %v12132
          %v12134 = vpop.xlane.xlu0 %12133
          %v12135 = vld [vmem:[#allocation3] sm:$0x1]
          %v12137 = vlaneseq
          %v12138 = vshrl.u32 %v12137, 7
          %v12139 = vsub.s32 0, %v12138
          %v12140 = vrot.slane %v12135, %v12139
          %v12142 = vadd.f32 %v12134, %v12140
          %v12143 = vmax.f32 %v12142, 0.0
          %vm12144 = vcmask 7168
          %12145 = vst.msk [vmem:[%s5] sm:$0xff] %vm12144, %v12143
        $region64: #{tpu_custom_call.1} parent=39 // pred_fallthru
          _
        // Predicated region
        $region65: #{tpu_custom_call.1} parent=39 // pred_check
          %p12146 = pneg %p146
        $region66: #{tpu_custom_call.1} parent=39 // pred_check_branch
          %12148 = sbr.rel (%p12146) target = $region68
        $region67: #{tpu_custom_call.1} parent=39 // pred_region
          _
        $region68: #{tpu_custom_call.1} parent=39 // pred_fallthru
          _
        // Predicated region
        $region69: #{tpu_custom_call.1} parent=39 // pred_check
          %p12149 = pneg %p146
        $region70: #{tpu_custom_call.1} parent=39 // pred_check_branch
          %12151 = sbr.rel (%p12149) target = $region72
        $region71: #{tpu_custom_call.1} parent=39 // pred_region
          _
        $region72: #{tpu_custom_call.1} parent=39 // pred_fallthru
          _
      $region40: #{tpu_custom_call.1} parent=5 // pred_fallthru
        _
      %p12152 = scmp.le.s32.totalorder 2, %s18
      // Predicated region
      $region73: #{tpu_custom_call.1} parent=5 // pred_check
        %p12153 = pneg %p12152
      $region74: #{tpu_custom_call.1} parent=5 // pred_check_branch
        %12155 = sbr.rel (%p12153) target = $region76
      $region75: #{tpu_custom_call.1} parent=5 // pred_region
        %s12156 = ssub.s32 %s18, 2
      $region76: #{tpu_custom_call.1} parent=5 // pred_fallthru
        _
    $region6: #{tpu_custom_call.1} parent=1 // loop_footer
      %s22 = sadd.s32 1, %s18
    $region7: #{tpu_custom_call.1} parent=1 // loop_footer_branch
      %17 = sbr.rel target = $region3
    $region8: #{tpu_custom_call.1} parent=1 // loop_exit
      _
    %12157 = vsyncpa [#allocation5], 1
    %s12158 = scalar_lea.sflag [#allocation5], 1
    %12159 = vsyncpa %s12158, 1
    %12160 = vsyncpa [#allocation7], 1
    %s12161 = scalar_lea.sflag [#allocation7], 1
    %12162 = vsyncpa %s12161, 1
    %12163 = vsyncpa [#allocation10], 1

</llo_original>
